<compile_context>
chip_gen: v6e
topology: v6e:2x2x1
jax: 0.10.0
libtpu: 0.0.40
codegen_flags: <defaults>
</compile_context>

<pallas_src>
import jax
import jax.numpy as jnp
from jax import lax
from jax.experimental import pallas as pl
from jax.experimental.pallas import tpu as pltpu

EPS = 1e-5
NEG_SLOPE = 0.1


# ----------------------------- kernels ------------------------------------ #

def conv1x1_stats_kernel(x_ref, w_ref, y_ref, stats_ref):
    """1x1 conv (= matmul) on one M-tile + per-tile BN partial statistics."""
    y = jnp.dot(x_ref[...], w_ref[...], preferred_element_type=jnp.float32)
    y_ref[...] = y
    rows = y.shape[0]
    s = jnp.sum(y, axis=0, keepdims=True)                 # (1, Cmid) tile sum
    mu = s / rows
    m2 = jnp.sum((y - mu) ** 2, axis=0, keepdims=True)    # tile-centered 2nd moment
    stats_ref[...] = jnp.concatenate([s, m2], axis=-1).reshape(1, 1, -1)


def fused_res_conv1_kernel(y3_ref, x_ref, scale_ref, shift_ref, w_ref,
                           xnew_ref, y1_ref, stats_ref):
    """Fusion of (previous block) BN2 + LeakyReLU + residual with
    (current block) 1x1 conv + BN1 partial stats, on one M-tile."""
    t = y3_ref[...] * scale_ref[...] + shift_ref[...]      # folded BN2
    t = jnp.maximum(t, NEG_SLOPE * t)                      # LeakyReLU(0.1)
    xnew = t + x_ref[...]                                  # residual add
    xnew_ref[...] = xnew
    y1 = jnp.dot(xnew, w_ref[...], preferred_element_type=jnp.float32)
    y1_ref[...] = y1
    rows = y1.shape[0]
    s = jnp.sum(y1, axis=0, keepdims=True)
    mu = s / rows
    m2 = jnp.sum((y1 - mu) ** 2, axis=0, keepdims=True)
    stats_ref[...] = jnp.concatenate([s, m2], axis=-1).reshape(1, 1, -1)


def conv3x3_stats_kernel(h_ref, w_ref, scale_ref, shift_ref, y_ref, stats_ref,
                         pad_ref):
    """Per image: folded BN1 + LeakyReLU of the raw conv1 output, in-kernel
    zero padding into a VMEM scratch, 3x3 conv as 9 accumulated K=Cmid
    matmuls, plus per-image BN2 partial statistics."""
    h = h_ref[0]                                           # (H, W, Cmid), raw conv1 out
    hh, ww, cmid = h.shape
    cout = w_ref.shape[-1]

    a = h * scale_ref[...].reshape(1, 1, cmid) + shift_ref[...].reshape(1, 1, cmid)
    a = jnp.maximum(a, NEG_SLOPE * a)                      # LeakyReLU(0.1)

    # Zero-padded activation lives only in VMEM (no HBM round trip).
    pad_ref[...] = jnp.zeros_like(pad_ref)
    pad_ref[1:hh + 1, 1:ww + 1, :] = a

    # Accumulate the nine taps instead of concatenating them (low peak VMEM).
    acc = jnp.zeros((hh * ww, cout), jnp.float32)
    for ky in range(3):
        for kx in range(3):
            tap = pad_ref[ky:ky + hh, kx:kx + ww, :].reshape(hh * ww, cmid)
            acc = acc + jnp.dot(tap, w_ref[ky, kx, :, :],
                                preferred_element_type=jnp.float32)

    y_ref[...] = acc.reshape(1, hh, ww, cout)
    s = jnp.sum(acc, axis=0, keepdims=True)
    mu = s / (hh * ww)
    m2 = jnp.sum((acc - mu) ** 2, axis=0, keepdims=True)
    stats_ref[...] = jnp.concatenate([s, m2], axis=-1).reshape(1, 1, -1)


def bn_lrelu_residual_kernel(y_ref, x_ref, scale_ref, shift_ref, o_ref):
    """Folded BN2 + LeakyReLU + residual add (last block only)."""
    t = y_ref[...] * scale_ref[...] + shift_ref[...]
    t = jnp.maximum(t, NEG_SLOPE * t)
    o_ref[...] = t + x_ref[...]


# --------------------------- pallas wrappers ------------------------------- #

def _vmem_limit_bytes():
    try:
        cap = int(pltpu.get_tpu_info().vmem_capacity_bytes)
    except Exception:
        cap = 64 * 1024 * 1024
    return int(min(cap * 3 // 4, 96 * 1024 * 1024))


def _mosaic_params(semantics, vmem_limit):
    return pltpu.CompilerParams(dimension_semantics=semantics,
                                vmem_limit_bytes=vmem_limit)


def _pick_row_tile(m, bytes_per_row, vmem_budget, target=2048):
    """Largest multiple-of-8 divisor of m that is <= target, fits the (double
    buffered) VMEM budget, and leaves >= 2 grid steps when possible."""
    if m % 8 != 0:
        return m   # TODO(synk): cdiv grid + weighted stats combine for odd M
    limit = min(target, m)
    max_rows = max(8, (vmem_budget // max(1, 2 * bytes_per_row)) // 8 * 8)
    limit = min(limit, max_rows)
    if m // limit < 2 and m >= 16:
        limit = m // 2
    limit = max(8, limit - limit % 8)
    for cand in range(limit, 7, -8):
        if m % cand == 0:
            return cand
    return m


def conv1x1_with_stats(x2d, w1, tm, vmem_limit):
    m, cin = x2d.shape
    cmid = w1.shape[1]
    t = m // tm
    y, st = pl.pallas_call(
        conv1x1_stats_kernel,
        out_shape=(jax.ShapeDtypeStruct((m, cmid), jnp.float32),
                   jax.ShapeDtypeStruct((t, 1, 2 * cmid), jnp.float32)),
        grid=(t,),
        in_specs=[pl.BlockSpec((tm, cin), lambda i: (i, 0)),
                  pl.BlockSpec((cin, cmid), lambda i: (0, 0))],
        out_specs=(pl.BlockSpec((tm, cmid), lambda i: (i, 0)),
                   pl.BlockSpec((1, 1, 2 * cmid), lambda i: (i, 0, 0))),
        compiler_params=_mosaic_params(("parallel",), vmem_limit),
    )(x2d, w1)
    return y, st.reshape(t, 2 * cmid)


def fused_residual_conv1(y3_2d, x2d, scale2, shift2, w1, tm, vmem_limit):
    m, c = x2d.shape
    cmid = w1.shape[1]
    t = m // tm
    xnew, y1, st = pl.pallas_call(
        fused_res_conv1_kernel,
        out_shape=(jax.ShapeDtypeStruct((m, c), jnp.float32),
                   jax.ShapeDtypeStruct((m, cmid), jnp.float32),
                   jax.ShapeDtypeStruct((t, 1, 2 * cmid), jnp.float32)),
        grid=(t,),
        in_specs=[pl.BlockSpec((tm, c), lambda i: (i, 0)),     # y3 (prev conv2, raw)
                  pl.BlockSpec((tm, c), lambda i: (i, 0)),     # x  (residual, dead after)
                  pl.BlockSpec((1, c), lambda i: (0, 0)),      # scale2
                  pl.BlockSpec((1, c), lambda i: (0, 0)),      # shift2
                  pl.BlockSpec((c, cmid), lambda i: (0, 0))],  # w1 of next block
        out_specs=(pl.BlockSpec((tm, c), lambda i: (i, 0)),    # x_new
                   pl.BlockSpec((tm, cmid), lambda i: (i, 0)), # y1 of next block
                   pl.BlockSpec((1, 1, 2 * cmid), lambda i: (i, 0, 0))),
        input_output_aliases={1: 0},                           # reuse x buffer for x_new
        compiler_params=_mosaic_params(("parallel",), vmem_limit),
    )(y3_2d, x2d, scale2, shift2, w1)
    return xnew, y1, st.reshape(t, 2 * cmid)


def conv3x3_with_stats(h_nhwc, w3, scale1, shift1, vmem_limit):
    n, hh, ww, cmid = h_nhwc.shape
    cout = w3.shape[-1]
    y, st = pl.pallas_call(
        conv3x3_stats_kernel,
        out_shape=(jax.ShapeDtypeStruct((n, hh, ww, cout), jnp.float32),
                   jax.ShapeDtypeStruct((n, 1, 2 * cout), jnp.float32)),
        grid=(n,),
        in_specs=[pl.BlockSpec((1, hh, ww, cmid), lambda i: (i, 0, 0, 0)),
                  pl.BlockSpec((3, 3, cmid, cout), lambda i: (0, 0, 0, 0)),
                  pl.BlockSpec((1, cmid), lambda i: (0, 0)),
                  pl.BlockSpec((1, cmid), lambda i: (0, 0))],
        out_specs=(pl.BlockSpec((1, hh, ww, cout), lambda i: (i, 0, 0, 0)),
                   pl.BlockSpec((1, 1, 2 * cout), lambda i: (i, 0, 0))),
        scratch_shapes=[pltpu.VMEM((hh + 2, ww + 2, cmid), jnp.float32)],
        compiler_params=_mosaic_params(("parallel",), vmem_limit),
    )(h_nhwc, w3, scale1, shift1)
    return y, st.reshape(n, 2 * cout)


def bn_lrelu_residual(y3_2d, x2d, scale2, shift2, tm, vmem_limit):
    m, c = y3_2d.shape
    t = m // tm
    return pl.pallas_call(
        bn_lrelu_residual_kernel,
        out_shape=jax.ShapeDtypeStruct((m, c), jnp.float32),
        grid=(t,),
        in_specs=[pl.BlockSpec((tm, c), lambda i: (i, 0)),
                  pl.BlockSpec((tm, c), lambda i: (i, 0)),
                  pl.BlockSpec((1, c), lambda i: (0, 0)),
                  pl.BlockSpec((1, c), lambda i: (0, 0))],
        out_specs=pl.BlockSpec((tm, c), lambda i: (i, 0)),
        input_output_aliases={1: 0},
        compiler_params=_mosaic_params(("parallel",), vmem_limit),
    )(y3_2d, x2d, scale2, shift2)


# ------------------------------ glue --------------------------------------- #

def _finalize_stats(stats, gamma, beta, per_count):
    """Combine per-tile (sum, centered M2) -> per-channel folded (scale, shift).

    stats: (T, 2*C) lane-packed; each tile covers exactly `per_count` rows.
    Chan's combination keeps the variance numerically stable."""
    stats = stats.reshape(stats.shape[0], -1)
    c = stats.shape[-1] // 2
    sums, m2s = stats[:, :c], stats[:, c:]
    t = stats.shape[0]
    total = t * per_count
    mean = jnp.sum(sums, axis=0) / total
    tile_means = sums / per_count
    m2 = jnp.sum(m2s, axis=0) + per_count * jnp.sum((tile_means - mean) ** 2, axis=0)
    var = jnp.maximum(m2 / total, 0.0)                 # biased (training-mode) variance
    scale = gamma * lax.rsqrt(var + EPS)
    shift = beta - mean * scale
    return scale.reshape(1, -1), shift.reshape(1, -1)


def residual_block_forward(x_nchw, params):
    if not params:
        return x_nchw
    n, c, hgt, wid = x_nchw.shape
    m = n * hgt * wid
    vlim = _vmem_limit_bytes()
    # TODO(synk): keep the surrounding model NHWC end-to-end to drop these
    # boundary transposes (one extra HBM read+write each).
    x = jnp.transpose(x_nchw, (0, 2, 3, 1)).reshape(m, c)   # NCHW -> NHWC -> (M, C)

    scale2 = shift2 = y3 = None
    for b, p in enumerate(params):
        cmid = p["w1"].shape[1]
        tm = _pick_row_tile(m, bytes_per_row=(3 * c + 2 * cmid) * 4,
                            vmem_budget=vlim // 2)

        if b == 0:
            # Pass A (first block): 1x1 conv, raw output + BN1 partial stats.
            y1, st1 = conv1x1_with_stats(x, p["w1"], tm, vlim)
        else:
            # Pass A (fused): previous block's BN2+LReLU+residual + this block's
            # 1x1 conv + BN1 partial stats; activation never bounces to HBM twice.
            x, y1, st1 = fused_residual_conv1(y3, x, scale2, shift2,
                                              p["w1"], tm, vlim)
        scale1, shift1 = _finalize_stats(st1, p["g1"], p["b1"], tm)

        # Pass B: in-kernel padded 3x3 conv over the normalized conv1 output,
        # raw output + BN2 partial stats (per image).
        y3_4d, st2 = conv3x3_with_stats(y1.reshape(n, hgt, wid, cmid),
                                        p["w3"], scale1, shift1, vlim)
        scale2, shift2 = _finalize_stats(st2, p["g3"], p["b3"], hgt * wid)
        y3 = y3_4d.reshape(m, c)

    # Final pass: BN2 + LeakyReLU + residual of the last block.
    tm = _pick_row_tile(m, bytes_per_row=3 * c * 4, vmem_budget=vlim // 2)
    out = bn_lrelu_residual(y3, x, scale2, shift2, tm, vlim)
    return jnp.transpose(out.reshape(n, hgt, wid, c), (0, 3, 1, 2))   # back to NCHW


def init_params(key, num_block, in_channels):
    c, cm = in_channels, in_channels // 2
    params = []
    for _ in range(num_block):
        key, k1, k2, k3, k4, k5, k6 = jax.random.split(key, 7)
        w1 = jax.random.normal(k1, (cm, c, 1, 1), jnp.float32) / jnp.sqrt(c * 1.0)
        w3 = jax.random.normal(k2, (c, cm, 3, 3), jnp.float32) / jnp.sqrt(9.0 * cm)
        g1 = 1.0 + 0.1 * jax.random.normal(k3, (cm,), jnp.float32)
        b1 = 0.1 * jax.random.normal(k4, (cm,), jnp.float32)
        g3 = 1.0 + 0.1 * jax.random.normal(k5, (c,), jnp.float32)
        b3 = 0.1 * jax.random.normal(k6, (c,), jnp.float32)
        params.append(dict(
            w1_oihw=w1, w3_oihw=w3,
            w1=w1.reshape(cm, c).T,                       # (Cin, Cmid)
            w3=jnp.transpose(w3, (2, 3, 1, 0)),           # (kh, kw, Cmid, Cout)
            g1=g1, b1=b1, g3=g3, b3=b3))
    return params


# --------------------------- pure-JAX reference ----------------------------- #

def _bn_lrelu_ref(x_nchw, gamma, beta):
    mean = jnp.mean(x_nchw, axis=(0, 2, 3), keepdims=True)
    var = jnp.mean((x_nchw - mean) ** 2, axis=(0, 2, 3), keepdims=True)
    y = (x_nchw - mean) * lax.rsqrt(var + EPS) * gamma.reshape(1, -1, 1, 1) \
        + beta.reshape(1, -1, 1, 1)
    return jnp.where(y > 0, y, NEG_SLOPE * y)


def _conv_ref(x_nchw, w_oihw, pad):
    return lax.conv_general_dilated(
        x_nchw, w_oihw, window_strides=(1, 1),
        padding=((pad, pad), (pad, pad)),
        dimension_numbers=("NCHW", "OIHW", "NCHW"))


def reference_forward(x_nchw, params):
    x = x_nchw
    for p in params:
        h = _bn_lrelu_ref(_conv_ref(x, p["w1_oihw"], 0), p["g1"], p["b1"])
        y = _bn_lrelu_ref(_conv_ref(h, p["w3_oihw"], 1), p["g3"], p["b3"])
        x = y + x
    return x


# ------------------------------- main --------------------------------------- #

if __name__ == "__main__":
    key = jax.random.PRNGKey(0)
    kx, kp = jax.random.split(key)

    N, C, H, W = 2, 16, 16, 16   # input layout: NCHW (PyTorch convention)
    NUM_BLOCK = 2

    x = jax.random.normal(kx, (N, C, H, W), jnp.float32)
    params = init_params(kp, NUM_BLOCK, C)

    fwd = jax.jit(residual_block_forward)
    out = jax.block_until_ready(fwd(x, params))
    ref = jax.block_until_ready(reference_forward(x, params))

    assert out.shape == (N, C, H, W), out.shape
    max_err = float(jnp.max(jnp.abs(out - ref)))
    if not jnp.allclose(out, ref, atol=2e-3, rtol=2e-3):
        raise AssertionError(f"mismatch vs JAX reference, max_err={max_err}")
    print("KERNEL_OK")
</pallas_src>

<mosaic_0001>
module attributes {stable_mosaic.version = 11 : i64} {
  func.func @conv1x1_stats_kernel(%arg0: i32, %arg1: memref<256x16xf32, #tpu.memory_space<vmem>>, %arg2: memref<16x8xf32, #tpu.memory_space<vmem>>, %arg3: memref<256x8xf32, #tpu.memory_space<vmem>>, %arg4: memref<1x1x16xf32, #tpu.memory_space<vmem>>) attributes {dimension_semantics = [#tpu.dimension_semantics<parallel>], iteration_bounds = array<i64: 2>, scalar_prefetch = 0 : i64, scratch_operands = 0 : i64, tpu.core_type = #tpu.core_type<tc>, window_params = [{transform_indices = @transform_0, window_bounds = array<i64: 256, 16>}, {pipeline_mode = #tpu.pipeline_mode<synchronous>, transform_indices = @transform_1, window_bounds = array<i64: 16, 8>}, {transform_indices = @transform_2, window_bounds = array<i64: 256, 8>}, {transform_indices = @transform_3, window_bounds = array<i64: 1, 1, 16>}]} {
    %c0 = arith.constant 0 : index
    %c0_0 = arith.constant 0 : index
    %0 = vector.load %arg1[%c0, %c0_0] : memref<256x16xf32, #tpu.memory_space<vmem>>, vector<256x16xf32>
    %c0_1 = arith.constant 0 : index
    %c0_2 = arith.constant 0 : index
    %1 = vector.load %arg2[%c0_1, %c0_2] : memref<16x8xf32, #tpu.memory_space<vmem>>, vector<16x8xf32>
    %cst = arith.constant dense<0.000000e+00> : vector<256x8xf32>
    %2 = tpu.matmul %0, %1, %cst {dimension_numbers = #tpu.dot_dimension_numbers<[1], [0], [0], [1], [0, 0, 1, 1], [], []>} : vector<256x16xf32>, vector<16x8xf32>, vector<256x8xf32> -> vector<256x8xf32>
    %c0_3 = arith.constant 0 : index
    %c0_4 = arith.constant 0 : index
    %3 = vector.load %arg3[%c0_3, %c0_4] : memref<256x8xf32, #tpu.memory_space<vmem>>, vector<256x8xf32>
    tpu.vector_store %arg3[%c0_3, %c0_4], %2 {strides = array<i32>} : memref<256x8xf32, #tpu.memory_space<vmem>>, vector<256x8xf32>,
    %cst_5 = arith.constant dense<0.000000e+00> : vector<8xf32>
    %4 = vector.multi_reduction <add>, %2, %cst_5 [0] : vector<256x8xf32> to vector<8xf32>
    %5 = vector.shape_cast %4 : vector<8xf32> to vector<1x8xf32>
    %cst_6 = arith.constant 2.560000e+02 : f32
    %6 = vector.broadcast %cst_6 : f32 to vector<1x8xf32>
    %7 = arith.divf %5, %6 : vector<1x8xf32>
    %8 = vector.broadcast %7 : vector<1x8xf32> to vector<256x8xf32>
    %9 = arith.subf %2, %8 : vector<256x8xf32>
    %10 = arith.mulf %9, %9 : vector<256x8xf32>
    %cst_7 = arith.constant dense<0.000000e+00> : vector<8xf32>
    %11 = vector.multi_reduction <add>, %10, %cst_7 [0] : vector<256x8xf32> to vector<8xf32>
    %12 = vector.shape_cast %11 : vector<8xf32> to vector<1x8xf32>
    %13 = tpu.concatenate %5, %12 in 1 : vector<1x8xf32>, vector<1x8xf32> -> vector<1x16xf32>
    %14 = vector.shape_cast %13 : vector<1x16xf32> to vector<1x1x16xf32>
    %c0_8 = arith.constant 0 : index
    %c0_9 = arith.constant 0 : index
    %c0_10 = arith.constant 0 : index
    %15 = vector.load %arg4[%c0_8, %c0_9, %c0_10] : memref<1x1x16xf32, #tpu.memory_space<vmem>>, vector<1x1x16xf32>
    tpu.vector_store %arg4[%c0_8, %c0_9, %c0_10], %14 {strides = array<i32>} : memref<1x1x16xf32, #tpu.memory_space<vmem>>, vector<1x1x16xf32>,
    return
  }
  func.func @transform_0(%arg0: i32) -> (i32, i32) {
    %c0_i32 = arith.constant 0 : i32
    %c0_i32_0 = arith.constant 0 : i32
    return %arg0, %c0_i32 : i32, i32
  }
  func.func @transform_1(%arg0: i32) -> (i32, i32) {
    %c0_i32 = arith.constant 0 : i32
    %c0_i32_0 = arith.constant 0 : i32
    %c0_i32_1 = arith.constant 0 : i32
    return %c0_i32, %c0_i32_0 : i32, i32
  }
  func.func @transform_2(%arg0: i32) -> (i32, i32) {
    %c0_i32 = arith.constant 0 : i32
    %c0_i32_0 = arith.constant 0 : i32
    return %arg0, %c0_i32 : i32, i32
  }
  func.func @transform_3(%arg0: i32) -> (i32, i32, i32) {
    %c0_i32 = arith.constant 0 : i32
    %c0_i32_0 = arith.constant 0 : i32
    %c0_i32_1 = arith.constant 0 : i32
    return %arg0, %c0_i32, %c0_i32_0 : i32, i32, i32
  }
}

module attributes {stable_mosaic.version = 11 : i64} {
  func.func @conv3x3_stats_kernel(%arg0: i32, %arg1: memref<1x16x16x8xf32, #tpu.memory_space<vmem>>, %arg2: memref<3x3x8x16xf32, #tpu.memory_space<vmem>>, %arg3: memref<1x8xf32, #tpu.memory_space<vmem>>, %arg4: memref<1x8xf32, #tpu.memory_space<vmem>>, %arg5: memref<1x16x16x16xf32, #tpu.memory_space<vmem>>, %arg6: memref<1x1x32xf32, #tpu.memory_space<vmem>>, %arg7: memref<18x18x8xf32, #tpu.memory_space<vmem>>) attributes {dimension_semantics = [#tpu.dimension_semantics<parallel>], iteration_bounds = array<i64: 2>, scalar_prefetch = 0 : i64, scratch_operands = 1 : i64, tpu.core_type = #tpu.core_type<tc>, window_params = [{transform_indices = @transform_0, window_bounds = array<i64: 1, 16, 16, 8>}, {pipeline_mode = #tpu.pipeline_mode<synchronous>, transform_indices = @transform_1, window_bounds = array<i64: 3, 3, 8, 16>}, {pipeline_mode = #tpu.pipeline_mode<synchronous>, transform_indices = @transform_2, window_bounds = array<i64: 1, 8>}, {pipeline_mode = #tpu.pipeline_mode<synchronous>, transform_indices = @transform_3, window_bounds = array<i64: 1, 8>}, {transform_indices = @transform_4, window_bounds = array<i64: 1, 16, 16, 16>}, {transform_indices = @transform_5, window_bounds = array<i64: 1, 1, 32>}]} {
    %c0 = arith.constant 0 : index
    %c0_0 = arith.constant 0 : index
    %c0_1 = arith.constant 0 : index
    %c0_2 = arith.constant 0 : index
    %0 = vector.load %arg1[%c0, %c0_0, %c0_1, %c0_2] : memref<1x16x16x8xf32, #tpu.memory_space<vmem>>, vector<1x16x16x8xf32>
    %1 = vector.shape_cast %0 : vector<1x16x16x8xf32> to vector<16x16x8xf32>
    %c0_3 = arith.constant 0 : index
    %c0_4 = arith.constant 0 : index
    %2 = vector.load %arg3[%c0_3, %c0_4] : memref<1x8xf32, #tpu.memory_space<vmem>>, vector<1x8xf32>
    %3 = vector.shape_cast %2 : vector<1x8xf32> to vector<1x1x8xf32>
    %4 = vector.broadcast %3 : vector<1x1x8xf32> to vector<16x16x8xf32>
    %5 = arith.mulf %1, %4 : vector<16x16x8xf32>
    %c0_5 = arith.constant 0 : index
    %c0_6 = arith.constant 0 : index
    %6 = vector.load %arg4[%c0_5, %c0_6] : memref<1x8xf32, #tpu.memory_space<vmem>>, vector<1x8xf32>
    %7 = vector.shape_cast %6 : vector<1x8xf32> to vector<1x1x8xf32>
    %8 = vector.broadcast %7 : vector<1x1x8xf32> to vector<16x16x8xf32>
    %9 = arith.addf %5, %8 : vector<16x16x8xf32>
    %cst = arith.constant 1.000000e-01 : f32
    %10 = vector.broadcast %cst : f32 to vector<16x16x8xf32>
    %11 = arith.mulf %10, %9 : vector<16x16x8xf32>
    %12 = arith.maximumf %9, %11 : vector<16x16x8xf32>
    %cst_7 = arith.constant 0.000000e+00 : f32
    %13 = vector.broadcast %cst_7 : f32 to vector<18x18x8xf32>
    %c0_8 = arith.constant 0 : index
    %c0_9 = arith.constant 0 : index
    %c0_10 = arith.constant 0 : index
    %14 = vector.load %arg7[%c0_8, %c0_9, %c0_10] : memref<18x18x8xf32, #tpu.memory_space<vmem>>, vector<18x18x8xf32>
    tpu.vector_store %arg7[%c0_8, %c0_9, %c0_10], %13 {strides = array<i32>} : memref<18x18x8xf32, #tpu.memory_space<vmem>>, vector<18x18x8xf32>,
    %c1 = arith.constant 1 : index
    %c1_11 = arith.constant 1 : index
    %c0_12 = arith.constant 0 : index
    %15 = vector.load %arg7[%c1, %c1_11, %c0_12] : memref<18x18x8xf32, #tpu.memory_space<vmem>>, vector<16x16x8xf32>
    tpu.vector_store %arg7[%c1, %c1_11, %c0_12], %12 {strides = array<i32>} : memref<18x18x8xf32, #tpu.memory_space<vmem>>, vector<16x16x8xf32>,
    %cst_13 = arith.constant 0.000000e+00 : f32
    %16 = vector.broadcast %cst_13 : f32 to vector<256x16xf32>
    %c0_14 = arith.constant 0 : index
    %c0_15 = arith.constant 0 : index
    %c0_16 = arith.constant 0 : index
    %17 = vector.load %arg7[%c0_14, %c0_15, %c0_16] : memref<18x18x8xf32, #tpu.memory_space<vmem>>, vector<16x16x8xf32>
    %18 = vector.shape_cast %17 : vector<16x16x8xf32> to vector<256x8xf32>
    %c0_17 = arith.constant 0 : index
    %c0_18 = arith.constant 0 : index
    %c0_19 = arith.constant 0 : index
    %c0_20 = arith.constant 0 : index
    %19 = vector.load %arg2[%c0_17, %c0_18, %c0_19, %c0_20] : memref<3x3x8x16xf32, #tpu.memory_space<vmem>>, vector<1x1x8x16xf32>
    %20 = vector.shape_cast %19 : vector<1x1x8x16xf32> to vector<8x16xf32>
    %cst_21 = arith.constant dense<0.000000e+00> : vector<256x16xf32>
    %21 = tpu.matmul %18, %20, %cst_21 {dimension_numbers = #tpu.dot_dimension_numbers<[1], [0], [0], [1], [0, 0, 1, 1], [], []>} : vector<256x8xf32>, vector<8x16xf32>, vector<256x16xf32> -> vector<256x16xf32>
    %22 = arith.addf %16, %21 : vector<256x16xf32>
    %c0_22 = arith.constant 0 : index
    %c1_23 = arith.constant 1 : index
    %c0_24 = arith.constant 0 : index
    %23 = vector.load %arg7[%c0_22, %c1_23, %c0_24] : memref<18x18x8xf32, #tpu.memory_space<vmem>>, vector<16x16x8xf32>
    %24 = vector.shape_cast %23 : vector<16x16x8xf32> to vector<256x8xf32>
    %c0_25 = arith.constant 0 : index
    %c1_26 = arith.constant 1 : index
    %c0_27 = arith.constant 0 : index
    %c0_28 = arith.constant 0 : index
    %25 = vector.load %arg2[%c0_25, %c1_26, %c0_27, %c0_28] : memref<3x3x8x16xf32, #tpu.memory_space<vmem>>, vector<1x1x8x16xf32>
    %26 = vector.shape_cast %25 : vector<1x1x8x16xf32> to vector<8x16xf32>
    %cst_29 = arith.constant dense<0.000000e+00> : vector<256x16xf32>
    %27 = tpu.matmul %24, %26, %cst_29 {dimension_numbers = #tpu.dot_dimension_numbers<[1], [0], [0], [1], [0, 0, 1, 1], [], []>} : vector<256x8xf32>, vector<8x16xf32>, vector<256x16xf32> -> vector<256x16xf32>
    %28 = arith.addf %22, %27 : vector<256x16xf32>
    %c0_30 = arith.constant 0 : index
    %c2 = arith.constant 2 : index
    %c0_31 = arith.constant 0 : index
    %29 = vector.load %arg7[%c0_30, %c2, %c0_31] : memref<18x18x8xf32, #tpu.memory_space<vmem>>, vector<16x16x8xf32>
    %30 = vector.shape_cast %29 : vector<16x16x8xf32> to vector<256x8xf32>
    %c0_32 = arith.constant 0 : index
    %c2_33 = arith.constant 2 : index
    %c0_34 = arith.constant 0 : index
    %c0_35 = arith.constant 0 : index
    %31 = vector.load %arg2[%c0_32, %c2_33, %c0_34, %c0_35] : memref<3x3x8x16xf32, #tpu.memory_space<vmem>>, vector<1x1x8x16xf32>
    %32 = vector.shape_cast %31 : vector<1x1x8x16xf32> to vector<8x16xf32>
    %cst_36 = arith.constant dense<0.000000e+00> : vector<256x16xf32>
    %33 = tpu.matmul %30, %32, %cst_36 {dimension_numbers = #tpu.dot_dimension_numbers<[1], [0], [0], [1], [0, 0, 1, 1], [], []>} : vector<256x8xf32>, vector<8x16xf32>, vector<256x16xf32> -> vector<256x16xf32>
    %34 = arith.addf %28, %33 : vector<256x16xf32>
    %c1_37 = arith.constant 1 : index
    %c0_38 = arith.constant 0 : index
    %c0_39 = arith.constant 0 : index
    %35 = vector.load %arg7[%c1_37, %c0_38, %c0_39] : memref<18x18x8xf32, #tpu.memory_space<vmem>>, vector<16x16x8xf32>
    %36 = vector.shape_cast %35 : vector<16x16x8xf32> to vector<256x8xf32>
    %c1_40 = arith.constant 1 : index
    %c0_41 = arith.constant 0 : index
    %c0_42 = arith.constant 0 : index
    %c0_43 = arith.constant 0 : index
    %37 = vector.load %arg2[%c1_40, %c0_41, %c0_42, %c0_43] : memref<3x3x8x16xf32, #tpu.memory_space<vmem>>, vector<1x1x8x16xf32>
    %38 = vector.shape_cast %37 : vector<1x1x8x16xf32> to vector<8x16xf32>
    %cst_44 = arith.constant dense<0.000000e+00> : vector<256x16xf32>
    %39 = tpu.matmul %36, %38, %cst_44 {dimension_numbers = #tpu.dot_dimension_numbers<[1], [0], [0], [1], [0, 0, 1, 1], [], []>} : vector<256x8xf32>, vector<8x16xf32>, vector<256x16xf32> -> vector<256x16xf32>
    %40 = arith.addf %34, %39 : vector<256x16xf32>
    %c1_45 = arith.constant 1 : index
    %c1_46 = arith.constant 1 : index
    %c0_47 = arith.constant 0 : index
    %41 = vector.load %arg7[%c1_45, %c1_46, %c0_47] : memref<18x18x8xf32, #tpu.memory_space<vmem>>, vector<16x16x8xf32>
    %42 = vector.shape_cast %41 : vector<16x16x8xf32> to vector<256x8xf32>
    %c1_48 = arith.constant 1 : index
    %c1_49 = arith.constant 1 : index
    %c0_50 = arith.constant 0 : index
    %c0_51 = arith.constant 0 : index
    %43 = vector.load %arg2[%c1_48, %c1_49, %c0_50, %c0_51] : memref<3x3x8x16xf32, #tpu.memory_space<vmem>>, vector<1x1x8x16xf32>
    %44 = vector.shape_cast %43 : vector<1x1x8x16xf32> to vector<8x16xf32>
    %cst_52 = arith.constant dense<0.000000e+00> : vector<256x16xf32>
    %45 = tpu.matmul %42, %44, %cst_52 {dimension_numbers = #tpu.dot_dimension_numbers<[1], [0], [0], [1], [0, 0, 1, 1], [], []>} : vector<256x8xf32>, vector<8x16xf32>, vector<256x16xf32> -> vector<256x16xf32>
    %46 = arith.addf %40, %45 : vector<256x16xf32>
    %c1_53 = arith.constant 1 : index
    %c2_54 = arith.constant 2 : index
    %c0_55 = arith.constant 0 : index
    %47 = vector.load %arg7[%c1_53, %c2_54, %c0_55] : memref<18x18x8xf32, #tpu.memory_space<vmem>>, vector<16x16x8xf32>
    %48 = vector.shape_cast %47 : vector<16x16x8xf32> to vector<256x8xf32>
    %c1_56 = arith.constant 1 : index
    %c2_57 = arith.constant 2 : index
    %c0_58 = arith.constant 0 : index
    %c0_59 = arith.constant 0 : index
    %49 = vector.load %arg2[%c1_56, %c2_57, %c0_58, %c0_59] : memref<3x3x8x16xf32, #tpu.memory_space<vmem>>, vector<1x1x8x16xf32>
    %50 = vector.shape_cast %49 : vector<1x1x8x16xf32> to vector<8x16xf32>
    %cst_60 = arith.constant dense<0.000000e+00> : vector<256x16xf32>
    %51 = tpu.matmul %48, %50, %cst_60 {dimension_numbers = #tpu.dot_dimension_numbers<[1], [0], [0], [1], [0, 0, 1, 1], [], []>} : vector<256x8xf32>, vector<8x16xf32>, vector<256x16xf32> -> vector<256x16xf32>
    %52 = arith.addf %46, %51 : vector<256x16xf32>
    %c2_61 = arith.constant 2 : index
    %c0_62 = arith.constant 0 : index
    %c0_63 = arith.constant 0 : index
    %53 = vector.load %arg7[%c2_61, %c0_62, %c0_63] : memref<18x18x8xf32, #tpu.memory_space<vmem>>, vector<16x16x8xf32>
    %54 = vector.shape_cast %53 : vector<16x16x8xf32> to vector<256x8xf32>
    %c2_64 = arith.constant 2 : index
    %c0_65 = arith.constant 0 : index
    %c0_66 = arith.constant 0 : index
    %c0_67 = arith.constant 0 : index
    %55 = vector.load %arg2[%c2_64, %c0_65, %c0_66, %c0_67] : memref<3x3x8x16xf32, #tpu.memory_space<vmem>>, vector<1x1x8x16xf32>
    %56 = vector.shape_cast %55 : vector<1x1x8x16xf32> to vector<8x16xf32>
    %cst_68 = arith.constant dense<0.000000e+00> : vector<256x16xf32>
    %57 = tpu.matmul %54, %56, %cst_68 {dimension_numbers = #tpu.dot_dimension_numbers<[1], [0], [0], [1], [0, 0, 1, 1], [], []>} : vector<256x8xf32>, vector<8x16xf32>, vector<256x16xf32> -> vector<256x16xf32>
    %58 = arith.addf %52, %57 : vector<256x16xf32>
    %c2_69 = arith.constant 2 : index
    %c1_70 = arith.constant 1 : index
    %c0_71 = arith.constant 0 : index
    %59 = vector.load %arg7[%c2_69, %c1_70, %c0_71] : memref<18x18x8xf32, #tpu.memory_space<vmem>>, vector<16x16x8xf32>
    %60 = vector.shape_cast %59 : vector<16x16x8xf32> to vector<256x8xf32>
    %c2_72 = arith.constant 2 : index
    %c1_73 = arith.constant 1 : index
    %c0_74 = arith.constant 0 : index
    %c0_75 = arith.constant 0 : index
    %61 = vector.load %arg2[%c2_72, %c1_73, %c0_74, %c0_75] : memref<3x3x8x16xf32, #tpu.memory_space<vmem>>, vector<1x1x8x16xf32>
    %62 = vector.shape_cast %61 : vector<1x1x8x16xf32> to vector<8x16xf32>
    %cst_76 = arith.constant dense<0.000000e+00> : vector<256x16xf32>
    %63 = tpu.matmul %60, %62, %cst_76 {dimension_numbers = #tpu.dot_dimension_numbers<[1], [0], [0], [1], [0, 0, 1, 1], [], []>} : vector<256x8xf32>, vector<8x16xf32>, vector<256x16xf32> -> vector<256x16xf32>
    %64 = arith.addf %58, %63 : vector<256x16xf32>
    %c2_77 = arith.constant 2 : index
    %c2_78 = arith.constant 2 : index
    %c0_79 = arith.constant 0 : index
    %65 = vector.load %arg7[%c2_77, %c2_78, %c0_79] : memref<18x18x8xf32, #tpu.memory_space<vmem>>, vector<16x16x8xf32>
    %66 = vector.shape_cast %65 : vector<16x16x8xf32> to vector<256x8xf32>
    %c2_80 = arith.constant 2 : index
    %c2_81 = arith.constant 2 : index
    %c0_82 = arith.constant 0 : index
    %c0_83 = arith.constant 0 : index
    %67 = vector.load %arg2[%c2_80, %c2_81, %c0_82, %c0_83] : memref<3x3x8x16xf32, #tpu.memory_space<vmem>>, vector<1x1x8x16xf32>
    %68 = vector.shape_cast %67 : vector<1x1x8x16xf32> to vector<8x16xf32>
    %cst_84 = arith.constant dense<0.000000e+00> : vector<256x16xf32>
    %69 = tpu.matmul %66, %68, %cst_84 {dimension_numbers = #tpu.dot_dimension_numbers<[1], [0], [0], [1], [0, 0, 1, 1], [], []>} : vector<256x8xf32>, vector<8x16xf32>, vector<256x16xf32> -> vector<256x16xf32>
    %70 = arith.addf %64, %69 : vector<256x16xf32>
    %71 = vector.shape_cast %70 : vector<256x16xf32> to vector<1x16x16x16xf32>
    %c0_85 = arith.constant 0 : index
    %c0_86 = arith.constant 0 : index
    %c0_87 = arith.constant 0 : index
    %c0_88 = arith.constant 0 : index
    %72 = vector.load %arg5[%c0_85, %c0_86, %c0_87, %c0_88] : memref<1x16x16x16xf32, #tpu.memory_space<vmem>>, vector<1x16x16x16xf32>
    tpu.vector_store %arg5[%c0_85, %c0_86, %c0_87, %c0_88], %71 {strides = array<i32>} : memref<1x16x16x16xf32, #tpu.memory_space<vmem>>, vector<1x16x16x16xf32>,
    %cst_89 = arith.constant dense<0.000000e+00> : vector<16xf32>
    %73 = vector.multi_reduction <add>, %70, %cst_89 [0] : vector<256x16xf32> to vector<16xf32>
    %74 = vector.shape_cast %73 : vector<16xf32> to vector<1x16xf32>
    %cst_90 = arith.constant 2.560000e+02 : f32
    %75 = vector.broadcast %cst_90 : f32 to vector<1x16xf32>
    %76 = arith.divf %74, %75 : vector<1x16xf32>
    %77 = vector.broadcast %76 : vector<1x16xf32> to vector<256x16xf32>
    %78 = arith.subf %70, %77 : vector<256x16xf32>
    %79 = arith.mulf %78, %78 : vector<256x16xf32>
    %cst_91 = arith.constant dense<0.000000e+00> : vector<16xf32>
    %80 = vector.multi_reduction <add>, %79, %cst_91 [0] : vector<256x16xf32> to vector<16xf32>
    %81 = vector.shape_cast %80 : vector<16xf32> to vector<1x16xf32>
    %82 = tpu.concatenate %74, %81 in 1 : vector<1x16xf32>, vector<1x16xf32> -> vector<1x32xf32>
    %83 = vector.shape_cast %82 : vector<1x32xf32> to vector<1x1x32xf32>
    %c0_92 = arith.constant 0 : index
    %c0_93 = arith.constant 0 : index
    %c0_94 = arith.constant 0 : index
    %84 = vector.load %arg6[%c0_92, %c0_93, %c0_94] : memref<1x1x32xf32, #tpu.memory_space<vmem>>, vector<1x1x32xf32>
    tpu.vector_store %arg6[%c0_92, %c0_93, %c0_94], %83 {strides = array<i32>} : memref<1x1x32xf32, #tpu.memory_space<vmem>>, vector<1x1x32xf32>,
    return
  }
  func.func @transform_0(%arg0: i32) -> (i32, i32, i32, i32) {
    %c0_i32 = arith.constant 0 : i32
    %c0_i32_0 = arith.constant 0 : i32
    %c0_i32_1 = arith.constant 0 : i32
    %c0_i32_2 = arith.constant 0 : i32
    return %arg0, %c0_i32, %c0_i32_0, %c0_i32_1 : i32, i32, i32, i32
  }
  func.func @transform_1(%arg0: i32) -> (i32, i32, i32, i32) {
    %c0_i32 = arith.constant 0 : i32
    %c0_i32_0 = arith.constant 0 : i32
    %c0_i32_1 = arith.constant 0 : i32
    %c0_i32_2 = arith.constant 0 : i32
    %c0_i32_3 = arith.constant 0 : i32
    return %c0_i32, %c0_i32_0, %c0_i32_1, %c0_i32_2 : i32, i32, i32, i32
  }
  func.func @transform_2(%arg0: i32) -> (i32, i32) {
    %c0_i32 = arith.constant 0 : i32
    %c0_i32_0 = arith.constant 0 : i32
    %c0_i32_1 = arith.constant 0 : i32
    return %c0_i32, %c0_i32_0 : i32, i32
  }
  func.func @transform_3(%arg0: i32) -> (i32, i32) {
    %c0_i32 = arith.constant 0 : i32
    %c0_i32_0 = arith.constant 0 : i32
    %c0_i32_1 = arith.constant 0 : i32
    return %c0_i32, %c0_i32_0 : i32, i32
  }
  func.func @transform_4(%arg0: i32) -> (i32, i32, i32, i32) {
    %c0_i32 = arith.constant 0 : i32
    %c0_i32_0 = arith.constant 0 : i32
    %c0_i32_1 = arith.constant 0 : i32
    %c0_i32_2 = arith.constant 0 : i32
    return %arg0, %c0_i32, %c0_i32_0, %c0_i32_1 : i32, i32, i32, i32
  }
  func.func @transform_5(%arg0: i32) -> (i32, i32, i32) {
    %c0_i32 = arith.constant 0 : i32
    %c0_i32_0 = arith.constant 0 : i32
    %c0_i32_1 = arith.constant 0 : i32
    return %arg0, %c0_i32, %c0_i32_0 : i32, i32, i32
  }
}

module attributes {stable_mosaic.version = 11 : i64} {
  func.func @fused_res_conv1_kernel(%arg0: i32, %arg1: memref<256x16xf32, #tpu.memory_space<vmem>>, %arg2: memref<256x16xf32, #tpu.memory_space<vmem>>, %arg3: memref<1x16xf32, #tpu.memory_space<vmem>>, %arg4: memref<1x16xf32, #tpu.memory_space<vmem>>, %arg5: memref<16x8xf32, #tpu.memory_space<vmem>>, %arg6: memref<256x16xf32, #tpu.memory_space<vmem>>, %arg7: memref<256x8xf32, #tpu.memory_space<vmem>>, %arg8: memref<1x1x16xf32, #tpu.memory_space<vmem>>) attributes {dimension_semantics = [#tpu.dimension_semantics<parallel>], iteration_bounds = array<i64: 2>, scalar_prefetch = 0 : i64, scratch_operands = 0 : i64, tpu.core_type = #tpu.core_type<tc>, window_params = [{transform_indices = @transform_0, window_bounds = array<i64: 256, 16>}, {transform_indices = @transform_1, window_bounds = array<i64: 256, 16>}, {pipeline_mode = #tpu.pipeline_mode<synchronous>, transform_indices = @transform_2, window_bounds = array<i64: 1, 16>}, {pipeline_mode = #tpu.pipeline_mode<synchronous>, transform_indices = @transform_3, window_bounds = array<i64: 1, 16>}, {pipeline_mode = #tpu.pipeline_mode<synchronous>, transform_indices = @transform_4, window_bounds = array<i64: 16, 8>}, {transform_indices = @transform_5, window_bounds = array<i64: 256, 16>}, {transform_indices = @transform_6, window_bounds = array<i64: 256, 8>}, {transform_indices = @transform_7, window_bounds = array<i64: 1, 1, 16>}]} {
    %c0 = arith.constant 0 : index
    %c0_0 = arith.constant 0 : index
    %0 = vector.load %arg1[%c0, %c0_0] : memref<256x16xf32, #tpu.memory_space<vmem>>, vector<256x16xf32>
    %c0_1 = arith.constant 0 : index
    %c0_2 = arith.constant 0 : index
    %1 = vector.load %arg3[%c0_1, %c0_2] : memref<1x16xf32, #tpu.memory_space<vmem>>, vector<1x16xf32>
    %2 = vector.broadcast %1 : vector<1x16xf32> to vector<256x16xf32>
    %3 = arith.mulf %0, %2 : vector<256x16xf32>
    %c0_3 = arith.constant 0 : index
    %c0_4 = arith.constant 0 : index
    %4 = vector.load %arg4[%c0_3, %c0_4] : memref<1x16xf32, #tpu.memory_space<vmem>>, vector<1x16xf32>
    %5 = vector.broadcast %4 : vector<1x16xf32> to vector<256x16xf32>
    %6 = arith.addf %3, %5 : vector<256x16xf32>
    %cst = arith.constant 1.000000e-01 : f32
    %7 = vector.broadcast %cst : f32 to vector<256x16xf32>
    %8 = arith.mulf %7, %6 : vector<256x16xf32>
    %9 = arith.maximumf %6, %8 : vector<256x16xf32>
    %c0_5 = arith.constant 0 : index
    %c0_6 = arith.constant 0 : index
    %10 = vector.load %arg2[%c0_5, %c0_6] : memref<256x16xf32, #tpu.memory_space<vmem>>, vector<256x16xf32>
    %11 = arith.addf %9, %10 : vector<256x16xf32>
    %c0_7 = arith.constant 0 : index
    %c0_8 = arith.constant 0 : index
    %12 = vector.load %arg6[%c0_7, %c0_8] : memref<256x16xf32, #tpu.memory_space<vmem>>, vector<256x16xf32>
    tpu.vector_store %arg6[%c0_7, %c0_8], %11 {strides = array<i32>} : memref<256x16xf32, #tpu.memory_space<vmem>>, vector<256x16xf32>,
    %c0_9 = arith.constant 0 : index
    %c0_10 = arith.constant 0 : index
    %13 = vector.load %arg5[%c0_9, %c0_10] : memref<16x8xf32, #tpu.memory_space<vmem>>, vector<16x8xf32>
    %cst_11 = arith.constant dense<0.000000e+00> : vector<256x8xf32>
    %14 = tpu.matmul %11, %13, %cst_11 {dimension_numbers = #tpu.dot_dimension_numbers<[1], [0], [0], [1], [0, 0, 1, 1], [], []>} : vector<256x16xf32>, vector<16x8xf32>, vector<256x8xf32> -> vector<256x8xf32>
    %c0_12 = arith.constant 0 : index
    %c0_13 = arith.constant 0 : index
    %15 = vector.load %arg7[%c0_12, %c0_13] : memref<256x8xf32, #tpu.memory_space<vmem>>, vector<256x8xf32>
    tpu.vector_store %arg7[%c0_12, %c0_13], %14 {strides = array<i32>} : memref<256x8xf32, #tpu.memory_space<vmem>>, vector<256x8xf32>,
    %cst_14 = arith.constant dense<0.000000e+00> : vector<8xf32>
    %16 = vector.multi_reduction <add>, %14, %cst_14 [0] : vector<256x8xf32> to vector<8xf32>
    %17 = vector.shape_cast %16 : vector<8xf32> to vector<1x8xf32>
    %cst_15 = arith.constant 2.560000e+02 : f32
    %18 = vector.broadcast %cst_15 : f32 to vector<1x8xf32>
    %19 = arith.divf %17, %18 : vector<1x8xf32>
    %20 = vector.broadcast %19 : vector<1x8xf32> to vector<256x8xf32>
    %21 = arith.subf %14, %20 : vector<256x8xf32>
    %22 = arith.mulf %21, %21 : vector<256x8xf32>
    %cst_16 = arith.constant dense<0.000000e+00> : vector<8xf32>
    %23 = vector.multi_reduction <add>, %22, %cst_16 [0] : vector<256x8xf32> to vector<8xf32>
    %24 = vector.shape_cast %23 : vector<8xf32> to vector<1x8xf32>
    %25 = tpu.concatenate %17, %24 in 1 : vector<1x8xf32>, vector<1x8xf32> -> vector<1x16xf32>
    %26 = vector.shape_cast %25 : vector<1x16xf32> to vector<1x1x16xf32>
    %c0_17 = arith.constant 0 : index
    %c0_18 = arith.constant 0 : index
    %c0_19 = arith.constant 0 : index
    %27 = vector.load %arg8[%c0_17, %c0_18, %c0_19] : memref<1x1x16xf32, #tpu.memory_space<vmem>>, vector<1x1x16xf32>
    tpu.vector_store %arg8[%c0_17, %c0_18, %c0_19], %26 {strides = array<i32>} : memref<1x1x16xf32, #tpu.memory_space<vmem>>, vector<1x1x16xf32>,
    return
  }
  func.func @transform_0(%arg0: i32) -> (i32, i32) {
    %c0_i32 = arith.constant 0 : i32
    %c0_i32_0 = arith.constant 0 : i32
    return %arg0, %c0_i32 : i32, i32
  }
  func.func @transform_1(%arg0: i32) -> (i32, i32) {
    %c0_i32 = arith.constant 0 : i32
    %c0_i32_0 = arith.constant 0 : i32
    return %arg0, %c0_i32 : i32, i32
  }
  func.func @transform_2(%arg0: i32) -> (i32, i32) {
    %c0_i32 = arith.constant 0 : i32
    %c0_i32_0 = arith.constant 0 : i32
    %c0_i32_1 = arith.constant 0 : i32
    return %c0_i32, %c0_i32_0 : i32, i32
  }
  func.func @transform_3(%arg0: i32) -> (i32, i32) {
    %c0_i32 = arith.constant 0 : i32
    %c0_i32_0 = arith.constant 0 : i32
    %c0_i32_1 = arith.constant 0 : i32
    return %c0_i32, %c0_i32_0 : i32, i32
  }
  func.func @transform_4(%arg0: i32) -> (i32, i32) {
    %c0_i32 = arith.constant 0 : i32
    %c0_i32_0 = arith.constant 0 : i32
    %c0_i32_1 = arith.constant 0 : i32
    return %c0_i32, %c0_i32_0 : i32, i32
  }
  func.func @transform_5(%arg0: i32) -> (i32, i32) {
    %c0_i32 = arith.constant 0 : i32
    %c0_i32_0 = arith.constant 0 : i32
    return %arg0, %c0_i32 : i32, i32
  }
  func.func @transform_6(%arg0: i32) -> (i32, i32) {
    %c0_i32 = arith.constant 0 : i32
    %c0_i32_0 = arith.constant 0 : i32
    return %arg0, %c0_i32 : i32, i32
  }
  func.func @transform_7(%arg0: i32) -> (i32, i32, i32) {
    %c0_i32 = arith.constant 0 : i32
    %c0_i32_0 = arith.constant 0 : i32
    %c0_i32_1 = arith.constant 0 : i32
    return %arg0, %c0_i32, %c0_i32_0 : i32, i32, i32
  }
}

module attributes {stable_mosaic.version = 11 : i64} {
  func.func @bn_lrelu_residual_kernel(%arg0: i32, %arg1: memref<256x16xf32, #tpu.memory_space<vmem>>, %arg2: memref<256x16xf32, #tpu.memory_space<vmem>>, %arg3: memref<1x16xf32, #tpu.memory_space<vmem>>, %arg4: memref<1x16xf32, #tpu.memory_space<vmem>>, %arg5: memref<256x16xf32, #tpu.memory_space<vmem>>) attributes {dimension_semantics = [#tpu.dimension_semantics<parallel>], iteration_bounds = array<i64: 2>, scalar_prefetch = 0 : i64, scratch_operands = 0 : i64, tpu.core_type = #tpu.core_type<tc>, window_params = [{transform_indices = @transform_0, window_bounds = array<i64: 256, 16>}, {transform_indices = @transform_1, window_bounds = array<i64: 256, 16>}, {pipeline_mode = #tpu.pipeline_mode<synchronous>, transform_indices = @transform_2, window_bounds = array<i64: 1, 16>}, {pipeline_mode = #tpu.pipeline_mode<synchronous>, transform_indices = @transform_3, window_bounds = array<i64: 1, 16>}, {transform_indices = @transform_4, window_bounds = array<i64: 256, 16>}]} {
    %c0 = arith.constant 0 : index
    %c0_0 = arith.constant 0 : index
    %0 = vector.load %arg1[%c0, %c0_0] : memref<256x16xf32, #tpu.memory_space<vmem>>, vector<256x16xf32>
    %c0_1 = arith.constant 0 : index
    %c0_2 = arith.constant 0 : index
    %1 = vector.load %arg3[%c0_1, %c0_2] : memref<1x16xf32, #tpu.memory_space<vmem>>, vector<1x16xf32>
    %2 = vector.broadcast %1 : vector<1x16xf32> to vector<256x16xf32>
    %3 = arith.mulf %0, %2 : vector<256x16xf32>
    %c0_3 = arith.constant 0 : index
    %c0_4 = arith.constant 0 : index
    %4 = vector.load %arg4[%c0_3, %c0_4] : memref<1x16xf32, #tpu.memory_space<vmem>>, vector<1x16xf32>
    %5 = vector.broadcast %4 : vector<1x16xf32> to vector<256x16xf32>
    %6 = arith.addf %3, %5 : vector<256x16xf32>
    %cst = arith.constant 1.000000e-01 : f32
    %7 = vector.broadcast %cst : f32 to vector<256x16xf32>
    %8 = arith.mulf %7, %6 : vector<256x16xf32>
    %9 = arith.maximumf %6, %8 : vector<256x16xf32>
    %c0_5 = arith.constant 0 : index
    %c0_6 = arith.constant 0 : index
    %10 = vector.load %arg2[%c0_5, %c0_6] : memref<256x16xf32, #tpu.memory_space<vmem>>, vector<256x16xf32>
    %11 = arith.addf %9, %10 : vector<256x16xf32>
    %c0_7 = arith.constant 0 : index
    %c0_8 = arith.constant 0 : index
    %12 = vector.load %arg5[%c0_7, %c0_8] : memref<256x16xf32, #tpu.memory_space<vmem>>, vector<256x16xf32>
    tpu.vector_store %arg5[%c0_7, %c0_8], %11 {strides = array<i32>} : memref<256x16xf32, #tpu.memory_space<vmem>>, vector<256x16xf32>,
    return
  }
  func.func @transform_0(%arg0: i32) -> (i32, i32) {
    %c0_i32 = arith.constant 0 : i32
    %c0_i32_0 = arith.constant 0 : i32
    return %arg0, %c0_i32 : i32, i32
  }
  func.func @transform_1(%arg0: i32) -> (i32, i32) {
    %c0_i32 = arith.constant 0 : i32
    %c0_i32_0 = arith.constant 0 : i32
    return %arg0, %c0_i32 : i32, i32
  }
  func.func @transform_2(%arg0: i32) -> (i32, i32) {
    %c0_i32 = arith.constant 0 : i32
    %c0_i32_0 = arith.constant 0 : i32
    %c0_i32_1 = arith.constant 0 : i32
    return %c0_i32, %c0_i32_0 : i32, i32
  }
  func.func @transform_3(%arg0: i32) -> (i32, i32) {
    %c0_i32 = arith.constant 0 : i32
    %c0_i32_0 = arith.constant 0 : i32
    %c0_i32_1 = arith.constant 0 : i32
    return %c0_i32, %c0_i32_0 : i32, i32
  }
  func.func @transform_4(%arg0: i32) -> (i32, i32) {
    %c0_i32 = arith.constant 0 : i32
    %c0_i32_0 = arith.constant 0 : i32
    return %arg0, %c0_i32 : i32, i32
  }
}

</mosaic_0001>

<llo_original>
// kernel: residual_block_forward.5
$region0: #{residual_block_forward.5}
  #allocation0 [shape = 'u32[]', space=smem, size = 0x4, offset = 0x4, fixed_abs, tag = 'smem constant byte address 0x4 - core index']
  #allocation1 [shape = 'u32[144,128]{1,0:T(1,128)}', space=vmem, size = 0x12000, scoped, tag = 'internal scratch']
  %s0 = inlined_call_operand.vmem [shape: f32[512,16], index: 0, kind: input, shape index: {}]
  %s1 = inlined_call_operand.vmem [shape: f32[16,8], index: 1, kind: input, shape index: {}]
  %s2 = inlined_call_operand.vmem [shape: f32[512,8], index: 2, kind: output, shape index: {0}]
  %s3 = inlined_call_operand.vmem [shape: f32[2,1,16], index: 3, kind: output, shape index: {1}]
  %4 = xla_tuple %s2, %s3
  %s5 = sld [smem:[#allocation0]]
  $region49: #{residual_block_forward.5} parent=0
    _
  %s7 = ssub.s32 1, %s5
  %s8 = scalar_select 0, %s7, %s5
  loop: start=0, step=1, limit=4
  $region2: #{residual_block_forward.5} parent=0 // loop_pre_header
    _
  $region3: #{residual_block_forward.5} parent=0 // loop_header
    %s10 = sphi 0, %s14
    %p11 = scmp.ge.s32.totalorder %s10, 4
    %s20 = sphi 0, %s22
    %s23 = sphi 0, %s20
    %s24 = sphi 0, %s23
    %s40 = sphi 0, %s24
    %s44 = sphi 0, %s44
    %s46 = sphi 0, %s44
    %s47 = sphi 0, %s46
    %s61 = sphi 0, %s47
    %s67 = sphi 0, %s69
    %s70 = sphi 0, %s67
    %s71 = sphi 0, %s70
    %s87 = sphi 0, %s71
    %s93 = sphi 0, %s95
    %s96 = sphi 0, %s93
    %s97 = sphi 0, %s96
    %s113 = sphi 0, %s97
  $region4: #{residual_block_forward.5} parent=0 // loop_header_branch
    %13 = sbr.rel (%p11) target = $region8
  $region5: #{residual_block_forward.5} parent=0 // loop_body
    %s15 = ssub.s32 %s10, 1
    %s16 = ssub.s32 %s10, 2
    %s17 = sadd.s32 %s10, 1
    %s18 = ssub.s32 %s10, %s17
    %p19 = scmp.eq.s32.totalorder %s18, 0
    %s21 = sadd.s32 %s20, 1
    %s22 = scalar_select %p19, %s20, %s21
    %p25 = pneg %p19
    %p26 = scmp.eq.s32.totalorder %s10, 1
    %p27 = por %p25, %p26
    %p28 = scmp.ne.s32.totalorder %s20, %s23
    %p29 = scmp.eq.s32.totalorder %s10, 0
    %p30 = por %p28, %p29
    %p31 = scmp.ne.s32.totalorder %s20, %s23
    %p32 = scmp.eq.s32.totalorder %s15, 1
    %p33 = por %p31, %p32
    %p34 = scmp.ne.s32.totalorder %s23, %s24
    %p35 = scmp.eq.s32.totalorder %s15, 0
    %p36 = por %p34, %p35
    %p37 = scmp.ne.s32.totalorder %s23, %s24
    %p38 = scmp.eq.s32.totalorder %s16, 1
    %p39 = por %p37, %p38
    %p41 = scmp.ne.s32.totalorder %s24, %s40
    %p42 = scmp.eq.s32.totalorder %s16, 0
    %p43 = por %p41, %p42
    %s45 = sadd.s32 %s44, 1
    %p48 = scmp.eq.s32.totalorder %s10, 1
    %p49 = scmp.ne.s32.totalorder %s44, %s46
    %p50 = scmp.eq.s32.totalorder %s10, 0
    %p51 = por %p49, %p50
    %p52 = scmp.ne.s32.totalorder %s44, %s46
    %p53 = scmp.eq.s32.totalorder %s15, 1
    %p54 = por %p52, %p53
    %p55 = scmp.ne.s32.totalorder %s46, %s47
    %p56 = scmp.eq.s32.totalorder %s15, 0
    %p57 = por %p55, %p56
    %p58 = scmp.ne.s32.totalorder %s46, %s47
    %p59 = scmp.eq.s32.totalorder %s16, 1
    %p60 = por %p58, %p59
    %p62 = scmp.ne.s32.totalorder %s47, %s61
    %p63 = scmp.eq.s32.totalorder %s16, 0
    %p64 = por %p62, %p63
    %s65 = ssub.s32 %s10, %s17
    %p66 = scmp.eq.s32.totalorder %s65, 0
    %s68 = sadd.s32 %s67, 1
    %s69 = scalar_select %p66, %s67, %s68
    %p72 = pneg %p66
    %p73 = scmp.eq.s32.totalorder %s10, 1
    %p74 = por %p72, %p73
    %p75 = scmp.ne.s32.totalorder %s67, %s70
    %p76 = scmp.eq.s32.totalorder %s10, 0
    %p77 = por %p75, %p76
    %p78 = scmp.ne.s32.totalorder %s67, %s70
    %p79 = scmp.eq.s32.totalorder %s15, 1
    %p80 = por %p78, %p79
    %p81 = scmp.ne.s32.totalorder %s70, %s71
    %p82 = scmp.eq.s32.totalorder %s15, 0
    %p83 = por %p81, %p82
    %p84 = scmp.ne.s32.totalorder %s70, %s71
    %p85 = scmp.eq.s32.totalorder %s16, 1
    %p86 = por %p84, %p85
    %p88 = scmp.ne.s32.totalorder %s71, %s87
    %p89 = scmp.eq.s32.totalorder %s16, 0
    %p90 = por %p88, %p89
    %s91 = ssub.s32 %s10, %s17
    %p92 = scmp.eq.s32.totalorder %s91, 0
    %s94 = sadd.s32 %s93, 1
    %s95 = scalar_select %p92, %s93, %s94
    %p98 = pneg %p92
    %p99 = scmp.eq.s32.totalorder %s10, 1
    %p100 = por %p98, %p99
    %p101 = scmp.ne.s32.totalorder %s93, %s96
    %p102 = scmp.eq.s32.totalorder %s10, 0
    %p103 = por %p101, %p102
    %p104 = scmp.ne.s32.totalorder %s93, %s96
    %p105 = scmp.eq.s32.totalorder %s15, 1
    %p106 = por %p104, %p105
    %p107 = scmp.ne.s32.totalorder %s96, %s97
    %p108 = scmp.eq.s32.totalorder %s15, 0
    %p109 = por %p107, %p108
    %p110 = scmp.ne.s32.totalorder %s96, %s97
    %p111 = scmp.eq.s32.totalorder %s16, 1
    %p112 = por %p110, %p111
    %p114 = scmp.ne.s32.totalorder %s97, %s113
    %p115 = scmp.eq.s32.totalorder %s16, 0
    %p116 = por %p114, %p115
    %p117 = scmp.le.s32.totalorder 1, %s10
    %p118 = scmp.lt.s32.totalorder %s10, 3
    %p119 = pnand %p117, %p118
    %p120 = pneg %p119
    // Predicated region
    $region9: #{residual_block_forward.5} parent=5 // pred_check
      _
    $region10: #{residual_block_forward.5} parent=5 // pred_check_branch
      %122 = sbr.rel (%p119) target = $region12
    $region11: #{residual_block_forward.5} parent=5 // pred_region
      %s123 = ssub.s32 %s10, 1
      // Predicated region
      $region13: #{residual_block_forward.5} parent=11 // pred_check
        %p124 = pneg %p57
      $region14: #{residual_block_forward.5} parent=11 // pred_check_branch
        %126 = sbr.rel (%p124) target = $region16
      $region15: #{residual_block_forward.5} parent=11 // pred_region
        _
      $region16: #{residual_block_forward.5} parent=11 // pred_fallthru
        _
    $region12: #{residual_block_forward.5} parent=5 // pred_fallthru
      _
    %p127 = scmp.lt.s32.totalorder %s10, 2
    // Predicated region
    $region17: #{residual_block_forward.5} parent=5 // pred_check
      %p128 = pneg %p127
    $region18: #{residual_block_forward.5} parent=5 // pred_check_branch
      %130 = sbr.rel (%p128) target = $region20
    $region19: #{residual_block_forward.5} parent=5 // pred_region
      // Predicated region
      $region21: #{residual_block_forward.5} parent=19 // pred_check
        %p131 = pneg %p30
      $region22: #{residual_block_forward.5} parent=19 // pred_check_branch
        %133 = sbr.rel (%p131) target = $region24
      $region23: #{residual_block_forward.5} parent=19 // pred_region
        %s134 = smul.u32 32, %s10
        %p135 = scmp.lt.s32.totalorder %s134, 63
        %s136 = scalar_select %p135, %s134, 63
        %s137 = smul.addr %s136, 8
        %s138 = scalar_lea.vmem %s0, %s137
        %s139 = smul.u32 32, %s10
      $region24: #{residual_block_forward.5} parent=19 // pred_fallthru
        _
    $region20: #{residual_block_forward.5} parent=5 // pred_fallthru
      _
    %p140 = scmp.le.s32.totalorder 1, %s10
    %p141 = scmp.lt.s32.totalorder %s10, 3
    %p142 = pnand %p140, %p141
    %p143 = pneg %p142
    // Predicated region
    $region25: #{residual_block_forward.5} parent=5 // pred_check
      _
    $region26: #{residual_block_forward.5} parent=5 // pred_check_branch
      %145 = sbr.rel (%p142) target = $region28
    $region27: #{residual_block_forward.5} parent=5 // pred_region
      %s146 = ssub.s32 %s10, 1
      %s147 = smul.u32 32, %s15
      %p148 = scmp.lt.s32.totalorder %s147, 63
      %s149 = scalar_select %p148, %s147, 63
      %s150 = smul.addr %s149, 8
      %s151 = scalar_lea.vmem %s0, %s150
      %p152 = pneg %p36
      %p153 = pneg %p33
      %p154 = pneg %p57
      %p155 = pneg %p54
      %p156 = pneg %p83
      %p157 = pneg %p80
      %s158 = smul.u32 32, %s15
      %p159 = scmp.lt.s32.totalorder %s158, 63
      %s160 = scalar_select %p159, %s158, 63
      %s161 = smul.addr %s160, 8
      %s162 = scalar_lea.vmem %s2, %s161
      %p163 = pneg %p109
      %p164 = pneg %p106
      %p165 = scmp.lt.s32.totalorder %s15, 1
      %s166 = scalar_select %p165, %s15, 1
      %s167 = scalar_lea.vmem %s3, %s166
      %s168 = smul.u32 32, %s15
      %p169 = scmp.lt.s32.totalorder %s168, 63
      %s170 = scalar_select %p169, %s168, 63
      %s171 = smul.addr %s170, 8
      %s172 = scalar_lea.vmem %s0, %s171
      %s173 = smul.u32 32, %s15
      %s174 = smul.u32 32, %s15
      %p175 = scmp.lt.s32.totalorder %s174, 63
      %s176 = scalar_select %p175, %s174, 63
      %s177 = smul.addr %s176, 8
      %s178 = scalar_lea.vmem %s2, %s177
      %s179 = smul.u32 32, %s15
      %p180 = scmp.lt.s32.totalorder %s15, 1
      %s181 = scalar_select %p180, %s15, 1
      %s182 = scalar_lea.vmem %s3, %s181
      %v183 = vld [vmem:[%s172] sm:$0xff]
      %v184 = vld [vmem:[%s172 + $0x8] sm:$0xff]
      %v185 = vld [vmem:[%s172 + $0x10] sm:$0xff]
      %v186 = vld [vmem:[%s172 + $0x18] sm:$0xff]
      %v187 = vld [vmem:[%s172 + $0x20] sm:$0xff]
      %v188 = vld [vmem:[%s172 + $0x28] sm:$0xff]
      %v189 = vld [vmem:[%s172 + $0x30] sm:$0xff]
      %v190 = vld [vmem:[%s172 + $0x38] sm:$0xff]
      %v191 = vld [vmem:[%s172 + $0x40] sm:$0xff]
      %v192 = vld [vmem:[%s172 + $0x48] sm:$0xff]
      %v193 = vld [vmem:[%s172 + $0x50] sm:$0xff]
      %v194 = vld [vmem:[%s172 + $0x58] sm:$0xff]
      %v195 = vld [vmem:[%s172 + $0x60] sm:$0xff]
      %v196 = vld [vmem:[%s172 + $0x68] sm:$0xff]
      %v197 = vld [vmem:[%s172 + $0x70] sm:$0xff]
      %v198 = vld [vmem:[%s172 + $0x78] sm:$0xff]
      %v199 = vld [vmem:[%s172 + $0x80] sm:$0xff]
      %v200 = vld [vmem:[%s172 + $0x88] sm:$0xff]
      %v201 = vld [vmem:[%s172 + $0x90] sm:$0xff]
      %v202 = vld [vmem:[%s172 + $0x98] sm:$0xff]
      %v203 = vld [vmem:[%s172 + $0xa0] sm:$0xff]
      %v204 = vld [vmem:[%s172 + $0xa8] sm:$0xff]
      %v205 = vld [vmem:[%s172 + $0xb0] sm:$0xff]
      %v206 = vld [vmem:[%s172 + $0xb8] sm:$0xff]
      %v207 = vld [vmem:[%s172 + $0xc0] sm:$0xff]
      %v208 = vld [vmem:[%s172 + $0xc8] sm:$0xff]
      %v209 = vld [vmem:[%s172 + $0xd0] sm:$0xff]
      %v210 = vld [vmem:[%s172 + $0xd8] sm:$0xff]
      %v211 = vld [vmem:[%s172 + $0xe0] sm:$0xff]
      %v212 = vld [vmem:[%s172 + $0xe8] sm:$0xff]
      %v213 = vld [vmem:[%s172 + $0xf0] sm:$0xff]
      %v214 = vld [vmem:[%s172 + $0xf8] sm:$0xff]
      %v215 = vld [vmem:[%s1] sm:$0xff]
      %v216 = vld [vmem:[%s1 + $0x8] sm:$0xff]
      %vm217 = vcmask 130048
      %v219 = vsel %vm217, %v183, 0
      %v222 = vsel %vm217, %v184, 0
      %v225 = vsel %vm217, %v185, 0
      %v228 = vsel %vm217, %v186, 0
      %v231 = vsel %vm217, %v187, 0
      %v234 = vsel %vm217, %v188, 0
      %v237 = vsel %vm217, %v189, 0
      %v240 = vsel %vm217, %v190, 0
      %v243 = vsel %vm217, %v191, 0
      %v246 = vsel %vm217, %v192, 0
      %v249 = vsel %vm217, %v193, 0
      %v252 = vsel %vm217, %v194, 0
      %v255 = vsel %vm217, %v195, 0
      %v258 = vsel %vm217, %v196, 0
      %v261 = vsel %vm217, %v197, 0
      %v264 = vsel %vm217, %v198, 0
      %v267 = vsel %vm217, %v199, 0
      %v270 = vsel %vm217, %v200, 0
      %v273 = vsel %vm217, %v201, 0
      %v276 = vsel %vm217, %v202, 0
      %v279 = vsel %vm217, %v203, 0
      %v282 = vsel %vm217, %v204, 0
      %v285 = vsel %vm217, %v205, 0
      %v288 = vsel %vm217, %v206, 0
      %v291 = vsel %vm217, %v207, 0
      %v294 = vsel %vm217, %v208, 0
      %v297 = vsel %vm217, %v209, 0
      %v300 = vsel %vm217, %v210, 0
      %v303 = vsel %vm217, %v211, 0
      %v306 = vsel %vm217, %v212, 0
      %v309 = vsel %vm217, %v213, 0
      %v312 = vsel %vm217, %v214, 0
      %314 = vmatprep.subr.mxu0 0.0
      %315 = vmatpush1.msra.mxu0 0.0
      %316 = vmatprep.subr.mxu0 0.0
      %317 = vmatpush1.msra.mxu0 0.0
      %318 = vmatprep.subr.mxu0 0.0
      %319 = vmatpush1.msra.mxu0 0.0
      %320 = vmatprep.subr.mxu0 0.0
      %321 = vmatpush1.msra.mxu0 0.0
      %322 = vmatprep.subr.mxu0 0.0
      %323 = vmatpush1.msra.mxu0 0.0
      %324 = vmatprep.subr.mxu0 0.0
      %325 = vmatpush1.msra.mxu0 0.0
      %326 = vmatprep.subr.mxu0 0.0
      %327 = vmatpush1.msra.mxu0 0.0
      %328 = vmatprep.subr.mxu0 0.0
      %329 = vmatpush1.msra.mxu0 0.0
      %330 = vmatprep.subr.mxu0 0.0
      %331 = vmatpush1.msra.mxu0 0.0
      %332 = vmatprep.subr.mxu0 0.0
      %333 = vmatpush1.msra.mxu0 0.0
      %334 = vmatprep.subr.mxu0 0.0
      %335 = vmatpush1.msra.mxu0 0.0
      %336 = vmatprep.subr.mxu0 0.0
      %337 = vmatpush1.msra.mxu0 0.0
      %338 = vmatprep.subr.mxu0 0.0
      %339 = vmatpush1.msra.mxu0 0.0
      %340 = vmatprep.subr.mxu0 0.0
      %341 = vmatpush1.msra.mxu0 0.0
      %342 = vmatprep.subr.mxu0 0.0
      %343 = vmatpush1.msra.mxu0 %v216
      %344 = vmatprep.subr.mxu0 0.0
      %345 = vmatpush1.msra.mxu0 %v215
      %346 = vmatprep.subr.mxu0 0.0
      %347 = vmatpush2.msra.mxu0 0.0
      %348 = vmatprep.subr.mxu0 0.0
      %349 = vmatpush2.msra.mxu0 0.0
      %350 = vmatprep.subr.mxu0 0.0
      %351 = vmatpush2.msra.mxu0 0.0
      %352 = vmatprep.subr.mxu0 0.0
      %353 = vmatpush2.msra.mxu0 0.0
      %354 = vmatprep.subr.mxu0 0.0
      %355 = vmatpush2.msra.mxu0 0.0
      %356 = vmatprep.subr.mxu0 0.0
      %357 = vmatpush2.msra.mxu0 0.0
      %358 = vmatprep.subr.mxu0 0.0
      %359 = vmatpush2.msra.mxu0 0.0
      %360 = vmatprep.subr.mxu0 0.0
      %361 = vmatpush2.msra.mxu0 0.0
      %362 = vmatprep.subr.mxu0 0.0
      %363 = vmatpush2.msra.mxu0 0.0
      %364 = vmatprep.subr.mxu0 0.0
      %365 = vmatpush2.msra.mxu0 0.0
      %366 = vmatprep.subr.mxu0 0.0
      %367 = vmatpush2.msra.mxu0 0.0
      %368 = vmatprep.subr.mxu0 0.0
      %369 = vmatpush2.msra.mxu0 0.0
      %370 = vmatprep.subr.mxu0 0.0
      %371 = vmatpush2.msra.mxu0 0.0
      %372 = vmatprep.subr.mxu0 0.0
      %373 = vmatpush2.msra.mxu0 0.0
      %374 = vmatprep.subr.mxu0 0.0
      %375 = vmatpush2.msra.mxu0 0.0
      %376 = vmatprep.subr.mxu0 0.0
      %377 = vmatpush2.msra.mxu0 0.0
      %378 = vmatprep.mubr.f32.mxu0 0.0
      %379 = vmatmul.mubr.f32.gmra.mxu0 %v219
      %v380 = vpop.f32.mrf.mxu0
      %v381 = vadd.f32 0.0, %v380
      %v382 = vpop.f32.mrf.mxu0
      %383 = vmatprep.mubr.f32.mxu0 0.0
      %384 = vmatmul.mubr.f32.gmra.mxu0 %v222
      %v385 = vpop.f32.mrf.mxu0
      %v386 = vadd.f32 0.0, %v385
      %v387 = vpop.f32.mrf.mxu0
      %388 = vmatprep.mubr.f32.mxu0 0.0
      %389 = vmatmul.mubr.f32.gmra.mxu0 %v225
      %v390 = vpop.f32.mrf.mxu0
      %v391 = vadd.f32 0.0, %v390
      %v392 = vpop.f32.mrf.mxu0
      %393 = vmatprep.mubr.f32.mxu0 0.0
      %394 = vmatmul.mubr.f32.gmra.mxu0 %v228
      %v395 = vpop.f32.mrf.mxu0
      %v396 = vadd.f32 0.0, %v395
      %v397 = vpop.f32.mrf.mxu0
      %398 = vmatprep.mubr.f32.mxu0 0.0
      %399 = vmatmul.mubr.f32.gmra.mxu0 %v231
      %v400 = vpop.f32.mrf.mxu0
      %v401 = vadd.f32 0.0, %v400
      %v402 = vpop.f32.mrf.mxu0
      %403 = vmatprep.mubr.f32.mxu0 0.0
      %404 = vmatmul.mubr.f32.gmra.mxu0 %v234
      %v405 = vpop.f32.mrf.mxu0
      %v406 = vadd.f32 0.0, %v405
      %v407 = vpop.f32.mrf.mxu0
      %408 = vmatprep.mubr.f32.mxu0 0.0
      %409 = vmatmul.mubr.f32.gmra.mxu0 %v237
      %v410 = vpop.f32.mrf.mxu0
      %v411 = vadd.f32 0.0, %v410
      %v412 = vpop.f32.mrf.mxu0
      %413 = vmatprep.mubr.f32.mxu0 0.0
      %414 = vmatmul.mubr.f32.gmra.mxu0 %v240
      %v415 = vpop.f32.mrf.mxu0
      %v416 = vadd.f32 0.0, %v415
      %v417 = vpop.f32.mrf.mxu0
      %418 = vmatprep.mubr.f32.mxu0 0.0
      %419 = vmatmul.mubr.f32.gmra.mxu0 %v243
      %v420 = vpop.f32.mrf.mxu0
      %v421 = vadd.f32 0.0, %v420
      %v422 = vpop.f32.mrf.mxu0
      %423 = vmatprep.mubr.f32.mxu0 0.0
      %424 = vmatmul.mubr.f32.gmra.mxu0 %v246
      %v425 = vpop.f32.mrf.mxu0
      %v426 = vadd.f32 0.0, %v425
      %v427 = vpop.f32.mrf.mxu0
      %428 = vmatprep.mubr.f32.mxu0 0.0
      %429 = vmatmul.mubr.f32.gmra.mxu0 %v249
      %v430 = vpop.f32.mrf.mxu0
      %v431 = vadd.f32 0.0, %v430
      %v432 = vpop.f32.mrf.mxu0
      %433 = vmatprep.mubr.f32.mxu0 0.0
      %434 = vmatmul.mubr.f32.gmra.mxu0 %v252
      %v435 = vpop.f32.mrf.mxu0
      %v436 = vadd.f32 0.0, %v435
      %v437 = vpop.f32.mrf.mxu0
      %438 = vmatprep.mubr.f32.mxu0 0.0
      %439 = vmatmul.mubr.f32.gmra.mxu0 %v255
      %v440 = vpop.f32.mrf.mxu0
      %v441 = vadd.f32 0.0, %v440
      %v442 = vpop.f32.mrf.mxu0
      %443 = vmatprep.mubr.f32.mxu0 0.0
      %444 = vmatmul.mubr.f32.gmra.mxu0 %v258
      %v445 = vpop.f32.mrf.mxu0
      %v446 = vadd.f32 0.0, %v445
      %v447 = vpop.f32.mrf.mxu0
      %448 = vmatprep.mubr.f32.mxu0 0.0
      %449 = vmatmul.mubr.f32.gmra.mxu0 %v261
      %v450 = vpop.f32.mrf.mxu0
      %v451 = vadd.f32 0.0, %v450
      %v452 = vpop.f32.mrf.mxu0
      %453 = vmatprep.mubr.f32.mxu0 0.0
      %454 = vmatmul.mubr.f32.gmra.mxu0 %v264
      %v455 = vpop.f32.mrf.mxu0
      %v456 = vadd.f32 0.0, %v455
      %v457 = vpop.f32.mrf.mxu0
      %458 = vmatprep.mubr.f32.mxu0 0.0
      %459 = vmatmul.mubr.f32.gmra.mxu0 %v267
      %v460 = vpop.f32.mrf.mxu0
      %v461 = vadd.f32 0.0, %v460
      %v462 = vpop.f32.mrf.mxu0
      %463 = vmatprep.mubr.f32.mxu0 0.0
      %464 = vmatmul.mubr.f32.gmra.mxu0 %v270
      %v465 = vpop.f32.mrf.mxu0
      %v466 = vadd.f32 0.0, %v465
      %v467 = vpop.f32.mrf.mxu0
      %468 = vmatprep.mubr.f32.mxu0 0.0
      %469 = vmatmul.mubr.f32.gmra.mxu0 %v273
      %v470 = vpop.f32.mrf.mxu0
      %v471 = vadd.f32 0.0, %v470
      %v472 = vpop.f32.mrf.mxu0
      %473 = vmatprep.mubr.f32.mxu0 0.0
      %474 = vmatmul.mubr.f32.gmra.mxu0 %v276
      %v475 = vpop.f32.mrf.mxu0
      %v476 = vadd.f32 0.0, %v475
      %v477 = vpop.f32.mrf.mxu0
      %478 = vmatprep.mubr.f32.mxu0 0.0
      %479 = vmatmul.mubr.f32.gmra.mxu0 %v279
      %v480 = vpop.f32.mrf.mxu0
      %v481 = vadd.f32 0.0, %v480
      %v482 = vpop.f32.mrf.mxu0
      %483 = vmatprep.mubr.f32.mxu0 0.0
      %484 = vmatmul.mubr.f32.gmra.mxu0 %v282
      %v485 = vpop.f32.mrf.mxu0
      %v486 = vadd.f32 0.0, %v485
      %v487 = vpop.f32.mrf.mxu0
      %488 = vmatprep.mubr.f32.mxu0 0.0
      %489 = vmatmul.mubr.f32.gmra.mxu0 %v285
      %v490 = vpop.f32.mrf.mxu0
      %v491 = vadd.f32 0.0, %v490
      %v492 = vpop.f32.mrf.mxu0
      %493 = vmatprep.mubr.f32.mxu0 0.0
      %494 = vmatmul.mubr.f32.gmra.mxu0 %v288
      %v495 = vpop.f32.mrf.mxu0
      %v496 = vadd.f32 0.0, %v495
      %v497 = vpop.f32.mrf.mxu0
      %498 = vmatprep.mubr.f32.mxu0 0.0
      %499 = vmatmul.mubr.f32.gmra.mxu0 %v291
      %v500 = vpop.f32.mrf.mxu0
      %v501 = vadd.f32 0.0, %v500
      %v502 = vpop.f32.mrf.mxu0
      %503 = vmatprep.mubr.f32.mxu0 0.0
      %504 = vmatmul.mubr.f32.gmra.mxu0 %v294
      %v505 = vpop.f32.mrf.mxu0
      %v506 = vadd.f32 0.0, %v505
      %v507 = vpop.f32.mrf.mxu0
      %508 = vmatprep.mubr.f32.mxu0 0.0
      %509 = vmatmul.mubr.f32.gmra.mxu0 %v297
      %v510 = vpop.f32.mrf.mxu0
      %v511 = vadd.f32 0.0, %v510
      %v512 = vpop.f32.mrf.mxu0
      %513 = vmatprep.mubr.f32.mxu0 0.0
      %514 = vmatmul.mubr.f32.gmra.mxu0 %v300
      %v515 = vpop.f32.mrf.mxu0
      %v516 = vadd.f32 0.0, %v515
      %v517 = vpop.f32.mrf.mxu0
      %518 = vmatprep.mubr.f32.mxu0 0.0
      %519 = vmatmul.mubr.f32.gmra.mxu0 %v303
      %v520 = vpop.f32.mrf.mxu0
      %v521 = vadd.f32 0.0, %v520
      %v522 = vpop.f32.mrf.mxu0
      %523 = vmatprep.mubr.f32.mxu0 0.0
      %524 = vmatmul.mubr.f32.gmra.mxu0 %v306
      %v525 = vpop.f32.mrf.mxu0
      %v526 = vadd.f32 0.0, %v525
      %v527 = vpop.f32.mrf.mxu0
      %528 = vmatprep.mubr.f32.mxu0 0.0
      %529 = vmatmul.mubr.f32.gmra.mxu0 %v309
      %v530 = vpop.f32.mrf.mxu0
      %v531 = vadd.f32 0.0, %v530
      %v532 = vpop.f32.mrf.mxu0
      %533 = vmatprep.mubr.f32.mxu0 0.0
      %534 = vmatmul.mubr.f32.gmra.mxu0 %v312
      %v535 = vpop.f32.mrf.mxu0
      %v536 = vadd.f32 0.0, %v535
      %v537 = vpop.f32.mrf.mxu0
      %538 = vdwg.mxu0
      %vm539 = vcmask 64512
      %540 = vst.msk [vmem:[%s178] sm:$0xff] %vm539, %v381
      %541 = vst.msk [vmem:[%s178 + $0x8] sm:$0xff] %vm539, %v386
      %542 = vst.msk [vmem:[%s178 + $0x10] sm:$0xff] %vm539, %v391
      %543 = vst.msk [vmem:[%s178 + $0x18] sm:$0xff] %vm539, %v396
      %544 = vst.msk [vmem:[%s178 + $0x20] sm:$0xff] %vm539, %v401
      %545 = vst.msk [vmem:[%s178 + $0x28] sm:$0xff] %vm539, %v406
      %546 = vst.msk [vmem:[%s178 + $0x30] sm:$0xff] %vm539, %v411
      %547 = vst.msk [vmem:[%s178 + $0x38] sm:$0xff] %vm539, %v416
      %548 = vst.msk [vmem:[%s178 + $0x40] sm:$0xff] %vm539, %v421
      %549 = vst.msk [vmem:[%s178 + $0x48] sm:$0xff] %vm539, %v426
      %550 = vst.msk [vmem:[%s178 + $0x50] sm:$0xff] %vm539, %v431
      %551 = vst.msk [vmem:[%s178 + $0x58] sm:$0xff] %vm539, %v436
      %552 = vst.msk [vmem:[%s178 + $0x60] sm:$0xff] %vm539, %v441
      %553 = vst.msk [vmem:[%s178 + $0x68] sm:$0xff] %vm539, %v446
      %554 = vst.msk [vmem:[%s178 + $0x70] sm:$0xff] %vm539, %v451
      %555 = vst.msk [vmem:[%s178 + $0x78] sm:$0xff] %vm539, %v456
      %556 = vst.msk [vmem:[%s178 + $0x80] sm:$0xff] %vm539, %v461
      %557 = vst.msk [vmem:[%s178 + $0x88] sm:$0xff] %vm539, %v466
      %558 = vst.msk [vmem:[%s178 + $0x90] sm:$0xff] %vm539, %v471
      %559 = vst.msk [vmem:[%s178 + $0x98] sm:$0xff] %vm539, %v476
      %560 = vst.msk [vmem:[%s178 + $0xa0] sm:$0xff] %vm539, %v481
      %561 = vst.msk [vmem:[%s178 + $0xa8] sm:$0xff] %vm539, %v486
      %562 = vst.msk [vmem:[%s178 + $0xb0] sm:$0xff] %vm539, %v491
      %563 = vst.msk [vmem:[%s178 + $0xb8] sm:$0xff] %vm539, %v496
      %564 = vst.msk [vmem:[%s178 + $0xc0] sm:$0xff] %vm539, %v501
      %565 = vst.msk [vmem:[%s178 + $0xc8] sm:$0xff] %vm539, %v506
      %566 = vst.msk [vmem:[%s178 + $0xd0] sm:$0xff] %vm539, %v511
      %567 = vst.msk [vmem:[%s178 + $0xd8] sm:$0xff] %vm539, %v516
      %568 = vst.msk [vmem:[%s178 + $0xe0] sm:$0xff] %vm539, %v521
      %569 = vst.msk [vmem:[%s178 + $0xe8] sm:$0xff] %vm539, %v526
      %570 = vst.msk [vmem:[%s178 + $0xf0] sm:$0xff] %vm539, %v531
      %571 = vst.msk [vmem:[%s178 + $0xf8] sm:$0xff] %vm539, %v536
      %v572 = vsel %vm539, %v381, 0.0
      %v573 = vsel %vm539, %v386, 0.0
      %v574 = vadd.f32 %v572, %v573
      %v575 = vsel %vm539, %v391, 0.0
      %v576 = vadd.f32 %v574, %v575
      %v577 = vsel %vm539, %v396, 0.0
      %v578 = vadd.f32 %v576, %v577
      %v579 = vsel %vm539, %v401, 0.0
      %v580 = vadd.f32 %v578, %v579
      %v581 = vsel %vm539, %v406, 0.0
      %v582 = vadd.f32 %v580, %v581
      %v583 = vsel %vm539, %v411, 0.0
      %v584 = vadd.f32 %v582, %v583
      %v585 = vsel %vm539, %v416, 0.0
      %v586 = vadd.f32 %v584, %v585
      %v587 = vsel %vm539, %v421, 0.0
      %v588 = vadd.f32 %v586, %v587
      %v589 = vsel %vm539, %v426, 0.0
      %v590 = vadd.f32 %v588, %v589
      %v591 = vsel %vm539, %v431, 0.0
      %v592 = vadd.f32 %v590, %v591
      %v593 = vsel %vm539, %v436, 0.0
      %v594 = vadd.f32 %v592, %v593
      %v595 = vsel %vm539, %v441, 0.0
      %v596 = vadd.f32 %v594, %v595
      %v597 = vsel %vm539, %v446, 0.0
      %v598 = vadd.f32 %v596, %v597
      %v599 = vsel %vm539, %v451, 0.0
      %v600 = vadd.f32 %v598, %v599
      %v601 = vsel %vm539, %v456, 0.0
      %v602 = vadd.f32 %v600, %v601
      %v603 = vsel %vm539, %v461, 0.0
      %v604 = vadd.f32 %v602, %v603
      %v605 = vsel %vm539, %v466, 0.0
      %v606 = vadd.f32 %v604, %v605
      %v607 = vsel %vm539, %v471, 0.0
      %v608 = vadd.f32 %v606, %v607
      %v609 = vsel %vm539, %v476, 0.0
      %v610 = vadd.f32 %v608, %v609
      %v611 = vsel %vm539, %v481, 0.0
      %v612 = vadd.f32 %v610, %v611
      %v613 = vsel %vm539, %v486, 0.0
      %v614 = vadd.f32 %v612, %v613
      %v615 = vsel %vm539, %v491, 0.0
      %v616 = vadd.f32 %v614, %v615
      %v617 = vsel %vm539, %v496, 0.0
      %v618 = vadd.f32 %v616, %v617
      %v619 = vsel %vm539, %v501, 0.0
      %v620 = vadd.f32 %v618, %v619
      %v621 = vsel %vm539, %v506, 0.0
      %v622 = vadd.f32 %v620, %v621
      %v623 = vsel %vm539, %v511, 0.0
      %v624 = vadd.f32 %v622, %v623
      %v625 = vsel %vm539, %v516, 0.0
      %v626 = vadd.f32 %v624, %v625
      %v627 = vsel %vm539, %v521, 0.0
      %v628 = vadd.f32 %v626, %v627
      %v629 = vsel %vm539, %v526, 0.0
      %v630 = vadd.f32 %v628, %v629
      %v631 = vsel %vm539, %v531, 0.0
      %v632 = vadd.f32 %v630, %v631
      %v633 = vsel %vm539, %v536, 0.0
      %v634 = vadd.f32 %v632, %v633
      %v635 = vrot.slane %v634, 4
      %v636 = vadd.f32 %v634, %v635
      %v637 = vrot.slane %v636, 2
      %v638 = vadd.f32 %v636, %v637
      %v639 = vrot.slane %v638, 1
      %v640 = vadd.f32 %v638, %v639
      %v641 = vrcp.pop 256.0
      %v642 = vmul.f32 %v640, %v641
      %v643 = vsub.f32 %v381, %v642
      %v644 = vsub.f32 %v386, %v642
      %v645 = vsub.f32 %v391, %v642
      %v646 = vsub.f32 %v396, %v642
      %v647 = vsub.f32 %v401, %v642
      %v648 = vsub.f32 %v406, %v642
      %v649 = vsub.f32 %v411, %v642
      %v650 = vsub.f32 %v416, %v642
      %v651 = vsub.f32 %v421, %v642
      %v652 = vsub.f32 %v426, %v642
      %v653 = vsub.f32 %v431, %v642
      %v654 = vsub.f32 %v436, %v642
      %v655 = vsub.f32 %v441, %v642
      %v656 = vsub.f32 %v446, %v642
      %v657 = vsub.f32 %v451, %v642
      %v658 = vsub.f32 %v456, %v642
      %v659 = vsub.f32 %v461, %v642
      %v660 = vsub.f32 %v466, %v642
      %v661 = vsub.f32 %v471, %v642
      %v662 = vsub.f32 %v476, %v642
      %v663 = vsub.f32 %v481, %v642
      %v664 = vsub.f32 %v486, %v642
      %v665 = vsub.f32 %v491, %v642
      %v666 = vsub.f32 %v496, %v642
      %v667 = vsub.f32 %v501, %v642
      %v668 = vsub.f32 %v506, %v642
      %v669 = vsub.f32 %v511, %v642
      %v670 = vsub.f32 %v516, %v642
      %v671 = vsub.f32 %v521, %v642
      %v672 = vsub.f32 %v526, %v642
      %v673 = vsub.f32 %v531, %v642
      %v674 = vsub.f32 %v536, %v642
      %v675 = vmul.f32 %v643, %v643
      %v676 = vmul.f32 %v644, %v644
      %v677 = vmul.f32 %v645, %v645
      %v678 = vmul.f32 %v646, %v646
      %v679 = vmul.f32 %v647, %v647
      %v680 = vmul.f32 %v648, %v648
      %v681 = vmul.f32 %v649, %v649
      %v682 = vmul.f32 %v650, %v650
      %v683 = vmul.f32 %v651, %v651
      %v684 = vmul.f32 %v652, %v652
      %v685 = vmul.f32 %v653, %v653
      %v686 = vmul.f32 %v654, %v654
      %v687 = vmul.f32 %v655, %v655
      %v688 = vmul.f32 %v656, %v656
      %v689 = vmul.f32 %v657, %v657
      %v690 = vmul.f32 %v658, %v658
      %v691 = vmul.f32 %v659, %v659
      %v692 = vmul.f32 %v660, %v660
      %v693 = vmul.f32 %v661, %v661
      %v694 = vmul.f32 %v662, %v662
      %v695 = vmul.f32 %v663, %v663
      %v696 = vmul.f32 %v664, %v664
      %v697 = vmul.f32 %v665, %v665
      %v698 = vmul.f32 %v666, %v666
      %v699 = vmul.f32 %v667, %v667
      %v700 = vmul.f32 %v668, %v668
      %v701 = vmul.f32 %v669, %v669
      %v702 = vmul.f32 %v670, %v670
      %v703 = vmul.f32 %v671, %v671
      %v704 = vmul.f32 %v672, %v672
      %v705 = vmul.f32 %v673, %v673
      %v706 = vmul.f32 %v674, %v674
      %v707 = vsel %vm539, %v675, 0.0
      %v708 = vsel %vm539, %v676, 0.0
      %v709 = vadd.f32 %v707, %v708
      %v710 = vsel %vm539, %v677, 0.0
      %v711 = vadd.f32 %v709, %v710
      %v712 = vsel %vm539, %v678, 0.0
      %v713 = vadd.f32 %v711, %v712
      %v714 = vsel %vm539, %v679, 0.0
      %v715 = vadd.f32 %v713, %v714
      %v716 = vsel %vm539, %v680, 0.0
      %v717 = vadd.f32 %v715, %v716
      %v718 = vsel %vm539, %v681, 0.0
      %v719 = vadd.f32 %v717, %v718
      %v720 = vsel %vm539, %v682, 0.0
      %v721 = vadd.f32 %v719, %v720
      %v722 = vsel %vm539, %v683, 0.0
      %v723 = vadd.f32 %v721, %v722
      %v724 = vsel %vm539, %v684, 0.0
      %v725 = vadd.f32 %v723, %v724
      %v726 = vsel %vm539, %v685, 0.0
      %v727 = vadd.f32 %v725, %v726
      %v728 = vsel %vm539, %v686, 0.0
      %v729 = vadd.f32 %v727, %v728
      %v730 = vsel %vm539, %v687, 0.0
      %v731 = vadd.f32 %v729, %v730
      %v732 = vsel %vm539, %v688, 0.0
      %v733 = vadd.f32 %v731, %v732
      %v734 = vsel %vm539, %v689, 0.0
      %v735 = vadd.f32 %v733, %v734
      %v736 = vsel %vm539, %v690, 0.0
      %v737 = vadd.f32 %v735, %v736
      %v738 = vsel %vm539, %v691, 0.0
      %v739 = vadd.f32 %v737, %v738
      %v740 = vsel %vm539, %v692, 0.0
      %v741 = vadd.f32 %v739, %v740
      %v742 = vsel %vm539, %v693, 0.0
      %v743 = vadd.f32 %v741, %v742
      %v744 = vsel %vm539, %v694, 0.0
      %v745 = vadd.f32 %v743, %v744
      %v746 = vsel %vm539, %v695, 0.0
      %v747 = vadd.f32 %v745, %v746
      %v748 = vsel %vm539, %v696, 0.0
      %v749 = vadd.f32 %v747, %v748
      %v750 = vsel %vm539, %v697, 0.0
      %v751 = vadd.f32 %v749, %v750
      %v752 = vsel %vm539, %v698, 0.0
      %v753 = vadd.f32 %v751, %v752
      %v754 = vsel %vm539, %v699, 0.0
      %v755 = vadd.f32 %v753, %v754
      %v756 = vsel %vm539, %v700, 0.0
      %v757 = vadd.f32 %v755, %v756
      %v758 = vsel %vm539, %v701, 0.0
      %v759 = vadd.f32 %v757, %v758
      %v760 = vsel %vm539, %v702, 0.0
      %v761 = vadd.f32 %v759, %v760
      %v762 = vsel %vm539, %v703, 0.0
      %v763 = vadd.f32 %v761, %v762
      %v764 = vsel %vm539, %v704, 0.0
      %v765 = vadd.f32 %v763, %v764
      %v766 = vsel %vm539, %v705, 0.0
      %v767 = vadd.f32 %v765, %v766
      %v768 = vsel %vm539, %v706, 0.0
      %v769 = vadd.f32 %v767, %v768
      %v770 = vrot.slane %v769, 4
      %v771 = vadd.f32 %v769, %v770
      %v772 = vrot.slane %v771, 2
      %v773 = vadd.f32 %v771, %v772
      %v774 = vrot.slane %v773, 1
      %v775 = vadd.f32 %v773, %v774
      %777 = vrot.lane.b32.xlu0 %v775, 8
      %v778 = vpop.permute.xlu0 %777
      %v780 = vsel %vm539, %v640, %v778
      %vm781 = vcmask 122880
      %782 = vst.msk [vmem:[%s182] sm:$0x1] %vm781, %v780
      %s783 = smul.u32 32, %s15
      %p784 = scmp.lt.s32.totalorder %s783, 63
      %s785 = scalar_select %p784, %s783, 63
      %s786 = smul.addr %s785, 8
      %s787 = scalar_lea.vmem %s2, %s786
      %p788 = scmp.lt.s32.totalorder %s15, 1
      %s789 = scalar_select %p788, %s15, 1
      %s790 = scalar_lea.vmem %s3, %s789
      // Predicated region
      $region29: #{residual_block_forward.5} parent=27 // pred_check
        %p791 = pneg %p80
      $region30: #{residual_block_forward.5} parent=27 // pred_check_branch
        %793 = sbr.rel (%p791) target = $region32
      $region31: #{residual_block_forward.5} parent=27 // pred_region
        %s794 = smul.u32 32, %s15
      $region32: #{residual_block_forward.5} parent=27 // pred_fallthru
        _
      // Predicated region
      $region33: #{residual_block_forward.5} parent=27 // pred_check
        %p795 = pneg %p106
      $region34: #{residual_block_forward.5} parent=27 // pred_check_branch
        %797 = sbr.rel (%p795) target = $region36
      $region35: #{residual_block_forward.5} parent=27 // pred_region
        _
      $region36: #{residual_block_forward.5} parent=27 // pred_fallthru
        _
    $region28: #{residual_block_forward.5} parent=5 // pred_fallthru
      _
    %p798 = scmp.le.s32.totalorder 2, %s10
    // Predicated region
    $region37: #{residual_block_forward.5} parent=5 // pred_check
      %p799 = pneg %p798
    $region38: #{residual_block_forward.5} parent=5 // pred_check_branch
      %801 = sbr.rel (%p799) target = $region40
    $region39: #{residual_block_forward.5} parent=5 // pred_region
      %s802 = ssub.s32 %s10, 2
      // Predicated region
      $region41: #{residual_block_forward.5} parent=39 // pred_check
        %p803 = pneg %p86
      $region42: #{residual_block_forward.5} parent=39 // pred_check_branch
        %805 = sbr.rel (%p803) target = $region44
      $region43: #{residual_block_forward.5} parent=39 // pred_region
        %s806 = smul.u32 32, %s16
        %p807 = scmp.lt.s32.totalorder %s806, 63
        %s808 = scalar_select %p807, %s806, 63
        %s809 = smul.addr %s808, 8
        %s810 = scalar_lea.vmem %s2, %s809
      $region44: #{residual_block_forward.5} parent=39 // pred_fallthru
        _
      // Predicated region
      $region45: #{residual_block_forward.5} parent=39 // pred_check
        %p811 = pneg %p112
      $region46: #{residual_block_forward.5} parent=39 // pred_check_branch
        %813 = sbr.rel (%p811) target = $region48
      $region47: #{residual_block_forward.5} parent=39 // pred_region
        %p814 = scmp.lt.s32.totalorder %s16, 1
        %s815 = scalar_select %p814, %s16, 1
        %s816 = scalar_lea.vmem %s3, %s815
      $region48: #{residual_block_forward.5} parent=39 // pred_fallthru
        _
    $region40: #{residual_block_forward.5} parent=5 // pred_fallthru
      _
  $region6: #{residual_block_forward.5} parent=0 // loop_footer
    %s14 = sadd.s32 1, %s10
  $region7: #{residual_block_forward.5} parent=0 // loop_footer_branch
    %9 = sbr.rel target = $region3
  $region8: #{residual_block_forward.5} parent=0 // loop_exit
    _

// kernel: residual_block_forward.7
$region0: #{residual_block_forward.7}
  #allocation0 [shape = 'u32[]', space=smem, size = 0x4, offset = 0x4, fixed_abs, tag = 'smem constant byte address 0x4 - core index']
  #allocation1 [shape = 'u32[144,128]{1,0:T(1,128)}', space=vmem, size = 0x12000, scoped, tag = 'internal scratch']
  %s0 = inlined_call_operand.vmem [shape: f32[512,16], index: 0, kind: input, shape index: {}]
  %s1 = inlined_call_operand.vmem [shape: f32[512,16], index: 1, kind: input, shape index: {}, may-alias: {1,5}]
  %s2 = inlined_call_operand.vmem [shape: f32[1,16], index: 2, kind: input, shape index: {}]
  %s3 = inlined_call_operand.vmem [shape: f32[1,16], index: 3, kind: input, shape index: {}]
  %s4 = inlined_call_operand.vmem [shape: f32[16,8], index: 4, kind: input, shape index: {}]
  %s5 = inlined_call_operand.vmem [shape: f32[512,16], index: 5, kind: output, shape index: {0}, may-alias: {1,5}]
  %s6 = inlined_call_operand.vmem [shape: f32[512,8], index: 6, kind: output, shape index: {1}]
  %s7 = inlined_call_operand.vmem [shape: f32[2,1,16], index: 7, kind: output, shape index: {2}]
  %8 = xla_tuple %s5, %s6, %s7
  %s9 = sld [smem:[#allocation0]]
  $region69: #{residual_block_forward.7} parent=0
    _
  %s11 = ssub.s32 1, %s9
  %s12 = scalar_select 0, %s11, %s9
  loop: start=0, step=1, limit=4
  $region2: #{residual_block_forward.7} parent=0 // loop_pre_header
    _
  $region3: #{residual_block_forward.7} parent=0 // loop_header
    %s14 = sphi 0, %s18
    %p15 = scmp.ge.s32.totalorder %s14, 4
    %s24 = sphi 0, %s26
    %s27 = sphi 0, %s24
    %s28 = sphi 0, %s27
    %s44 = sphi 0, %s28
    %s50 = sphi 0, %s52
    %s53 = sphi 0, %s50
    %s54 = sphi 0, %s53
    %s70 = sphi 0, %s54
    %s74 = sphi 0, %s74
    %s76 = sphi 0, %s74
    %s77 = sphi 0, %s76
    %s91 = sphi 0, %s77
    %s95 = sphi 0, %s95
    %s97 = sphi 0, %s95
    %s98 = sphi 0, %s97
    %s112 = sphi 0, %s98
    %s116 = sphi 0, %s116
    %s118 = sphi 0, %s116
    %s119 = sphi 0, %s118
    %s133 = sphi 0, %s119
    %s139 = sphi 0, %s141
    %s142 = sphi 0, %s139
    %s143 = sphi 0, %s142
    %s159 = sphi 0, %s143
    %s165 = sphi 0, %s167
    %s168 = sphi 0, %s165
    %s169 = sphi 0, %s168
    %s185 = sphi 0, %s169
    %s191 = sphi 0, %s193
    %s194 = sphi 0, %s191
    %s195 = sphi 0, %s194
    %s211 = sphi 0, %s195
  $region4: #{residual_block_forward.7} parent=0 // loop_header_branch
    %17 = sbr.rel (%p15) target = $region8
  $region5: #{residual_block_forward.7} parent=0 // loop_body
    %s19 = ssub.s32 %s14, 1
    %s20 = ssub.s32 %s14, 2
    %s21 = sadd.s32 %s14, 1
    %s22 = ssub.s32 %s14, %s21
    %p23 = scmp.eq.s32.totalorder %s22, 0
    %s25 = sadd.s32 %s24, 1
    %s26 = scalar_select %p23, %s24, %s25
    %p29 = pneg %p23
    %p30 = scmp.eq.s32.totalorder %s14, 1
    %p31 = por %p29, %p30
    %p32 = scmp.ne.s32.totalorder %s24, %s27
    %p33 = scmp.eq.s32.totalorder %s14, 0
    %p34 = por %p32, %p33
    %p35 = scmp.ne.s32.totalorder %s24, %s27
    %p36 = scmp.eq.s32.totalorder %s19, 1
    %p37 = por %p35, %p36
    %p38 = scmp.ne.s32.totalorder %s27, %s28
    %p39 = scmp.eq.s32.totalorder %s19, 0
    %p40 = por %p38, %p39
    %p41 = scmp.ne.s32.totalorder %s27, %s28
    %p42 = scmp.eq.s32.totalorder %s20, 1
    %p43 = por %p41, %p42
    %p45 = scmp.ne.s32.totalorder %s28, %s44
    %p46 = scmp.eq.s32.totalorder %s20, 0
    %p47 = por %p45, %p46
    %s48 = ssub.s32 %s14, %s21
    %p49 = scmp.eq.s32.totalorder %s48, 0
    %s51 = sadd.s32 %s50, 1
    %s52 = scalar_select %p49, %s50, %s51
    %p55 = pneg %p49
    %p56 = scmp.eq.s32.totalorder %s14, 1
    %p57 = por %p55, %p56
    %p58 = scmp.ne.s32.totalorder %s50, %s53
    %p59 = scmp.eq.s32.totalorder %s14, 0
    %p60 = por %p58, %p59
    %p61 = scmp.ne.s32.totalorder %s50, %s53
    %p62 = scmp.eq.s32.totalorder %s19, 1
    %p63 = por %p61, %p62
    %p64 = scmp.ne.s32.totalorder %s53, %s54
    %p65 = scmp.eq.s32.totalorder %s19, 0
    %p66 = por %p64, %p65
    %p67 = scmp.ne.s32.totalorder %s53, %s54
    %p68 = scmp.eq.s32.totalorder %s20, 1
    %p69 = por %p67, %p68
    %p71 = scmp.ne.s32.totalorder %s54, %s70
    %p72 = scmp.eq.s32.totalorder %s20, 0
    %p73 = por %p71, %p72
    %s75 = sadd.s32 %s74, 1
    %p78 = scmp.eq.s32.totalorder %s14, 1
    %p79 = scmp.ne.s32.totalorder %s74, %s76
    %p80 = scmp.eq.s32.totalorder %s14, 0
    %p81 = por %p79, %p80
    %p82 = scmp.ne.s32.totalorder %s74, %s76
    %p83 = scmp.eq.s32.totalorder %s19, 1
    %p84 = por %p82, %p83
    %p85 = scmp.ne.s32.totalorder %s76, %s77
    %p86 = scmp.eq.s32.totalorder %s19, 0
    %p87 = por %p85, %p86
    %p88 = scmp.ne.s32.totalorder %s76, %s77
    %p89 = scmp.eq.s32.totalorder %s20, 1
    %p90 = por %p88, %p89
    %p92 = scmp.ne.s32.totalorder %s77, %s91
    %p93 = scmp.eq.s32.totalorder %s20, 0
    %p94 = por %p92, %p93
    %s96 = sadd.s32 %s95, 1
    %p99 = scmp.eq.s32.totalorder %s14, 1
    %p100 = scmp.ne.s32.totalorder %s95, %s97
    %p101 = scmp.eq.s32.totalorder %s14, 0
    %p102 = por %p100, %p101
    %p103 = scmp.ne.s32.totalorder %s95, %s97
    %p104 = scmp.eq.s32.totalorder %s19, 1
    %p105 = por %p103, %p104
    %p106 = scmp.ne.s32.totalorder %s97, %s98
    %p107 = scmp.eq.s32.totalorder %s19, 0
    %p108 = por %p106, %p107
    %p109 = scmp.ne.s32.totalorder %s97, %s98
    %p110 = scmp.eq.s32.totalorder %s20, 1
    %p111 = por %p109, %p110
    %p113 = scmp.ne.s32.totalorder %s98, %s112
    %p114 = scmp.eq.s32.totalorder %s20, 0
    %p115 = por %p113, %p114
    %s117 = sadd.s32 %s116, 1
    %p120 = scmp.eq.s32.totalorder %s14, 1
    %p121 = scmp.ne.s32.totalorder %s116, %s118
    %p122 = scmp.eq.s32.totalorder %s14, 0
    %p123 = por %p121, %p122
    %p124 = scmp.ne.s32.totalorder %s116, %s118
    %p125 = scmp.eq.s32.totalorder %s19, 1
    %p126 = por %p124, %p125
    %p127 = scmp.ne.s32.totalorder %s118, %s119
    %p128 = scmp.eq.s32.totalorder %s19, 0
    %p129 = por %p127, %p128
    %p130 = scmp.ne.s32.totalorder %s118, %s119
    %p131 = scmp.eq.s32.totalorder %s20, 1
    %p132 = por %p130, %p131
    %p134 = scmp.ne.s32.totalorder %s119, %s133
    %p135 = scmp.eq.s32.totalorder %s20, 0
    %p136 = por %p134, %p135
    %s137 = ssub.s32 %s14, %s21
    %p138 = scmp.eq.s32.totalorder %s137, 0
    %s140 = sadd.s32 %s139, 1
    %s141 = scalar_select %p138, %s139, %s140
    %p144 = pneg %p138
    %p145 = scmp.eq.s32.totalorder %s14, 1
    %p146 = por %p144, %p145
    %p147 = scmp.ne.s32.totalorder %s139, %s142
    %p148 = scmp.eq.s32.totalorder %s14, 0
    %p149 = por %p147, %p148
    %p150 = scmp.ne.s32.totalorder %s139, %s142
    %p151 = scmp.eq.s32.totalorder %s19, 1
    %p152 = por %p150, %p151
    %p153 = scmp.ne.s32.totalorder %s142, %s143
    %p154 = scmp.eq.s32.totalorder %s19, 0
    %p155 = por %p153, %p154
    %p156 = scmp.ne.s32.totalorder %s142, %s143
    %p157 = scmp.eq.s32.totalorder %s20, 1
    %p158 = por %p156, %p157
    %p160 = scmp.ne.s32.totalorder %s143, %s159
    %p161 = scmp.eq.s32.totalorder %s20, 0
    %p162 = por %p160, %p161
    %s163 = ssub.s32 %s14, %s21
    %p164 = scmp.eq.s32.totalorder %s163, 0
    %s166 = sadd.s32 %s165, 1
    %s167 = scalar_select %p164, %s165, %s166
    %p170 = pneg %p164
    %p171 = scmp.eq.s32.totalorder %s14, 1
    %p172 = por %p170, %p171
    %p173 = scmp.ne.s32.totalorder %s165, %s168
    %p174 = scmp.eq.s32.totalorder %s14, 0
    %p175 = por %p173, %p174
    %p176 = scmp.ne.s32.totalorder %s165, %s168
    %p177 = scmp.eq.s32.totalorder %s19, 1
    %p178 = por %p176, %p177
    %p179 = scmp.ne.s32.totalorder %s168, %s169
    %p180 = scmp.eq.s32.totalorder %s19, 0
    %p181 = por %p179, %p180
    %p182 = scmp.ne.s32.totalorder %s168, %s169
    %p183 = scmp.eq.s32.totalorder %s20, 1
    %p184 = por %p182, %p183
    %p186 = scmp.ne.s32.totalorder %s169, %s185
    %p187 = scmp.eq.s32.totalorder %s20, 0
    %p188 = por %p186, %p187
    %s189 = ssub.s32 %s14, %s21
    %p190 = scmp.eq.s32.totalorder %s189, 0
    %s192 = sadd.s32 %s191, 1
    %s193 = scalar_select %p190, %s191, %s192
    %p196 = pneg %p190
    %p197 = scmp.eq.s32.totalorder %s14, 1
    %p198 = por %p196, %p197
    %p199 = scmp.ne.s32.totalorder %s191, %s194
    %p200 = scmp.eq.s32.totalorder %s14, 0
    %p201 = por %p199, %p200
    %p202 = scmp.ne.s32.totalorder %s191, %s194
    %p203 = scmp.eq.s32.totalorder %s19, 1
    %p204 = por %p202, %p203
    %p205 = scmp.ne.s32.totalorder %s194, %s195
    %p206 = scmp.eq.s32.totalorder %s19, 0
    %p207 = por %p205, %p206
    %p208 = scmp.ne.s32.totalorder %s194, %s195
    %p209 = scmp.eq.s32.totalorder %s20, 1
    %p210 = por %p208, %p209
    %p212 = scmp.ne.s32.totalorder %s195, %s211
    %p213 = scmp.eq.s32.totalorder %s20, 0
    %p214 = por %p212, %p213
    %p215 = scmp.le.s32.totalorder 1, %s14
    %p216 = scmp.lt.s32.totalorder %s14, 3
    %p217 = pnand %p215, %p216
    %p218 = pneg %p217
    // Predicated region
    $region9: #{residual_block_forward.7} parent=5 // pred_check
      _
    $region10: #{residual_block_forward.7} parent=5 // pred_check_branch
      %220 = sbr.rel (%p217) target = $region12
    $region11: #{residual_block_forward.7} parent=5 // pred_region
      %s221 = ssub.s32 %s14, 1
      // Predicated region
      $region13: #{residual_block_forward.7} parent=11 // pred_check
        %p222 = pneg %p87
      $region14: #{residual_block_forward.7} parent=11 // pred_check_branch
        %224 = sbr.rel (%p222) target = $region16
      $region15: #{residual_block_forward.7} parent=11 // pred_region
        _
      $region16: #{residual_block_forward.7} parent=11 // pred_fallthru
        _
      // Predicated region
      $region17: #{residual_block_forward.7} parent=11 // pred_check
        %p225 = pneg %p108
      $region18: #{residual_block_forward.7} parent=11 // pred_check_branch
        %227 = sbr.rel (%p225) target = $region20
      $region19: #{residual_block_forward.7} parent=11 // pred_region
        _
      $region20: #{residual_block_forward.7} parent=11 // pred_fallthru
        _
      // Predicated region
      $region21: #{residual_block_forward.7} parent=11 // pred_check
        %p228 = pneg %p129
      $region22: #{residual_block_forward.7} parent=11 // pred_check_branch
        %230 = sbr.rel (%p228) target = $region24
      $region23: #{residual_block_forward.7} parent=11 // pred_region
        _
      $region24: #{residual_block_forward.7} parent=11 // pred_fallthru
        _
    $region12: #{residual_block_forward.7} parent=5 // pred_fallthru
      _
    %p231 = scmp.lt.s32.totalorder %s14, 2
    // Predicated region
    $region25: #{residual_block_forward.7} parent=5 // pred_check
      %p232 = pneg %p231
    $region26: #{residual_block_forward.7} parent=5 // pred_check_branch
      %234 = sbr.rel (%p232) target = $region28
    $region27: #{residual_block_forward.7} parent=5 // pred_region
      // Predicated region
      $region29: #{residual_block_forward.7} parent=27 // pred_check
        %p235 = pneg %p34
      $region30: #{residual_block_forward.7} parent=27 // pred_check_branch
        %237 = sbr.rel (%p235) target = $region32
      $region31: #{residual_block_forward.7} parent=27 // pred_region
        %s238 = smul.u32 32, %s14
        %p239 = scmp.lt.s32.totalorder %s238, 63
        %s240 = scalar_select %p239, %s238, 63
        %s241 = smul.addr %s240, 8
        %s242 = scalar_lea.vmem %s0, %s241
        %s243 = smul.u32 32, %s14
      $region32: #{residual_block_forward.7} parent=27 // pred_fallthru
        _
      // Predicated region
      $region33: #{residual_block_forward.7} parent=27 // pred_check
        %p244 = pneg %p60
      $region34: #{residual_block_forward.7} parent=27 // pred_check_branch
        %246 = sbr.rel (%p244) target = $region36
      $region35: #{residual_block_forward.7} parent=27 // pred_region
        %s247 = smul.u32 32, %s14
        %p248 = scmp.lt.s32.totalorder %s247, 63
        %s249 = scalar_select %p248, %s247, 63
        %s250 = smul.addr %s249, 8
        %s251 = scalar_lea.vmem %s1, %s250
        %s252 = smul.u32 32, %s14
      $region36: #{residual_block_forward.7} parent=27 // pred_fallthru
        _
    $region28: #{residual_block_forward.7} parent=5 // pred_fallthru
      _
    %p253 = scmp.le.s32.totalorder 1, %s14
    %p254 = scmp.lt.s32.totalorder %s14, 3
    %p255 = pnand %p253, %p254
    %p256 = pneg %p255
    // Predicated region
    $region37: #{residual_block_forward.7} parent=5 // pred_check
      _
    $region38: #{residual_block_forward.7} parent=5 // pred_check_branch
      %258 = sbr.rel (%p255) target = $region40
    $region39: #{residual_block_forward.7} parent=5 // pred_region
      %s259 = ssub.s32 %s14, 1
      %s260 = smul.u32 32, %s19
      %p261 = scmp.lt.s32.totalorder %s260, 63
      %s262 = scalar_select %p261, %s260, 63
      %s263 = smul.addr %s262, 8
      %s264 = scalar_lea.vmem %s0, %s263
      %p265 = pneg %p40
      %p266 = pneg %p37
      %s267 = smul.u32 32, %s19
      %p268 = scmp.lt.s32.totalorder %s267, 63
      %s269 = scalar_select %p268, %s267, 63
      %s270 = smul.addr %s269, 8
      %s271 = scalar_lea.vmem %s1, %s270
      %p272 = pneg %p66
      %p273 = pneg %p63
      %p274 = pneg %p87
      %p275 = pneg %p84
      %p276 = pneg %p108
      %p277 = pneg %p105
      %p278 = pneg %p129
      %p279 = pneg %p126
      %p280 = pneg %p155
      %p281 = pneg %p152
      %s282 = smul.u32 32, %s19
      %p283 = scmp.lt.s32.totalorder %s282, 63
      %s284 = scalar_select %p283, %s282, 63
      %s285 = smul.addr %s284, 8
      %s286 = scalar_lea.vmem %s5, %s285
      %p287 = pneg %p181
      %p288 = pneg %p178
      %s289 = smul.u32 32, %s19
      %p290 = scmp.lt.s32.totalorder %s289, 63
      %s291 = scalar_select %p290, %s289, 63
      %s292 = smul.addr %s291, 8
      %s293 = scalar_lea.vmem %s6, %s292
      %p294 = pneg %p207
      %p295 = pneg %p204
      %p296 = scmp.lt.s32.totalorder %s19, 1
      %s297 = scalar_select %p296, %s19, 1
      %s298 = scalar_lea.vmem %s7, %s297
      %s299 = smul.u32 32, %s19
      %p300 = scmp.lt.s32.totalorder %s299, 63
      %s301 = scalar_select %p300, %s299, 63
      %s302 = smul.addr %s301, 8
      %s303 = scalar_lea.vmem %s0, %s302
      %s304 = smul.u32 32, %s19
      %s305 = smul.u32 32, %s19
      %p306 = scmp.lt.s32.totalorder %s305, 63
      %s307 = scalar_select %p306, %s305, 63
      %s308 = smul.addr %s307, 8
      %s309 = scalar_lea.vmem %s1, %s308
      %s310 = smul.u32 32, %s19
      %s311 = smul.u32 32, %s19
      %p312 = scmp.lt.s32.totalorder %s311, 63
      %s313 = scalar_select %p312, %s311, 63
      %s314 = smul.addr %s313, 8
      %s315 = scalar_lea.vmem %s5, %s314
      %s316 = smul.u32 32, %s19
      %s317 = smul.u32 32, %s19
      %p318 = scmp.lt.s32.totalorder %s317, 63
      %s319 = scalar_select %p318, %s317, 63
      %s320 = smul.addr %s319, 8
      %s321 = scalar_lea.vmem %s6, %s320
      %s322 = smul.u32 32, %s19
      %p323 = scmp.lt.s32.totalorder %s19, 1
      %s324 = scalar_select %p323, %s19, 1
      %s325 = scalar_lea.vmem %s7, %s324
      %v326 = vld [vmem:[%s303] sm:$0xff]
      %v327 = vld [vmem:[%s303 + $0x8] sm:$0xff]
      %v328 = vld [vmem:[%s303 + $0x10] sm:$0xff]
      %v329 = vld [vmem:[%s303 + $0x18] sm:$0xff]
      %v330 = vld [vmem:[%s303 + $0x20] sm:$0xff]
      %v331 = vld [vmem:[%s303 + $0x28] sm:$0xff]
      %v332 = vld [vmem:[%s303 + $0x30] sm:$0xff]
      %v333 = vld [vmem:[%s303 + $0x38] sm:$0xff]
      %v334 = vld [vmem:[%s303 + $0x40] sm:$0xff]
      %v335 = vld [vmem:[%s303 + $0x48] sm:$0xff]
      %v336 = vld [vmem:[%s303 + $0x50] sm:$0xff]
      %v337 = vld [vmem:[%s303 + $0x58] sm:$0xff]
      %v338 = vld [vmem:[%s303 + $0x60] sm:$0xff]
      %v339 = vld [vmem:[%s303 + $0x68] sm:$0xff]
      %v340 = vld [vmem:[%s303 + $0x70] sm:$0xff]
      %v341 = vld [vmem:[%s303 + $0x78] sm:$0xff]
      %v342 = vld [vmem:[%s303 + $0x80] sm:$0xff]
      %v343 = vld [vmem:[%s303 + $0x88] sm:$0xff]
      %v344 = vld [vmem:[%s303 + $0x90] sm:$0xff]
      %v345 = vld [vmem:[%s303 + $0x98] sm:$0xff]
      %v346 = vld [vmem:[%s303 + $0xa0] sm:$0xff]
      %v347 = vld [vmem:[%s303 + $0xa8] sm:$0xff]
      %v348 = vld [vmem:[%s303 + $0xb0] sm:$0xff]
      %v349 = vld [vmem:[%s303 + $0xb8] sm:$0xff]
      %v350 = vld [vmem:[%s303 + $0xc0] sm:$0xff]
      %v351 = vld [vmem:[%s303 + $0xc8] sm:$0xff]
      %v352 = vld [vmem:[%s303 + $0xd0] sm:$0xff]
      %v353 = vld [vmem:[%s303 + $0xd8] sm:$0xff]
      %v354 = vld [vmem:[%s303 + $0xe0] sm:$0xff]
      %v355 = vld [vmem:[%s303 + $0xe8] sm:$0xff]
      %v356 = vld [vmem:[%s303 + $0xf0] sm:$0xff]
      %v357 = vld [vmem:[%s303 + $0xf8] sm:$0xff]
      %v358 = vld [vmem:[%s2] sm:$0x1]
      %v360 = vlaneseq
      %v361 = vshrl.u32 %v360, 7
      %v362 = vsub.s32 0, %v361
      %v363 = vrot.slane %v358, %v362
      %v365 = vmul.f32 %v326, %v363
      %v366 = vmul.f32 %v327, %v363
      %v367 = vmul.f32 %v328, %v363
      %v368 = vmul.f32 %v329, %v363
      %v369 = vmul.f32 %v330, %v363
      %v370 = vmul.f32 %v331, %v363
      %v371 = vmul.f32 %v332, %v363
      %v372 = vmul.f32 %v333, %v363
      %v373 = vmul.f32 %v334, %v363
      %v374 = vmul.f32 %v335, %v363
      %v375 = vmul.f32 %v336, %v363
      %v376 = vmul.f32 %v337, %v363
      %v377 = vmul.f32 %v338, %v363
      %v378 = vmul.f32 %v339, %v363
      %v379 = vmul.f32 %v340, %v363
      %v380 = vmul.f32 %v341, %v363
      %v381 = vmul.f32 %v342, %v363
      %v382 = vmul.f32 %v343, %v363
      %v383 = vmul.f32 %v344, %v363
      %v384 = vmul.f32 %v345, %v363
      %v385 = vmul.f32 %v346, %v363
      %v386 = vmul.f32 %v347, %v363
      %v387 = vmul.f32 %v348, %v363
      %v388 = vmul.f32 %v349, %v363
      %v389 = vmul.f32 %v350, %v363
      %v390 = vmul.f32 %v351, %v363
      %v391 = vmul.f32 %v352, %v363
      %v392 = vmul.f32 %v353, %v363
      %v393 = vmul.f32 %v354, %v363
      %v394 = vmul.f32 %v355, %v363
      %v395 = vmul.f32 %v356, %v363
      %v396 = vmul.f32 %v357, %v363
      %v397 = vld [vmem:[%s3] sm:$0x1]
      %v399 = vlaneseq
      %v400 = vshrl.u32 %v399, 7
      %v401 = vsub.s32 0, %v400
      %v402 = vrot.slane %v397, %v401
      %v404 = vadd.f32 %v365, %v402
      %v405 = vadd.f32 %v366, %v402
      %v406 = vadd.f32 %v367, %v402
      %v407 = vadd.f32 %v368, %v402
      %v408 = vadd.f32 %v369, %v402
      %v409 = vadd.f32 %v370, %v402
      %v410 = vadd.f32 %v371, %v402
      %v411 = vadd.f32 %v372, %v402
      %v412 = vadd.f32 %v373, %v402
      %v413 = vadd.f32 %v374, %v402
      %v414 = vadd.f32 %v375, %v402
      %v415 = vadd.f32 %v376, %v402
      %v416 = vadd.f32 %v377, %v402
      %v417 = vadd.f32 %v378, %v402
      %v418 = vadd.f32 %v379, %v402
      %v419 = vadd.f32 %v380, %v402
      %v420 = vadd.f32 %v381, %v402
      %v421 = vadd.f32 %v382, %v402
      %v422 = vadd.f32 %v383, %v402
      %v423 = vadd.f32 %v384, %v402
      %v424 = vadd.f32 %v385, %v402
      %v425 = vadd.f32 %v386, %v402
      %v426 = vadd.f32 %v387, %v402
      %v427 = vadd.f32 %v388, %v402
      %v428 = vadd.f32 %v389, %v402
      %v429 = vadd.f32 %v390, %v402
      %v430 = vadd.f32 %v391, %v402
      %v431 = vadd.f32 %v392, %v402
      %v432 = vadd.f32 %v393, %v402
      %v433 = vadd.f32 %v394, %v402
      %v434 = vadd.f32 %v395, %v402
      %v435 = vadd.f32 %v396, %v402
      %v436 = vmul.f32 %v404, 0.1
      %v437 = vmul.f32 %v405, 0.1
      %v438 = vmul.f32 %v406, 0.1
      %v439 = vmul.f32 %v407, 0.1
      %v440 = vmul.f32 %v408, 0.1
      %v441 = vmul.f32 %v409, 0.1
      %v442 = vmul.f32 %v410, 0.1
      %v443 = vmul.f32 %v411, 0.1
      %v444 = vmul.f32 %v412, 0.1
      %v445 = vmul.f32 %v413, 0.1
      %v446 = vmul.f32 %v414, 0.1
      %v447 = vmul.f32 %v415, 0.1
      %v448 = vmul.f32 %v416, 0.1
      %v449 = vmul.f32 %v417, 0.1
      %v450 = vmul.f32 %v418, 0.1
      %v451 = vmul.f32 %v419, 0.1
      %v452 = vmul.f32 %v420, 0.1
      %v453 = vmul.f32 %v421, 0.1
      %v454 = vmul.f32 %v422, 0.1
      %v455 = vmul.f32 %v423, 0.1
      %v456 = vmul.f32 %v424, 0.1
      %v457 = vmul.f32 %v425, 0.1
      %v458 = vmul.f32 %v426, 0.1
      %v459 = vmul.f32 %v427, 0.1
      %v460 = vmul.f32 %v428, 0.1
      %v461 = vmul.f32 %v429, 0.1
      %v462 = vmul.f32 %v430, 0.1
      %v463 = vmul.f32 %v431, 0.1
      %v464 = vmul.f32 %v432, 0.1
      %v465 = vmul.f32 %v433, 0.1
      %v466 = vmul.f32 %v434, 0.1
      %v467 = vmul.f32 %v435, 0.1
      %v468 = vmax.f32 %v404, %v436
      %v469 = vmax.f32 %v405, %v437
      %v470 = vmax.f32 %v406, %v438
      %v471 = vmax.f32 %v407, %v439
      %v472 = vmax.f32 %v408, %v440
      %v473 = vmax.f32 %v409, %v441
      %v474 = vmax.f32 %v410, %v442
      %v475 = vmax.f32 %v411, %v443
      %v476 = vmax.f32 %v412, %v444
      %v477 = vmax.f32 %v413, %v445
      %v478 = vmax.f32 %v414, %v446
      %v479 = vmax.f32 %v415, %v447
      %v480 = vmax.f32 %v416, %v448
      %v481 = vmax.f32 %v417, %v449
      %v482 = vmax.f32 %v418, %v450
      %v483 = vmax.f32 %v419, %v451
      %v484 = vmax.f32 %v420, %v452
      %v485 = vmax.f32 %v421, %v453
      %v486 = vmax.f32 %v422, %v454
      %v487 = vmax.f32 %v423, %v455
      %v488 = vmax.f32 %v424, %v456
      %v489 = vmax.f32 %v425, %v457
      %v490 = vmax.f32 %v426, %v458
      %v491 = vmax.f32 %v427, %v459
      %v492 = vmax.f32 %v428, %v460
      %v493 = vmax.f32 %v429, %v461
      %v494 = vmax.f32 %v430, %v462
      %v495 = vmax.f32 %v431, %v463
      %v496 = vmax.f32 %v432, %v464
      %v497 = vmax.f32 %v433, %v465
      %v498 = vmax.f32 %v434, %v466
      %v499 = vmax.f32 %v435, %v467
      %v500 = vld [vmem:[%s309] sm:$0xff]
      %v501 = vld [vmem:[%s309 + $0x8] sm:$0xff]
      %v502 = vld [vmem:[%s309 + $0x10] sm:$0xff]
      %v503 = vld [vmem:[%s309 + $0x18] sm:$0xff]
      %v504 = vld [vmem:[%s309 + $0x20] sm:$0xff]
      %v505 = vld [vmem:[%s309 + $0x28] sm:$0xff]
      %v506 = vld [vmem:[%s309 + $0x30] sm:$0xff]
      %v507 = vld [vmem:[%s309 + $0x38] sm:$0xff]
      %v508 = vld [vmem:[%s309 + $0x40] sm:$0xff]
      %v509 = vld [vmem:[%s309 + $0x48] sm:$0xff]
      %v510 = vld [vmem:[%s309 + $0x50] sm:$0xff]
      %v511 = vld [vmem:[%s309 + $0x58] sm:$0xff]
      %v512 = vld [vmem:[%s309 + $0x60] sm:$0xff]
      %v513 = vld [vmem:[%s309 + $0x68] sm:$0xff]
      %v514 = vld [vmem:[%s309 + $0x70] sm:$0xff]
      %v515 = vld [vmem:[%s309 + $0x78] sm:$0xff]
      %v516 = vld [vmem:[%s309 + $0x80] sm:$0xff]
      %v517 = vld [vmem:[%s309 + $0x88] sm:$0xff]
      %v518 = vld [vmem:[%s309 + $0x90] sm:$0xff]
      %v519 = vld [vmem:[%s309 + $0x98] sm:$0xff]
      %v520 = vld [vmem:[%s309 + $0xa0] sm:$0xff]
      %v521 = vld [vmem:[%s309 + $0xa8] sm:$0xff]
      %v522 = vld [vmem:[%s309 + $0xb0] sm:$0xff]
      %v523 = vld [vmem:[%s309 + $0xb8] sm:$0xff]
      %v524 = vld [vmem:[%s309 + $0xc0] sm:$0xff]
      %v525 = vld [vmem:[%s309 + $0xc8] sm:$0xff]
      %v526 = vld [vmem:[%s309 + $0xd0] sm:$0xff]
      %v527 = vld [vmem:[%s309 + $0xd8] sm:$0xff]
      %v528 = vld [vmem:[%s309 + $0xe0] sm:$0xff]
      %v529 = vld [vmem:[%s309 + $0xe8] sm:$0xff]
      %v530 = vld [vmem:[%s309 + $0xf0] sm:$0xff]
      %v531 = vld [vmem:[%s309 + $0xf8] sm:$0xff]
      %v532 = vadd.f32 %v468, %v500
      %v533 = vadd.f32 %v469, %v501
      %v534 = vadd.f32 %v470, %v502
      %v535 = vadd.f32 %v471, %v503
      %v536 = vadd.f32 %v472, %v504
      %v537 = vadd.f32 %v473, %v505
      %v538 = vadd.f32 %v474, %v506
      %v539 = vadd.f32 %v475, %v507
      %v540 = vadd.f32 %v476, %v508
      %v541 = vadd.f32 %v477, %v509
      %v542 = vadd.f32 %v478, %v510
      %v543 = vadd.f32 %v479, %v511
      %v544 = vadd.f32 %v480, %v512
      %v545 = vadd.f32 %v481, %v513
      %v546 = vadd.f32 %v482, %v514
      %v547 = vadd.f32 %v483, %v515
      %v548 = vadd.f32 %v484, %v516
      %v549 = vadd.f32 %v485, %v517
      %v550 = vadd.f32 %v486, %v518
      %v551 = vadd.f32 %v487, %v519
      %v552 = vadd.f32 %v488, %v520
      %v553 = vadd.f32 %v489, %v521
      %v554 = vadd.f32 %v490, %v522
      %v555 = vadd.f32 %v491, %v523
      %v556 = vadd.f32 %v492, %v524
      %v557 = vadd.f32 %v493, %v525
      %v558 = vadd.f32 %v494, %v526
      %v559 = vadd.f32 %v495, %v527
      %v560 = vadd.f32 %v496, %v528
      %v561 = vadd.f32 %v497, %v529
      %v562 = vadd.f32 %v498, %v530
      %v563 = vadd.f32 %v499, %v531
      %vm564 = vcmask 130048
      %565 = vst.msk [vmem:[%s315] sm:$0xff] %vm564, %v532
      %566 = vst.msk [vmem:[%s315 + $0x8] sm:$0xff] %vm564, %v533
      %567 = vst.msk [vmem:[%s315 + $0x10] sm:$0xff] %vm564, %v534
      %568 = vst.msk [vmem:[%s315 + $0x18] sm:$0xff] %vm564, %v535
      %569 = vst.msk [vmem:[%s315 + $0x20] sm:$0xff] %vm564, %v536
      %570 = vst.msk [vmem:[%s315 + $0x28] sm:$0xff] %vm564, %v537
      %571 = vst.msk [vmem:[%s315 + $0x30] sm:$0xff] %vm564, %v538
      %572 = vst.msk [vmem:[%s315 + $0x38] sm:$0xff] %vm564, %v539
      %573 = vst.msk [vmem:[%s315 + $0x40] sm:$0xff] %vm564, %v540
      %574 = vst.msk [vmem:[%s315 + $0x48] sm:$0xff] %vm564, %v541
      %575 = vst.msk [vmem:[%s315 + $0x50] sm:$0xff] %vm564, %v542
      %576 = vst.msk [vmem:[%s315 + $0x58] sm:$0xff] %vm564, %v543
      %577 = vst.msk [vmem:[%s315 + $0x60] sm:$0xff] %vm564, %v544
      %578 = vst.msk [vmem:[%s315 + $0x68] sm:$0xff] %vm564, %v545
      %579 = vst.msk [vmem:[%s315 + $0x70] sm:$0xff] %vm564, %v546
      %580 = vst.msk [vmem:[%s315 + $0x78] sm:$0xff] %vm564, %v547
      %581 = vst.msk [vmem:[%s315 + $0x80] sm:$0xff] %vm564, %v548
      %582 = vst.msk [vmem:[%s315 + $0x88] sm:$0xff] %vm564, %v549
      %583 = vst.msk [vmem:[%s315 + $0x90] sm:$0xff] %vm564, %v550
      %584 = vst.msk [vmem:[%s315 + $0x98] sm:$0xff] %vm564, %v551
      %585 = vst.msk [vmem:[%s315 + $0xa0] sm:$0xff] %vm564, %v552
      %586 = vst.msk [vmem:[%s315 + $0xa8] sm:$0xff] %vm564, %v553
      %587 = vst.msk [vmem:[%s315 + $0xb0] sm:$0xff] %vm564, %v554
      %588 = vst.msk [vmem:[%s315 + $0xb8] sm:$0xff] %vm564, %v555
      %589 = vst.msk [vmem:[%s315 + $0xc0] sm:$0xff] %vm564, %v556
      %590 = vst.msk [vmem:[%s315 + $0xc8] sm:$0xff] %vm564, %v557
      %591 = vst.msk [vmem:[%s315 + $0xd0] sm:$0xff] %vm564, %v558
      %592 = vst.msk [vmem:[%s315 + $0xd8] sm:$0xff] %vm564, %v559
      %593 = vst.msk [vmem:[%s315 + $0xe0] sm:$0xff] %vm564, %v560
      %594 = vst.msk [vmem:[%s315 + $0xe8] sm:$0xff] %vm564, %v561
      %595 = vst.msk [vmem:[%s315 + $0xf0] sm:$0xff] %vm564, %v562
      %596 = vst.msk [vmem:[%s315 + $0xf8] sm:$0xff] %vm564, %v563
      %v597 = vld [vmem:[%s4] sm:$0xff]
      %v598 = vld [vmem:[%s4 + $0x8] sm:$0xff]
      %v600 = vsel %vm564, %v532, 0
      %v603 = vsel %vm564, %v533, 0
      %v606 = vsel %vm564, %v534, 0
      %v609 = vsel %vm564, %v535, 0
      %v612 = vsel %vm564, %v536, 0
      %v615 = vsel %vm564, %v537, 0
      %v618 = vsel %vm564, %v538, 0
      %v621 = vsel %vm564, %v539, 0
      %v624 = vsel %vm564, %v540, 0
      %v627 = vsel %vm564, %v541, 0
      %v630 = vsel %vm564, %v542, 0
      %v633 = vsel %vm564, %v543, 0
      %v636 = vsel %vm564, %v544, 0
      %v639 = vsel %vm564, %v545, 0
      %v642 = vsel %vm564, %v546, 0
      %v645 = vsel %vm564, %v547, 0
      %v648 = vsel %vm564, %v548, 0
      %v651 = vsel %vm564, %v549, 0
      %v654 = vsel %vm564, %v550, 0
      %v657 = vsel %vm564, %v551, 0
      %v660 = vsel %vm564, %v552, 0
      %v663 = vsel %vm564, %v553, 0
      %v666 = vsel %vm564, %v554, 0
      %v669 = vsel %vm564, %v555, 0
      %v672 = vsel %vm564, %v556, 0
      %v675 = vsel %vm564, %v557, 0
      %v678 = vsel %vm564, %v558, 0
      %v681 = vsel %vm564, %v559, 0
      %v684 = vsel %vm564, %v560, 0
      %v687 = vsel %vm564, %v561, 0
      %v690 = vsel %vm564, %v562, 0
      %v693 = vsel %vm564, %v563, 0
      %695 = vmatprep.subr.mxu0 0.0
      %696 = vmatpush1.msra.mxu0 0.0
      %697 = vmatprep.subr.mxu0 0.0
      %698 = vmatpush1.msra.mxu0 0.0
      %699 = vmatprep.subr.mxu0 0.0
      %700 = vmatpush1.msra.mxu0 0.0
      %701 = vmatprep.subr.mxu0 0.0
      %702 = vmatpush1.msra.mxu0 0.0
      %703 = vmatprep.subr.mxu0 0.0
      %704 = vmatpush1.msra.mxu0 0.0
      %705 = vmatprep.subr.mxu0 0.0
      %706 = vmatpush1.msra.mxu0 0.0
      %707 = vmatprep.subr.mxu0 0.0
      %708 = vmatpush1.msra.mxu0 0.0
      %709 = vmatprep.subr.mxu0 0.0
      %710 = vmatpush1.msra.mxu0 0.0
      %711 = vmatprep.subr.mxu0 0.0
      %712 = vmatpush1.msra.mxu0 0.0
      %713 = vmatprep.subr.mxu0 0.0
      %714 = vmatpush1.msra.mxu0 0.0
      %715 = vmatprep.subr.mxu0 0.0
      %716 = vmatpush1.msra.mxu0 0.0
      %717 = vmatprep.subr.mxu0 0.0
      %718 = vmatpush1.msra.mxu0 0.0
      %719 = vmatprep.subr.mxu0 0.0
      %720 = vmatpush1.msra.mxu0 0.0
      %721 = vmatprep.subr.mxu0 0.0
      %722 = vmatpush1.msra.mxu0 0.0
      %723 = vmatprep.subr.mxu0 0.0
      %724 = vmatpush1.msra.mxu0 %v598
      %725 = vmatprep.subr.mxu0 0.0
      %726 = vmatpush1.msra.mxu0 %v597
      %727 = vmatprep.subr.mxu0 0.0
      %728 = vmatpush2.msra.mxu0 0.0
      %729 = vmatprep.subr.mxu0 0.0
      %730 = vmatpush2.msra.mxu0 0.0
      %731 = vmatprep.subr.mxu0 0.0
      %732 = vmatpush2.msra.mxu0 0.0
      %733 = vmatprep.subr.mxu0 0.0
      %734 = vmatpush2.msra.mxu0 0.0
      %735 = vmatprep.subr.mxu0 0.0
      %736 = vmatpush2.msra.mxu0 0.0
      %737 = vmatprep.subr.mxu0 0.0
      %738 = vmatpush2.msra.mxu0 0.0
      %739 = vmatprep.subr.mxu0 0.0
      %740 = vmatpush2.msra.mxu0 0.0
      %741 = vmatprep.subr.mxu0 0.0
      %742 = vmatpush2.msra.mxu0 0.0
      %743 = vmatprep.subr.mxu0 0.0
      %744 = vmatpush2.msra.mxu0 0.0
      %745 = vmatprep.subr.mxu0 0.0
      %746 = vmatpush2.msra.mxu0 0.0
      %747 = vmatprep.subr.mxu0 0.0
      %748 = vmatpush2.msra.mxu0 0.0
      %749 = vmatprep.subr.mxu0 0.0
      %750 = vmatpush2.msra.mxu0 0.0
      %751 = vmatprep.subr.mxu0 0.0
      %752 = vmatpush2.msra.mxu0 0.0
      %753 = vmatprep.subr.mxu0 0.0
      %754 = vmatpush2.msra.mxu0 0.0
      %755 = vmatprep.subr.mxu0 0.0
      %756 = vmatpush2.msra.mxu0 0.0
      %757 = vmatprep.subr.mxu0 0.0
      %758 = vmatpush2.msra.mxu0 0.0
      %759 = vmatprep.mubr.f32.mxu0 0.0
      %760 = vmatmul.mubr.f32.gmra.mxu0 %v600
      %v761 = vpop.f32.mrf.mxu0
      %v762 = vadd.f32 0.0, %v761
      %v763 = vpop.f32.mrf.mxu0
      %764 = vmatprep.mubr.f32.mxu0 0.0
      %765 = vmatmul.mubr.f32.gmra.mxu0 %v603
      %v766 = vpop.f32.mrf.mxu0
      %v767 = vadd.f32 0.0, %v766
      %v768 = vpop.f32.mrf.mxu0
      %769 = vmatprep.mubr.f32.mxu0 0.0
      %770 = vmatmul.mubr.f32.gmra.mxu0 %v606
      %v771 = vpop.f32.mrf.mxu0
      %v772 = vadd.f32 0.0, %v771
      %v773 = vpop.f32.mrf.mxu0
      %774 = vmatprep.mubr.f32.mxu0 0.0
      %775 = vmatmul.mubr.f32.gmra.mxu0 %v609
      %v776 = vpop.f32.mrf.mxu0
      %v777 = vadd.f32 0.0, %v776
      %v778 = vpop.f32.mrf.mxu0
      %779 = vmatprep.mubr.f32.mxu0 0.0
      %780 = vmatmul.mubr.f32.gmra.mxu0 %v612
      %v781 = vpop.f32.mrf.mxu0
      %v782 = vadd.f32 0.0, %v781
      %v783 = vpop.f32.mrf.mxu0
      %784 = vmatprep.mubr.f32.mxu0 0.0
      %785 = vmatmul.mubr.f32.gmra.mxu0 %v615
      %v786 = vpop.f32.mrf.mxu0
      %v787 = vadd.f32 0.0, %v786
      %v788 = vpop.f32.mrf.mxu0
      %789 = vmatprep.mubr.f32.mxu0 0.0
      %790 = vmatmul.mubr.f32.gmra.mxu0 %v618
      %v791 = vpop.f32.mrf.mxu0
      %v792 = vadd.f32 0.0, %v791
      %v793 = vpop.f32.mrf.mxu0
      %794 = vmatprep.mubr.f32.mxu0 0.0
      %795 = vmatmul.mubr.f32.gmra.mxu0 %v621
      %v796 = vpop.f32.mrf.mxu0
      %v797 = vadd.f32 0.0, %v796
      %v798 = vpop.f32.mrf.mxu0
      %799 = vmatprep.mubr.f32.mxu0 0.0
      %800 = vmatmul.mubr.f32.gmra.mxu0 %v624
      %v801 = vpop.f32.mrf.mxu0
      %v802 = vadd.f32 0.0, %v801
      %v803 = vpop.f32.mrf.mxu0
      %804 = vmatprep.mubr.f32.mxu0 0.0
      %805 = vmatmul.mubr.f32.gmra.mxu0 %v627
      %v806 = vpop.f32.mrf.mxu0
      %v807 = vadd.f32 0.0, %v806
      %v808 = vpop.f32.mrf.mxu0
      %809 = vmatprep.mubr.f32.mxu0 0.0
      %810 = vmatmul.mubr.f32.gmra.mxu0 %v630
      %v811 = vpop.f32.mrf.mxu0
      %v812 = vadd.f32 0.0, %v811
      %v813 = vpop.f32.mrf.mxu0
      %814 = vmatprep.mubr.f32.mxu0 0.0
      %815 = vmatmul.mubr.f32.gmra.mxu0 %v633
      %v816 = vpop.f32.mrf.mxu0
      %v817 = vadd.f32 0.0, %v816
      %v818 = vpop.f32.mrf.mxu0
      %819 = vmatprep.mubr.f32.mxu0 0.0
      %820 = vmatmul.mubr.f32.gmra.mxu0 %v636
      %v821 = vpop.f32.mrf.mxu0
      %v822 = vadd.f32 0.0, %v821
      %v823 = vpop.f32.mrf.mxu0
      %824 = vmatprep.mubr.f32.mxu0 0.0
      %825 = vmatmul.mubr.f32.gmra.mxu0 %v639
      %v826 = vpop.f32.mrf.mxu0
      %v827 = vadd.f32 0.0, %v826
      %v828 = vpop.f32.mrf.mxu0
      %829 = vmatprep.mubr.f32.mxu0 0.0
      %830 = vmatmul.mubr.f32.gmra.mxu0 %v642
      %v831 = vpop.f32.mrf.mxu0
      %v832 = vadd.f32 0.0, %v831
      %v833 = vpop.f32.mrf.mxu0
      %834 = vmatprep.mubr.f32.mxu0 0.0
      %835 = vmatmul.mubr.f32.gmra.mxu0 %v645
      %v836 = vpop.f32.mrf.mxu0
      %v837 = vadd.f32 0.0, %v836
      %v838 = vpop.f32.mrf.mxu0
      %839 = vmatprep.mubr.f32.mxu0 0.0
      %840 = vmatmul.mubr.f32.gmra.mxu0 %v648
      %v841 = vpop.f32.mrf.mxu0
      %v842 = vadd.f32 0.0, %v841
      %v843 = vpop.f32.mrf.mxu0
      %844 = vmatprep.mubr.f32.mxu0 0.0
      %845 = vmatmul.mubr.f32.gmra.mxu0 %v651
      %v846 = vpop.f32.mrf.mxu0
      %v847 = vadd.f32 0.0, %v846
      %v848 = vpop.f32.mrf.mxu0
      %849 = vmatprep.mubr.f32.mxu0 0.0
      %850 = vmatmul.mubr.f32.gmra.mxu0 %v654
      %v851 = vpop.f32.mrf.mxu0
      %v852 = vadd.f32 0.0, %v851
      %v853 = vpop.f32.mrf.mxu0
      %854 = vmatprep.mubr.f32.mxu0 0.0
      %855 = vmatmul.mubr.f32.gmra.mxu0 %v657
      %v856 = vpop.f32.mrf.mxu0
      %v857 = vadd.f32 0.0, %v856
      %v858 = vpop.f32.mrf.mxu0
      %859 = vmatprep.mubr.f32.mxu0 0.0
      %860 = vmatmul.mubr.f32.gmra.mxu0 %v660
      %v861 = vpop.f32.mrf.mxu0
      %v862 = vadd.f32 0.0, %v861
      %v863 = vpop.f32.mrf.mxu0
      %864 = vmatprep.mubr.f32.mxu0 0.0
      %865 = vmatmul.mubr.f32.gmra.mxu0 %v663
      %v866 = vpop.f32.mrf.mxu0
      %v867 = vadd.f32 0.0, %v866
      %v868 = vpop.f32.mrf.mxu0
      %869 = vmatprep.mubr.f32.mxu0 0.0
      %870 = vmatmul.mubr.f32.gmra.mxu0 %v666
      %v871 = vpop.f32.mrf.mxu0
      %v872 = vadd.f32 0.0, %v871
      %v873 = vpop.f32.mrf.mxu0
      %874 = vmatprep.mubr.f32.mxu0 0.0
      %875 = vmatmul.mubr.f32.gmra.mxu0 %v669
      %v876 = vpop.f32.mrf.mxu0
      %v877 = vadd.f32 0.0, %v876
      %v878 = vpop.f32.mrf.mxu0
      %879 = vmatprep.mubr.f32.mxu0 0.0
      %880 = vmatmul.mubr.f32.gmra.mxu0 %v672
      %v881 = vpop.f32.mrf.mxu0
      %v882 = vadd.f32 0.0, %v881
      %v883 = vpop.f32.mrf.mxu0
      %884 = vmatprep.mubr.f32.mxu0 0.0
      %885 = vmatmul.mubr.f32.gmra.mxu0 %v675
      %v886 = vpop.f32.mrf.mxu0
      %v887 = vadd.f32 0.0, %v886
      %v888 = vpop.f32.mrf.mxu0
      %889 = vmatprep.mubr.f32.mxu0 0.0
      %890 = vmatmul.mubr.f32.gmra.mxu0 %v678
      %v891 = vpop.f32.mrf.mxu0
      %v892 = vadd.f32 0.0, %v891
      %v893 = vpop.f32.mrf.mxu0
      %894 = vmatprep.mubr.f32.mxu0 0.0
      %895 = vmatmul.mubr.f32.gmra.mxu0 %v681
      %v896 = vpop.f32.mrf.mxu0
      %v897 = vadd.f32 0.0, %v896
      %v898 = vpop.f32.mrf.mxu0
      %899 = vmatprep.mubr.f32.mxu0 0.0
      %900 = vmatmul.mubr.f32.gmra.mxu0 %v684
      %v901 = vpop.f32.mrf.mxu0
      %v902 = vadd.f32 0.0, %v901
      %v903 = vpop.f32.mrf.mxu0
      %904 = vmatprep.mubr.f32.mxu0 0.0
      %905 = vmatmul.mubr.f32.gmra.mxu0 %v687
      %v906 = vpop.f32.mrf.mxu0
      %v907 = vadd.f32 0.0, %v906
      %v908 = vpop.f32.mrf.mxu0
      %909 = vmatprep.mubr.f32.mxu0 0.0
      %910 = vmatmul.mubr.f32.gmra.mxu0 %v690
      %v911 = vpop.f32.mrf.mxu0
      %v912 = vadd.f32 0.0, %v911
      %v913 = vpop.f32.mrf.mxu0
      %914 = vmatprep.mubr.f32.mxu0 0.0
      %915 = vmatmul.mubr.f32.gmra.mxu0 %v693
      %v916 = vpop.f32.mrf.mxu0
      %v917 = vadd.f32 0.0, %v916
      %v918 = vpop.f32.mrf.mxu0
      %919 = vdwg.mxu0
      %vm920 = vcmask 64512
      %921 = vst.msk [vmem:[%s321] sm:$0xff] %vm920, %v762
      %922 = vst.msk [vmem:[%s321 + $0x8] sm:$0xff] %vm920, %v767
      %923 = vst.msk [vmem:[%s321 + $0x10] sm:$0xff] %vm920, %v772
      %924 = vst.msk [vmem:[%s321 + $0x18] sm:$0xff] %vm920, %v777
      %925 = vst.msk [vmem:[%s321 + $0x20] sm:$0xff] %vm920, %v782
      %926 = vst.msk [vmem:[%s321 + $0x28] sm:$0xff] %vm920, %v787
      %927 = vst.msk [vmem:[%s321 + $0x30] sm:$0xff] %vm920, %v792
      %928 = vst.msk [vmem:[%s321 + $0x38] sm:$0xff] %vm920, %v797
      %929 = vst.msk [vmem:[%s321 + $0x40] sm:$0xff] %vm920, %v802
      %930 = vst.msk [vmem:[%s321 + $0x48] sm:$0xff] %vm920, %v807
      %931 = vst.msk [vmem:[%s321 + $0x50] sm:$0xff] %vm920, %v812
      %932 = vst.msk [vmem:[%s321 + $0x58] sm:$0xff] %vm920, %v817
      %933 = vst.msk [vmem:[%s321 + $0x60] sm:$0xff] %vm920, %v822
      %934 = vst.msk [vmem:[%s321 + $0x68] sm:$0xff] %vm920, %v827
      %935 = vst.msk [vmem:[%s321 + $0x70] sm:$0xff] %vm920, %v832
      %936 = vst.msk [vmem:[%s321 + $0x78] sm:$0xff] %vm920, %v837
      %937 = vst.msk [vmem:[%s321 + $0x80] sm:$0xff] %vm920, %v842
      %938 = vst.msk [vmem:[%s321 + $0x88] sm:$0xff] %vm920, %v847
      %939 = vst.msk [vmem:[%s321 + $0x90] sm:$0xff] %vm920, %v852
      %940 = vst.msk [vmem:[%s321 + $0x98] sm:$0xff] %vm920, %v857
      %941 = vst.msk [vmem:[%s321 + $0xa0] sm:$0xff] %vm920, %v862
      %942 = vst.msk [vmem:[%s321 + $0xa8] sm:$0xff] %vm920, %v867
      %943 = vst.msk [vmem:[%s321 + $0xb0] sm:$0xff] %vm920, %v872
      %944 = vst.msk [vmem:[%s321 + $0xb8] sm:$0xff] %vm920, %v877
      %945 = vst.msk [vmem:[%s321 + $0xc0] sm:$0xff] %vm920, %v882
      %946 = vst.msk [vmem:[%s321 + $0xc8] sm:$0xff] %vm920, %v887
      %947 = vst.msk [vmem:[%s321 + $0xd0] sm:$0xff] %vm920, %v892
      %948 = vst.msk [vmem:[%s321 + $0xd8] sm:$0xff] %vm920, %v897
      %949 = vst.msk [vmem:[%s321 + $0xe0] sm:$0xff] %vm920, %v902
      %950 = vst.msk [vmem:[%s321 + $0xe8] sm:$0xff] %vm920, %v907
      %951 = vst.msk [vmem:[%s321 + $0xf0] sm:$0xff] %vm920, %v912
      %952 = vst.msk [vmem:[%s321 + $0xf8] sm:$0xff] %vm920, %v917
      %v953 = vsel %vm920, %v762, 0.0
      %v954 = vsel %vm920, %v767, 0.0
      %v955 = vadd.f32 %v953, %v954
      %v956 = vsel %vm920, %v772, 0.0
      %v957 = vadd.f32 %v955, %v956
      %v958 = vsel %vm920, %v777, 0.0
      %v959 = vadd.f32 %v957, %v958
      %v960 = vsel %vm920, %v782, 0.0
      %v961 = vadd.f32 %v959, %v960
      %v962 = vsel %vm920, %v787, 0.0
      %v963 = vadd.f32 %v961, %v962
      %v964 = vsel %vm920, %v792, 0.0
      %v965 = vadd.f32 %v963, %v964
      %v966 = vsel %vm920, %v797, 0.0
      %v967 = vadd.f32 %v965, %v966
      %v968 = vsel %vm920, %v802, 0.0
      %v969 = vadd.f32 %v967, %v968
      %v970 = vsel %vm920, %v807, 0.0
      %v971 = vadd.f32 %v969, %v970
      %v972 = vsel %vm920, %v812, 0.0
      %v973 = vadd.f32 %v971, %v972
      %v974 = vsel %vm920, %v817, 0.0
      %v975 = vadd.f32 %v973, %v974
      %v976 = vsel %vm920, %v822, 0.0
      %v977 = vadd.f32 %v975, %v976
      %v978 = vsel %vm920, %v827, 0.0
      %v979 = vadd.f32 %v977, %v978
      %v980 = vsel %vm920, %v832, 0.0
      %v981 = vadd.f32 %v979, %v980
      %v982 = vsel %vm920, %v837, 0.0
      %v983 = vadd.f32 %v981, %v982
      %v984 = vsel %vm920, %v842, 0.0
      %v985 = vadd.f32 %v983, %v984
      %v986 = vsel %vm920, %v847, 0.0
      %v987 = vadd.f32 %v985, %v986
      %v988 = vsel %vm920, %v852, 0.0
      %v989 = vadd.f32 %v987, %v988
      %v990 = vsel %vm920, %v857, 0.0
      %v991 = vadd.f32 %v989, %v990
      %v992 = vsel %vm920, %v862, 0.0
      %v993 = vadd.f32 %v991, %v992
      %v994 = vsel %vm920, %v867, 0.0
      %v995 = vadd.f32 %v993, %v994
      %v996 = vsel %vm920, %v872, 0.0
      %v997 = vadd.f32 %v995, %v996
      %v998 = vsel %vm920, %v877, 0.0
      %v999 = vadd.f32 %v997, %v998
      %v1000 = vsel %vm920, %v882, 0.0
      %v1001 = vadd.f32 %v999, %v1000
      %v1002 = vsel %vm920, %v887, 0.0
      %v1003 = vadd.f32 %v1001, %v1002
      %v1004 = vsel %vm920, %v892, 0.0
      %v1005 = vadd.f32 %v1003, %v1004
      %v1006 = vsel %vm920, %v897, 0.0
      %v1007 = vadd.f32 %v1005, %v1006
      %v1008 = vsel %vm920, %v902, 0.0
      %v1009 = vadd.f32 %v1007, %v1008
      %v1010 = vsel %vm920, %v907, 0.0
      %v1011 = vadd.f32 %v1009, %v1010
      %v1012 = vsel %vm920, %v912, 0.0
      %v1013 = vadd.f32 %v1011, %v1012
      %v1014 = vsel %vm920, %v917, 0.0
      %v1015 = vadd.f32 %v1013, %v1014
      %v1016 = vrot.slane %v1015, 4
      %v1017 = vadd.f32 %v1015, %v1016
      %v1018 = vrot.slane %v1017, 2
      %v1019 = vadd.f32 %v1017, %v1018
      %v1020 = vrot.slane %v1019, 1
      %v1021 = vadd.f32 %v1019, %v1020
      %v1022 = vrcp.pop 256.0
      %v1023 = vmul.f32 %v1021, %v1022
      %v1024 = vsub.f32 %v762, %v1023
      %v1025 = vsub.f32 %v767, %v1023
      %v1026 = vsub.f32 %v772, %v1023
      %v1027 = vsub.f32 %v777, %v1023
      %v1028 = vsub.f32 %v782, %v1023
      %v1029 = vsub.f32 %v787, %v1023
      %v1030 = vsub.f32 %v792, %v1023
      %v1031 = vsub.f32 %v797, %v1023
      %v1032 = vsub.f32 %v802, %v1023
      %v1033 = vsub.f32 %v807, %v1023
      %v1034 = vsub.f32 %v812, %v1023
      %v1035 = vsub.f32 %v817, %v1023
      %v1036 = vsub.f32 %v822, %v1023
      %v1037 = vsub.f32 %v827, %v1023
      %v1038 = vsub.f32 %v832, %v1023
      %v1039 = vsub.f32 %v837, %v1023
      %v1040 = vsub.f32 %v842, %v1023
      %v1041 = vsub.f32 %v847, %v1023
      %v1042 = vsub.f32 %v852, %v1023
      %v1043 = vsub.f32 %v857, %v1023
      %v1044 = vsub.f32 %v862, %v1023
      %v1045 = vsub.f32 %v867, %v1023
      %v1046 = vsub.f32 %v872, %v1023
      %v1047 = vsub.f32 %v877, %v1023
      %v1048 = vsub.f32 %v882, %v1023
      %v1049 = vsub.f32 %v887, %v1023
      %v1050 = vsub.f32 %v892, %v1023
      %v1051 = vsub.f32 %v897, %v1023
      %v1052 = vsub.f32 %v902, %v1023
      %v1053 = vsub.f32 %v907, %v1023
      %v1054 = vsub.f32 %v912, %v1023
      %v1055 = vsub.f32 %v917, %v1023
      %v1056 = vmul.f32 %v1024, %v1024
      %v1057 = vmul.f32 %v1025, %v1025
      %v1058 = vmul.f32 %v1026, %v1026
      %v1059 = vmul.f32 %v1027, %v1027
      %v1060 = vmul.f32 %v1028, %v1028
      %v1061 = vmul.f32 %v1029, %v1029
      %v1062 = vmul.f32 %v1030, %v1030
      %v1063 = vmul.f32 %v1031, %v1031
      %v1064 = vmul.f32 %v1032, %v1032
      %v1065 = vmul.f32 %v1033, %v1033
      %v1066 = vmul.f32 %v1034, %v1034
      %v1067 = vmul.f32 %v1035, %v1035
      %v1068 = vmul.f32 %v1036, %v1036
      %v1069 = vmul.f32 %v1037, %v1037
      %v1070 = vmul.f32 %v1038, %v1038
      %v1071 = vmul.f32 %v1039, %v1039
      %v1072 = vmul.f32 %v1040, %v1040
      %v1073 = vmul.f32 %v1041, %v1041
      %v1074 = vmul.f32 %v1042, %v1042
      %v1075 = vmul.f32 %v1043, %v1043
      %v1076 = vmul.f32 %v1044, %v1044
      %v1077 = vmul.f32 %v1045, %v1045
      %v1078 = vmul.f32 %v1046, %v1046
      %v1079 = vmul.f32 %v1047, %v1047
      %v1080 = vmul.f32 %v1048, %v1048
      %v1081 = vmul.f32 %v1049, %v1049
      %v1082 = vmul.f32 %v1050, %v1050
      %v1083 = vmul.f32 %v1051, %v1051
      %v1084 = vmul.f32 %v1052, %v1052
      %v1085 = vmul.f32 %v1053, %v1053
      %v1086 = vmul.f32 %v1054, %v1054
      %v1087 = vmul.f32 %v1055, %v1055
      %v1088 = vsel %vm920, %v1056, 0.0
      %v1089 = vsel %vm920, %v1057, 0.0
      %v1090 = vadd.f32 %v1088, %v1089
      %v1091 = vsel %vm920, %v1058, 0.0
      %v1092 = vadd.f32 %v1090, %v1091
      %v1093 = vsel %vm920, %v1059, 0.0
      %v1094 = vadd.f32 %v1092, %v1093
      %v1095 = vsel %vm920, %v1060, 0.0
      %v1096 = vadd.f32 %v1094, %v1095
      %v1097 = vsel %vm920, %v1061, 0.0
      %v1098 = vadd.f32 %v1096, %v1097
      %v1099 = vsel %vm920, %v1062, 0.0
      %v1100 = vadd.f32 %v1098, %v1099
      %v1101 = vsel %vm920, %v1063, 0.0
      %v1102 = vadd.f32 %v1100, %v1101
      %v1103 = vsel %vm920, %v1064, 0.0
      %v1104 = vadd.f32 %v1102, %v1103
      %v1105 = vsel %vm920, %v1065, 0.0
      %v1106 = vadd.f32 %v1104, %v1105
      %v1107 = vsel %vm920, %v1066, 0.0
      %v1108 = vadd.f32 %v1106, %v1107
      %v1109 = vsel %vm920, %v1067, 0.0
      %v1110 = vadd.f32 %v1108, %v1109
      %v1111 = vsel %vm920, %v1068, 0.0
      %v1112 = vadd.f32 %v1110, %v1111
      %v1113 = vsel %vm920, %v1069, 0.0
      %v1114 = vadd.f32 %v1112, %v1113
      %v1115 = vsel %vm920, %v1070, 0.0
      %v1116 = vadd.f32 %v1114, %v1115
      %v1117 = vsel %vm920, %v1071, 0.0
      %v1118 = vadd.f32 %v1116, %v1117
      %v1119 = vsel %vm920, %v1072, 0.0
      %v1120 = vadd.f32 %v1118, %v1119
      %v1121 = vsel %vm920, %v1073, 0.0
      %v1122 = vadd.f32 %v1120, %v1121
      %v1123 = vsel %vm920, %v1074, 0.0
      %v1124 = vadd.f32 %v1122, %v1123
      %v1125 = vsel %vm920, %v1075, 0.0
      %v1126 = vadd.f32 %v1124, %v1125
      %v1127 = vsel %vm920, %v1076, 0.0
      %v1128 = vadd.f32 %v1126, %v1127
      %v1129 = vsel %vm920, %v1077, 0.0
      %v1130 = vadd.f32 %v1128, %v1129
      %v1131 = vsel %vm920, %v1078, 0.0
      %v1132 = vadd.f32 %v1130, %v1131
      %v1133 = vsel %vm920, %v1079, 0.0
      %v1134 = vadd.f32 %v1132, %v1133
      %v1135 = vsel %vm920, %v1080, 0.0
      %v1136 = vadd.f32 %v1134, %v1135
      %v1137 = vsel %vm920, %v1081, 0.0
      %v1138 = vadd.f32 %v1136, %v1137
      %v1139 = vsel %vm920, %v1082, 0.0
      %v1140 = vadd.f32 %v1138, %v1139
      %v1141 = vsel %vm920, %v1083, 0.0
      %v1142 = vadd.f32 %v1140, %v1141
      %v1143 = vsel %vm920, %v1084, 0.0
      %v1144 = vadd.f32 %v1142, %v1143
      %v1145 = vsel %vm920, %v1085, 0.0
      %v1146 = vadd.f32 %v1144, %v1145
      %v1147 = vsel %vm920, %v1086, 0.0
      %v1148 = vadd.f32 %v1146, %v1147
      %v1149 = vsel %vm920, %v1087, 0.0
      %v1150 = vadd.f32 %v1148, %v1149
      %v1151 = vrot.slane %v1150, 4
      %v1152 = vadd.f32 %v1150, %v1151
      %v1153 = vrot.slane %v1152, 2
      %v1154 = vadd.f32 %v1152, %v1153
      %v1155 = vrot.slane %v1154, 1
      %v1156 = vadd.f32 %v1154, %v1155
      %1158 = vrot.lane.b32.xlu0 %v1156, 8
      %v1159 = vpop.permute.xlu0 %1158
      %v1161 = vsel %vm920, %v1021, %v1159
      %vm1162 = vcmask 122880
      %1163 = vst.msk [vmem:[%s325] sm:$0x1] %vm1162, %v1161
      %s1164 = smul.u32 32, %s19
      %p1165 = scmp.lt.s32.totalorder %s1164, 63
      %s1166 = scalar_select %p1165, %s1164, 63
      %s1167 = smul.addr %s1166, 8
      %s1168 = scalar_lea.vmem %s5, %s1167
      %s1169 = smul.u32 32, %s19
      %p1170 = scmp.lt.s32.totalorder %s1169, 63
      %s1171 = scalar_select %p1170, %s1169, 63
      %s1172 = smul.addr %s1171, 8
      %s1173 = scalar_lea.vmem %s6, %s1172
      %p1174 = scmp.lt.s32.totalorder %s19, 1
      %s1175 = scalar_select %p1174, %s19, 1
      %s1176 = scalar_lea.vmem %s7, %s1175
      // Predicated region
      $region41: #{residual_block_forward.7} parent=39 // pred_check
        %p1177 = pneg %p152
      $region42: #{residual_block_forward.7} parent=39 // pred_check_branch
        %1179 = sbr.rel (%p1177) target = $region44
      $region43: #{residual_block_forward.7} parent=39 // pred_region
        %s1180 = smul.u32 32, %s19
      $region44: #{residual_block_forward.7} parent=39 // pred_fallthru
        _
      // Predicated region
      $region45: #{residual_block_forward.7} parent=39 // pred_check
        %p1181 = pneg %p178
      $region46: #{residual_block_forward.7} parent=39 // pred_check_branch
        %1183 = sbr.rel (%p1181) target = $region48
      $region47: #{residual_block_forward.7} parent=39 // pred_region
        %s1184 = smul.u32 32, %s19
      $region48: #{residual_block_forward.7} parent=39 // pred_fallthru
        _
      // Predicated region
      $region49: #{residual_block_forward.7} parent=39 // pred_check
        %p1185 = pneg %p204
      $region50: #{residual_block_forward.7} parent=39 // pred_check_branch
        %1187 = sbr.rel (%p1185) target = $region52
      $region51: #{residual_block_forward.7} parent=39 // pred_region
        _
      $region52: #{residual_block_forward.7} parent=39 // pred_fallthru
        _
    $region40: #{residual_block_forward.7} parent=5 // pred_fallthru
      _
    %p1188 = scmp.le.s32.totalorder 2, %s14
    // Predicated region
    $region53: #{residual_block_forward.7} parent=5 // pred_check
      %p1189 = pneg %p1188
    $region54: #{residual_block_forward.7} parent=5 // pred_check_branch
      %1191 = sbr.rel (%p1189) target = $region56
    $region55: #{residual_block_forward.7} parent=5 // pred_region
      %s1192 = ssub.s32 %s14, 2
      // Predicated region
      $region57: #{residual_block_forward.7} parent=55 // pred_check
        %p1193 = pneg %p158
      $region58: #{residual_block_forward.7} parent=55 // pred_check_branch
        %1195 = sbr.rel (%p1193) target = $region60
      $region59: #{residual_block_forward.7} parent=55 // pred_region
        %s1196 = smul.u32 32, %s20
        %p1197 = scmp.lt.s32.totalorder %s1196, 63
        %s1198 = scalar_select %p1197, %s1196, 63
        %s1199 = smul.addr %s1198, 8
        %s1200 = scalar_lea.vmem %s5, %s1199
      $region60: #{residual_block_forward.7} parent=55 // pred_fallthru
        _
      // Predicated region
      $region61: #{residual_block_forward.7} parent=55 // pred_check
        %p1201 = pneg %p184
      $region62: #{residual_block_forward.7} parent=55 // pred_check_branch
        %1203 = sbr.rel (%p1201) target = $region64
      $region63: #{residual_block_forward.7} parent=55 // pred_region
        %s1204 = smul.u32 32, %s20
        %p1205 = scmp.lt.s32.totalorder %s1204, 63
        %s1206 = scalar_select %p1205, %s1204, 63
        %s1207 = smul.addr %s1206, 8
        %s1208 = scalar_lea.vmem %s6, %s1207
      $region64: #{residual_block_forward.7} parent=55 // pred_fallthru
        _
      // Predicated region
      $region65: #{residual_block_forward.7} parent=55 // pred_check
        %p1209 = pneg %p210
      $region66: #{residual_block_forward.7} parent=55 // pred_check_branch
        %1211 = sbr.rel (%p1209) target = $region68
      $region67: #{residual_block_forward.7} parent=55 // pred_region
        %p1212 = scmp.lt.s32.totalorder %s20, 1
        %s1213 = scalar_select %p1212, %s20, 1
        %s1214 = scalar_lea.vmem %s7, %s1213
      $region68: #{residual_block_forward.7} parent=55 // pred_fallthru
        _
    $region56: #{residual_block_forward.7} parent=5 // pred_fallthru
      _
  $region6: #{residual_block_forward.7} parent=0 // loop_footer
    %s18 = sadd.s32 1, %s14
  $region7: #{residual_block_forward.7} parent=0 // loop_footer_branch
    %13 = sbr.rel target = $region3
  $region8: #{residual_block_forward.7} parent=0 // loop_exit
    _

// kernel: residual_block_forward.9
$region0: #{residual_block_forward.9}
  #allocation0 [shape = 'u32[]', space=smem, size = 0x4, offset = 0x4, fixed_abs, tag = 'smem constant byte address 0x4 - core index']
  #allocation1 [shape = 'u32[144,128]{1,0:T(1,128)}', space=vmem, size = 0x12000, scoped, tag = 'internal scratch']
  %s0 = inlined_call_operand.vmem [shape: f32[512,16], index: 0, kind: input, shape index: {}]
  %s1 = inlined_call_operand.vmem [shape: f32[512,16], index: 1, kind: input, shape index: {}, may-alias: {1,4}]
  %s2 = inlined_call_operand.vmem [shape: f32[1,16], index: 2, kind: input, shape index: {}]
  %s3 = inlined_call_operand.vmem [shape: f32[1,16], index: 3, kind: input, shape index: {}]
  %s4 = inlined_call_operand.vmem [shape: f32[512,16], index: 4, kind: output, shape index: {}, may-alias: {1,4}]
  %s5 = sld [smem:[#allocation0]]
  $region49: #{residual_block_forward.9} parent=0
    _
  %s7 = ssub.s32 1, %s5
  %s8 = scalar_select 0, %s7, %s5
  loop: start=0, step=1, limit=4
  $region2: #{residual_block_forward.9} parent=0 // loop_pre_header
    _
  $region3: #{residual_block_forward.9} parent=0 // loop_header
    %s10 = sphi 0, %s14
    %p11 = scmp.ge.s32.totalorder %s10, 4
    %s20 = sphi 0, %s22
    %s23 = sphi 0, %s20
    %s24 = sphi 0, %s23
    %s40 = sphi 0, %s24
    %s46 = sphi 0, %s48
    %s49 = sphi 0, %s46
    %s50 = sphi 0, %s49
    %s66 = sphi 0, %s50
    %s70 = sphi 0, %s70
    %s72 = sphi 0, %s70
    %s73 = sphi 0, %s72
    %s87 = sphi 0, %s73
    %s91 = sphi 0, %s91
    %s93 = sphi 0, %s91
    %s94 = sphi 0, %s93
    %s108 = sphi 0, %s94
    %s114 = sphi 0, %s116
    %s117 = sphi 0, %s114
    %s118 = sphi 0, %s117
    %s134 = sphi 0, %s118
  $region4: #{residual_block_forward.9} parent=0 // loop_header_branch
    %13 = sbr.rel (%p11) target = $region8
  $region5: #{residual_block_forward.9} parent=0 // loop_body
    %s15 = ssub.s32 %s10, 1
    %s16 = ssub.s32 %s10, 2
    %s17 = sadd.s32 %s10, 1
    %s18 = ssub.s32 %s10, %s17
    %p19 = scmp.eq.s32.totalorder %s18, 0
    %s21 = sadd.s32 %s20, 1
    %s22 = scalar_select %p19, %s20, %s21
    %p25 = pneg %p19
    %p26 = scmp.eq.s32.totalorder %s10, 1
    %p27 = por %p25, %p26
    %p28 = scmp.ne.s32.totalorder %s20, %s23
    %p29 = scmp.eq.s32.totalorder %s10, 0
    %p30 = por %p28, %p29
    %p31 = scmp.ne.s32.totalorder %s20, %s23
    %p32 = scmp.eq.s32.totalorder %s15, 1
    %p33 = por %p31, %p32
    %p34 = scmp.ne.s32.totalorder %s23, %s24
    %p35 = scmp.eq.s32.totalorder %s15, 0
    %p36 = por %p34, %p35
    %p37 = scmp.ne.s32.totalorder %s23, %s24
    %p38 = scmp.eq.s32.totalorder %s16, 1
    %p39 = por %p37, %p38
    %p41 = scmp.ne.s32.totalorder %s24, %s40
    %p42 = scmp.eq.s32.totalorder %s16, 0
    %p43 = por %p41, %p42
    %s44 = ssub.s32 %s10, %s17
    %p45 = scmp.eq.s32.totalorder %s44, 0
    %s47 = sadd.s32 %s46, 1
    %s48 = scalar_select %p45, %s46, %s47
    %p51 = pneg %p45
    %p52 = scmp.eq.s32.totalorder %s10, 1
    %p53 = por %p51, %p52
    %p54 = scmp.ne.s32.totalorder %s46, %s49
    %p55 = scmp.eq.s32.totalorder %s10, 0
    %p56 = por %p54, %p55
    %p57 = scmp.ne.s32.totalorder %s46, %s49
    %p58 = scmp.eq.s32.totalorder %s15, 1
    %p59 = por %p57, %p58
    %p60 = scmp.ne.s32.totalorder %s49, %s50
    %p61 = scmp.eq.s32.totalorder %s15, 0
    %p62 = por %p60, %p61
    %p63 = scmp.ne.s32.totalorder %s49, %s50
    %p64 = scmp.eq.s32.totalorder %s16, 1
    %p65 = por %p63, %p64
    %p67 = scmp.ne.s32.totalorder %s50, %s66
    %p68 = scmp.eq.s32.totalorder %s16, 0
    %p69 = por %p67, %p68
    %s71 = sadd.s32 %s70, 1
    %p74 = scmp.eq.s32.totalorder %s10, 1
    %p75 = scmp.ne.s32.totalorder %s70, %s72
    %p76 = scmp.eq.s32.totalorder %s10, 0
    %p77 = por %p75, %p76
    %p78 = scmp.ne.s32.totalorder %s70, %s72
    %p79 = scmp.eq.s32.totalorder %s15, 1
    %p80 = por %p78, %p79
    %p81 = scmp.ne.s32.totalorder %s72, %s73
    %p82 = scmp.eq.s32.totalorder %s15, 0
    %p83 = por %p81, %p82
    %p84 = scmp.ne.s32.totalorder %s72, %s73
    %p85 = scmp.eq.s32.totalorder %s16, 1
    %p86 = por %p84, %p85
    %p88 = scmp.ne.s32.totalorder %s73, %s87
    %p89 = scmp.eq.s32.totalorder %s16, 0
    %p90 = por %p88, %p89
    %s92 = sadd.s32 %s91, 1
    %p95 = scmp.eq.s32.totalorder %s10, 1
    %p96 = scmp.ne.s32.totalorder %s91, %s93
    %p97 = scmp.eq.s32.totalorder %s10, 0
    %p98 = por %p96, %p97
    %p99 = scmp.ne.s32.totalorder %s91, %s93
    %p100 = scmp.eq.s32.totalorder %s15, 1
    %p101 = por %p99, %p100
    %p102 = scmp.ne.s32.totalorder %s93, %s94
    %p103 = scmp.eq.s32.totalorder %s15, 0
    %p104 = por %p102, %p103
    %p105 = scmp.ne.s32.totalorder %s93, %s94
    %p106 = scmp.eq.s32.totalorder %s16, 1
    %p107 = por %p105, %p106
    %p109 = scmp.ne.s32.totalorder %s94, %s108
    %p110 = scmp.eq.s32.totalorder %s16, 0
    %p111 = por %p109, %p110
    %s112 = ssub.s32 %s10, %s17
    %p113 = scmp.eq.s32.totalorder %s112, 0
    %s115 = sadd.s32 %s114, 1
    %s116 = scalar_select %p113, %s114, %s115
    %p119 = pneg %p113
    %p120 = scmp.eq.s32.totalorder %s10, 1
    %p121 = por %p119, %p120
    %p122 = scmp.ne.s32.totalorder %s114, %s117
    %p123 = scmp.eq.s32.totalorder %s10, 0
    %p124 = por %p122, %p123
    %p125 = scmp.ne.s32.totalorder %s114, %s117
    %p126 = scmp.eq.s32.totalorder %s15, 1
    %p127 = por %p125, %p126
    %p128 = scmp.ne.s32.totalorder %s117, %s118
    %p129 = scmp.eq.s32.totalorder %s15, 0
    %p130 = por %p128, %p129
    %p131 = scmp.ne.s32.totalorder %s117, %s118
    %p132 = scmp.eq.s32.totalorder %s16, 1
    %p133 = por %p131, %p132
    %p135 = scmp.ne.s32.totalorder %s118, %s134
    %p136 = scmp.eq.s32.totalorder %s16, 0
    %p137 = por %p135, %p136
    %p138 = scmp.le.s32.totalorder 1, %s10
    %p139 = scmp.lt.s32.totalorder %s10, 3
    %p140 = pnand %p138, %p139
    %p141 = pneg %p140
    // Predicated region
    $region9: #{residual_block_forward.9} parent=5 // pred_check
      _
    $region10: #{residual_block_forward.9} parent=5 // pred_check_branch
      %143 = sbr.rel (%p140) target = $region12
    $region11: #{residual_block_forward.9} parent=5 // pred_region
      %s144 = ssub.s32 %s10, 1
      // Predicated region
      $region13: #{residual_block_forward.9} parent=11 // pred_check
        %p145 = pneg %p83
      $region14: #{residual_block_forward.9} parent=11 // pred_check_branch
        %147 = sbr.rel (%p145) target = $region16
      $region15: #{residual_block_forward.9} parent=11 // pred_region
        _
      $region16: #{residual_block_forward.9} parent=11 // pred_fallthru
        _
      // Predicated region
      $region17: #{residual_block_forward.9} parent=11 // pred_check
        %p148 = pneg %p104
      $region18: #{residual_block_forward.9} parent=11 // pred_check_branch
        %150 = sbr.rel (%p148) target = $region20
      $region19: #{residual_block_forward.9} parent=11 // pred_region
        _
      $region20: #{residual_block_forward.9} parent=11 // pred_fallthru
        _
    $region12: #{residual_block_forward.9} parent=5 // pred_fallthru
      _
    %p151 = scmp.lt.s32.totalorder %s10, 2
    // Predicated region
    $region21: #{residual_block_forward.9} parent=5 // pred_check
      %p152 = pneg %p151
    $region22: #{residual_block_forward.9} parent=5 // pred_check_branch
      %154 = sbr.rel (%p152) target = $region24
    $region23: #{residual_block_forward.9} parent=5 // pred_region
      // Predicated region
      $region25: #{residual_block_forward.9} parent=23 // pred_check
        %p155 = pneg %p30
      $region26: #{residual_block_forward.9} parent=23 // pred_check_branch
        %157 = sbr.rel (%p155) target = $region28
      $region27: #{residual_block_forward.9} parent=23 // pred_region
        %s158 = smul.u32 32, %s10
        %p159 = scmp.lt.s32.totalorder %s158, 63
        %s160 = scalar_select %p159, %s158, 63
        %s161 = smul.addr %s160, 8
        %s162 = scalar_lea.vmem %s0, %s161
        %s163 = smul.u32 32, %s10
      $region28: #{residual_block_forward.9} parent=23 // pred_fallthru
        _
      // Predicated region
      $region29: #{residual_block_forward.9} parent=23 // pred_check
        %p164 = pneg %p56
      $region30: #{residual_block_forward.9} parent=23 // pred_check_branch
        %166 = sbr.rel (%p164) target = $region32
      $region31: #{residual_block_forward.9} parent=23 // pred_region
        %s167 = smul.u32 32, %s10
        %p168 = scmp.lt.s32.totalorder %s167, 63
        %s169 = scalar_select %p168, %s167, 63
        %s170 = smul.addr %s169, 8
        %s171 = scalar_lea.vmem %s1, %s170
        %s172 = smul.u32 32, %s10
      $region32: #{residual_block_forward.9} parent=23 // pred_fallthru
        _
    $region24: #{residual_block_forward.9} parent=5 // pred_fallthru
      _
    %p173 = scmp.le.s32.totalorder 1, %s10
    %p174 = scmp.lt.s32.totalorder %s10, 3
    %p175 = pnand %p173, %p174
    %p176 = pneg %p175
    // Predicated region
    $region33: #{residual_block_forward.9} parent=5 // pred_check
      _
    $region34: #{residual_block_forward.9} parent=5 // pred_check_branch
      %178 = sbr.rel (%p175) target = $region36
    $region35: #{residual_block_forward.9} parent=5 // pred_region
      %s179 = ssub.s32 %s10, 1
      %s180 = smul.u32 32, %s15
      %p181 = scmp.lt.s32.totalorder %s180, 63
      %s182 = scalar_select %p181, %s180, 63
      %s183 = smul.addr %s182, 8
      %s184 = scalar_lea.vmem %s0, %s183
      %p185 = pneg %p36
      %p186 = pneg %p33
      %s187 = smul.u32 32, %s15
      %p188 = scmp.lt.s32.totalorder %s187, 63
      %s189 = scalar_select %p188, %s187, 63
      %s190 = smul.addr %s189, 8
      %s191 = scalar_lea.vmem %s1, %s190
      %p192 = pneg %p62
      %p193 = pneg %p59
      %p194 = pneg %p83
      %p195 = pneg %p80
      %p196 = pneg %p104
      %p197 = pneg %p101
      %p198 = pneg %p130
      %p199 = pneg %p127
      %s200 = smul.u32 32, %s15
      %p201 = scmp.lt.s32.totalorder %s200, 63
      %s202 = scalar_select %p201, %s200, 63
      %s203 = smul.addr %s202, 8
      %s204 = scalar_lea.vmem %s4, %s203
      %s205 = smul.u32 32, %s15
      %p206 = scmp.lt.s32.totalorder %s205, 63
      %s207 = scalar_select %p206, %s205, 63
      %s208 = smul.addr %s207, 8
      %s209 = scalar_lea.vmem %s0, %s208
      %s210 = smul.u32 32, %s15
      %s211 = smul.u32 32, %s15
      %p212 = scmp.lt.s32.totalorder %s211, 63
      %s213 = scalar_select %p212, %s211, 63
      %s214 = smul.addr %s213, 8
      %s215 = scalar_lea.vmem %s1, %s214
      %s216 = smul.u32 32, %s15
      %s217 = smul.u32 32, %s15
      %p218 = scmp.lt.s32.totalorder %s217, 63
      %s219 = scalar_select %p218, %s217, 63
      %s220 = smul.addr %s219, 8
      %s221 = scalar_lea.vmem %s4, %s220
      %s222 = smul.u32 32, %s15
      %v223 = vld [vmem:[%s209] sm:$0xff]
      %v224 = vld [vmem:[%s209 + $0x8] sm:$0xff]
      %v225 = vld [vmem:[%s209 + $0x10] sm:$0xff]
      %v226 = vld [vmem:[%s209 + $0x18] sm:$0xff]
      %v227 = vld [vmem:[%s209 + $0x20] sm:$0xff]
      %v228 = vld [vmem:[%s209 + $0x28] sm:$0xff]
      %v229 = vld [vmem:[%s209 + $0x30] sm:$0xff]
      %v230 = vld [vmem:[%s209 + $0x38] sm:$0xff]
      %v231 = vld [vmem:[%s209 + $0x40] sm:$0xff]
      %v232 = vld [vmem:[%s209 + $0x48] sm:$0xff]
      %v233 = vld [vmem:[%s209 + $0x50] sm:$0xff]
      %v234 = vld [vmem:[%s209 + $0x58] sm:$0xff]
      %v235 = vld [vmem:[%s209 + $0x60] sm:$0xff]
      %v236 = vld [vmem:[%s209 + $0x68] sm:$0xff]
      %v237 = vld [vmem:[%s209 + $0x70] sm:$0xff]
      %v238 = vld [vmem:[%s209 + $0x78] sm:$0xff]
      %v239 = vld [vmem:[%s209 + $0x80] sm:$0xff]
      %v240 = vld [vmem:[%s209 + $0x88] sm:$0xff]
      %v241 = vld [vmem:[%s209 + $0x90] sm:$0xff]
      %v242 = vld [vmem:[%s209 + $0x98] sm:$0xff]
      %v243 = vld [vmem:[%s209 + $0xa0] sm:$0xff]
      %v244 = vld [vmem:[%s209 + $0xa8] sm:$0xff]
      %v245 = vld [vmem:[%s209 + $0xb0] sm:$0xff]
      %v246 = vld [vmem:[%s209 + $0xb8] sm:$0xff]
      %v247 = vld [vmem:[%s209 + $0xc0] sm:$0xff]
      %v248 = vld [vmem:[%s209 + $0xc8] sm:$0xff]
      %v249 = vld [vmem:[%s209 + $0xd0] sm:$0xff]
      %v250 = vld [vmem:[%s209 + $0xd8] sm:$0xff]
      %v251 = vld [vmem:[%s209 + $0xe0] sm:$0xff]
      %v252 = vld [vmem:[%s209 + $0xe8] sm:$0xff]
      %v253 = vld [vmem:[%s209 + $0xf0] sm:$0xff]
      %v254 = vld [vmem:[%s209 + $0xf8] sm:$0xff]
      %v255 = vld [vmem:[%s2] sm:$0x1]
      %v257 = vlaneseq
      %v258 = vshrl.u32 %v257, 7
      %v259 = vsub.s32 0, %v258
      %v260 = vrot.slane %v255, %v259
      %v262 = vmul.f32 %v223, %v260
      %v263 = vmul.f32 %v224, %v260
      %v264 = vmul.f32 %v225, %v260
      %v265 = vmul.f32 %v226, %v260
      %v266 = vmul.f32 %v227, %v260
      %v267 = vmul.f32 %v228, %v260
      %v268 = vmul.f32 %v229, %v260
      %v269 = vmul.f32 %v230, %v260
      %v270 = vmul.f32 %v231, %v260
      %v271 = vmul.f32 %v232, %v260
      %v272 = vmul.f32 %v233, %v260
      %v273 = vmul.f32 %v234, %v260
      %v274 = vmul.f32 %v235, %v260
      %v275 = vmul.f32 %v236, %v260
      %v276 = vmul.f32 %v237, %v260
      %v277 = vmul.f32 %v238, %v260
      %v278 = vmul.f32 %v239, %v260
      %v279 = vmul.f32 %v240, %v260
      %v280 = vmul.f32 %v241, %v260
      %v281 = vmul.f32 %v242, %v260
      %v282 = vmul.f32 %v243, %v260
      %v283 = vmul.f32 %v244, %v260
      %v284 = vmul.f32 %v245, %v260
      %v285 = vmul.f32 %v246, %v260
      %v286 = vmul.f32 %v247, %v260
      %v287 = vmul.f32 %v248, %v260
      %v288 = vmul.f32 %v249, %v260
      %v289 = vmul.f32 %v250, %v260
      %v290 = vmul.f32 %v251, %v260
      %v291 = vmul.f32 %v252, %v260
      %v292 = vmul.f32 %v253, %v260
      %v293 = vmul.f32 %v254, %v260
      %v294 = vld [vmem:[%s3] sm:$0x1]
      %v296 = vlaneseq
      %v297 = vshrl.u32 %v296, 7
      %v298 = vsub.s32 0, %v297
      %v299 = vrot.slane %v294, %v298
      %v301 = vadd.f32 %v262, %v299
      %v302 = vadd.f32 %v263, %v299
      %v303 = vadd.f32 %v264, %v299
      %v304 = vadd.f32 %v265, %v299
      %v305 = vadd.f32 %v266, %v299
      %v306 = vadd.f32 %v267, %v299
      %v307 = vadd.f32 %v268, %v299
      %v308 = vadd.f32 %v269, %v299
      %v309 = vadd.f32 %v270, %v299
      %v310 = vadd.f32 %v271, %v299
      %v311 = vadd.f32 %v272, %v299
      %v312 = vadd.f32 %v273, %v299
      %v313 = vadd.f32 %v274, %v299
      %v314 = vadd.f32 %v275, %v299
      %v315 = vadd.f32 %v276, %v299
      %v316 = vadd.f32 %v277, %v299
      %v317 = vadd.f32 %v278, %v299
      %v318 = vadd.f32 %v279, %v299
      %v319 = vadd.f32 %v280, %v299
      %v320 = vadd.f32 %v281, %v299
      %v321 = vadd.f32 %v282, %v299
      %v322 = vadd.f32 %v283, %v299
      %v323 = vadd.f32 %v284, %v299
      %v324 = vadd.f32 %v285, %v299
      %v325 = vadd.f32 %v286, %v299
      %v326 = vadd.f32 %v287, %v299
      %v327 = vadd.f32 %v288, %v299
      %v328 = vadd.f32 %v289, %v299
      %v329 = vadd.f32 %v290, %v299
      %v330 = vadd.f32 %v291, %v299
      %v331 = vadd.f32 %v292, %v299
      %v332 = vadd.f32 %v293, %v299
      %v333 = vmul.f32 %v301, 0.1
      %v334 = vmul.f32 %v302, 0.1
      %v335 = vmul.f32 %v303, 0.1
      %v336 = vmul.f32 %v304, 0.1
      %v337 = vmul.f32 %v305, 0.1
      %v338 = vmul.f32 %v306, 0.1
      %v339 = vmul.f32 %v307, 0.1
      %v340 = vmul.f32 %v308, 0.1
      %v341 = vmul.f32 %v309, 0.1
      %v342 = vmul.f32 %v310, 0.1
      %v343 = vmul.f32 %v311, 0.1
      %v344 = vmul.f32 %v312, 0.1
      %v345 = vmul.f32 %v313, 0.1
      %v346 = vmul.f32 %v314, 0.1
      %v347 = vmul.f32 %v315, 0.1
      %v348 = vmul.f32 %v316, 0.1
      %v349 = vmul.f32 %v317, 0.1
      %v350 = vmul.f32 %v318, 0.1
      %v351 = vmul.f32 %v319, 0.1
      %v352 = vmul.f32 %v320, 0.1
      %v353 = vmul.f32 %v321, 0.1
      %v354 = vmul.f32 %v322, 0.1
      %v355 = vmul.f32 %v323, 0.1
      %v356 = vmul.f32 %v324, 0.1
      %v357 = vmul.f32 %v325, 0.1
      %v358 = vmul.f32 %v326, 0.1
      %v359 = vmul.f32 %v327, 0.1
      %v360 = vmul.f32 %v328, 0.1
      %v361 = vmul.f32 %v329, 0.1
      %v362 = vmul.f32 %v330, 0.1
      %v363 = vmul.f32 %v331, 0.1
      %v364 = vmul.f32 %v332, 0.1
      %v365 = vmax.f32 %v301, %v333
      %v366 = vmax.f32 %v302, %v334
      %v367 = vmax.f32 %v303, %v335
      %v368 = vmax.f32 %v304, %v336
      %v369 = vmax.f32 %v305, %v337
      %v370 = vmax.f32 %v306, %v338
      %v371 = vmax.f32 %v307, %v339
      %v372 = vmax.f32 %v308, %v340
      %v373 = vmax.f32 %v309, %v341
      %v374 = vmax.f32 %v310, %v342
      %v375 = vmax.f32 %v311, %v343
      %v376 = vmax.f32 %v312, %v344
      %v377 = vmax.f32 %v313, %v345
      %v378 = vmax.f32 %v314, %v346
      %v379 = vmax.f32 %v315, %v347
      %v380 = vmax.f32 %v316, %v348
      %v381 = vmax.f32 %v317, %v349
      %v382 = vmax.f32 %v318, %v350
      %v383 = vmax.f32 %v319, %v351
      %v384 = vmax.f32 %v320, %v352
      %v385 = vmax.f32 %v321, %v353
      %v386 = vmax.f32 %v322, %v354
      %v387 = vmax.f32 %v323, %v355
      %v388 = vmax.f32 %v324, %v356
      %v389 = vmax.f32 %v325, %v357
      %v390 = vmax.f32 %v326, %v358
      %v391 = vmax.f32 %v327, %v359
      %v392 = vmax.f32 %v328, %v360
      %v393 = vmax.f32 %v329, %v361
      %v394 = vmax.f32 %v330, %v362
      %v395 = vmax.f32 %v331, %v363
      %v396 = vmax.f32 %v332, %v364
      %v397 = vld [vmem:[%s215] sm:$0xff]
      %v398 = vld [vmem:[%s215 + $0x8] sm:$0xff]
      %v399 = vld [vmem:[%s215 + $0x10] sm:$0xff]
      %v400 = vld [vmem:[%s215 + $0x18] sm:$0xff]
      %v401 = vld [vmem:[%s215 + $0x20] sm:$0xff]
      %v402 = vld [vmem:[%s215 + $0x28] sm:$0xff]
      %v403 = vld [vmem:[%s215 + $0x30] sm:$0xff]
      %v404 = vld [vmem:[%s215 + $0x38] sm:$0xff]
      %v405 = vld [vmem:[%s215 + $0x40] sm:$0xff]
      %v406 = vld [vmem:[%s215 + $0x48] sm:$0xff]
      %v407 = vld [vmem:[%s215 + $0x50] sm:$0xff]
      %v408 = vld [vmem:[%s215 + $0x58] sm:$0xff]
      %v409 = vld [vmem:[%s215 + $0x60] sm:$0xff]
      %v410 = vld [vmem:[%s215 + $0x68] sm:$0xff]
      %v411 = vld [vmem:[%s215 + $0x70] sm:$0xff]
      %v412 = vld [vmem:[%s215 + $0x78] sm:$0xff]
      %v413 = vld [vmem:[%s215 + $0x80] sm:$0xff]
      %v414 = vld [vmem:[%s215 + $0x88] sm:$0xff]
      %v415 = vld [vmem:[%s215 + $0x90] sm:$0xff]
      %v416 = vld [vmem:[%s215 + $0x98] sm:$0xff]
      %v417 = vld [vmem:[%s215 + $0xa0] sm:$0xff]
      %v418 = vld [vmem:[%s215 + $0xa8] sm:$0xff]
      %v419 = vld [vmem:[%s215 + $0xb0] sm:$0xff]
      %v420 = vld [vmem:[%s215 + $0xb8] sm:$0xff]
      %v421 = vld [vmem:[%s215 + $0xc0] sm:$0xff]
      %v422 = vld [vmem:[%s215 + $0xc8] sm:$0xff]
      %v423 = vld [vmem:[%s215 + $0xd0] sm:$0xff]
      %v424 = vld [vmem:[%s215 + $0xd8] sm:$0xff]
      %v425 = vld [vmem:[%s215 + $0xe0] sm:$0xff]
      %v426 = vld [vmem:[%s215 + $0xe8] sm:$0xff]
      %v427 = vld [vmem:[%s215 + $0xf0] sm:$0xff]
      %v428 = vld [vmem:[%s215 + $0xf8] sm:$0xff]
      %v429 = vadd.f32 %v365, %v397
      %v430 = vadd.f32 %v366, %v398
      %v431 = vadd.f32 %v367, %v399
      %v432 = vadd.f32 %v368, %v400
      %v433 = vadd.f32 %v369, %v401
      %v434 = vadd.f32 %v370, %v402
      %v435 = vadd.f32 %v371, %v403
      %v436 = vadd.f32 %v372, %v404
      %v437 = vadd.f32 %v373, %v405
      %v438 = vadd.f32 %v374, %v406
      %v439 = vadd.f32 %v375, %v407
      %v440 = vadd.f32 %v376, %v408
      %v441 = vadd.f32 %v377, %v409
      %v442 = vadd.f32 %v378, %v410
      %v443 = vadd.f32 %v379, %v411
      %v444 = vadd.f32 %v380, %v412
      %v445 = vadd.f32 %v381, %v413
      %v446 = vadd.f32 %v382, %v414
      %v447 = vadd.f32 %v383, %v415
      %v448 = vadd.f32 %v384, %v416
      %v449 = vadd.f32 %v385, %v417
      %v450 = vadd.f32 %v386, %v418
      %v451 = vadd.f32 %v387, %v419
      %v452 = vadd.f32 %v388, %v420
      %v453 = vadd.f32 %v389, %v421
      %v454 = vadd.f32 %v390, %v422
      %v455 = vadd.f32 %v391, %v423
      %v456 = vadd.f32 %v392, %v424
      %v457 = vadd.f32 %v393, %v425
      %v458 = vadd.f32 %v394, %v426
      %v459 = vadd.f32 %v395, %v427
      %v460 = vadd.f32 %v396, %v428
      %vm461 = vcmask 130048
      %462 = vst.msk [vmem:[%s221] sm:$0xff] %vm461, %v429
      %463 = vst.msk [vmem:[%s221 + $0x8] sm:$0xff] %vm461, %v430
      %464 = vst.msk [vmem:[%s221 + $0x10] sm:$0xff] %vm461, %v431
      %465 = vst.msk [vmem:[%s221 + $0x18] sm:$0xff] %vm461, %v432
      %466 = vst.msk [vmem:[%s221 + $0x20] sm:$0xff] %vm461, %v433
      %467 = vst.msk [vmem:[%s221 + $0x28] sm:$0xff] %vm461, %v434
      %468 = vst.msk [vmem:[%s221 + $0x30] sm:$0xff] %vm461, %v435
      %469 = vst.msk [vmem:[%s221 + $0x38] sm:$0xff] %vm461, %v436
      %470 = vst.msk [vmem:[%s221 + $0x40] sm:$0xff] %vm461, %v437
      %471 = vst.msk [vmem:[%s221 + $0x48] sm:$0xff] %vm461, %v438
      %472 = vst.msk [vmem:[%s221 + $0x50] sm:$0xff] %vm461, %v439
      %473 = vst.msk [vmem:[%s221 + $0x58] sm:$0xff] %vm461, %v440
      %474 = vst.msk [vmem:[%s221 + $0x60] sm:$0xff] %vm461, %v441
      %475 = vst.msk [vmem:[%s221 + $0x68] sm:$0xff] %vm461, %v442
      %476 = vst.msk [vmem:[%s221 + $0x70] sm:$0xff] %vm461, %v443
      %477 = vst.msk [vmem:[%s221 + $0x78] sm:$0xff] %vm461, %v444
      %478 = vst.msk [vmem:[%s221 + $0x80] sm:$0xff] %vm461, %v445
      %479 = vst.msk [vmem:[%s221 + $0x88] sm:$0xff] %vm461, %v446
      %480 = vst.msk [vmem:[%s221 + $0x90] sm:$0xff] %vm461, %v447
      %481 = vst.msk [vmem:[%s221 + $0x98] sm:$0xff] %vm461, %v448
      %482 = vst.msk [vmem:[%s221 + $0xa0] sm:$0xff] %vm461, %v449
      %483 = vst.msk [vmem:[%s221 + $0xa8] sm:$0xff] %vm461, %v450
      %484 = vst.msk [vmem:[%s221 + $0xb0] sm:$0xff] %vm461, %v451
      %485 = vst.msk [vmem:[%s221 + $0xb8] sm:$0xff] %vm461, %v452
      %486 = vst.msk [vmem:[%s221 + $0xc0] sm:$0xff] %vm461, %v453
      %487 = vst.msk [vmem:[%s221 + $0xc8] sm:$0xff] %vm461, %v454
      %488 = vst.msk [vmem:[%s221 + $0xd0] sm:$0xff] %vm461, %v455
      %489 = vst.msk [vmem:[%s221 + $0xd8] sm:$0xff] %vm461, %v456
      %490 = vst.msk [vmem:[%s221 + $0xe0] sm:$0xff] %vm461, %v457
      %491 = vst.msk [vmem:[%s221 + $0xe8] sm:$0xff] %vm461, %v458
      %492 = vst.msk [vmem:[%s221 + $0xf0] sm:$0xff] %vm461, %v459
      %493 = vst.msk [vmem:[%s221 + $0xf8] sm:$0xff] %vm461, %v460
      %s494 = smul.u32 32, %s15
      %p495 = scmp.lt.s32.totalorder %s494, 63
      %s496 = scalar_select %p495, %s494, 63
      %s497 = smul.addr %s496, 8
      %s498 = scalar_lea.vmem %s4, %s497
      // Predicated region
      $region37: #{residual_block_forward.9} parent=35 // pred_check
        %p499 = pneg %p127
      $region38: #{residual_block_forward.9} parent=35 // pred_check_branch
        %501 = sbr.rel (%p499) target = $region40
      $region39: #{residual_block_forward.9} parent=35 // pred_region
        %s502 = smul.u32 32, %s15
      $region40: #{residual_block_forward.9} parent=35 // pred_fallthru
        _
    $region36: #{residual_block_forward.9} parent=5 // pred_fallthru
      _
    %p503 = scmp.le.s32.totalorder 2, %s10
    // Predicated region
    $region41: #{residual_block_forward.9} parent=5 // pred_check
      %p504 = pneg %p503
    $region42: #{residual_block_forward.9} parent=5 // pred_check_branch
      %506 = sbr.rel (%p504) target = $region44
    $region43: #{residual_block_forward.9} parent=5 // pred_region
      %s507 = ssub.s32 %s10, 2
      // Predicated region
      $region45: #{residual_block_forward.9} parent=43 // pred_check
        %p508 = pneg %p133
      $region46: #{residual_block_forward.9} parent=43 // pred_check_branch
        %510 = sbr.rel (%p508) target = $region48
      $region47: #{residual_block_forward.9} parent=43 // pred_region
        %s511 = smul.u32 32, %s16
        %p512 = scmp.lt.s32.totalorder %s511, 63
        %s513 = scalar_select %p512, %s511, 63
        %s514 = smul.addr %s513, 8
        %s515 = scalar_lea.vmem %s4, %s514
      $region48: #{residual_block_forward.9} parent=43 // pred_fallthru
        _
    $region44: #{residual_block_forward.9} parent=5 // pred_fallthru
      _
  $region6: #{residual_block_forward.9} parent=0 // loop_footer
    %s14 = sadd.s32 1, %s10
  $region7: #{residual_block_forward.9} parent=0 // loop_footer_branch
    %9 = sbr.rel target = $region3
  $region8: #{residual_block_forward.9} parent=0 // loop_exit
    _

// kernel: residual_block_forward.6
$region0: #{residual_block_forward.6}
  #allocation0 [shape = 'u32[]', space=smem, size = 0x4, offset = 0x4, fixed_abs, tag = 'smem constant byte address 0x4 - core index']
  #allocation1 [shape = 'u32[144,128]{1,0:T(1,128)}', space=vmem, size = 0x12000, scoped, tag = 'internal scratch']
  #allocation2 [shape = 'f32[18,18,8]{2,1,0:T(8,128)}', space=vmem, size = 0x36000, scoped, tag = 'scratch operand']
  %s0 = inlined_call_operand.vmem [shape: f32[2,16,16,8], index: 0, kind: input, shape index: {}]
  %s1 = inlined_call_operand.vmem [shape: f32[3,3,8,16], index: 1, kind: input, shape index: {}]
  %s2 = inlined_call_operand.vmem [shape: f32[1,8], index: 2, kind: input, shape index: {}]
  %s3 = inlined_call_operand.vmem [shape: f32[1,8], index: 3, kind: input, shape index: {}]
  %s4 = inlined_call_operand.vmem [shape: f32[2,16,16,16], index: 4, kind: output, shape index: {0}]
  %s5 = inlined_call_operand.vmem [shape: f32[2,1,32], index: 5, kind: output, shape index: {1}]
  %6 = xla_tuple %s4, %s5
  %s7 = sld [smem:[#allocation0]]
  $region57: #{residual_block_forward.6} parent=0
    _
  %s9 = ssub.s32 1, %s7
  %s10 = scalar_select 0, %s9, %s7
  loop: start=0, step=1, limit=4
  $region2: #{residual_block_forward.6} parent=0 // loop_pre_header
    _
  $region3: #{residual_block_forward.6} parent=0 // loop_header
    %s12 = sphi 0, %s16
    %p13 = scmp.ge.s32.totalorder %s12, 4
    %s22 = sphi 0, %s24
    %s25 = sphi 0, %s22
    %s26 = sphi 0, %s25
    %s42 = sphi 0, %s26
    %s46 = sphi 0, %s46
    %s48 = sphi 0, %s46
    %s49 = sphi 0, %s48
    %s63 = sphi 0, %s49
    %s67 = sphi 0, %s67
    %s69 = sphi 0, %s67
    %s70 = sphi 0, %s69
    %s84 = sphi 0, %s70
    %s88 = sphi 0, %s88
    %s90 = sphi 0, %s88
    %s91 = sphi 0, %s90
    %s105 = sphi 0, %s91
    %s111 = sphi 0, %s113
    %s114 = sphi 0, %s111
    %s115 = sphi 0, %s114
    %s131 = sphi 0, %s115
    %s137 = sphi 0, %s139
    %s140 = sphi 0, %s137
    %s141 = sphi 0, %s140
    %s157 = sphi 0, %s141
  $region4: #{residual_block_forward.6} parent=0 // loop_header_branch
    %15 = sbr.rel (%p13) target = $region8
  $region5: #{residual_block_forward.6} parent=0 // loop_body
    %s17 = ssub.s32 %s12, 1
    %s18 = ssub.s32 %s12, 2
    %s19 = sadd.s32 %s12, 1
    %s20 = ssub.s32 %s12, %s19
    %p21 = scmp.eq.s32.totalorder %s20, 0
    %s23 = sadd.s32 %s22, 1
    %s24 = scalar_select %p21, %s22, %s23
    %p27 = pneg %p21
    %p28 = scmp.eq.s32.totalorder %s12, 1
    %p29 = por %p27, %p28
    %p30 = scmp.ne.s32.totalorder %s22, %s25
    %p31 = scmp.eq.s32.totalorder %s12, 0
    %p32 = por %p30, %p31
    %p33 = scmp.ne.s32.totalorder %s22, %s25
    %p34 = scmp.eq.s32.totalorder %s17, 1
    %p35 = por %p33, %p34
    %p36 = scmp.ne.s32.totalorder %s25, %s26
    %p37 = scmp.eq.s32.totalorder %s17, 0
    %p38 = por %p36, %p37
    %p39 = scmp.ne.s32.totalorder %s25, %s26
    %p40 = scmp.eq.s32.totalorder %s18, 1
    %p41 = por %p39, %p40
    %p43 = scmp.ne.s32.totalorder %s26, %s42
    %p44 = scmp.eq.s32.totalorder %s18, 0
    %p45 = por %p43, %p44
    %s47 = sadd.s32 %s46, 1
    %p50 = scmp.eq.s32.totalorder %s12, 1
    %p51 = scmp.ne.s32.totalorder %s46, %s48
    %p52 = scmp.eq.s32.totalorder %s12, 0
    %p53 = por %p51, %p52
    %p54 = scmp.ne.s32.totalorder %s46, %s48
    %p55 = scmp.eq.s32.totalorder %s17, 1
    %p56 = por %p54, %p55
    %p57 = scmp.ne.s32.totalorder %s48, %s49
    %p58 = scmp.eq.s32.totalorder %s17, 0
    %p59 = por %p57, %p58
    %p60 = scmp.ne.s32.totalorder %s48, %s49
    %p61 = scmp.eq.s32.totalorder %s18, 1
    %p62 = por %p60, %p61
    %p64 = scmp.ne.s32.totalorder %s49, %s63
    %p65 = scmp.eq.s32.totalorder %s18, 0
    %p66 = por %p64, %p65
    %s68 = sadd.s32 %s67, 1
    %p71 = scmp.eq.s32.totalorder %s12, 1
    %p72 = scmp.ne.s32.totalorder %s67, %s69
    %p73 = scmp.eq.s32.totalorder %s12, 0
    %p74 = por %p72, %p73
    %p75 = scmp.ne.s32.totalorder %s67, %s69
    %p76 = scmp.eq.s32.totalorder %s17, 1
    %p77 = por %p75, %p76
    %p78 = scmp.ne.s32.totalorder %s69, %s70
    %p79 = scmp.eq.s32.totalorder %s17, 0
    %p80 = por %p78, %p79
    %p81 = scmp.ne.s32.totalorder %s69, %s70
    %p82 = scmp.eq.s32.totalorder %s18, 1
    %p83 = por %p81, %p82
    %p85 = scmp.ne.s32.totalorder %s70, %s84
    %p86 = scmp.eq.s32.totalorder %s18, 0
    %p87 = por %p85, %p86
    %s89 = sadd.s32 %s88, 1
    %p92 = scmp.eq.s32.totalorder %s12, 1
    %p93 = scmp.ne.s32.totalorder %s88, %s90
    %p94 = scmp.eq.s32.totalorder %s12, 0
    %p95 = por %p93, %p94
    %p96 = scmp.ne.s32.totalorder %s88, %s90
    %p97 = scmp.eq.s32.totalorder %s17, 1
    %p98 = por %p96, %p97
    %p99 = scmp.ne.s32.totalorder %s90, %s91
    %p100 = scmp.eq.s32.totalorder %s17, 0
    %p101 = por %p99, %p100
    %p102 = scmp.ne.s32.totalorder %s90, %s91
    %p103 = scmp.eq.s32.totalorder %s18, 1
    %p104 = por %p102, %p103
    %p106 = scmp.ne.s32.totalorder %s91, %s105
    %p107 = scmp.eq.s32.totalorder %s18, 0
    %p108 = por %p106, %p107
    %s109 = ssub.s32 %s12, %s19
    %p110 = scmp.eq.s32.totalorder %s109, 0
    %s112 = sadd.s32 %s111, 1
    %s113 = scalar_select %p110, %s111, %s112
    %p116 = pneg %p110
    %p117 = scmp.eq.s32.totalorder %s12, 1
    %p118 = por %p116, %p117
    %p119 = scmp.ne.s32.totalorder %s111, %s114
    %p120 = scmp.eq.s32.totalorder %s12, 0
    %p121 = por %p119, %p120
    %p122 = scmp.ne.s32.totalorder %s111, %s114
    %p123 = scmp.eq.s32.totalorder %s17, 1
    %p124 = por %p122, %p123
    %p125 = scmp.ne.s32.totalorder %s114, %s115
    %p126 = scmp.eq.s32.totalorder %s17, 0
    %p127 = por %p125, %p126
    %p128 = scmp.ne.s32.totalorder %s114, %s115
    %p129 = scmp.eq.s32.totalorder %s18, 1
    %p130 = por %p128, %p129
    %p132 = scmp.ne.s32.totalorder %s115, %s131
    %p133 = scmp.eq.s32.totalorder %s18, 0
    %p134 = por %p132, %p133
    %s135 = ssub.s32 %s12, %s19
    %p136 = scmp.eq.s32.totalorder %s135, 0
    %s138 = sadd.s32 %s137, 1
    %s139 = scalar_select %p136, %s137, %s138
    %p142 = pneg %p136
    %p143 = scmp.eq.s32.totalorder %s12, 1
    %p144 = por %p142, %p143
    %p145 = scmp.ne.s32.totalorder %s137, %s140
    %p146 = scmp.eq.s32.totalorder %s12, 0
    %p147 = por %p145, %p146
    %p148 = scmp.ne.s32.totalorder %s137, %s140
    %p149 = scmp.eq.s32.totalorder %s17, 1
    %p150 = por %p148, %p149
    %p151 = scmp.ne.s32.totalorder %s140, %s141
    %p152 = scmp.eq.s32.totalorder %s17, 0
    %p153 = por %p151, %p152
    %p154 = scmp.ne.s32.totalorder %s140, %s141
    %p155 = scmp.eq.s32.totalorder %s18, 1
    %p156 = por %p154, %p155
    %p158 = scmp.ne.s32.totalorder %s141, %s157
    %p159 = scmp.eq.s32.totalorder %s18, 0
    %p160 = por %p158, %p159
    %p161 = scmp.le.s32.totalorder 1, %s12
    %p162 = scmp.lt.s32.totalorder %s12, 3
    %p163 = pnand %p161, %p162
    %p164 = pneg %p163
    // Predicated region
    $region9: #{residual_block_forward.6} parent=5 // pred_check
      _
    $region10: #{residual_block_forward.6} parent=5 // pred_check_branch
      %166 = sbr.rel (%p163) target = $region12
    $region11: #{residual_block_forward.6} parent=5 // pred_region
      %s167 = ssub.s32 %s12, 1
      // Predicated region
      $region13: #{residual_block_forward.6} parent=11 // pred_check
        %p168 = pneg %p59
      $region14: #{residual_block_forward.6} parent=11 // pred_check_branch
        %170 = sbr.rel (%p168) target = $region16
      $region15: #{residual_block_forward.6} parent=11 // pred_region
        _
      $region16: #{residual_block_forward.6} parent=11 // pred_fallthru
        _
      // Predicated region
      $region17: #{residual_block_forward.6} parent=11 // pred_check
        %p171 = pneg %p80
      $region18: #{residual_block_forward.6} parent=11 // pred_check_branch
        %173 = sbr.rel (%p171) target = $region20
      $region19: #{residual_block_forward.6} parent=11 // pred_region
        _
      $region20: #{residual_block_forward.6} parent=11 // pred_fallthru
        _
      // Predicated region
      $region21: #{residual_block_forward.6} parent=11 // pred_check
        %p174 = pneg %p101
      $region22: #{residual_block_forward.6} parent=11 // pred_check_branch
        %176 = sbr.rel (%p174) target = $region24
      $region23: #{residual_block_forward.6} parent=11 // pred_region
        _
      $region24: #{residual_block_forward.6} parent=11 // pred_fallthru
        _
    $region12: #{residual_block_forward.6} parent=5 // pred_fallthru
      _
    %p177 = scmp.lt.s32.totalorder %s12, 2
    // Predicated region
    $region25: #{residual_block_forward.6} parent=5 // pred_check
      %p178 = pneg %p177
    $region26: #{residual_block_forward.6} parent=5 // pred_check_branch
      %180 = sbr.rel (%p178) target = $region28
    $region27: #{residual_block_forward.6} parent=5 // pred_region
      // Predicated region
      $region29: #{residual_block_forward.6} parent=27 // pred_check
        %p181 = pneg %p32
      $region30: #{residual_block_forward.6} parent=27 // pred_check_branch
        %183 = sbr.rel (%p181) target = $region32
      $region31: #{residual_block_forward.6} parent=27 // pred_region
        %p184 = scmp.lt.s32.totalorder %s12, 1
        %s185 = scalar_select %p184, %s12, 1
        %s186 = smul.addr %s185, 32
        %s187 = smul.addr %s186, 8
        %s188 = scalar_lea.vmem %s0, %s187
      $region32: #{residual_block_forward.6} parent=27 // pred_fallthru
        _
    $region28: #{residual_block_forward.6} parent=5 // pred_fallthru
      _
    %p189 = scmp.le.s32.totalorder 1, %s12
    %p190 = scmp.lt.s32.totalorder %s12, 3
    %p191 = pnand %p189, %p190
    %p192 = pneg %p191
    // Predicated region
    $region33: #{residual_block_forward.6} parent=5 // pred_check
      _
    $region34: #{residual_block_forward.6} parent=5 // pred_check_branch
      %194 = sbr.rel (%p191) target = $region36
    $region35: #{residual_block_forward.6} parent=5 // pred_region
      %s195 = ssub.s32 %s12, 1
      %p196 = scmp.lt.s32.totalorder %s17, 1
      %s197 = scalar_select %p196, %s17, 1
      %s198 = smul.addr %s197, 32
      %s199 = smul.addr %s198, 8
      %s200 = scalar_lea.vmem %s0, %s199
      %p201 = pneg %p38
      %p202 = pneg %p35
      %p203 = pneg %p59
      %p204 = pneg %p56
      %p205 = pneg %p80
      %p206 = pneg %p77
      %p207 = pneg %p101
      %p208 = pneg %p98
      %p209 = pneg %p127
      %p210 = pneg %p124
      %p211 = scmp.lt.s32.totalorder %s17, 1
      %s212 = scalar_select %p211, %s17, 1
      %s213 = smul.addr %s212, 32
      %s214 = smul.addr %s213, 8
      %s215 = scalar_lea.vmem %s4, %s214
      %p216 = pneg %p153
      %p217 = pneg %p150
      %p218 = scmp.lt.s32.totalorder %s17, 1
      %s219 = scalar_select %p218, %s17, 1
      %s220 = scalar_lea.vmem %s5, %s219
      %p221 = scmp.lt.s32.totalorder %s17, 1
      %s222 = scalar_select %p221, %s17, 1
      %s223 = smul.addr %s222, 32
      %s224 = smul.addr %s223, 8
      %s225 = scalar_lea.vmem %s0, %s224
      %p226 = scmp.lt.s32.totalorder %s17, 1
      %s227 = scalar_select %p226, %s17, 1
      %s228 = smul.addr %s227, 32
      %s229 = smul.addr %s228, 8
      %s230 = scalar_lea.vmem %s4, %s229
      %p231 = scmp.lt.s32.totalorder %s17, 1
      %s232 = scalar_select %p231, %s17, 1
      %s233 = scalar_lea.vmem %s5, %s232
      %v234 = vld [vmem:[%s225] sm:$0xff]
      %v235 = vld [vmem:[%s225 + $0x8] sm:$0xff]
      %v236 = vld [vmem:[%s225 + $0x10] sm:$0xff]
      %v237 = vld [vmem:[%s225 + $0x18] sm:$0xff]
      %v238 = vld [vmem:[%s225 + $0x20] sm:$0xff]
      %v239 = vld [vmem:[%s225 + $0x28] sm:$0xff]
      %v240 = vld [vmem:[%s225 + $0x30] sm:$0xff]
      %v241 = vld [vmem:[%s225 + $0x38] sm:$0xff]
      %v242 = vld [vmem:[%s225 + $0x40] sm:$0xff]
      %v243 = vld [vmem:[%s225 + $0x48] sm:$0xff]
      %v244 = vld [vmem:[%s225 + $0x50] sm:$0xff]
      %v245 = vld [vmem:[%s225 + $0x58] sm:$0xff]
      %v246 = vld [vmem:[%s225 + $0x60] sm:$0xff]
      %v247 = vld [vmem:[%s225 + $0x68] sm:$0xff]
      %v248 = vld [vmem:[%s225 + $0x70] sm:$0xff]
      %v249 = vld [vmem:[%s225 + $0x78] sm:$0xff]
      %v250 = vld [vmem:[%s225 + $0x80] sm:$0xff]
      %v251 = vld [vmem:[%s225 + $0x88] sm:$0xff]
      %v252 = vld [vmem:[%s225 + $0x90] sm:$0xff]
      %v253 = vld [vmem:[%s225 + $0x98] sm:$0xff]
      %v254 = vld [vmem:[%s225 + $0xa0] sm:$0xff]
      %v255 = vld [vmem:[%s225 + $0xa8] sm:$0xff]
      %v256 = vld [vmem:[%s225 + $0xb0] sm:$0xff]
      %v257 = vld [vmem:[%s225 + $0xb8] sm:$0xff]
      %v258 = vld [vmem:[%s225 + $0xc0] sm:$0xff]
      %v259 = vld [vmem:[%s225 + $0xc8] sm:$0xff]
      %v260 = vld [vmem:[%s225 + $0xd0] sm:$0xff]
      %v261 = vld [vmem:[%s225 + $0xd8] sm:$0xff]
      %v262 = vld [vmem:[%s225 + $0xe0] sm:$0xff]
      %v263 = vld [vmem:[%s225 + $0xe8] sm:$0xff]
      %v264 = vld [vmem:[%s225 + $0xf0] sm:$0xff]
      %v265 = vld [vmem:[%s225 + $0xf8] sm:$0xff]
      %v266 = vld [vmem:[%s2] sm:$0x1]
      %v268 = vlaneseq
      %v269 = vshrl.u32 %v268, 7
      %v270 = vsub.s32 0, %v269
      %v271 = vrot.slane %v266, %v270
      %v273 = vmul.f32 %v234, %v271
      %v274 = vmul.f32 %v235, %v271
      %v275 = vmul.f32 %v236, %v271
      %v276 = vmul.f32 %v237, %v271
      %v277 = vmul.f32 %v238, %v271
      %v278 = vmul.f32 %v239, %v271
      %v279 = vmul.f32 %v240, %v271
      %v280 = vmul.f32 %v241, %v271
      %v281 = vmul.f32 %v242, %v271
      %v282 = vmul.f32 %v243, %v271
      %v283 = vmul.f32 %v244, %v271
      %v284 = vmul.f32 %v245, %v271
      %v285 = vmul.f32 %v246, %v271
      %v286 = vmul.f32 %v247, %v271
      %v287 = vmul.f32 %v248, %v271
      %v288 = vmul.f32 %v249, %v271
      %v289 = vmul.f32 %v250, %v271
      %v290 = vmul.f32 %v251, %v271
      %v291 = vmul.f32 %v252, %v271
      %v292 = vmul.f32 %v253, %v271
      %v293 = vmul.f32 %v254, %v271
      %v294 = vmul.f32 %v255, %v271
      %v295 = vmul.f32 %v256, %v271
      %v296 = vmul.f32 %v257, %v271
      %v297 = vmul.f32 %v258, %v271
      %v298 = vmul.f32 %v259, %v271
      %v299 = vmul.f32 %v260, %v271
      %v300 = vmul.f32 %v261, %v271
      %v301 = vmul.f32 %v262, %v271
      %v302 = vmul.f32 %v263, %v271
      %v303 = vmul.f32 %v264, %v271
      %v304 = vmul.f32 %v265, %v271
      %v305 = vld [vmem:[%s3] sm:$0x1]
      %v307 = vlaneseq
      %v308 = vshrl.u32 %v307, 7
      %v309 = vsub.s32 0, %v308
      %v310 = vrot.slane %v305, %v309
      %v312 = vadd.f32 %v273, %v310
      %v313 = vadd.f32 %v274, %v310
      %v314 = vadd.f32 %v275, %v310
      %v315 = vadd.f32 %v276, %v310
      %v316 = vadd.f32 %v277, %v310
      %v317 = vadd.f32 %v278, %v310
      %v318 = vadd.f32 %v279, %v310
      %v319 = vadd.f32 %v280, %v310
      %v320 = vadd.f32 %v281, %v310
      %v321 = vadd.f32 %v282, %v310
      %v322 = vadd.f32 %v283, %v310
      %v323 = vadd.f32 %v284, %v310
      %v324 = vadd.f32 %v285, %v310
      %v325 = vadd.f32 %v286, %v310
      %v326 = vadd.f32 %v287, %v310
      %v327 = vadd.f32 %v288, %v310
      %v328 = vadd.f32 %v289, %v310
      %v329 = vadd.f32 %v290, %v310
      %v330 = vadd.f32 %v291, %v310
      %v331 = vadd.f32 %v292, %v310
      %v332 = vadd.f32 %v293, %v310
      %v333 = vadd.f32 %v294, %v310
      %v334 = vadd.f32 %v295, %v310
      %v335 = vadd.f32 %v296, %v310
      %v336 = vadd.f32 %v297, %v310
      %v337 = vadd.f32 %v298, %v310
      %v338 = vadd.f32 %v299, %v310
      %v339 = vadd.f32 %v300, %v310
      %v340 = vadd.f32 %v301, %v310
      %v341 = vadd.f32 %v302, %v310
      %v342 = vadd.f32 %v303, %v310
      %v343 = vadd.f32 %v304, %v310
      %v344 = vmul.f32 %v312, 0.1
      %v345 = vmul.f32 %v313, 0.1
      %v346 = vmul.f32 %v314, 0.1
      %v347 = vmul.f32 %v315, 0.1
      %v348 = vmul.f32 %v316, 0.1
      %v349 = vmul.f32 %v317, 0.1
      %v350 = vmul.f32 %v318, 0.1
      %v351 = vmul.f32 %v319, 0.1
      %v352 = vmul.f32 %v320, 0.1
      %v353 = vmul.f32 %v321, 0.1
      %v354 = vmul.f32 %v322, 0.1
      %v355 = vmul.f32 %v323, 0.1
      %v356 = vmul.f32 %v324, 0.1
      %v357 = vmul.f32 %v325, 0.1
      %v358 = vmul.f32 %v326, 0.1
      %v359 = vmul.f32 %v327, 0.1
      %v360 = vmul.f32 %v328, 0.1
      %v361 = vmul.f32 %v329, 0.1
      %v362 = vmul.f32 %v330, 0.1
      %v363 = vmul.f32 %v331, 0.1
      %v364 = vmul.f32 %v332, 0.1
      %v365 = vmul.f32 %v333, 0.1
      %v366 = vmul.f32 %v334, 0.1
      %v367 = vmul.f32 %v335, 0.1
      %v368 = vmul.f32 %v336, 0.1
      %v369 = vmul.f32 %v337, 0.1
      %v370 = vmul.f32 %v338, 0.1
      %v371 = vmul.f32 %v339, 0.1
      %v372 = vmul.f32 %v340, 0.1
      %v373 = vmul.f32 %v341, 0.1
      %v374 = vmul.f32 %v342, 0.1
      %v375 = vmul.f32 %v343, 0.1
      %v376 = vmax.f32 %v312, %v344
      %v377 = vmax.f32 %v313, %v345
      %v378 = vmax.f32 %v314, %v346
      %v379 = vmax.f32 %v315, %v347
      %v380 = vmax.f32 %v316, %v348
      %v381 = vmax.f32 %v317, %v349
      %v382 = vmax.f32 %v318, %v350
      %v383 = vmax.f32 %v319, %v351
      %v384 = vmax.f32 %v320, %v352
      %v385 = vmax.f32 %v321, %v353
      %v386 = vmax.f32 %v322, %v354
      %v387 = vmax.f32 %v323, %v355
      %v388 = vmax.f32 %v324, %v356
      %v389 = vmax.f32 %v325, %v357
      %v390 = vmax.f32 %v326, %v358
      %v391 = vmax.f32 %v327, %v359
      %v392 = vmax.f32 %v328, %v360
      %v393 = vmax.f32 %v329, %v361
      %v394 = vmax.f32 %v330, %v362
      %v395 = vmax.f32 %v331, %v363
      %v396 = vmax.f32 %v332, %v364
      %v397 = vmax.f32 %v333, %v365
      %v398 = vmax.f32 %v334, %v366
      %v399 = vmax.f32 %v335, %v367
      %v400 = vmax.f32 %v336, %v368
      %v401 = vmax.f32 %v337, %v369
      %v402 = vmax.f32 %v338, %v370
      %v403 = vmax.f32 %v339, %v371
      %v404 = vmax.f32 %v340, %v372
      %v405 = vmax.f32 %v341, %v373
      %v406 = vmax.f32 %v342, %v374
      %v407 = vmax.f32 %v343, %v375
      %vm408 = vcmask 64512
      %409 = vst.msk [vmem:[#allocation2] sm:$0xff] %vm408, 0.0
      %410 = vst.msk [vmem:[#allocation2 + $0x8] sm:$0xff] %vm408, 0.0
      %vm411 = vcmask 58368
      %412 = vst.msk [vmem:[#allocation2 + $0x10] sm:$0x3] %vm411, 0.0
      %413 = vst.msk [vmem:[#allocation2 + $0x18] sm:$0xff] %vm408, 0.0
      %414 = vst.msk [vmem:[#allocation2 + $0x20] sm:$0xff] %vm408, 0.0
      %415 = vst.msk [vmem:[#allocation2 + $0x28] sm:$0x3] %vm411, 0.0
      %416 = vst.msk [vmem:[#allocation2 + $0x30] sm:$0xff] %vm408, 0.0
      %417 = vst.msk [vmem:[#allocation2 + $0x38] sm:$0xff] %vm408, 0.0
      %418 = vst.msk [vmem:[#allocation2 + $0x40] sm:$0x3] %vm411, 0.0
      %419 = vst.msk [vmem:[#allocation2 + $0x48] sm:$0xff] %vm408, 0.0
      %420 = vst.msk [vmem:[#allocation2 + $0x50] sm:$0xff] %vm408, 0.0
      %421 = vst.msk [vmem:[#allocation2 + $0x58] sm:$0x3] %vm411, 0.0
      %422 = vst.msk [vmem:[#allocation2 + $0x60] sm:$0xff] %vm408, 0.0
      %423 = vst.msk [vmem:[#allocation2 + $0x68] sm:$0xff] %vm408, 0.0
      %424 = vst.msk [vmem:[#allocation2 + $0x70] sm:$0x3] %vm411, 0.0
      %425 = vst.msk [vmem:[#allocation2 + $0x78] sm:$0xff] %vm408, 0.0
      %426 = vst.msk [vmem:[#allocation2 + $0x80] sm:$0xff] %vm408, 0.0
      %427 = vst.msk [vmem:[#allocation2 + $0x88] sm:$0x3] %vm411, 0.0
      %428 = vst.msk [vmem:[#allocation2 + $0x90] sm:$0xff] %vm408, 0.0
      %429 = vst.msk [vmem:[#allocation2 + $0x98] sm:$0xff] %vm408, 0.0
      %430 = vst.msk [vmem:[#allocation2 + $0xa0] sm:$0x3] %vm411, 0.0
      %431 = vst.msk [vmem:[#allocation2 + $0xa8] sm:$0xff] %vm408, 0.0
      %432 = vst.msk [vmem:[#allocation2 + $0xb0] sm:$0xff] %vm408, 0.0
      %433 = vst.msk [vmem:[#allocation2 + $0xb8] sm:$0x3] %vm411, 0.0
      %434 = vst.msk [vmem:[#allocation2 + $0xc0] sm:$0xff] %vm408, 0.0
      %435 = vst.msk [vmem:[#allocation2 + $0xc8] sm:$0xff] %vm408, 0.0
      %436 = vst.msk [vmem:[#allocation2 + $0xd0] sm:$0x3] %vm411, 0.0
      %437 = vst.msk [vmem:[#allocation2 + $0xd8] sm:$0xff] %vm408, 0.0
      %438 = vst.msk [vmem:[#allocation2 + $0xe0] sm:$0xff] %vm408, 0.0
      %439 = vst.msk [vmem:[#allocation2 + $0xe8] sm:$0x3] %vm411, 0.0
      %440 = vst.msk [vmem:[#allocation2 + $0xf0] sm:$0xff] %vm408, 0.0
      %441 = vst.msk [vmem:[#allocation2 + $0xf8] sm:$0xff] %vm408, 0.0
      %442 = vst.msk [vmem:[#allocation2 + $0x100] sm:$0x3] %vm411, 0.0
      %443 = vst.msk [vmem:[#allocation2 + $0x108] sm:$0xff] %vm408, 0.0
      %444 = vst.msk [vmem:[#allocation2 + $0x110] sm:$0xff] %vm408, 0.0
      %445 = vst.msk [vmem:[#allocation2 + $0x118] sm:$0x3] %vm411, 0.0
      %446 = vst.msk [vmem:[#allocation2 + $0x120] sm:$0xff] %vm408, 0.0
      %447 = vst.msk [vmem:[#allocation2 + $0x128] sm:$0xff] %vm408, 0.0
      %448 = vst.msk [vmem:[#allocation2 + $0x130] sm:$0x3] %vm411, 0.0
      %449 = vst.msk [vmem:[#allocation2 + $0x138] sm:$0xff] %vm408, 0.0
      %450 = vst.msk [vmem:[#allocation2 + $0x140] sm:$0xff] %vm408, 0.0
      %451 = vst.msk [vmem:[#allocation2 + $0x148] sm:$0x3] %vm411, 0.0
      %452 = vst.msk [vmem:[#allocation2 + $0x150] sm:$0xff] %vm408, 0.0
      %453 = vst.msk [vmem:[#allocation2 + $0x158] sm:$0xff] %vm408, 0.0
      %454 = vst.msk [vmem:[#allocation2 + $0x160] sm:$0x3] %vm411, 0.0
      %455 = vst.msk [vmem:[#allocation2 + $0x168] sm:$0xff] %vm408, 0.0
      %456 = vst.msk [vmem:[#allocation2 + $0x170] sm:$0xff] %vm408, 0.0
      %457 = vst.msk [vmem:[#allocation2 + $0x178] sm:$0x3] %vm411, 0.0
      %458 = vst.msk [vmem:[#allocation2 + $0x180] sm:$0xff] %vm408, 0.0
      %459 = vst.msk [vmem:[#allocation2 + $0x188] sm:$0xff] %vm408, 0.0
      %460 = vst.msk [vmem:[#allocation2 + $0x190] sm:$0x3] %vm411, 0.0
      %461 = vst.msk [vmem:[#allocation2 + $0x198] sm:$0xff] %vm408, 0.0
      %462 = vst.msk [vmem:[#allocation2 + $0x1a0] sm:$0xff] %vm408, 0.0
      %463 = vst.msk [vmem:[#allocation2 + $0x1a8] sm:$0x3] %vm411, 0.0
      %s464 = scalar_lea.vmem [#allocation2], 24
      %465 = vst.msk [vmem:[%s464 + $0x1] sm:$0xff] %vm408, %v376
      %466 = vst.msk [vmem:[%s464 + $0x9] sm:$0xff] %vm408, %v377
      %467 = vst.msk [vmem:[%s464 + $0x19] sm:$0xff] %vm408, %v378
      %468 = vst.msk [vmem:[%s464 + $0x21] sm:$0xff] %vm408, %v379
      %469 = vst.msk [vmem:[%s464 + $0x31] sm:$0xff] %vm408, %v380
      %470 = vst.msk [vmem:[%s464 + $0x39] sm:$0xff] %vm408, %v381
      %471 = vst.msk [vmem:[%s464 + $0x49] sm:$0xff] %vm408, %v382
      %472 = vst.msk [vmem:[%s464 + $0x51] sm:$0xff] %vm408, %v383
      %473 = vst.msk [vmem:[%s464 + $0x61] sm:$0xff] %vm408, %v384
      %474 = vst.msk [vmem:[%s464 + $0x69] sm:$0xff] %vm408, %v385
      %475 = vst.msk [vmem:[%s464 + $0x79] sm:$0xff] %vm408, %v386
      %476 = vst.msk [vmem:[%s464 + $0x81] sm:$0xff] %vm408, %v387
      %477 = vst.msk [vmem:[%s464 + $0x91] sm:$0xff] %vm408, %v388
      %478 = vst.msk [vmem:[%s464 + $0x99] sm:$0xff] %vm408, %v389
      %479 = vst.msk [vmem:[%s464 + $0xa9] sm:$0xff] %vm408, %v390
      %480 = vst.msk [vmem:[%s464 + $0xb1] sm:$0xff] %vm408, %v391
      %481 = vst.msk [vmem:[%s464 + $0xc1] sm:$0xff] %vm408, %v392
      %482 = vst.msk [vmem:[%s464 + $0xc9] sm:$0xff] %vm408, %v393
      %483 = vst.msk [vmem:[%s464 + $0xd9] sm:$0xff] %vm408, %v394
      %484 = vst.msk [vmem:[%s464 + $0xe1] sm:$0xff] %vm408, %v395
      %485 = vst.msk [vmem:[%s464 + $0xf1] sm:$0xff] %vm408, %v396
      %486 = vst.msk [vmem:[%s464 + $0xf9] sm:$0xff] %vm408, %v397
      %487 = vst.msk [vmem:[%s464 + $0x109] sm:$0xff] %vm408, %v398
      %488 = vst.msk [vmem:[%s464 + $0x111] sm:$0xff] %vm408, %v399
      %489 = vst.msk [vmem:[%s464 + $0x121] sm:$0xff] %vm408, %v400
      %490 = vst.msk [vmem:[%s464 + $0x129] sm:$0xff] %vm408, %v401
      %491 = vst.msk [vmem:[%s464 + $0x139] sm:$0xff] %vm408, %v402
      %492 = vst.msk [vmem:[%s464 + $0x141] sm:$0xff] %vm408, %v403
      %493 = vst.msk [vmem:[%s464 + $0x151] sm:$0xff] %vm408, %v404
      %494 = vst.msk [vmem:[%s464 + $0x159] sm:$0xff] %vm408, %v405
      %495 = vst.msk [vmem:[%s464 + $0x169] sm:$0xff] %vm408, %v406
      %496 = vst.msk [vmem:[%s464 + $0x171] sm:$0xff] %vm408, %v407
      %v497 = vld [vmem:[#allocation2] sm:$0xff]
      %v498 = vld [vmem:[#allocation2 + $0x8] sm:$0xff]
      %v499 = vld [vmem:[#allocation2 + $0x18] sm:$0xff]
      %v500 = vld [vmem:[#allocation2 + $0x20] sm:$0xff]
      %v501 = vld [vmem:[#allocation2 + $0x30] sm:$0xff]
      %v502 = vld [vmem:[#allocation2 + $0x38] sm:$0xff]
      %v503 = vld [vmem:[#allocation2 + $0x48] sm:$0xff]
      %v504 = vld [vmem:[#allocation2 + $0x50] sm:$0xff]
      %v505 = vld [vmem:[#allocation2 + $0x60] sm:$0xff]
      %v506 = vld [vmem:[#allocation2 + $0x68] sm:$0xff]
      %v507 = vld [vmem:[#allocation2 + $0x78] sm:$0xff]
      %v508 = vld [vmem:[#allocation2 + $0x80] sm:$0xff]
      %v509 = vld [vmem:[#allocation2 + $0x90] sm:$0xff]
      %v510 = vld [vmem:[#allocation2 + $0x98] sm:$0xff]
      %v511 = vld [vmem:[#allocation2 + $0xa8] sm:$0xff]
      %v512 = vld [vmem:[#allocation2 + $0xb0] sm:$0xff]
      %v513 = vld [vmem:[#allocation2 + $0xc0] sm:$0xff]
      %v514 = vld [vmem:[#allocation2 + $0xc8] sm:$0xff]
      %v515 = vld [vmem:[#allocation2 + $0xd8] sm:$0xff]
      %v516 = vld [vmem:[#allocation2 + $0xe0] sm:$0xff]
      %v517 = vld [vmem:[#allocation2 + $0xf0] sm:$0xff]
      %v518 = vld [vmem:[#allocation2 + $0xf8] sm:$0xff]
      %v519 = vld [vmem:[#allocation2 + $0x108] sm:$0xff]
      %v520 = vld [vmem:[#allocation2 + $0x110] sm:$0xff]
      %v521 = vld [vmem:[#allocation2 + $0x120] sm:$0xff]
      %v522 = vld [vmem:[#allocation2 + $0x128] sm:$0xff]
      %v523 = vld [vmem:[#allocation2 + $0x138] sm:$0xff]
      %v524 = vld [vmem:[#allocation2 + $0x140] sm:$0xff]
      %v525 = vld [vmem:[#allocation2 + $0x150] sm:$0xff]
      %v526 = vld [vmem:[#allocation2 + $0x158] sm:$0xff]
      %v527 = vld [vmem:[#allocation2 + $0x168] sm:$0xff]
      %v528 = vld [vmem:[#allocation2 + $0x170] sm:$0xff]
      %v529 = vld [vmem:[%s1] sm:$0xff]
      %v530 = vld [vmem:[#allocation2 + $0x1] sm:$0xff]
      %v531 = vld [vmem:[#allocation2 + $0x9] sm:$0xff]
      %v532 = vld [vmem:[#allocation2 + $0x19] sm:$0xff]
      %v533 = vld [vmem:[#allocation2 + $0x21] sm:$0xff]
      %v534 = vld [vmem:[#allocation2 + $0x31] sm:$0xff]
      %v535 = vld [vmem:[#allocation2 + $0x39] sm:$0xff]
      %v536 = vld [vmem:[#allocation2 + $0x49] sm:$0xff]
      %v537 = vld [vmem:[#allocation2 + $0x51] sm:$0xff]
      %v538 = vld [vmem:[#allocation2 + $0x61] sm:$0xff]
      %v539 = vld [vmem:[#allocation2 + $0x69] sm:$0xff]
      %v540 = vld [vmem:[#allocation2 + $0x79] sm:$0xff]
      %v541 = vld [vmem:[#allocation2 + $0x81] sm:$0xff]
      %v542 = vld [vmem:[#allocation2 + $0x91] sm:$0xff]
      %v543 = vld [vmem:[#allocation2 + $0x99] sm:$0xff]
      %v544 = vld [vmem:[#allocation2 + $0xa9] sm:$0xff]
      %v545 = vld [vmem:[#allocation2 + $0xb1] sm:$0xff]
      %v546 = vld [vmem:[#allocation2 + $0xc1] sm:$0xff]
      %v547 = vld [vmem:[#allocation2 + $0xc9] sm:$0xff]
      %v548 = vld [vmem:[#allocation2 + $0xd9] sm:$0xff]
      %v549 = vld [vmem:[#allocation2 + $0xe1] sm:$0xff]
      %v550 = vld [vmem:[#allocation2 + $0xf1] sm:$0xff]
      %v551 = vld [vmem:[#allocation2 + $0xf9] sm:$0xff]
      %v552 = vld [vmem:[#allocation2 + $0x109] sm:$0xff]
      %v553 = vld [vmem:[#allocation2 + $0x111] sm:$0xff]
      %v554 = vld [vmem:[#allocation2 + $0x121] sm:$0xff]
      %v555 = vld [vmem:[#allocation2 + $0x129] sm:$0xff]
      %v556 = vld [vmem:[#allocation2 + $0x139] sm:$0xff]
      %v557 = vld [vmem:[#allocation2 + $0x141] sm:$0xff]
      %v558 = vld [vmem:[#allocation2 + $0x151] sm:$0xff]
      %v559 = vld [vmem:[#allocation2 + $0x159] sm:$0xff]
      %v560 = vld [vmem:[#allocation2 + $0x169] sm:$0xff]
      %v561 = vld [vmem:[#allocation2 + $0x171] sm:$0xff]
      %s562 = scalar_lea.vmem %s1, 8
      %v563 = vld [vmem:[%s562] sm:$0xff]
      %v565 = vsel %vm408, %v530, 0
      %v568 = vsel %vm408, %v531, 0
      %v571 = vsel %vm408, %v532, 0
      %v574 = vsel %vm408, %v533, 0
      %v577 = vsel %vm408, %v534, 0
      %v580 = vsel %vm408, %v535, 0
      %v583 = vsel %vm408, %v536, 0
      %v586 = vsel %vm408, %v537, 0
      %v589 = vsel %vm408, %v538, 0
      %v592 = vsel %vm408, %v539, 0
      %v595 = vsel %vm408, %v540, 0
      %v598 = vsel %vm408, %v541, 0
      %v601 = vsel %vm408, %v542, 0
      %v604 = vsel %vm408, %v543, 0
      %v607 = vsel %vm408, %v544, 0
      %v610 = vsel %vm408, %v545, 0
      %v613 = vsel %vm408, %v546, 0
      %v616 = vsel %vm408, %v547, 0
      %v619 = vsel %vm408, %v548, 0
      %v622 = vsel %vm408, %v549, 0
      %v625 = vsel %vm408, %v550, 0
      %v628 = vsel %vm408, %v551, 0
      %v631 = vsel %vm408, %v552, 0
      %v634 = vsel %vm408, %v553, 0
      %v637 = vsel %vm408, %v554, 0
      %v640 = vsel %vm408, %v555, 0
      %v643 = vsel %vm408, %v556, 0
      %v646 = vsel %vm408, %v557, 0
      %v649 = vsel %vm408, %v558, 0
      %v652 = vsel %vm408, %v559, 0
      %v655 = vsel %vm408, %v560, 0
      %v658 = vsel %vm408, %v561, 0
      %660 = vmatprep.subr.mxu0 0.0
      %661 = vmatpush1.msra.mxu0 0.0
      %662 = vmatprep.subr.mxu0 0.0
      %663 = vmatpush1.msra.mxu0 0.0
      %664 = vmatprep.subr.mxu0 0.0
      %665 = vmatpush1.msra.mxu0 0.0
      %666 = vmatprep.subr.mxu0 0.0
      %667 = vmatpush1.msra.mxu0 0.0
      %668 = vmatprep.subr.mxu0 0.0
      %669 = vmatpush1.msra.mxu0 0.0
      %670 = vmatprep.subr.mxu0 0.0
      %671 = vmatpush1.msra.mxu0 0.0
      %672 = vmatprep.subr.mxu0 0.0
      %673 = vmatpush1.msra.mxu0 0.0
      %674 = vmatprep.subr.mxu0 0.0
      %675 = vmatpush1.msra.mxu0 0.0
      %676 = vmatprep.subr.mxu0 0.0
      %677 = vmatpush1.msra.mxu0 0.0
      %678 = vmatprep.subr.mxu0 0.0
      %679 = vmatpush1.msra.mxu0 0.0
      %680 = vmatprep.subr.mxu0 0.0
      %681 = vmatpush1.msra.mxu0 0.0
      %682 = vmatprep.subr.mxu0 0.0
      %683 = vmatpush1.msra.mxu0 0.0
      %684 = vmatprep.subr.mxu0 0.0
      %685 = vmatpush1.msra.mxu0 0.0
      %686 = vmatprep.subr.mxu0 0.0
      %687 = vmatpush1.msra.mxu0 0.0
      %688 = vmatprep.subr.mxu0 0.0
      %689 = vmatpush1.msra.mxu0 0.0
      %690 = vmatprep.subr.mxu0 0.0
      %691 = vmatpush1.msra.mxu0 %v563
      %692 = vmatprep.subr.mxu0 0.0
      %693 = vmatpush2.msra.mxu0 0.0
      %694 = vmatprep.subr.mxu0 0.0
      %695 = vmatpush2.msra.mxu0 0.0
      %696 = vmatprep.subr.mxu0 0.0
      %697 = vmatpush2.msra.mxu0 0.0
      %698 = vmatprep.subr.mxu0 0.0
      %699 = vmatpush2.msra.mxu0 0.0
      %700 = vmatprep.subr.mxu0 0.0
      %701 = vmatpush2.msra.mxu0 0.0
      %702 = vmatprep.subr.mxu0 0.0
      %703 = vmatpush2.msra.mxu0 0.0
      %704 = vmatprep.subr.mxu0 0.0
      %705 = vmatpush2.msra.mxu0 0.0
      %706 = vmatprep.subr.mxu0 0.0
      %707 = vmatpush2.msra.mxu0 0.0
      %708 = vmatprep.subr.mxu0 0.0
      %709 = vmatpush2.msra.mxu0 0.0
      %710 = vmatprep.subr.mxu0 0.0
      %711 = vmatpush2.msra.mxu0 0.0
      %712 = vmatprep.subr.mxu0 0.0
      %713 = vmatpush2.msra.mxu0 0.0
      %714 = vmatprep.subr.mxu0 0.0
      %715 = vmatpush2.msra.mxu0 0.0
      %716 = vmatprep.subr.mxu0 0.0
      %717 = vmatpush2.msra.mxu0 0.0
      %718 = vmatprep.subr.mxu0 0.0
      %719 = vmatpush2.msra.mxu0 0.0
      %720 = vmatprep.subr.mxu0 0.0
      %721 = vmatpush2.msra.mxu0 0.0
      %722 = vmatprep.subr.mxu0 0.0
      %723 = vmatpush2.msra.mxu0 0.0
      %724 = vmatprep.mubr.f32.mxu0 0.0
      %725 = vmatmul.mubr.f32.gmra.mxu0 %v565
      %v726 = vpop.f32.mrf.mxu0
      %v727 = vadd.f32 0.0, %v726
      %v728 = vpop.f32.mrf.mxu0
      %729 = vmatprep.mubr.f32.mxu0 0.0
      %730 = vmatmul.mubr.f32.gmra.mxu0 %v568
      %v731 = vpop.f32.mrf.mxu0
      %v732 = vadd.f32 0.0, %v731
      %v733 = vpop.f32.mrf.mxu0
      %734 = vmatprep.mubr.f32.mxu0 0.0
      %735 = vmatmul.mubr.f32.gmra.mxu0 %v571
      %v736 = vpop.f32.mrf.mxu0
      %v737 = vadd.f32 0.0, %v736
      %v738 = vpop.f32.mrf.mxu0
      %739 = vmatprep.mubr.f32.mxu0 0.0
      %740 = vmatmul.mubr.f32.gmra.mxu0 %v574
      %v741 = vpop.f32.mrf.mxu0
      %v742 = vadd.f32 0.0, %v741
      %v743 = vpop.f32.mrf.mxu0
      %744 = vmatprep.mubr.f32.mxu0 0.0
      %745 = vmatmul.mubr.f32.gmra.mxu0 %v577
      %v746 = vpop.f32.mrf.mxu0
      %v747 = vadd.f32 0.0, %v746
      %v748 = vpop.f32.mrf.mxu0
      %749 = vmatprep.mubr.f32.mxu0 0.0
      %750 = vmatmul.mubr.f32.gmra.mxu0 %v580
      %v751 = vpop.f32.mrf.mxu0
      %v752 = vadd.f32 0.0, %v751
      %v753 = vpop.f32.mrf.mxu0
      %754 = vmatprep.mubr.f32.mxu0 0.0
      %755 = vmatmul.mubr.f32.gmra.mxu0 %v583
      %v756 = vpop.f32.mrf.mxu0
      %v757 = vadd.f32 0.0, %v756
      %v758 = vpop.f32.mrf.mxu0
      %759 = vmatprep.mubr.f32.mxu0 0.0
      %760 = vmatmul.mubr.f32.gmra.mxu0 %v586
      %v761 = vpop.f32.mrf.mxu0
      %v762 = vadd.f32 0.0, %v761
      %v763 = vpop.f32.mrf.mxu0
      %764 = vmatprep.mubr.f32.mxu0 0.0
      %765 = vmatmul.mubr.f32.gmra.mxu0 %v589
      %v766 = vpop.f32.mrf.mxu0
      %v767 = vadd.f32 0.0, %v766
      %v768 = vpop.f32.mrf.mxu0
      %769 = vmatprep.mubr.f32.mxu0 0.0
      %770 = vmatmul.mubr.f32.gmra.mxu0 %v592
      %v771 = vpop.f32.mrf.mxu0
      %v772 = vadd.f32 0.0, %v771
      %v773 = vpop.f32.mrf.mxu0
      %774 = vmatprep.mubr.f32.mxu0 0.0
      %775 = vmatmul.mubr.f32.gmra.mxu0 %v595
      %v776 = vpop.f32.mrf.mxu0
      %v777 = vadd.f32 0.0, %v776
      %v778 = vpop.f32.mrf.mxu0
      %779 = vmatprep.mubr.f32.mxu0 0.0
      %780 = vmatmul.mubr.f32.gmra.mxu0 %v598
      %v781 = vpop.f32.mrf.mxu0
      %v782 = vadd.f32 0.0, %v781
      %v783 = vpop.f32.mrf.mxu0
      %784 = vmatprep.mubr.f32.mxu0 0.0
      %785 = vmatmul.mubr.f32.gmra.mxu0 %v601
      %v786 = vpop.f32.mrf.mxu0
      %v787 = vadd.f32 0.0, %v786
      %v788 = vpop.f32.mrf.mxu0
      %789 = vmatprep.mubr.f32.mxu0 0.0
      %790 = vmatmul.mubr.f32.gmra.mxu0 %v604
      %v791 = vpop.f32.mrf.mxu0
      %v792 = vadd.f32 0.0, %v791
      %v793 = vpop.f32.mrf.mxu0
      %794 = vmatprep.mubr.f32.mxu0 0.0
      %795 = vmatmul.mubr.f32.gmra.mxu0 %v607
      %v796 = vpop.f32.mrf.mxu0
      %v797 = vadd.f32 0.0, %v796
      %v798 = vpop.f32.mrf.mxu0
      %799 = vmatprep.mubr.f32.mxu0 0.0
      %800 = vmatmul.mubr.f32.gmra.mxu0 %v610
      %v801 = vpop.f32.mrf.mxu0
      %v802 = vadd.f32 0.0, %v801
      %v803 = vpop.f32.mrf.mxu0
      %804 = vmatprep.mubr.f32.mxu0 0.0
      %805 = vmatmul.mubr.f32.gmra.mxu0 %v613
      %v806 = vpop.f32.mrf.mxu0
      %v807 = vadd.f32 0.0, %v806
      %v808 = vpop.f32.mrf.mxu0
      %809 = vmatprep.mubr.f32.mxu0 0.0
      %810 = vmatmul.mubr.f32.gmra.mxu0 %v616
      %v811 = vpop.f32.mrf.mxu0
      %v812 = vadd.f32 0.0, %v811
      %v813 = vpop.f32.mrf.mxu0
      %814 = vmatprep.mubr.f32.mxu0 0.0
      %815 = vmatmul.mubr.f32.gmra.mxu0 %v619
      %v816 = vpop.f32.mrf.mxu0
      %v817 = vadd.f32 0.0, %v816
      %v818 = vpop.f32.mrf.mxu0
      %819 = vmatprep.mubr.f32.mxu0 0.0
      %820 = vmatmul.mubr.f32.gmra.mxu0 %v622
      %v821 = vpop.f32.mrf.mxu0
      %v822 = vadd.f32 0.0, %v821
      %v823 = vpop.f32.mrf.mxu0
      %824 = vmatprep.mubr.f32.mxu0 0.0
      %825 = vmatmul.mubr.f32.gmra.mxu0 %v625
      %v826 = vpop.f32.mrf.mxu0
      %v827 = vadd.f32 0.0, %v826
      %v828 = vpop.f32.mrf.mxu0
      %829 = vmatprep.mubr.f32.mxu0 0.0
      %830 = vmatmul.mubr.f32.gmra.mxu0 %v628
      %v831 = vpop.f32.mrf.mxu0
      %v832 = vadd.f32 0.0, %v831
      %v833 = vpop.f32.mrf.mxu0
      %834 = vmatprep.mubr.f32.mxu0 0.0
      %835 = vmatmul.mubr.f32.gmra.mxu0 %v631
      %v836 = vpop.f32.mrf.mxu0
      %v837 = vadd.f32 0.0, %v836
      %v838 = vpop.f32.mrf.mxu0
      %839 = vmatprep.mubr.f32.mxu0 0.0
      %840 = vmatmul.mubr.f32.gmra.mxu0 %v634
      %v841 = vpop.f32.mrf.mxu0
      %v842 = vadd.f32 0.0, %v841
      %v843 = vpop.f32.mrf.mxu0
      %844 = vmatprep.mubr.f32.mxu0 0.0
      %845 = vmatmul.mubr.f32.gmra.mxu0 %v637
      %v846 = vpop.f32.mrf.mxu0
      %v847 = vadd.f32 0.0, %v846
      %v848 = vpop.f32.mrf.mxu0
      %849 = vmatprep.mubr.f32.mxu0 0.0
      %850 = vmatmul.mubr.f32.gmra.mxu0 %v640
      %v851 = vpop.f32.mrf.mxu0
      %v852 = vadd.f32 0.0, %v851
      %v853 = vpop.f32.mrf.mxu0
      %854 = vmatprep.mubr.f32.mxu0 0.0
      %855 = vmatmul.mubr.f32.gmra.mxu0 %v643
      %v856 = vpop.f32.mrf.mxu0
      %v857 = vadd.f32 0.0, %v856
      %v858 = vpop.f32.mrf.mxu0
      %859 = vmatprep.mubr.f32.mxu0 0.0
      %860 = vmatmul.mubr.f32.gmra.mxu0 %v646
      %v861 = vpop.f32.mrf.mxu0
      %v862 = vadd.f32 0.0, %v861
      %v863 = vpop.f32.mrf.mxu0
      %864 = vmatprep.mubr.f32.mxu0 0.0
      %865 = vmatmul.mubr.f32.gmra.mxu0 %v649
      %v866 = vpop.f32.mrf.mxu0
      %v867 = vadd.f32 0.0, %v866
      %v868 = vpop.f32.mrf.mxu0
      %869 = vmatprep.mubr.f32.mxu0 0.0
      %870 = vmatmul.mubr.f32.gmra.mxu0 %v652
      %v871 = vpop.f32.mrf.mxu0
      %v872 = vadd.f32 0.0, %v871
      %v873 = vpop.f32.mrf.mxu0
      %874 = vmatprep.mubr.f32.mxu0 0.0
      %875 = vmatmul.mubr.f32.gmra.mxu0 %v655
      %v876 = vpop.f32.mrf.mxu0
      %v877 = vadd.f32 0.0, %v876
      %v878 = vpop.f32.mrf.mxu0
      %879 = vmatprep.mubr.f32.mxu0 0.0
      %880 = vmatmul.mubr.f32.gmra.mxu0 %v658
      %v881 = vpop.f32.mrf.mxu0
      %v882 = vadd.f32 0.0, %v881
      %v883 = vpop.f32.mrf.mxu0
      %884 = vdwg.mxu0
      %v886 = vsel %vm408, %v497, 0
      %v889 = vsel %vm408, %v498, 0
      %v892 = vsel %vm408, %v499, 0
      %v895 = vsel %vm408, %v500, 0
      %v898 = vsel %vm408, %v501, 0
      %v901 = vsel %vm408, %v502, 0
      %v904 = vsel %vm408, %v503, 0
      %v907 = vsel %vm408, %v504, 0
      %v910 = vsel %vm408, %v505, 0
      %v913 = vsel %vm408, %v506, 0
      %v916 = vsel %vm408, %v507, 0
      %v919 = vsel %vm408, %v508, 0
      %v922 = vsel %vm408, %v509, 0
      %v925 = vsel %vm408, %v510, 0
      %v928 = vsel %vm408, %v511, 0
      %v931 = vsel %vm408, %v512, 0
      %v934 = vsel %vm408, %v513, 0
      %v937 = vsel %vm408, %v514, 0
      %v940 = vsel %vm408, %v515, 0
      %v943 = vsel %vm408, %v516, 0
      %v946 = vsel %vm408, %v517, 0
      %v949 = vsel %vm408, %v518, 0
      %v952 = vsel %vm408, %v519, 0
      %v955 = vsel %vm408, %v520, 0
      %v958 = vsel %vm408, %v521, 0
      %v961 = vsel %vm408, %v522, 0
      %v964 = vsel %vm408, %v523, 0
      %v967 = vsel %vm408, %v524, 0
      %v970 = vsel %vm408, %v525, 0
      %v973 = vsel %vm408, %v526, 0
      %v976 = vsel %vm408, %v527, 0
      %v979 = vsel %vm408, %v528, 0
      %981 = vmatprep.subr.mxu0 0.0
      %982 = vmatpush1.msra.mxu0 0.0
      %983 = vmatprep.subr.mxu0 0.0
      %984 = vmatpush1.msra.mxu0 0.0
      %985 = vmatprep.subr.mxu0 0.0
      %986 = vmatpush1.msra.mxu0 0.0
      %987 = vmatprep.subr.mxu0 0.0
      %988 = vmatpush1.msra.mxu0 0.0
      %989 = vmatprep.subr.mxu0 0.0
      %990 = vmatpush1.msra.mxu0 0.0
      %991 = vmatprep.subr.mxu0 0.0
      %992 = vmatpush1.msra.mxu0 0.0
      %993 = vmatprep.subr.mxu0 0.0
      %994 = vmatpush1.msra.mxu0 0.0
      %995 = vmatprep.subr.mxu0 0.0
      %996 = vmatpush1.msra.mxu0 0.0
      %997 = vmatprep.subr.mxu0 0.0
      %998 = vmatpush1.msra.mxu0 0.0
      %999 = vmatprep.subr.mxu0 0.0
      %1000 = vmatpush1.msra.mxu0 0.0
      %1001 = vmatprep.subr.mxu0 0.0
      %1002 = vmatpush1.msra.mxu0 0.0
      %1003 = vmatprep.subr.mxu0 0.0
      %1004 = vmatpush1.msra.mxu0 0.0
      %1005 = vmatprep.subr.mxu0 0.0
      %1006 = vmatpush1.msra.mxu0 0.0
      %1007 = vmatprep.subr.mxu0 0.0
      %1008 = vmatpush1.msra.mxu0 0.0
      %1009 = vmatprep.subr.mxu0 0.0
      %1010 = vmatpush1.msra.mxu0 0.0
      %1011 = vmatprep.subr.mxu0 0.0
      %1012 = vmatpush1.msra.mxu0 %v529
      %1013 = vmatprep.subr.mxu0 0.0
      %1014 = vmatpush2.msra.mxu0 0.0
      %1015 = vmatprep.subr.mxu0 0.0
      %1016 = vmatpush2.msra.mxu0 0.0
      %1017 = vmatprep.subr.mxu0 0.0
      %1018 = vmatpush2.msra.mxu0 0.0
      %1019 = vmatprep.subr.mxu0 0.0
      %1020 = vmatpush2.msra.mxu0 0.0
      %1021 = vmatprep.subr.mxu0 0.0
      %1022 = vmatpush2.msra.mxu0 0.0
      %1023 = vmatprep.subr.mxu0 0.0
      %1024 = vmatpush2.msra.mxu0 0.0
      %1025 = vmatprep.subr.mxu0 0.0
      %1026 = vmatpush2.msra.mxu0 0.0
      %1027 = vmatprep.subr.mxu0 0.0
      %1028 = vmatpush2.msra.mxu0 0.0
      %1029 = vmatprep.subr.mxu0 0.0
      %1030 = vmatpush2.msra.mxu0 0.0
      %1031 = vmatprep.subr.mxu0 0.0
      %1032 = vmatpush2.msra.mxu0 0.0
      %1033 = vmatprep.subr.mxu0 0.0
      %1034 = vmatpush2.msra.mxu0 0.0
      %1035 = vmatprep.subr.mxu0 0.0
      %1036 = vmatpush2.msra.mxu0 0.0
      %1037 = vmatprep.subr.mxu0 0.0
      %1038 = vmatpush2.msra.mxu0 0.0
      %1039 = vmatprep.subr.mxu0 0.0
      %1040 = vmatpush2.msra.mxu0 0.0
      %1041 = vmatprep.subr.mxu0 0.0
      %1042 = vmatpush2.msra.mxu0 0.0
      %1043 = vmatprep.subr.mxu0 0.0
      %1044 = vmatpush2.msra.mxu0 0.0
      %1045 = vmatprep.mubr.f32.mxu0 0.0
      %1046 = vmatmul.mubr.f32.gmra.mxu0 %v886
      %v1047 = vpop.f32.mrf.mxu0
      %v1048 = vadd.f32 %v727, %v1047
      %v1049 = vpop.f32.mrf.mxu0
      %1050 = vmatprep.mubr.f32.mxu0 0.0
      %1051 = vmatmul.mubr.f32.gmra.mxu0 %v889
      %v1052 = vpop.f32.mrf.mxu0
      %v1053 = vadd.f32 %v732, %v1052
      %v1054 = vpop.f32.mrf.mxu0
      %1055 = vmatprep.mubr.f32.mxu0 0.0
      %1056 = vmatmul.mubr.f32.gmra.mxu0 %v892
      %v1057 = vpop.f32.mrf.mxu0
      %v1058 = vadd.f32 %v737, %v1057
      %v1059 = vpop.f32.mrf.mxu0
      %1060 = vmatprep.mubr.f32.mxu0 0.0
      %1061 = vmatmul.mubr.f32.gmra.mxu0 %v895
      %v1062 = vpop.f32.mrf.mxu0
      %v1063 = vadd.f32 %v742, %v1062
      %v1064 = vpop.f32.mrf.mxu0
      %1065 = vmatprep.mubr.f32.mxu0 0.0
      %1066 = vmatmul.mubr.f32.gmra.mxu0 %v898
      %v1067 = vpop.f32.mrf.mxu0
      %v1068 = vadd.f32 %v747, %v1067
      %v1069 = vpop.f32.mrf.mxu0
      %1070 = vmatprep.mubr.f32.mxu0 0.0
      %1071 = vmatmul.mubr.f32.gmra.mxu0 %v901
      %v1072 = vpop.f32.mrf.mxu0
      %v1073 = vadd.f32 %v752, %v1072
      %v1074 = vpop.f32.mrf.mxu0
      %1075 = vmatprep.mubr.f32.mxu0 0.0
      %1076 = vmatmul.mubr.f32.gmra.mxu0 %v904
      %v1077 = vpop.f32.mrf.mxu0
      %v1078 = vadd.f32 %v757, %v1077
      %v1079 = vpop.f32.mrf.mxu0
      %1080 = vmatprep.mubr.f32.mxu0 0.0
      %1081 = vmatmul.mubr.f32.gmra.mxu0 %v907
      %v1082 = vpop.f32.mrf.mxu0
      %v1083 = vadd.f32 %v762, %v1082
      %v1084 = vpop.f32.mrf.mxu0
      %1085 = vmatprep.mubr.f32.mxu0 0.0
      %1086 = vmatmul.mubr.f32.gmra.mxu0 %v910
      %v1087 = vpop.f32.mrf.mxu0
      %v1088 = vadd.f32 %v767, %v1087
      %v1089 = vpop.f32.mrf.mxu0
      %1090 = vmatprep.mubr.f32.mxu0 0.0
      %1091 = vmatmul.mubr.f32.gmra.mxu0 %v913
      %v1092 = vpop.f32.mrf.mxu0
      %v1093 = vadd.f32 %v772, %v1092
      %v1094 = vpop.f32.mrf.mxu0
      %1095 = vmatprep.mubr.f32.mxu0 0.0
      %1096 = vmatmul.mubr.f32.gmra.mxu0 %v916
      %v1097 = vpop.f32.mrf.mxu0
      %v1098 = vadd.f32 %v777, %v1097
      %v1099 = vpop.f32.mrf.mxu0
      %1100 = vmatprep.mubr.f32.mxu0 0.0
      %1101 = vmatmul.mubr.f32.gmra.mxu0 %v919
      %v1102 = vpop.f32.mrf.mxu0
      %v1103 = vadd.f32 %v782, %v1102
      %v1104 = vpop.f32.mrf.mxu0
      %1105 = vmatprep.mubr.f32.mxu0 0.0
      %1106 = vmatmul.mubr.f32.gmra.mxu0 %v922
      %v1107 = vpop.f32.mrf.mxu0
      %v1108 = vadd.f32 %v787, %v1107
      %v1109 = vpop.f32.mrf.mxu0
      %1110 = vmatprep.mubr.f32.mxu0 0.0
      %1111 = vmatmul.mubr.f32.gmra.mxu0 %v925
      %v1112 = vpop.f32.mrf.mxu0
      %v1113 = vadd.f32 %v792, %v1112
      %v1114 = vpop.f32.mrf.mxu0
      %1115 = vmatprep.mubr.f32.mxu0 0.0
      %1116 = vmatmul.mubr.f32.gmra.mxu0 %v928
      %v1117 = vpop.f32.mrf.mxu0
      %v1118 = vadd.f32 %v797, %v1117
      %v1119 = vpop.f32.mrf.mxu0
      %1120 = vmatprep.mubr.f32.mxu0 0.0
      %1121 = vmatmul.mubr.f32.gmra.mxu0 %v931
      %v1122 = vpop.f32.mrf.mxu0
      %v1123 = vadd.f32 %v802, %v1122
      %v1124 = vpop.f32.mrf.mxu0
      %1125 = vmatprep.mubr.f32.mxu0 0.0
      %1126 = vmatmul.mubr.f32.gmra.mxu0 %v934
      %v1127 = vpop.f32.mrf.mxu0
      %v1128 = vadd.f32 %v807, %v1127
      %v1129 = vpop.f32.mrf.mxu0
      %1130 = vmatprep.mubr.f32.mxu0 0.0
      %1131 = vmatmul.mubr.f32.gmra.mxu0 %v937
      %v1132 = vpop.f32.mrf.mxu0
      %v1133 = vadd.f32 %v812, %v1132
      %v1134 = vpop.f32.mrf.mxu0
      %1135 = vmatprep.mubr.f32.mxu0 0.0
      %1136 = vmatmul.mubr.f32.gmra.mxu0 %v940
      %v1137 = vpop.f32.mrf.mxu0
      %v1138 = vadd.f32 %v817, %v1137
      %v1139 = vpop.f32.mrf.mxu0
      %1140 = vmatprep.mubr.f32.mxu0 0.0
      %1141 = vmatmul.mubr.f32.gmra.mxu0 %v943
      %v1142 = vpop.f32.mrf.mxu0
      %v1143 = vadd.f32 %v822, %v1142
      %v1144 = vpop.f32.mrf.mxu0
      %1145 = vmatprep.mubr.f32.mxu0 0.0
      %1146 = vmatmul.mubr.f32.gmra.mxu0 %v946
      %v1147 = vpop.f32.mrf.mxu0
      %v1148 = vadd.f32 %v827, %v1147
      %v1149 = vpop.f32.mrf.mxu0
      %1150 = vmatprep.mubr.f32.mxu0 0.0
      %1151 = vmatmul.mubr.f32.gmra.mxu0 %v949
      %v1152 = vpop.f32.mrf.mxu0
      %v1153 = vadd.f32 %v832, %v1152
      %v1154 = vpop.f32.mrf.mxu0
      %1155 = vmatprep.mubr.f32.mxu0 0.0
      %1156 = vmatmul.mubr.f32.gmra.mxu0 %v952
      %v1157 = vpop.f32.mrf.mxu0
      %v1158 = vadd.f32 %v837, %v1157
      %v1159 = vpop.f32.mrf.mxu0
      %1160 = vmatprep.mubr.f32.mxu0 0.0
      %1161 = vmatmul.mubr.f32.gmra.mxu0 %v955
      %v1162 = vpop.f32.mrf.mxu0
      %v1163 = vadd.f32 %v842, %v1162
      %v1164 = vpop.f32.mrf.mxu0
      %1165 = vmatprep.mubr.f32.mxu0 0.0
      %1166 = vmatmul.mubr.f32.gmra.mxu0 %v958
      %v1167 = vpop.f32.mrf.mxu0
      %v1168 = vadd.f32 %v847, %v1167
      %v1169 = vpop.f32.mrf.mxu0
      %1170 = vmatprep.mubr.f32.mxu0 0.0
      %1171 = vmatmul.mubr.f32.gmra.mxu0 %v961
      %v1172 = vpop.f32.mrf.mxu0
      %v1173 = vadd.f32 %v852, %v1172
      %v1174 = vpop.f32.mrf.mxu0
      %1175 = vmatprep.mubr.f32.mxu0 0.0
      %1176 = vmatmul.mubr.f32.gmra.mxu0 %v964
      %v1177 = vpop.f32.mrf.mxu0
      %v1178 = vadd.f32 %v857, %v1177
      %v1179 = vpop.f32.mrf.mxu0
      %1180 = vmatprep.mubr.f32.mxu0 0.0
      %1181 = vmatmul.mubr.f32.gmra.mxu0 %v967
      %v1182 = vpop.f32.mrf.mxu0
      %v1183 = vadd.f32 %v862, %v1182
      %v1184 = vpop.f32.mrf.mxu0
      %1185 = vmatprep.mubr.f32.mxu0 0.0
      %1186 = vmatmul.mubr.f32.gmra.mxu0 %v970
      %v1187 = vpop.f32.mrf.mxu0
      %v1188 = vadd.f32 %v867, %v1187
      %v1189 = vpop.f32.mrf.mxu0
      %1190 = vmatprep.mubr.f32.mxu0 0.0
      %1191 = vmatmul.mubr.f32.gmra.mxu0 %v973
      %v1192 = vpop.f32.mrf.mxu0
      %v1193 = vadd.f32 %v872, %v1192
      %v1194 = vpop.f32.mrf.mxu0
      %1195 = vmatprep.mubr.f32.mxu0 0.0
      %1196 = vmatmul.mubr.f32.gmra.mxu0 %v976
      %v1197 = vpop.f32.mrf.mxu0
      %v1198 = vadd.f32 %v877, %v1197
      %v1199 = vpop.f32.mrf.mxu0
      %1200 = vmatprep.mubr.f32.mxu0 0.0
      %1201 = vmatmul.mubr.f32.gmra.mxu0 %v979
      %v1202 = vpop.f32.mrf.mxu0
      %v1203 = vadd.f32 %v882, %v1202
      %v1204 = vpop.f32.mrf.mxu0
      %1205 = vdwg.mxu0
      %v1206 = vld [vmem:[#allocation2 + $0x2] sm:$0xff]
      %v1207 = vld [vmem:[#allocation2 + $0xa] sm:$0xff]
      %v1208 = vld [vmem:[#allocation2 + $0x1a] sm:$0xff]
      %v1209 = vld [vmem:[#allocation2 + $0x22] sm:$0xff]
      %v1210 = vld [vmem:[#allocation2 + $0x32] sm:$0xff]
      %v1211 = vld [vmem:[#allocation2 + $0x3a] sm:$0xff]
      %v1212 = vld [vmem:[#allocation2 + $0x4a] sm:$0xff]
      %v1213 = vld [vmem:[#allocation2 + $0x52] sm:$0xff]
      %v1214 = vld [vmem:[#allocation2 + $0x62] sm:$0xff]
      %v1215 = vld [vmem:[#allocation2 + $0x6a] sm:$0xff]
      %v1216 = vld [vmem:[#allocation2 + $0x7a] sm:$0xff]
      %v1217 = vld [vmem:[#allocation2 + $0x82] sm:$0xff]
      %v1218 = vld [vmem:[#allocation2 + $0x92] sm:$0xff]
      %v1219 = vld [vmem:[#allocation2 + $0x9a] sm:$0xff]
      %v1220 = vld [vmem:[#allocation2 + $0xaa] sm:$0xff]
      %v1221 = vld [vmem:[#allocation2 + $0xb2] sm:$0xff]
      %v1222 = vld [vmem:[#allocation2 + $0xc2] sm:$0xff]
      %v1223 = vld [vmem:[#allocation2 + $0xca] sm:$0xff]
      %v1224 = vld [vmem:[#allocation2 + $0xda] sm:$0xff]
      %v1225 = vld [vmem:[#allocation2 + $0xe2] sm:$0xff]
      %v1226 = vld [vmem:[#allocation2 + $0xf2] sm:$0xff]
      %v1227 = vld [vmem:[#allocation2 + $0xfa] sm:$0xff]
      %v1228 = vld [vmem:[#allocation2 + $0x10a] sm:$0xff]
      %v1229 = vld [vmem:[#allocation2 + $0x112] sm:$0xff]
      %v1230 = vld [vmem:[#allocation2 + $0x122] sm:$0xff]
      %v1231 = vld [vmem:[#allocation2 + $0x12a] sm:$0xff]
      %v1232 = vld [vmem:[#allocation2 + $0x13a] sm:$0xff]
      %v1233 = vld [vmem:[#allocation2 + $0x142] sm:$0xff]
      %v1234 = vld [vmem:[#allocation2 + $0x152] sm:$0xff]
      %v1235 = vld [vmem:[#allocation2 + $0x15a] sm:$0xff]
      %v1236 = vld [vmem:[#allocation2 + $0x16a] sm:$0xff]
      %v1237 = vld [vmem:[#allocation2 + $0x172] sm:$0xff]
      %s1238 = scalar_lea.vmem %s1, 16
      %v1239 = vld [vmem:[%s1238] sm:$0xff]
      %v1241 = vsel %vm408, %v1206, 0
      %v1244 = vsel %vm408, %v1207, 0
      %v1247 = vsel %vm408, %v1208, 0
      %v1250 = vsel %vm408, %v1209, 0
      %v1253 = vsel %vm408, %v1210, 0
      %v1256 = vsel %vm408, %v1211, 0
      %v1259 = vsel %vm408, %v1212, 0
      %v1262 = vsel %vm408, %v1213, 0
      %v1265 = vsel %vm408, %v1214, 0
      %v1268 = vsel %vm408, %v1215, 0
      %v1271 = vsel %vm408, %v1216, 0
      %v1274 = vsel %vm408, %v1217, 0
      %v1277 = vsel %vm408, %v1218, 0
      %v1280 = vsel %vm408, %v1219, 0
      %v1283 = vsel %vm408, %v1220, 0
      %v1286 = vsel %vm408, %v1221, 0
      %v1289 = vsel %vm408, %v1222, 0
      %v1292 = vsel %vm408, %v1223, 0
      %v1295 = vsel %vm408, %v1224, 0
      %v1298 = vsel %vm408, %v1225, 0
      %v1301 = vsel %vm408, %v1226, 0
      %v1304 = vsel %vm408, %v1227, 0
      %v1307 = vsel %vm408, %v1228, 0
      %v1310 = vsel %vm408, %v1229, 0
      %v1313 = vsel %vm408, %v1230, 0
      %v1316 = vsel %vm408, %v1231, 0
      %v1319 = vsel %vm408, %v1232, 0
      %v1322 = vsel %vm408, %v1233, 0
      %v1325 = vsel %vm408, %v1234, 0
      %v1328 = vsel %vm408, %v1235, 0
      %v1331 = vsel %vm408, %v1236, 0
      %v1334 = vsel %vm408, %v1237, 0
      %1336 = vmatprep.subr.mxu0 0.0
      %1337 = vmatpush1.msra.mxu0 0.0
      %1338 = vmatprep.subr.mxu0 0.0
      %1339 = vmatpush1.msra.mxu0 0.0
      %1340 = vmatprep.subr.mxu0 0.0
      %1341 = vmatpush1.msra.mxu0 0.0
      %1342 = vmatprep.subr.mxu0 0.0
      %1343 = vmatpush1.msra.mxu0 0.0
      %1344 = vmatprep.subr.mxu0 0.0
      %1345 = vmatpush1.msra.mxu0 0.0
      %1346 = vmatprep.subr.mxu0 0.0
      %1347 = vmatpush1.msra.mxu0 0.0
      %1348 = vmatprep.subr.mxu0 0.0
      %1349 = vmatpush1.msra.mxu0 0.0
      %1350 = vmatprep.subr.mxu0 0.0
      %1351 = vmatpush1.msra.mxu0 0.0
      %1352 = vmatprep.subr.mxu0 0.0
      %1353 = vmatpush1.msra.mxu0 0.0
      %1354 = vmatprep.subr.mxu0 0.0
      %1355 = vmatpush1.msra.mxu0 0.0
      %1356 = vmatprep.subr.mxu0 0.0
      %1357 = vmatpush1.msra.mxu0 0.0
      %1358 = vmatprep.subr.mxu0 0.0
      %1359 = vmatpush1.msra.mxu0 0.0
      %1360 = vmatprep.subr.mxu0 0.0
      %1361 = vmatpush1.msra.mxu0 0.0
      %1362 = vmatprep.subr.mxu0 0.0
      %1363 = vmatpush1.msra.mxu0 0.0
      %1364 = vmatprep.subr.mxu0 0.0
      %1365 = vmatpush1.msra.mxu0 0.0
      %1366 = vmatprep.subr.mxu0 0.0
      %1367 = vmatpush1.msra.mxu0 %v1239
      %1368 = vmatprep.subr.mxu0 0.0
      %1369 = vmatpush2.msra.mxu0 0.0
      %1370 = vmatprep.subr.mxu0 0.0
      %1371 = vmatpush2.msra.mxu0 0.0
      %1372 = vmatprep.subr.mxu0 0.0
      %1373 = vmatpush2.msra.mxu0 0.0
      %1374 = vmatprep.subr.mxu0 0.0
      %1375 = vmatpush2.msra.mxu0 0.0
      %1376 = vmatprep.subr.mxu0 0.0
      %1377 = vmatpush2.msra.mxu0 0.0
      %1378 = vmatprep.subr.mxu0 0.0
      %1379 = vmatpush2.msra.mxu0 0.0
      %1380 = vmatprep.subr.mxu0 0.0
      %1381 = vmatpush2.msra.mxu0 0.0
      %1382 = vmatprep.subr.mxu0 0.0
      %1383 = vmatpush2.msra.mxu0 0.0
      %1384 = vmatprep.subr.mxu0 0.0
      %1385 = vmatpush2.msra.mxu0 0.0
      %1386 = vmatprep.subr.mxu0 0.0
      %1387 = vmatpush2.msra.mxu0 0.0
      %1388 = vmatprep.subr.mxu0 0.0
      %1389 = vmatpush2.msra.mxu0 0.0
      %1390 = vmatprep.subr.mxu0 0.0
      %1391 = vmatpush2.msra.mxu0 0.0
      %1392 = vmatprep.subr.mxu0 0.0
      %1393 = vmatpush2.msra.mxu0 0.0
      %1394 = vmatprep.subr.mxu0 0.0
      %1395 = vmatpush2.msra.mxu0 0.0
      %1396 = vmatprep.subr.mxu0 0.0
      %1397 = vmatpush2.msra.mxu0 0.0
      %1398 = vmatprep.subr.mxu0 0.0
      %1399 = vmatpush2.msra.mxu0 0.0
      %1400 = vmatprep.mubr.f32.mxu0 0.0
      %1401 = vmatmul.mubr.f32.gmra.mxu0 %v1241
      %v1402 = vpop.f32.mrf.mxu0
      %v1403 = vadd.f32 0.0, %v1402
      %v1404 = vpop.f32.mrf.mxu0
      %1405 = vmatprep.mubr.f32.mxu0 0.0
      %1406 = vmatmul.mubr.f32.gmra.mxu0 %v1244
      %v1407 = vpop.f32.mrf.mxu0
      %v1408 = vadd.f32 0.0, %v1407
      %v1409 = vpop.f32.mrf.mxu0
      %1410 = vmatprep.mubr.f32.mxu0 0.0
      %1411 = vmatmul.mubr.f32.gmra.mxu0 %v1247
      %v1412 = vpop.f32.mrf.mxu0
      %v1413 = vadd.f32 0.0, %v1412
      %v1414 = vpop.f32.mrf.mxu0
      %1415 = vmatprep.mubr.f32.mxu0 0.0
      %1416 = vmatmul.mubr.f32.gmra.mxu0 %v1250
      %v1417 = vpop.f32.mrf.mxu0
      %v1418 = vadd.f32 0.0, %v1417
      %v1419 = vpop.f32.mrf.mxu0
      %1420 = vmatprep.mubr.f32.mxu0 0.0
      %1421 = vmatmul.mubr.f32.gmra.mxu0 %v1253
      %v1422 = vpop.f32.mrf.mxu0
      %v1423 = vadd.f32 0.0, %v1422
      %v1424 = vpop.f32.mrf.mxu0
      %1425 = vmatprep.mubr.f32.mxu0 0.0
      %1426 = vmatmul.mubr.f32.gmra.mxu0 %v1256
      %v1427 = vpop.f32.mrf.mxu0
      %v1428 = vadd.f32 0.0, %v1427
      %v1429 = vpop.f32.mrf.mxu0
      %1430 = vmatprep.mubr.f32.mxu0 0.0
      %1431 = vmatmul.mubr.f32.gmra.mxu0 %v1259
      %v1432 = vpop.f32.mrf.mxu0
      %v1433 = vadd.f32 0.0, %v1432
      %v1434 = vpop.f32.mrf.mxu0
      %1435 = vmatprep.mubr.f32.mxu0 0.0
      %1436 = vmatmul.mubr.f32.gmra.mxu0 %v1262
      %v1437 = vpop.f32.mrf.mxu0
      %v1438 = vadd.f32 0.0, %v1437
      %v1439 = vpop.f32.mrf.mxu0
      %1440 = vmatprep.mubr.f32.mxu0 0.0
      %1441 = vmatmul.mubr.f32.gmra.mxu0 %v1265
      %v1442 = vpop.f32.mrf.mxu0
      %v1443 = vadd.f32 0.0, %v1442
      %v1444 = vpop.f32.mrf.mxu0
      %1445 = vmatprep.mubr.f32.mxu0 0.0
      %1446 = vmatmul.mubr.f32.gmra.mxu0 %v1268
      %v1447 = vpop.f32.mrf.mxu0
      %v1448 = vadd.f32 0.0, %v1447
      %v1449 = vpop.f32.mrf.mxu0
      %1450 = vmatprep.mubr.f32.mxu0 0.0
      %1451 = vmatmul.mubr.f32.gmra.mxu0 %v1271
      %v1452 = vpop.f32.mrf.mxu0
      %v1453 = vadd.f32 0.0, %v1452
      %v1454 = vpop.f32.mrf.mxu0
      %1455 = vmatprep.mubr.f32.mxu0 0.0
      %1456 = vmatmul.mubr.f32.gmra.mxu0 %v1274
      %v1457 = vpop.f32.mrf.mxu0
      %v1458 = vadd.f32 0.0, %v1457
      %v1459 = vpop.f32.mrf.mxu0
      %1460 = vmatprep.mubr.f32.mxu0 0.0
      %1461 = vmatmul.mubr.f32.gmra.mxu0 %v1277
      %v1462 = vpop.f32.mrf.mxu0
      %v1463 = vadd.f32 0.0, %v1462
      %v1464 = vpop.f32.mrf.mxu0
      %1465 = vmatprep.mubr.f32.mxu0 0.0
      %1466 = vmatmul.mubr.f32.gmra.mxu0 %v1280
      %v1467 = vpop.f32.mrf.mxu0
      %v1468 = vadd.f32 0.0, %v1467
      %v1469 = vpop.f32.mrf.mxu0
      %1470 = vmatprep.mubr.f32.mxu0 0.0
      %1471 = vmatmul.mubr.f32.gmra.mxu0 %v1283
      %v1472 = vpop.f32.mrf.mxu0
      %v1473 = vadd.f32 0.0, %v1472
      %v1474 = vpop.f32.mrf.mxu0
      %1475 = vmatprep.mubr.f32.mxu0 0.0
      %1476 = vmatmul.mubr.f32.gmra.mxu0 %v1286
      %v1477 = vpop.f32.mrf.mxu0
      %v1478 = vadd.f32 0.0, %v1477
      %v1479 = vpop.f32.mrf.mxu0
      %1480 = vmatprep.mubr.f32.mxu0 0.0
      %1481 = vmatmul.mubr.f32.gmra.mxu0 %v1289
      %v1482 = vpop.f32.mrf.mxu0
      %v1483 = vadd.f32 0.0, %v1482
      %v1484 = vpop.f32.mrf.mxu0
      %1485 = vmatprep.mubr.f32.mxu0 0.0
      %1486 = vmatmul.mubr.f32.gmra.mxu0 %v1292
      %v1487 = vpop.f32.mrf.mxu0
      %v1488 = vadd.f32 0.0, %v1487
      %v1489 = vpop.f32.mrf.mxu0
      %1490 = vmatprep.mubr.f32.mxu0 0.0
      %1491 = vmatmul.mubr.f32.gmra.mxu0 %v1295
      %v1492 = vpop.f32.mrf.mxu0
      %v1493 = vadd.f32 0.0, %v1492
      %v1494 = vpop.f32.mrf.mxu0
      %1495 = vmatprep.mubr.f32.mxu0 0.0
      %1496 = vmatmul.mubr.f32.gmra.mxu0 %v1298
      %v1497 = vpop.f32.mrf.mxu0
      %v1498 = vadd.f32 0.0, %v1497
      %v1499 = vpop.f32.mrf.mxu0
      %1500 = vmatprep.mubr.f32.mxu0 0.0
      %1501 = vmatmul.mubr.f32.gmra.mxu0 %v1301
      %v1502 = vpop.f32.mrf.mxu0
      %v1503 = vadd.f32 0.0, %v1502
      %v1504 = vpop.f32.mrf.mxu0
      %1505 = vmatprep.mubr.f32.mxu0 0.0
      %1506 = vmatmul.mubr.f32.gmra.mxu0 %v1304
      %v1507 = vpop.f32.mrf.mxu0
      %v1508 = vadd.f32 0.0, %v1507
      %v1509 = vpop.f32.mrf.mxu0
      %1510 = vmatprep.mubr.f32.mxu0 0.0
      %1511 = vmatmul.mubr.f32.gmra.mxu0 %v1307
      %v1512 = vpop.f32.mrf.mxu0
      %v1513 = vadd.f32 0.0, %v1512
      %v1514 = vpop.f32.mrf.mxu0
      %1515 = vmatprep.mubr.f32.mxu0 0.0
      %1516 = vmatmul.mubr.f32.gmra.mxu0 %v1310
      %v1517 = vpop.f32.mrf.mxu0
      %v1518 = vadd.f32 0.0, %v1517
      %v1519 = vpop.f32.mrf.mxu0
      %1520 = vmatprep.mubr.f32.mxu0 0.0
      %1521 = vmatmul.mubr.f32.gmra.mxu0 %v1313
      %v1522 = vpop.f32.mrf.mxu0
      %v1523 = vadd.f32 0.0, %v1522
      %v1524 = vpop.f32.mrf.mxu0
      %1525 = vmatprep.mubr.f32.mxu0 0.0
      %1526 = vmatmul.mubr.f32.gmra.mxu0 %v1316
      %v1527 = vpop.f32.mrf.mxu0
      %v1528 = vadd.f32 0.0, %v1527
      %v1529 = vpop.f32.mrf.mxu0
      %1530 = vmatprep.mubr.f32.mxu0 0.0
      %1531 = vmatmul.mubr.f32.gmra.mxu0 %v1319
      %v1532 = vpop.f32.mrf.mxu0
      %v1533 = vadd.f32 0.0, %v1532
      %v1534 = vpop.f32.mrf.mxu0
      %1535 = vmatprep.mubr.f32.mxu0 0.0
      %1536 = vmatmul.mubr.f32.gmra.mxu0 %v1322
      %v1537 = vpop.f32.mrf.mxu0
      %v1538 = vadd.f32 0.0, %v1537
      %v1539 = vpop.f32.mrf.mxu0
      %1540 = vmatprep.mubr.f32.mxu0 0.0
      %1541 = vmatmul.mubr.f32.gmra.mxu0 %v1325
      %v1542 = vpop.f32.mrf.mxu0
      %v1543 = vadd.f32 0.0, %v1542
      %v1544 = vpop.f32.mrf.mxu0
      %1545 = vmatprep.mubr.f32.mxu0 0.0
      %1546 = vmatmul.mubr.f32.gmra.mxu0 %v1328
      %v1547 = vpop.f32.mrf.mxu0
      %v1548 = vadd.f32 0.0, %v1547
      %v1549 = vpop.f32.mrf.mxu0
      %1550 = vmatprep.mubr.f32.mxu0 0.0
      %1551 = vmatmul.mubr.f32.gmra.mxu0 %v1331
      %v1552 = vpop.f32.mrf.mxu0
      %v1553 = vadd.f32 0.0, %v1552
      %v1554 = vpop.f32.mrf.mxu0
      %1555 = vmatprep.mubr.f32.mxu0 0.0
      %1556 = vmatmul.mubr.f32.gmra.mxu0 %v1334
      %v1557 = vpop.f32.mrf.mxu0
      %v1558 = vadd.f32 0.0, %v1557
      %v1559 = vpop.f32.mrf.mxu0
      %1560 = vdwg.mxu0
      %v1561 = vadd.f32 %v1048, %v1403
      %v1562 = vadd.f32 %v1053, %v1408
      %v1563 = vadd.f32 %v1058, %v1413
      %v1564 = vadd.f32 %v1063, %v1418
      %v1565 = vadd.f32 %v1068, %v1423
      %v1566 = vadd.f32 %v1073, %v1428
      %v1567 = vadd.f32 %v1078, %v1433
      %v1568 = vadd.f32 %v1083, %v1438
      %v1569 = vadd.f32 %v1088, %v1443
      %v1570 = vadd.f32 %v1093, %v1448
      %v1571 = vadd.f32 %v1098, %v1453
      %v1572 = vadd.f32 %v1103, %v1458
      %v1573 = vadd.f32 %v1108, %v1463
      %v1574 = vadd.f32 %v1113, %v1468
      %v1575 = vadd.f32 %v1118, %v1473
      %v1576 = vadd.f32 %v1123, %v1478
      %v1577 = vadd.f32 %v1128, %v1483
      %v1578 = vadd.f32 %v1133, %v1488
      %v1579 = vadd.f32 %v1138, %v1493
      %v1580 = vadd.f32 %v1143, %v1498
      %v1581 = vadd.f32 %v1148, %v1503
      %v1582 = vadd.f32 %v1153, %v1508
      %v1583 = vadd.f32 %v1158, %v1513
      %v1584 = vadd.f32 %v1163, %v1518
      %v1585 = vadd.f32 %v1168, %v1523
      %v1586 = vadd.f32 %v1173, %v1528
      %v1587 = vadd.f32 %v1178, %v1533
      %v1588 = vadd.f32 %v1183, %v1538
      %v1589 = vadd.f32 %v1188, %v1543
      %v1590 = vadd.f32 %v1193, %v1548
      %v1591 = vadd.f32 %v1198, %v1553
      %v1592 = vadd.f32 %v1203, %v1558
      %v1593 = vld [vmem:[%s464] sm:$0xff]
      %v1594 = vld [vmem:[%s464 + $0x8] sm:$0xff]
      %v1595 = vld [vmem:[%s464 + $0x18] sm:$0xff]
      %v1596 = vld [vmem:[%s464 + $0x20] sm:$0xff]
      %v1597 = vld [vmem:[%s464 + $0x30] sm:$0xff]
      %v1598 = vld [vmem:[%s464 + $0x38] sm:$0xff]
      %v1599 = vld [vmem:[%s464 + $0x48] sm:$0xff]
      %v1600 = vld [vmem:[%s464 + $0x50] sm:$0xff]
      %v1601 = vld [vmem:[%s464 + $0x60] sm:$0xff]
      %v1602 = vld [vmem:[%s464 + $0x68] sm:$0xff]
      %v1603 = vld [vmem:[%s464 + $0x78] sm:$0xff]
      %v1604 = vld [vmem:[%s464 + $0x80] sm:$0xff]
      %v1605 = vld [vmem:[%s464 + $0x90] sm:$0xff]
      %v1606 = vld [vmem:[%s464 + $0x98] sm:$0xff]
      %v1607 = vld [vmem:[%s464 + $0xa8] sm:$0xff]
      %v1608 = vld [vmem:[%s464 + $0xb0] sm:$0xff]
      %v1609 = vld [vmem:[%s464 + $0xc0] sm:$0xff]
      %v1610 = vld [vmem:[%s464 + $0xc8] sm:$0xff]
      %v1611 = vld [vmem:[%s464 + $0xd8] sm:$0xff]
      %v1612 = vld [vmem:[%s464 + $0xe0] sm:$0xff]
      %v1613 = vld [vmem:[%s464 + $0xf0] sm:$0xff]
      %v1614 = vld [vmem:[%s464 + $0xf8] sm:$0xff]
      %v1615 = vld [vmem:[%s464 + $0x108] sm:$0xff]
      %v1616 = vld [vmem:[%s464 + $0x110] sm:$0xff]
      %v1617 = vld [vmem:[%s464 + $0x120] sm:$0xff]
      %v1618 = vld [vmem:[%s464 + $0x128] sm:$0xff]
      %v1619 = vld [vmem:[%s464 + $0x138] sm:$0xff]
      %v1620 = vld [vmem:[%s464 + $0x140] sm:$0xff]
      %v1621 = vld [vmem:[%s464 + $0x150] sm:$0xff]
      %v1622 = vld [vmem:[%s464 + $0x158] sm:$0xff]
      %v1623 = vld [vmem:[%s464 + $0x168] sm:$0xff]
      %v1624 = vld [vmem:[%s464 + $0x170] sm:$0xff]
      %s1625 = scalar_lea.vmem %s1, 24
      %v1626 = vld [vmem:[%s1625] sm:$0xff]
      %v1628 = vsel %vm408, %v1593, 0
      %v1631 = vsel %vm408, %v1594, 0
      %v1634 = vsel %vm408, %v1595, 0
      %v1637 = vsel %vm408, %v1596, 0
      %v1640 = vsel %vm408, %v1597, 0
      %v1643 = vsel %vm408, %v1598, 0
      %v1646 = vsel %vm408, %v1599, 0
      %v1649 = vsel %vm408, %v1600, 0
      %v1652 = vsel %vm408, %v1601, 0
      %v1655 = vsel %vm408, %v1602, 0
      %v1658 = vsel %vm408, %v1603, 0
      %v1661 = vsel %vm408, %v1604, 0
      %v1664 = vsel %vm408, %v1605, 0
      %v1667 = vsel %vm408, %v1606, 0
      %v1670 = vsel %vm408, %v1607, 0
      %v1673 = vsel %vm408, %v1608, 0
      %v1676 = vsel %vm408, %v1609, 0
      %v1679 = vsel %vm408, %v1610, 0
      %v1682 = vsel %vm408, %v1611, 0
      %v1685 = vsel %vm408, %v1612, 0
      %v1688 = vsel %vm408, %v1613, 0
      %v1691 = vsel %vm408, %v1614, 0
      %v1694 = vsel %vm408, %v1615, 0
      %v1697 = vsel %vm408, %v1616, 0
      %v1700 = vsel %vm408, %v1617, 0
      %v1703 = vsel %vm408, %v1618, 0
      %v1706 = vsel %vm408, %v1619, 0
      %v1709 = vsel %vm408, %v1620, 0
      %v1712 = vsel %vm408, %v1621, 0
      %v1715 = vsel %vm408, %v1622, 0
      %v1718 = vsel %vm408, %v1623, 0
      %v1721 = vsel %vm408, %v1624, 0
      %1723 = vmatprep.subr.mxu0 0.0
      %1724 = vmatpush1.msra.mxu0 0.0
      %1725 = vmatprep.subr.mxu0 0.0
      %1726 = vmatpush1.msra.mxu0 0.0
      %1727 = vmatprep.subr.mxu0 0.0
      %1728 = vmatpush1.msra.mxu0 0.0
      %1729 = vmatprep.subr.mxu0 0.0
      %1730 = vmatpush1.msra.mxu0 0.0
      %1731 = vmatprep.subr.mxu0 0.0
      %1732 = vmatpush1.msra.mxu0 0.0
      %1733 = vmatprep.subr.mxu0 0.0
      %1734 = vmatpush1.msra.mxu0 0.0
      %1735 = vmatprep.subr.mxu0 0.0
      %1736 = vmatpush1.msra.mxu0 0.0
      %1737 = vmatprep.subr.mxu0 0.0
      %1738 = vmatpush1.msra.mxu0 0.0
      %1739 = vmatprep.subr.mxu0 0.0
      %1740 = vmatpush1.msra.mxu0 0.0
      %1741 = vmatprep.subr.mxu0 0.0
      %1742 = vmatpush1.msra.mxu0 0.0
      %1743 = vmatprep.subr.mxu0 0.0
      %1744 = vmatpush1.msra.mxu0 0.0
      %1745 = vmatprep.subr.mxu0 0.0
      %1746 = vmatpush1.msra.mxu0 0.0
      %1747 = vmatprep.subr.mxu0 0.0
      %1748 = vmatpush1.msra.mxu0 0.0
      %1749 = vmatprep.subr.mxu0 0.0
      %1750 = vmatpush1.msra.mxu0 0.0
      %1751 = vmatprep.subr.mxu0 0.0
      %1752 = vmatpush1.msra.mxu0 0.0
      %1753 = vmatprep.subr.mxu0 0.0
      %1754 = vmatpush1.msra.mxu0 %v1626
      %1755 = vmatprep.subr.mxu0 0.0
      %1756 = vmatpush2.msra.mxu0 0.0
      %1757 = vmatprep.subr.mxu0 0.0
      %1758 = vmatpush2.msra.mxu0 0.0
      %1759 = vmatprep.subr.mxu0 0.0
      %1760 = vmatpush2.msra.mxu0 0.0
      %1761 = vmatprep.subr.mxu0 0.0
      %1762 = vmatpush2.msra.mxu0 0.0
      %1763 = vmatprep.subr.mxu0 0.0
      %1764 = vmatpush2.msra.mxu0 0.0
      %1765 = vmatprep.subr.mxu0 0.0
      %1766 = vmatpush2.msra.mxu0 0.0
      %1767 = vmatprep.subr.mxu0 0.0
      %1768 = vmatpush2.msra.mxu0 0.0
      %1769 = vmatprep.subr.mxu0 0.0
      %1770 = vmatpush2.msra.mxu0 0.0
      %1771 = vmatprep.subr.mxu0 0.0
      %1772 = vmatpush2.msra.mxu0 0.0
      %1773 = vmatprep.subr.mxu0 0.0
      %1774 = vmatpush2.msra.mxu0 0.0
      %1775 = vmatprep.subr.mxu0 0.0
      %1776 = vmatpush2.msra.mxu0 0.0
      %1777 = vmatprep.subr.mxu0 0.0
      %1778 = vmatpush2.msra.mxu0 0.0
      %1779 = vmatprep.subr.mxu0 0.0
      %1780 = vmatpush2.msra.mxu0 0.0
      %1781 = vmatprep.subr.mxu0 0.0
      %1782 = vmatpush2.msra.mxu0 0.0
      %1783 = vmatprep.subr.mxu0 0.0
      %1784 = vmatpush2.msra.mxu0 0.0
      %1785 = vmatprep.subr.mxu0 0.0
      %1786 = vmatpush2.msra.mxu0 0.0
      %1787 = vmatprep.mubr.f32.mxu0 0.0
      %1788 = vmatmul.mubr.f32.gmra.mxu0 %v1628
      %v1789 = vpop.f32.mrf.mxu0
      %v1790 = vadd.f32 0.0, %v1789
      %v1791 = vpop.f32.mrf.mxu0
      %1792 = vmatprep.mubr.f32.mxu0 0.0
      %1793 = vmatmul.mubr.f32.gmra.mxu0 %v1631
      %v1794 = vpop.f32.mrf.mxu0
      %v1795 = vadd.f32 0.0, %v1794
      %v1796 = vpop.f32.mrf.mxu0
      %1797 = vmatprep.mubr.f32.mxu0 0.0
      %1798 = vmatmul.mubr.f32.gmra.mxu0 %v1634
      %v1799 = vpop.f32.mrf.mxu0
      %v1800 = vadd.f32 0.0, %v1799
      %v1801 = vpop.f32.mrf.mxu0
      %1802 = vmatprep.mubr.f32.mxu0 0.0
      %1803 = vmatmul.mubr.f32.gmra.mxu0 %v1637
      %v1804 = vpop.f32.mrf.mxu0
      %v1805 = vadd.f32 0.0, %v1804
      %v1806 = vpop.f32.mrf.mxu0
      %1807 = vmatprep.mubr.f32.mxu0 0.0
      %1808 = vmatmul.mubr.f32.gmra.mxu0 %v1640
      %v1809 = vpop.f32.mrf.mxu0
      %v1810 = vadd.f32 0.0, %v1809
      %v1811 = vpop.f32.mrf.mxu0
      %1812 = vmatprep.mubr.f32.mxu0 0.0
      %1813 = vmatmul.mubr.f32.gmra.mxu0 %v1643
      %v1814 = vpop.f32.mrf.mxu0
      %v1815 = vadd.f32 0.0, %v1814
      %v1816 = vpop.f32.mrf.mxu0
      %1817 = vmatprep.mubr.f32.mxu0 0.0
      %1818 = vmatmul.mubr.f32.gmra.mxu0 %v1646
      %v1819 = vpop.f32.mrf.mxu0
      %v1820 = vadd.f32 0.0, %v1819
      %v1821 = vpop.f32.mrf.mxu0
      %1822 = vmatprep.mubr.f32.mxu0 0.0
      %1823 = vmatmul.mubr.f32.gmra.mxu0 %v1649
      %v1824 = vpop.f32.mrf.mxu0
      %v1825 = vadd.f32 0.0, %v1824
      %v1826 = vpop.f32.mrf.mxu0
      %1827 = vmatprep.mubr.f32.mxu0 0.0
      %1828 = vmatmul.mubr.f32.gmra.mxu0 %v1652
      %v1829 = vpop.f32.mrf.mxu0
      %v1830 = vadd.f32 0.0, %v1829
      %v1831 = vpop.f32.mrf.mxu0
      %1832 = vmatprep.mubr.f32.mxu0 0.0
      %1833 = vmatmul.mubr.f32.gmra.mxu0 %v1655
      %v1834 = vpop.f32.mrf.mxu0
      %v1835 = vadd.f32 0.0, %v1834
      %v1836 = vpop.f32.mrf.mxu0
      %1837 = vmatprep.mubr.f32.mxu0 0.0
      %1838 = vmatmul.mubr.f32.gmra.mxu0 %v1658
      %v1839 = vpop.f32.mrf.mxu0
      %v1840 = vadd.f32 0.0, %v1839
      %v1841 = vpop.f32.mrf.mxu0
      %1842 = vmatprep.mubr.f32.mxu0 0.0
      %1843 = vmatmul.mubr.f32.gmra.mxu0 %v1661
      %v1844 = vpop.f32.mrf.mxu0
      %v1845 = vadd.f32 0.0, %v1844
      %v1846 = vpop.f32.mrf.mxu0
      %1847 = vmatprep.mubr.f32.mxu0 0.0
      %1848 = vmatmul.mubr.f32.gmra.mxu0 %v1664
      %v1849 = vpop.f32.mrf.mxu0
      %v1850 = vadd.f32 0.0, %v1849
      %v1851 = vpop.f32.mrf.mxu0
      %1852 = vmatprep.mubr.f32.mxu0 0.0
      %1853 = vmatmul.mubr.f32.gmra.mxu0 %v1667
      %v1854 = vpop.f32.mrf.mxu0
      %v1855 = vadd.f32 0.0, %v1854
      %v1856 = vpop.f32.mrf.mxu0
      %1857 = vmatprep.mubr.f32.mxu0 0.0
      %1858 = vmatmul.mubr.f32.gmra.mxu0 %v1670
      %v1859 = vpop.f32.mrf.mxu0
      %v1860 = vadd.f32 0.0, %v1859
      %v1861 = vpop.f32.mrf.mxu0
      %1862 = vmatprep.mubr.f32.mxu0 0.0
      %1863 = vmatmul.mubr.f32.gmra.mxu0 %v1673
      %v1864 = vpop.f32.mrf.mxu0
      %v1865 = vadd.f32 0.0, %v1864
      %v1866 = vpop.f32.mrf.mxu0
      %1867 = vmatprep.mubr.f32.mxu0 0.0
      %1868 = vmatmul.mubr.f32.gmra.mxu0 %v1676
      %v1869 = vpop.f32.mrf.mxu0
      %v1870 = vadd.f32 0.0, %v1869
      %v1871 = vpop.f32.mrf.mxu0
      %1872 = vmatprep.mubr.f32.mxu0 0.0
      %1873 = vmatmul.mubr.f32.gmra.mxu0 %v1679
      %v1874 = vpop.f32.mrf.mxu0
      %v1875 = vadd.f32 0.0, %v1874
      %v1876 = vpop.f32.mrf.mxu0
      %1877 = vmatprep.mubr.f32.mxu0 0.0
      %1878 = vmatmul.mubr.f32.gmra.mxu0 %v1682
      %v1879 = vpop.f32.mrf.mxu0
      %v1880 = vadd.f32 0.0, %v1879
      %v1881 = vpop.f32.mrf.mxu0
      %1882 = vmatprep.mubr.f32.mxu0 0.0
      %1883 = vmatmul.mubr.f32.gmra.mxu0 %v1685
      %v1884 = vpop.f32.mrf.mxu0
      %v1885 = vadd.f32 0.0, %v1884
      %v1886 = vpop.f32.mrf.mxu0
      %1887 = vmatprep.mubr.f32.mxu0 0.0
      %1888 = vmatmul.mubr.f32.gmra.mxu0 %v1688
      %v1889 = vpop.f32.mrf.mxu0
      %v1890 = vadd.f32 0.0, %v1889
      %v1891 = vpop.f32.mrf.mxu0
      %1892 = vmatprep.mubr.f32.mxu0 0.0
      %1893 = vmatmul.mubr.f32.gmra.mxu0 %v1691
      %v1894 = vpop.f32.mrf.mxu0
      %v1895 = vadd.f32 0.0, %v1894
      %v1896 = vpop.f32.mrf.mxu0
      %1897 = vmatprep.mubr.f32.mxu0 0.0
      %1898 = vmatmul.mubr.f32.gmra.mxu0 %v1694
      %v1899 = vpop.f32.mrf.mxu0
      %v1900 = vadd.f32 0.0, %v1899
      %v1901 = vpop.f32.mrf.mxu0
      %1902 = vmatprep.mubr.f32.mxu0 0.0
      %1903 = vmatmul.mubr.f32.gmra.mxu0 %v1697
      %v1904 = vpop.f32.mrf.mxu0
      %v1905 = vadd.f32 0.0, %v1904
      %v1906 = vpop.f32.mrf.mxu0
      %1907 = vmatprep.mubr.f32.mxu0 0.0
      %1908 = vmatmul.mubr.f32.gmra.mxu0 %v1700
      %v1909 = vpop.f32.mrf.mxu0
      %v1910 = vadd.f32 0.0, %v1909
      %v1911 = vpop.f32.mrf.mxu0
      %1912 = vmatprep.mubr.f32.mxu0 0.0
      %1913 = vmatmul.mubr.f32.gmra.mxu0 %v1703
      %v1914 = vpop.f32.mrf.mxu0
      %v1915 = vadd.f32 0.0, %v1914
      %v1916 = vpop.f32.mrf.mxu0
      %1917 = vmatprep.mubr.f32.mxu0 0.0
      %1918 = vmatmul.mubr.f32.gmra.mxu0 %v1706
      %v1919 = vpop.f32.mrf.mxu0
      %v1920 = vadd.f32 0.0, %v1919
      %v1921 = vpop.f32.mrf.mxu0
      %1922 = vmatprep.mubr.f32.mxu0 0.0
      %1923 = vmatmul.mubr.f32.gmra.mxu0 %v1709
      %v1924 = vpop.f32.mrf.mxu0
      %v1925 = vadd.f32 0.0, %v1924
      %v1926 = vpop.f32.mrf.mxu0
      %1927 = vmatprep.mubr.f32.mxu0 0.0
      %1928 = vmatmul.mubr.f32.gmra.mxu0 %v1712
      %v1929 = vpop.f32.mrf.mxu0
      %v1930 = vadd.f32 0.0, %v1929
      %v1931 = vpop.f32.mrf.mxu0
      %1932 = vmatprep.mubr.f32.mxu0 0.0
      %1933 = vmatmul.mubr.f32.gmra.mxu0 %v1715
      %v1934 = vpop.f32.mrf.mxu0
      %v1935 = vadd.f32 0.0, %v1934
      %v1936 = vpop.f32.mrf.mxu0
      %1937 = vmatprep.mubr.f32.mxu0 0.0
      %1938 = vmatmul.mubr.f32.gmra.mxu0 %v1718
      %v1939 = vpop.f32.mrf.mxu0
      %v1940 = vadd.f32 0.0, %v1939
      %v1941 = vpop.f32.mrf.mxu0
      %1942 = vmatprep.mubr.f32.mxu0 0.0
      %1943 = vmatmul.mubr.f32.gmra.mxu0 %v1721
      %v1944 = vpop.f32.mrf.mxu0
      %v1945 = vadd.f32 0.0, %v1944
      %v1946 = vpop.f32.mrf.mxu0
      %1947 = vdwg.mxu0
      %v1948 = vadd.f32 %v1561, %v1790
      %v1949 = vadd.f32 %v1562, %v1795
      %v1950 = vadd.f32 %v1563, %v1800
      %v1951 = vadd.f32 %v1564, %v1805
      %v1952 = vadd.f32 %v1565, %v1810
      %v1953 = vadd.f32 %v1566, %v1815
      %v1954 = vadd.f32 %v1567, %v1820
      %v1955 = vadd.f32 %v1568, %v1825
      %v1956 = vadd.f32 %v1569, %v1830
      %v1957 = vadd.f32 %v1570, %v1835
      %v1958 = vadd.f32 %v1571, %v1840
      %v1959 = vadd.f32 %v1572, %v1845
      %v1960 = vadd.f32 %v1573, %v1850
      %v1961 = vadd.f32 %v1574, %v1855
      %v1962 = vadd.f32 %v1575, %v1860
      %v1963 = vadd.f32 %v1576, %v1865
      %v1964 = vadd.f32 %v1577, %v1870
      %v1965 = vadd.f32 %v1578, %v1875
      %v1966 = vadd.f32 %v1579, %v1880
      %v1967 = vadd.f32 %v1580, %v1885
      %v1968 = vadd.f32 %v1581, %v1890
      %v1969 = vadd.f32 %v1582, %v1895
      %v1970 = vadd.f32 %v1583, %v1900
      %v1971 = vadd.f32 %v1584, %v1905
      %v1972 = vadd.f32 %v1585, %v1910
      %v1973 = vadd.f32 %v1586, %v1915
      %v1974 = vadd.f32 %v1587, %v1920
      %v1975 = vadd.f32 %v1588, %v1925
      %v1976 = vadd.f32 %v1589, %v1930
      %v1977 = vadd.f32 %v1590, %v1935
      %v1978 = vadd.f32 %v1591, %v1940
      %v1979 = vadd.f32 %v1592, %v1945
      %v1980 = vld [vmem:[%s464 + $0x1] sm:$0xff]
      %v1981 = vld [vmem:[%s464 + $0x9] sm:$0xff]
      %v1982 = vld [vmem:[%s464 + $0x19] sm:$0xff]
      %v1983 = vld [vmem:[%s464 + $0x21] sm:$0xff]
      %v1984 = vld [vmem:[%s464 + $0x31] sm:$0xff]
      %v1985 = vld [vmem:[%s464 + $0x39] sm:$0xff]
      %v1986 = vld [vmem:[%s464 + $0x49] sm:$0xff]
      %v1987 = vld [vmem:[%s464 + $0x51] sm:$0xff]
      %v1988 = vld [vmem:[%s464 + $0x61] sm:$0xff]
      %v1989 = vld [vmem:[%s464 + $0x69] sm:$0xff]
      %v1990 = vld [vmem:[%s464 + $0x79] sm:$0xff]
      %v1991 = vld [vmem:[%s464 + $0x81] sm:$0xff]
      %v1992 = vld [vmem:[%s464 + $0x91] sm:$0xff]
      %v1993 = vld [vmem:[%s464 + $0x99] sm:$0xff]
      %v1994 = vld [vmem:[%s464 + $0xa9] sm:$0xff]
      %v1995 = vld [vmem:[%s464 + $0xb1] sm:$0xff]
      %v1996 = vld [vmem:[%s464 + $0xc1] sm:$0xff]
      %v1997 = vld [vmem:[%s464 + $0xc9] sm:$0xff]
      %v1998 = vld [vmem:[%s464 + $0xd9] sm:$0xff]
      %v1999 = vld [vmem:[%s464 + $0xe1] sm:$0xff]
      %v2000 = vld [vmem:[%s464 + $0xf1] sm:$0xff]
      %v2001 = vld [vmem:[%s464 + $0xf9] sm:$0xff]
      %v2002 = vld [vmem:[%s464 + $0x109] sm:$0xff]
      %v2003 = vld [vmem:[%s464 + $0x111] sm:$0xff]
      %v2004 = vld [vmem:[%s464 + $0x121] sm:$0xff]
      %v2005 = vld [vmem:[%s464 + $0x129] sm:$0xff]
      %v2006 = vld [vmem:[%s464 + $0x139] sm:$0xff]
      %v2007 = vld [vmem:[%s464 + $0x141] sm:$0xff]
      %v2008 = vld [vmem:[%s464 + $0x151] sm:$0xff]
      %v2009 = vld [vmem:[%s464 + $0x159] sm:$0xff]
      %v2010 = vld [vmem:[%s464 + $0x169] sm:$0xff]
      %v2011 = vld [vmem:[%s464 + $0x171] sm:$0xff]
      %s2012 = scalar_lea.vmem %s1, 32
      %v2013 = vld [vmem:[%s2012] sm:$0xff]
      %v2015 = vsel %vm408, %v1980, 0
      %v2018 = vsel %vm408, %v1981, 0
      %v2021 = vsel %vm408, %v1982, 0
      %v2024 = vsel %vm408, %v1983, 0
      %v2027 = vsel %vm408, %v1984, 0
      %v2030 = vsel %vm408, %v1985, 0
      %v2033 = vsel %vm408, %v1986, 0
      %v2036 = vsel %vm408, %v1987, 0
      %v2039 = vsel %vm408, %v1988, 0
      %v2042 = vsel %vm408, %v1989, 0
      %v2045 = vsel %vm408, %v1990, 0
      %v2048 = vsel %vm408, %v1991, 0
      %v2051 = vsel %vm408, %v1992, 0
      %v2054 = vsel %vm408, %v1993, 0
      %v2057 = vsel %vm408, %v1994, 0
      %v2060 = vsel %vm408, %v1995, 0
      %v2063 = vsel %vm408, %v1996, 0
      %v2066 = vsel %vm408, %v1997, 0
      %v2069 = vsel %vm408, %v1998, 0
      %v2072 = vsel %vm408, %v1999, 0
      %v2075 = vsel %vm408, %v2000, 0
      %v2078 = vsel %vm408, %v2001, 0
      %v2081 = vsel %vm408, %v2002, 0
      %v2084 = vsel %vm408, %v2003, 0
      %v2087 = vsel %vm408, %v2004, 0
      %v2090 = vsel %vm408, %v2005, 0
      %v2093 = vsel %vm408, %v2006, 0
      %v2096 = vsel %vm408, %v2007, 0
      %v2099 = vsel %vm408, %v2008, 0
      %v2102 = vsel %vm408, %v2009, 0
      %v2105 = vsel %vm408, %v2010, 0
      %v2108 = vsel %vm408, %v2011, 0
      %2110 = vmatprep.subr.mxu0 0.0
      %2111 = vmatpush1.msra.mxu0 0.0
      %2112 = vmatprep.subr.mxu0 0.0
      %2113 = vmatpush1.msra.mxu0 0.0
      %2114 = vmatprep.subr.mxu0 0.0
      %2115 = vmatpush1.msra.mxu0 0.0
      %2116 = vmatprep.subr.mxu0 0.0
      %2117 = vmatpush1.msra.mxu0 0.0
      %2118 = vmatprep.subr.mxu0 0.0
      %2119 = vmatpush1.msra.mxu0 0.0
      %2120 = vmatprep.subr.mxu0 0.0
      %2121 = vmatpush1.msra.mxu0 0.0
      %2122 = vmatprep.subr.mxu0 0.0
      %2123 = vmatpush1.msra.mxu0 0.0
      %2124 = vmatprep.subr.mxu0 0.0
      %2125 = vmatpush1.msra.mxu0 0.0
      %2126 = vmatprep.subr.mxu0 0.0
      %2127 = vmatpush1.msra.mxu0 0.0
      %2128 = vmatprep.subr.mxu0 0.0
      %2129 = vmatpush1.msra.mxu0 0.0
      %2130 = vmatprep.subr.mxu0 0.0
      %2131 = vmatpush1.msra.mxu0 0.0
      %2132 = vmatprep.subr.mxu0 0.0
      %2133 = vmatpush1.msra.mxu0 0.0
      %2134 = vmatprep.subr.mxu0 0.0
      %2135 = vmatpush1.msra.mxu0 0.0
      %2136 = vmatprep.subr.mxu0 0.0
      %2137 = vmatpush1.msra.mxu0 0.0
      %2138 = vmatprep.subr.mxu0 0.0
      %2139 = vmatpush1.msra.mxu0 0.0
      %2140 = vmatprep.subr.mxu0 0.0
      %2141 = vmatpush1.msra.mxu0 %v2013
      %2142 = vmatprep.subr.mxu0 0.0
      %2143 = vmatpush2.msra.mxu0 0.0
      %2144 = vmatprep.subr.mxu0 0.0
      %2145 = vmatpush2.msra.mxu0 0.0
      %2146 = vmatprep.subr.mxu0 0.0
      %2147 = vmatpush2.msra.mxu0 0.0
      %2148 = vmatprep.subr.mxu0 0.0
      %2149 = vmatpush2.msra.mxu0 0.0
      %2150 = vmatprep.subr.mxu0 0.0
      %2151 = vmatpush2.msra.mxu0 0.0
      %2152 = vmatprep.subr.mxu0 0.0
      %2153 = vmatpush2.msra.mxu0 0.0
      %2154 = vmatprep.subr.mxu0 0.0
      %2155 = vmatpush2.msra.mxu0 0.0
      %2156 = vmatprep.subr.mxu0 0.0
      %2157 = vmatpush2.msra.mxu0 0.0
      %2158 = vmatprep.subr.mxu0 0.0
      %2159 = vmatpush2.msra.mxu0 0.0
      %2160 = vmatprep.subr.mxu0 0.0
      %2161 = vmatpush2.msra.mxu0 0.0
      %2162 = vmatprep.subr.mxu0 0.0
      %2163 = vmatpush2.msra.mxu0 0.0
      %2164 = vmatprep.subr.mxu0 0.0
      %2165 = vmatpush2.msra.mxu0 0.0
      %2166 = vmatprep.subr.mxu0 0.0
      %2167 = vmatpush2.msra.mxu0 0.0
      %2168 = vmatprep.subr.mxu0 0.0
      %2169 = vmatpush2.msra.mxu0 0.0
      %2170 = vmatprep.subr.mxu0 0.0
      %2171 = vmatpush2.msra.mxu0 0.0
      %2172 = vmatprep.subr.mxu0 0.0
      %2173 = vmatpush2.msra.mxu0 0.0
      %2174 = vmatprep.mubr.f32.mxu0 0.0
      %2175 = vmatmul.mubr.f32.gmra.mxu0 %v2015
      %v2176 = vpop.f32.mrf.mxu0
      %v2177 = vadd.f32 0.0, %v2176
      %v2178 = vpop.f32.mrf.mxu0
      %2179 = vmatprep.mubr.f32.mxu0 0.0
      %2180 = vmatmul.mubr.f32.gmra.mxu0 %v2018
      %v2181 = vpop.f32.mrf.mxu0
      %v2182 = vadd.f32 0.0, %v2181
      %v2183 = vpop.f32.mrf.mxu0
      %2184 = vmatprep.mubr.f32.mxu0 0.0
      %2185 = vmatmul.mubr.f32.gmra.mxu0 %v2021
      %v2186 = vpop.f32.mrf.mxu0
      %v2187 = vadd.f32 0.0, %v2186
      %v2188 = vpop.f32.mrf.mxu0
      %2189 = vmatprep.mubr.f32.mxu0 0.0
      %2190 = vmatmul.mubr.f32.gmra.mxu0 %v2024
      %v2191 = vpop.f32.mrf.mxu0
      %v2192 = vadd.f32 0.0, %v2191
      %v2193 = vpop.f32.mrf.mxu0
      %2194 = vmatprep.mubr.f32.mxu0 0.0
      %2195 = vmatmul.mubr.f32.gmra.mxu0 %v2027
      %v2196 = vpop.f32.mrf.mxu0
      %v2197 = vadd.f32 0.0, %v2196
      %v2198 = vpop.f32.mrf.mxu0
      %2199 = vmatprep.mubr.f32.mxu0 0.0
      %2200 = vmatmul.mubr.f32.gmra.mxu0 %v2030
      %v2201 = vpop.f32.mrf.mxu0
      %v2202 = vadd.f32 0.0, %v2201
      %v2203 = vpop.f32.mrf.mxu0
      %2204 = vmatprep.mubr.f32.mxu0 0.0
      %2205 = vmatmul.mubr.f32.gmra.mxu0 %v2033
      %v2206 = vpop.f32.mrf.mxu0
      %v2207 = vadd.f32 0.0, %v2206
      %v2208 = vpop.f32.mrf.mxu0
      %2209 = vmatprep.mubr.f32.mxu0 0.0
      %2210 = vmatmul.mubr.f32.gmra.mxu0 %v2036
      %v2211 = vpop.f32.mrf.mxu0
      %v2212 = vadd.f32 0.0, %v2211
      %v2213 = vpop.f32.mrf.mxu0
      %2214 = vmatprep.mubr.f32.mxu0 0.0
      %2215 = vmatmul.mubr.f32.gmra.mxu0 %v2039
      %v2216 = vpop.f32.mrf.mxu0
      %v2217 = vadd.f32 0.0, %v2216
      %v2218 = vpop.f32.mrf.mxu0
      %2219 = vmatprep.mubr.f32.mxu0 0.0
      %2220 = vmatmul.mubr.f32.gmra.mxu0 %v2042
      %v2221 = vpop.f32.mrf.mxu0
      %v2222 = vadd.f32 0.0, %v2221
      %v2223 = vpop.f32.mrf.mxu0
      %2224 = vmatprep.mubr.f32.mxu0 0.0
      %2225 = vmatmul.mubr.f32.gmra.mxu0 %v2045
      %v2226 = vpop.f32.mrf.mxu0
      %v2227 = vadd.f32 0.0, %v2226
      %v2228 = vpop.f32.mrf.mxu0
      %2229 = vmatprep.mubr.f32.mxu0 0.0
      %2230 = vmatmul.mubr.f32.gmra.mxu0 %v2048
      %v2231 = vpop.f32.mrf.mxu0
      %v2232 = vadd.f32 0.0, %v2231
      %v2233 = vpop.f32.mrf.mxu0
      %2234 = vmatprep.mubr.f32.mxu0 0.0
      %2235 = vmatmul.mubr.f32.gmra.mxu0 %v2051
      %v2236 = vpop.f32.mrf.mxu0
      %v2237 = vadd.f32 0.0, %v2236
      %v2238 = vpop.f32.mrf.mxu0
      %2239 = vmatprep.mubr.f32.mxu0 0.0
      %2240 = vmatmul.mubr.f32.gmra.mxu0 %v2054
      %v2241 = vpop.f32.mrf.mxu0
      %v2242 = vadd.f32 0.0, %v2241
      %v2243 = vpop.f32.mrf.mxu0
      %2244 = vmatprep.mubr.f32.mxu0 0.0
      %2245 = vmatmul.mubr.f32.gmra.mxu0 %v2057
      %v2246 = vpop.f32.mrf.mxu0
      %v2247 = vadd.f32 0.0, %v2246
      %v2248 = vpop.f32.mrf.mxu0
      %2249 = vmatprep.mubr.f32.mxu0 0.0
      %2250 = vmatmul.mubr.f32.gmra.mxu0 %v2060
      %v2251 = vpop.f32.mrf.mxu0
      %v2252 = vadd.f32 0.0, %v2251
      %v2253 = vpop.f32.mrf.mxu0
      %2254 = vmatprep.mubr.f32.mxu0 0.0
      %2255 = vmatmul.mubr.f32.gmra.mxu0 %v2063
      %v2256 = vpop.f32.mrf.mxu0
      %v2257 = vadd.f32 0.0, %v2256
      %v2258 = vpop.f32.mrf.mxu0
      %2259 = vmatprep.mubr.f32.mxu0 0.0
      %2260 = vmatmul.mubr.f32.gmra.mxu0 %v2066
      %v2261 = vpop.f32.mrf.mxu0
      %v2262 = vadd.f32 0.0, %v2261
      %v2263 = vpop.f32.mrf.mxu0
      %2264 = vmatprep.mubr.f32.mxu0 0.0
      %2265 = vmatmul.mubr.f32.gmra.mxu0 %v2069
      %v2266 = vpop.f32.mrf.mxu0
      %v2267 = vadd.f32 0.0, %v2266
      %v2268 = vpop.f32.mrf.mxu0
      %2269 = vmatprep.mubr.f32.mxu0 0.0
      %2270 = vmatmul.mubr.f32.gmra.mxu0 %v2072
      %v2271 = vpop.f32.mrf.mxu0
      %v2272 = vadd.f32 0.0, %v2271
      %v2273 = vpop.f32.mrf.mxu0
      %2274 = vmatprep.mubr.f32.mxu0 0.0
      %2275 = vmatmul.mubr.f32.gmra.mxu0 %v2075
      %v2276 = vpop.f32.mrf.mxu0
      %v2277 = vadd.f32 0.0, %v2276
      %v2278 = vpop.f32.mrf.mxu0
      %2279 = vmatprep.mubr.f32.mxu0 0.0
      %2280 = vmatmul.mubr.f32.gmra.mxu0 %v2078
      %v2281 = vpop.f32.mrf.mxu0
      %v2282 = vadd.f32 0.0, %v2281
      %v2283 = vpop.f32.mrf.mxu0
      %2284 = vmatprep.mubr.f32.mxu0 0.0
      %2285 = vmatmul.mubr.f32.gmra.mxu0 %v2081
      %v2286 = vpop.f32.mrf.mxu0
      %v2287 = vadd.f32 0.0, %v2286
      %v2288 = vpop.f32.mrf.mxu0
      %2289 = vmatprep.mubr.f32.mxu0 0.0
      %2290 = vmatmul.mubr.f32.gmra.mxu0 %v2084
      %v2291 = vpop.f32.mrf.mxu0
      %v2292 = vadd.f32 0.0, %v2291
      %v2293 = vpop.f32.mrf.mxu0
      %2294 = vmatprep.mubr.f32.mxu0 0.0
      %2295 = vmatmul.mubr.f32.gmra.mxu0 %v2087
      %v2296 = vpop.f32.mrf.mxu0
      %v2297 = vadd.f32 0.0, %v2296
      %v2298 = vpop.f32.mrf.mxu0
      %2299 = vmatprep.mubr.f32.mxu0 0.0
      %2300 = vmatmul.mubr.f32.gmra.mxu0 %v2090
      %v2301 = vpop.f32.mrf.mxu0
      %v2302 = vadd.f32 0.0, %v2301
      %v2303 = vpop.f32.mrf.mxu0
      %2304 = vmatprep.mubr.f32.mxu0 0.0
      %2305 = vmatmul.mubr.f32.gmra.mxu0 %v2093
      %v2306 = vpop.f32.mrf.mxu0
      %v2307 = vadd.f32 0.0, %v2306
      %v2308 = vpop.f32.mrf.mxu0
      %2309 = vmatprep.mubr.f32.mxu0 0.0
      %2310 = vmatmul.mubr.f32.gmra.mxu0 %v2096
      %v2311 = vpop.f32.mrf.mxu0
      %v2312 = vadd.f32 0.0, %v2311
      %v2313 = vpop.f32.mrf.mxu0
      %2314 = vmatprep.mubr.f32.mxu0 0.0
      %2315 = vmatmul.mubr.f32.gmra.mxu0 %v2099
      %v2316 = vpop.f32.mrf.mxu0
      %v2317 = vadd.f32 0.0, %v2316
      %v2318 = vpop.f32.mrf.mxu0
      %2319 = vmatprep.mubr.f32.mxu0 0.0
      %2320 = vmatmul.mubr.f32.gmra.mxu0 %v2102
      %v2321 = vpop.f32.mrf.mxu0
      %v2322 = vadd.f32 0.0, %v2321
      %v2323 = vpop.f32.mrf.mxu0
      %2324 = vmatprep.mubr.f32.mxu0 0.0
      %2325 = vmatmul.mubr.f32.gmra.mxu0 %v2105
      %v2326 = vpop.f32.mrf.mxu0
      %v2327 = vadd.f32 0.0, %v2326
      %v2328 = vpop.f32.mrf.mxu0
      %2329 = vmatprep.mubr.f32.mxu0 0.0
      %2330 = vmatmul.mubr.f32.gmra.mxu0 %v2108
      %v2331 = vpop.f32.mrf.mxu0
      %v2332 = vadd.f32 0.0, %v2331
      %v2333 = vpop.f32.mrf.mxu0
      %2334 = vdwg.mxu0
      %v2335 = vadd.f32 %v1948, %v2177
      %v2336 = vadd.f32 %v1949, %v2182
      %v2337 = vadd.f32 %v1950, %v2187
      %v2338 = vadd.f32 %v1951, %v2192
      %v2339 = vadd.f32 %v1952, %v2197
      %v2340 = vadd.f32 %v1953, %v2202
      %v2341 = vadd.f32 %v1954, %v2207
      %v2342 = vadd.f32 %v1955, %v2212
      %v2343 = vadd.f32 %v1956, %v2217
      %v2344 = vadd.f32 %v1957, %v2222
      %v2345 = vadd.f32 %v1958, %v2227
      %v2346 = vadd.f32 %v1959, %v2232
      %v2347 = vadd.f32 %v1960, %v2237
      %v2348 = vadd.f32 %v1961, %v2242
      %v2349 = vadd.f32 %v1962, %v2247
      %v2350 = vadd.f32 %v1963, %v2252
      %v2351 = vadd.f32 %v1964, %v2257
      %v2352 = vadd.f32 %v1965, %v2262
      %v2353 = vadd.f32 %v1966, %v2267
      %v2354 = vadd.f32 %v1967, %v2272
      %v2355 = vadd.f32 %v1968, %v2277
      %v2356 = vadd.f32 %v1969, %v2282
      %v2357 = vadd.f32 %v1970, %v2287
      %v2358 = vadd.f32 %v1971, %v2292
      %v2359 = vadd.f32 %v1972, %v2297
      %v2360 = vadd.f32 %v1973, %v2302
      %v2361 = vadd.f32 %v1974, %v2307
      %v2362 = vadd.f32 %v1975, %v2312
      %v2363 = vadd.f32 %v1976, %v2317
      %v2364 = vadd.f32 %v1977, %v2322
      %v2365 = vadd.f32 %v1978, %v2327
      %v2366 = vadd.f32 %v1979, %v2332
      %v2367 = vld [vmem:[%s464 + $0x2] sm:$0xff]
      %v2368 = vld [vmem:[%s464 + $0xa] sm:$0xff]
      %v2369 = vld [vmem:[%s464 + $0x1a] sm:$0xff]
      %v2370 = vld [vmem:[%s464 + $0x22] sm:$0xff]
      %v2371 = vld [vmem:[%s464 + $0x32] sm:$0xff]
      %v2372 = vld [vmem:[%s464 + $0x3a] sm:$0xff]
      %v2373 = vld [vmem:[%s464 + $0x4a] sm:$0xff]
      %v2374 = vld [vmem:[%s464 + $0x52] sm:$0xff]
      %v2375 = vld [vmem:[%s464 + $0x62] sm:$0xff]
      %v2376 = vld [vmem:[%s464 + $0x6a] sm:$0xff]
      %v2377 = vld [vmem:[%s464 + $0x7a] sm:$0xff]
      %v2378 = vld [vmem:[%s464 + $0x82] sm:$0xff]
      %v2379 = vld [vmem:[%s464 + $0x92] sm:$0xff]
      %v2380 = vld [vmem:[%s464 + $0x9a] sm:$0xff]
      %v2381 = vld [vmem:[%s464 + $0xaa] sm:$0xff]
      %v2382 = vld [vmem:[%s464 + $0xb2] sm:$0xff]
      %v2383 = vld [vmem:[%s464 + $0xc2] sm:$0xff]
      %v2384 = vld [vmem:[%s464 + $0xca] sm:$0xff]
      %v2385 = vld [vmem:[%s464 + $0xda] sm:$0xff]
      %v2386 = vld [vmem:[%s464 + $0xe2] sm:$0xff]
      %v2387 = vld [vmem:[%s464 + $0xf2] sm:$0xff]
      %v2388 = vld [vmem:[%s464 + $0xfa] sm:$0xff]
      %v2389 = vld [vmem:[%s464 + $0x10a] sm:$0xff]
      %v2390 = vld [vmem:[%s464 + $0x112] sm:$0xff]
      %v2391 = vld [vmem:[%s464 + $0x122] sm:$0xff]
      %v2392 = vld [vmem:[%s464 + $0x12a] sm:$0xff]
      %v2393 = vld [vmem:[%s464 + $0x13a] sm:$0xff]
      %v2394 = vld [vmem:[%s464 + $0x142] sm:$0xff]
      %v2395 = vld [vmem:[%s464 + $0x152] sm:$0xff]
      %v2396 = vld [vmem:[%s464 + $0x15a] sm:$0xff]
      %v2397 = vld [vmem:[%s464 + $0x16a] sm:$0xff]
      %v2398 = vld [vmem:[%s464 + $0x172] sm:$0xff]
      %s2399 = scalar_lea.vmem %s1, 40
      %v2400 = vld [vmem:[%s2399] sm:$0xff]
      %v2402 = vsel %vm408, %v2367, 0
      %v2405 = vsel %vm408, %v2368, 0
      %v2408 = vsel %vm408, %v2369, 0
      %v2411 = vsel %vm408, %v2370, 0
      %v2414 = vsel %vm408, %v2371, 0
      %v2417 = vsel %vm408, %v2372, 0
      %v2420 = vsel %vm408, %v2373, 0
      %v2423 = vsel %vm408, %v2374, 0
      %v2426 = vsel %vm408, %v2375, 0
      %v2429 = vsel %vm408, %v2376, 0
      %v2432 = vsel %vm408, %v2377, 0
      %v2435 = vsel %vm408, %v2378, 0
      %v2438 = vsel %vm408, %v2379, 0
      %v2441 = vsel %vm408, %v2380, 0
      %v2444 = vsel %vm408, %v2381, 0
      %v2447 = vsel %vm408, %v2382, 0
      %v2450 = vsel %vm408, %v2383, 0
      %v2453 = vsel %vm408, %v2384, 0
      %v2456 = vsel %vm408, %v2385, 0
      %v2459 = vsel %vm408, %v2386, 0
      %v2462 = vsel %vm408, %v2387, 0
      %v2465 = vsel %vm408, %v2388, 0
      %v2468 = vsel %vm408, %v2389, 0
      %v2471 = vsel %vm408, %v2390, 0
      %v2474 = vsel %vm408, %v2391, 0
      %v2477 = vsel %vm408, %v2392, 0
      %v2480 = vsel %vm408, %v2393, 0
      %v2483 = vsel %vm408, %v2394, 0
      %v2486 = vsel %vm408, %v2395, 0
      %v2489 = vsel %vm408, %v2396, 0
      %v2492 = vsel %vm408, %v2397, 0
      %v2495 = vsel %vm408, %v2398, 0
      %2497 = vmatprep.subr.mxu0 0.0
      %2498 = vmatpush1.msra.mxu0 0.0
      %2499 = vmatprep.subr.mxu0 0.0
      %2500 = vmatpush1.msra.mxu0 0.0
      %2501 = vmatprep.subr.mxu0 0.0
      %2502 = vmatpush1.msra.mxu0 0.0
      %2503 = vmatprep.subr.mxu0 0.0
      %2504 = vmatpush1.msra.mxu0 0.0
      %2505 = vmatprep.subr.mxu0 0.0
      %2506 = vmatpush1.msra.mxu0 0.0
      %2507 = vmatprep.subr.mxu0 0.0
      %2508 = vmatpush1.msra.mxu0 0.0
      %2509 = vmatprep.subr.mxu0 0.0
      %2510 = vmatpush1.msra.mxu0 0.0
      %2511 = vmatprep.subr.mxu0 0.0
      %2512 = vmatpush1.msra.mxu0 0.0
      %2513 = vmatprep.subr.mxu0 0.0
      %2514 = vmatpush1.msra.mxu0 0.0
      %2515 = vmatprep.subr.mxu0 0.0
      %2516 = vmatpush1.msra.mxu0 0.0
      %2517 = vmatprep.subr.mxu0 0.0
      %2518 = vmatpush1.msra.mxu0 0.0
      %2519 = vmatprep.subr.mxu0 0.0
      %2520 = vmatpush1.msra.mxu0 0.0
      %2521 = vmatprep.subr.mxu0 0.0
      %2522 = vmatpush1.msra.mxu0 0.0
      %2523 = vmatprep.subr.mxu0 0.0
      %2524 = vmatpush1.msra.mxu0 0.0
      %2525 = vmatprep.subr.mxu0 0.0
      %2526 = vmatpush1.msra.mxu0 0.0
      %2527 = vmatprep.subr.mxu0 0.0
      %2528 = vmatpush1.msra.mxu0 %v2400
      %2529 = vmatprep.subr.mxu0 0.0
      %2530 = vmatpush2.msra.mxu0 0.0
      %2531 = vmatprep.subr.mxu0 0.0
      %2532 = vmatpush2.msra.mxu0 0.0
      %2533 = vmatprep.subr.mxu0 0.0
      %2534 = vmatpush2.msra.mxu0 0.0
      %2535 = vmatprep.subr.mxu0 0.0
      %2536 = vmatpush2.msra.mxu0 0.0
      %2537 = vmatprep.subr.mxu0 0.0
      %2538 = vmatpush2.msra.mxu0 0.0
      %2539 = vmatprep.subr.mxu0 0.0
      %2540 = vmatpush2.msra.mxu0 0.0
      %2541 = vmatprep.subr.mxu0 0.0
      %2542 = vmatpush2.msra.mxu0 0.0
      %2543 = vmatprep.subr.mxu0 0.0
      %2544 = vmatpush2.msra.mxu0 0.0
      %2545 = vmatprep.subr.mxu0 0.0
      %2546 = vmatpush2.msra.mxu0 0.0
      %2547 = vmatprep.subr.mxu0 0.0
      %2548 = vmatpush2.msra.mxu0 0.0
      %2549 = vmatprep.subr.mxu0 0.0
      %2550 = vmatpush2.msra.mxu0 0.0
      %2551 = vmatprep.subr.mxu0 0.0
      %2552 = vmatpush2.msra.mxu0 0.0
      %2553 = vmatprep.subr.mxu0 0.0
      %2554 = vmatpush2.msra.mxu0 0.0
      %2555 = vmatprep.subr.mxu0 0.0
      %2556 = vmatpush2.msra.mxu0 0.0
      %2557 = vmatprep.subr.mxu0 0.0
      %2558 = vmatpush2.msra.mxu0 0.0
      %2559 = vmatprep.subr.mxu0 0.0
      %2560 = vmatpush2.msra.mxu0 0.0
      %2561 = vmatprep.mubr.f32.mxu0 0.0
      %2562 = vmatmul.mubr.f32.gmra.mxu0 %v2402
      %v2563 = vpop.f32.mrf.mxu0
      %v2564 = vadd.f32 0.0, %v2563
      %v2565 = vpop.f32.mrf.mxu0
      %2566 = vmatprep.mubr.f32.mxu0 0.0
      %2567 = vmatmul.mubr.f32.gmra.mxu0 %v2405
      %v2568 = vpop.f32.mrf.mxu0
      %v2569 = vadd.f32 0.0, %v2568
      %v2570 = vpop.f32.mrf.mxu0
      %2571 = vmatprep.mubr.f32.mxu0 0.0
      %2572 = vmatmul.mubr.f32.gmra.mxu0 %v2408
      %v2573 = vpop.f32.mrf.mxu0
      %v2574 = vadd.f32 0.0, %v2573
      %v2575 = vpop.f32.mrf.mxu0
      %2576 = vmatprep.mubr.f32.mxu0 0.0
      %2577 = vmatmul.mubr.f32.gmra.mxu0 %v2411
      %v2578 = vpop.f32.mrf.mxu0
      %v2579 = vadd.f32 0.0, %v2578
      %v2580 = vpop.f32.mrf.mxu0
      %2581 = vmatprep.mubr.f32.mxu0 0.0
      %2582 = vmatmul.mubr.f32.gmra.mxu0 %v2414
      %v2583 = vpop.f32.mrf.mxu0
      %v2584 = vadd.f32 0.0, %v2583
      %v2585 = vpop.f32.mrf.mxu0
      %2586 = vmatprep.mubr.f32.mxu0 0.0
      %2587 = vmatmul.mubr.f32.gmra.mxu0 %v2417
      %v2588 = vpop.f32.mrf.mxu0
      %v2589 = vadd.f32 0.0, %v2588
      %v2590 = vpop.f32.mrf.mxu0
      %2591 = vmatprep.mubr.f32.mxu0 0.0
      %2592 = vmatmul.mubr.f32.gmra.mxu0 %v2420
      %v2593 = vpop.f32.mrf.mxu0
      %v2594 = vadd.f32 0.0, %v2593
      %v2595 = vpop.f32.mrf.mxu0
      %2596 = vmatprep.mubr.f32.mxu0 0.0
      %2597 = vmatmul.mubr.f32.gmra.mxu0 %v2423
      %v2598 = vpop.f32.mrf.mxu0
      %v2599 = vadd.f32 0.0, %v2598
      %v2600 = vpop.f32.mrf.mxu0
      %2601 = vmatprep.mubr.f32.mxu0 0.0
      %2602 = vmatmul.mubr.f32.gmra.mxu0 %v2426
      %v2603 = vpop.f32.mrf.mxu0
      %v2604 = vadd.f32 0.0, %v2603
      %v2605 = vpop.f32.mrf.mxu0
      %2606 = vmatprep.mubr.f32.mxu0 0.0
      %2607 = vmatmul.mubr.f32.gmra.mxu0 %v2429
      %v2608 = vpop.f32.mrf.mxu0
      %v2609 = vadd.f32 0.0, %v2608
      %v2610 = vpop.f32.mrf.mxu0
      %2611 = vmatprep.mubr.f32.mxu0 0.0
      %2612 = vmatmul.mubr.f32.gmra.mxu0 %v2432
      %v2613 = vpop.f32.mrf.mxu0
      %v2614 = vadd.f32 0.0, %v2613
      %v2615 = vpop.f32.mrf.mxu0
      %2616 = vmatprep.mubr.f32.mxu0 0.0
      %2617 = vmatmul.mubr.f32.gmra.mxu0 %v2435
      %v2618 = vpop.f32.mrf.mxu0
      %v2619 = vadd.f32 0.0, %v2618
      %v2620 = vpop.f32.mrf.mxu0
      %2621 = vmatprep.mubr.f32.mxu0 0.0
      %2622 = vmatmul.mubr.f32.gmra.mxu0 %v2438
      %v2623 = vpop.f32.mrf.mxu0
      %v2624 = vadd.f32 0.0, %v2623
      %v2625 = vpop.f32.mrf.mxu0
      %2626 = vmatprep.mubr.f32.mxu0 0.0
      %2627 = vmatmul.mubr.f32.gmra.mxu0 %v2441
      %v2628 = vpop.f32.mrf.mxu0
      %v2629 = vadd.f32 0.0, %v2628
      %v2630 = vpop.f32.mrf.mxu0
      %2631 = vmatprep.mubr.f32.mxu0 0.0
      %2632 = vmatmul.mubr.f32.gmra.mxu0 %v2444
      %v2633 = vpop.f32.mrf.mxu0
      %v2634 = vadd.f32 0.0, %v2633
      %v2635 = vpop.f32.mrf.mxu0
      %2636 = vmatprep.mubr.f32.mxu0 0.0
      %2637 = vmatmul.mubr.f32.gmra.mxu0 %v2447
      %v2638 = vpop.f32.mrf.mxu0
      %v2639 = vadd.f32 0.0, %v2638
      %v2640 = vpop.f32.mrf.mxu0
      %2641 = vmatprep.mubr.f32.mxu0 0.0
      %2642 = vmatmul.mubr.f32.gmra.mxu0 %v2450
      %v2643 = vpop.f32.mrf.mxu0
      %v2644 = vadd.f32 0.0, %v2643
      %v2645 = vpop.f32.mrf.mxu0
      %2646 = vmatprep.mubr.f32.mxu0 0.0
      %2647 = vmatmul.mubr.f32.gmra.mxu0 %v2453
      %v2648 = vpop.f32.mrf.mxu0
      %v2649 = vadd.f32 0.0, %v2648
      %v2650 = vpop.f32.mrf.mxu0
      %2651 = vmatprep.mubr.f32.mxu0 0.0
      %2652 = vmatmul.mubr.f32.gmra.mxu0 %v2456
      %v2653 = vpop.f32.mrf.mxu0
      %v2654 = vadd.f32 0.0, %v2653
      %v2655 = vpop.f32.mrf.mxu0
      %2656 = vmatprep.mubr.f32.mxu0 0.0
      %2657 = vmatmul.mubr.f32.gmra.mxu0 %v2459
      %v2658 = vpop.f32.mrf.mxu0
      %v2659 = vadd.f32 0.0, %v2658
      %v2660 = vpop.f32.mrf.mxu0
      %2661 = vmatprep.mubr.f32.mxu0 0.0
      %2662 = vmatmul.mubr.f32.gmra.mxu0 %v2462
      %v2663 = vpop.f32.mrf.mxu0
      %v2664 = vadd.f32 0.0, %v2663
      %v2665 = vpop.f32.mrf.mxu0
      %2666 = vmatprep.mubr.f32.mxu0 0.0
      %2667 = vmatmul.mubr.f32.gmra.mxu0 %v2465
      %v2668 = vpop.f32.mrf.mxu0
      %v2669 = vadd.f32 0.0, %v2668
      %v2670 = vpop.f32.mrf.mxu0
      %2671 = vmatprep.mubr.f32.mxu0 0.0
      %2672 = vmatmul.mubr.f32.gmra.mxu0 %v2468
      %v2673 = vpop.f32.mrf.mxu0
      %v2674 = vadd.f32 0.0, %v2673
      %v2675 = vpop.f32.mrf.mxu0
      %2676 = vmatprep.mubr.f32.mxu0 0.0
      %2677 = vmatmul.mubr.f32.gmra.mxu0 %v2471
      %v2678 = vpop.f32.mrf.mxu0
      %v2679 = vadd.f32 0.0, %v2678
      %v2680 = vpop.f32.mrf.mxu0
      %2681 = vmatprep.mubr.f32.mxu0 0.0
      %2682 = vmatmul.mubr.f32.gmra.mxu0 %v2474
      %v2683 = vpop.f32.mrf.mxu0
      %v2684 = vadd.f32 0.0, %v2683
      %v2685 = vpop.f32.mrf.mxu0
      %2686 = vmatprep.mubr.f32.mxu0 0.0
      %2687 = vmatmul.mubr.f32.gmra.mxu0 %v2477
      %v2688 = vpop.f32.mrf.mxu0
      %v2689 = vadd.f32 0.0, %v2688
      %v2690 = vpop.f32.mrf.mxu0
      %2691 = vmatprep.mubr.f32.mxu0 0.0
      %2692 = vmatmul.mubr.f32.gmra.mxu0 %v2480
      %v2693 = vpop.f32.mrf.mxu0
      %v2694 = vadd.f32 0.0, %v2693
      %v2695 = vpop.f32.mrf.mxu0
      %2696 = vmatprep.mubr.f32.mxu0 0.0
      %2697 = vmatmul.mubr.f32.gmra.mxu0 %v2483
      %v2698 = vpop.f32.mrf.mxu0
      %v2699 = vadd.f32 0.0, %v2698
      %v2700 = vpop.f32.mrf.mxu0
      %2701 = vmatprep.mubr.f32.mxu0 0.0
      %2702 = vmatmul.mubr.f32.gmra.mxu0 %v2486
      %v2703 = vpop.f32.mrf.mxu0
      %v2704 = vadd.f32 0.0, %v2703
      %v2705 = vpop.f32.mrf.mxu0
      %2706 = vmatprep.mubr.f32.mxu0 0.0
      %2707 = vmatmul.mubr.f32.gmra.mxu0 %v2489
      %v2708 = vpop.f32.mrf.mxu0
      %v2709 = vadd.f32 0.0, %v2708
      %v2710 = vpop.f32.mrf.mxu0
      %2711 = vmatprep.mubr.f32.mxu0 0.0
      %2712 = vmatmul.mubr.f32.gmra.mxu0 %v2492
      %v2713 = vpop.f32.mrf.mxu0
      %v2714 = vadd.f32 0.0, %v2713
      %v2715 = vpop.f32.mrf.mxu0
      %2716 = vmatprep.mubr.f32.mxu0 0.0
      %2717 = vmatmul.mubr.f32.gmra.mxu0 %v2495
      %v2718 = vpop.f32.mrf.mxu0
      %v2719 = vadd.f32 0.0, %v2718
      %v2720 = vpop.f32.mrf.mxu0
      %2721 = vdwg.mxu0
      %v2722 = vadd.f32 %v2335, %v2564
      %v2723 = vadd.f32 %v2336, %v2569
      %v2724 = vadd.f32 %v2337, %v2574
      %v2725 = vadd.f32 %v2338, %v2579
      %v2726 = vadd.f32 %v2339, %v2584
      %v2727 = vadd.f32 %v2340, %v2589
      %v2728 = vadd.f32 %v2341, %v2594
      %v2729 = vadd.f32 %v2342, %v2599
      %v2730 = vadd.f32 %v2343, %v2604
      %v2731 = vadd.f32 %v2344, %v2609
      %v2732 = vadd.f32 %v2345, %v2614
      %v2733 = vadd.f32 %v2346, %v2619
      %v2734 = vadd.f32 %v2347, %v2624
      %v2735 = vadd.f32 %v2348, %v2629
      %v2736 = vadd.f32 %v2349, %v2634
      %v2737 = vadd.f32 %v2350, %v2639
      %v2738 = vadd.f32 %v2351, %v2644
      %v2739 = vadd.f32 %v2352, %v2649
      %v2740 = vadd.f32 %v2353, %v2654
      %v2741 = vadd.f32 %v2354, %v2659
      %v2742 = vadd.f32 %v2355, %v2664
      %v2743 = vadd.f32 %v2356, %v2669
      %v2744 = vadd.f32 %v2357, %v2674
      %v2745 = vadd.f32 %v2358, %v2679
      %v2746 = vadd.f32 %v2359, %v2684
      %v2747 = vadd.f32 %v2360, %v2689
      %v2748 = vadd.f32 %v2361, %v2694
      %v2749 = vadd.f32 %v2362, %v2699
      %v2750 = vadd.f32 %v2363, %v2704
      %v2751 = vadd.f32 %v2364, %v2709
      %v2752 = vadd.f32 %v2365, %v2714
      %v2753 = vadd.f32 %v2366, %v2719
      %s2754 = scalar_lea.vmem [#allocation2], 48
      %v2755 = vld [vmem:[%s2754] sm:$0xff]
      %v2756 = vld [vmem:[%s2754 + $0x8] sm:$0xff]
      %v2757 = vld [vmem:[%s2754 + $0x18] sm:$0xff]
      %v2758 = vld [vmem:[%s2754 + $0x20] sm:$0xff]
      %v2759 = vld [vmem:[%s2754 + $0x30] sm:$0xff]
      %v2760 = vld [vmem:[%s2754 + $0x38] sm:$0xff]
      %v2761 = vld [vmem:[%s2754 + $0x48] sm:$0xff]
      %v2762 = vld [vmem:[%s2754 + $0x50] sm:$0xff]
      %v2763 = vld [vmem:[%s2754 + $0x60] sm:$0xff]
      %v2764 = vld [vmem:[%s2754 + $0x68] sm:$0xff]
      %v2765 = vld [vmem:[%s2754 + $0x78] sm:$0xff]
      %v2766 = vld [vmem:[%s2754 + $0x80] sm:$0xff]
      %v2767 = vld [vmem:[%s2754 + $0x90] sm:$0xff]
      %v2768 = vld [vmem:[%s2754 + $0x98] sm:$0xff]
      %v2769 = vld [vmem:[%s2754 + $0xa8] sm:$0xff]
      %v2770 = vld [vmem:[%s2754 + $0xb0] sm:$0xff]
      %v2771 = vld [vmem:[%s2754 + $0xc0] sm:$0xff]
      %v2772 = vld [vmem:[%s2754 + $0xc8] sm:$0xff]
      %v2773 = vld [vmem:[%s2754 + $0xd8] sm:$0xff]
      %v2774 = vld [vmem:[%s2754 + $0xe0] sm:$0xff]
      %v2775 = vld [vmem:[%s2754 + $0xf0] sm:$0xff]
      %v2776 = vld [vmem:[%s2754 + $0xf8] sm:$0xff]
      %v2777 = vld [vmem:[%s2754 + $0x108] sm:$0xff]
      %v2778 = vld [vmem:[%s2754 + $0x110] sm:$0xff]
      %v2779 = vld [vmem:[%s2754 + $0x120] sm:$0xff]
      %v2780 = vld [vmem:[%s2754 + $0x128] sm:$0xff]
      %v2781 = vld [vmem:[%s2754 + $0x138] sm:$0xff]
      %v2782 = vld [vmem:[%s2754 + $0x140] sm:$0xff]
      %v2783 = vld [vmem:[%s2754 + $0x150] sm:$0xff]
      %v2784 = vld [vmem:[%s2754 + $0x158] sm:$0xff]
      %v2785 = vld [vmem:[%s2754 + $0x168] sm:$0xff]
      %v2786 = vld [vmem:[%s2754 + $0x170] sm:$0xff]
      %s2787 = scalar_lea.vmem %s1, 48
      %v2788 = vld [vmem:[%s2787] sm:$0xff]
      %v2790 = vsel %vm408, %v2755, 0
      %v2793 = vsel %vm408, %v2756, 0
      %v2796 = vsel %vm408, %v2757, 0
      %v2799 = vsel %vm408, %v2758, 0
      %v2802 = vsel %vm408, %v2759, 0
      %v2805 = vsel %vm408, %v2760, 0
      %v2808 = vsel %vm408, %v2761, 0
      %v2811 = vsel %vm408, %v2762, 0
      %v2814 = vsel %vm408, %v2763, 0
      %v2817 = vsel %vm408, %v2764, 0
      %v2820 = vsel %vm408, %v2765, 0
      %v2823 = vsel %vm408, %v2766, 0
      %v2826 = vsel %vm408, %v2767, 0
      %v2829 = vsel %vm408, %v2768, 0
      %v2832 = vsel %vm408, %v2769, 0
      %v2835 = vsel %vm408, %v2770, 0
      %v2838 = vsel %vm408, %v2771, 0
      %v2841 = vsel %vm408, %v2772, 0
      %v2844 = vsel %vm408, %v2773, 0
      %v2847 = vsel %vm408, %v2774, 0
      %v2850 = vsel %vm408, %v2775, 0
      %v2853 = vsel %vm408, %v2776, 0
      %v2856 = vsel %vm408, %v2777, 0
      %v2859 = vsel %vm408, %v2778, 0
      %v2862 = vsel %vm408, %v2779, 0
      %v2865 = vsel %vm408, %v2780, 0
      %v2868 = vsel %vm408, %v2781, 0
      %v2871 = vsel %vm408, %v2782, 0
      %v2874 = vsel %vm408, %v2783, 0
      %v2877 = vsel %vm408, %v2784, 0
      %v2880 = vsel %vm408, %v2785, 0
      %v2883 = vsel %vm408, %v2786, 0
      %2885 = vmatprep.subr.mxu0 0.0
      %2886 = vmatpush1.msra.mxu0 0.0
      %2887 = vmatprep.subr.mxu0 0.0
      %2888 = vmatpush1.msra.mxu0 0.0
      %2889 = vmatprep.subr.mxu0 0.0
      %2890 = vmatpush1.msra.mxu0 0.0
      %2891 = vmatprep.subr.mxu0 0.0
      %2892 = vmatpush1.msra.mxu0 0.0
      %2893 = vmatprep.subr.mxu0 0.0
      %2894 = vmatpush1.msra.mxu0 0.0
      %2895 = vmatprep.subr.mxu0 0.0
      %2896 = vmatpush1.msra.mxu0 0.0
      %2897 = vmatprep.subr.mxu0 0.0
      %2898 = vmatpush1.msra.mxu0 0.0
      %2899 = vmatprep.subr.mxu0 0.0
      %2900 = vmatpush1.msra.mxu0 0.0
      %2901 = vmatprep.subr.mxu0 0.0
      %2902 = vmatpush1.msra.mxu0 0.0
      %2903 = vmatprep.subr.mxu0 0.0
      %2904 = vmatpush1.msra.mxu0 0.0
      %2905 = vmatprep.subr.mxu0 0.0
      %2906 = vmatpush1.msra.mxu0 0.0
      %2907 = vmatprep.subr.mxu0 0.0
      %2908 = vmatpush1.msra.mxu0 0.0
      %2909 = vmatprep.subr.mxu0 0.0
      %2910 = vmatpush1.msra.mxu0 0.0
      %2911 = vmatprep.subr.mxu0 0.0
      %2912 = vmatpush1.msra.mxu0 0.0
      %2913 = vmatprep.subr.mxu0 0.0
      %2914 = vmatpush1.msra.mxu0 0.0
      %2915 = vmatprep.subr.mxu0 0.0
      %2916 = vmatpush1.msra.mxu0 %v2788
      %2917 = vmatprep.subr.mxu0 0.0
      %2918 = vmatpush2.msra.mxu0 0.0
      %2919 = vmatprep.subr.mxu0 0.0
      %2920 = vmatpush2.msra.mxu0 0.0
      %2921 = vmatprep.subr.mxu0 0.0
      %2922 = vmatpush2.msra.mxu0 0.0
      %2923 = vmatprep.subr.mxu0 0.0
      %2924 = vmatpush2.msra.mxu0 0.0
      %2925 = vmatprep.subr.mxu0 0.0
      %2926 = vmatpush2.msra.mxu0 0.0
      %2927 = vmatprep.subr.mxu0 0.0
      %2928 = vmatpush2.msra.mxu0 0.0
      %2929 = vmatprep.subr.mxu0 0.0
      %2930 = vmatpush2.msra.mxu0 0.0
      %2931 = vmatprep.subr.mxu0 0.0
      %2932 = vmatpush2.msra.mxu0 0.0
      %2933 = vmatprep.subr.mxu0 0.0
      %2934 = vmatpush2.msra.mxu0 0.0
      %2935 = vmatprep.subr.mxu0 0.0
      %2936 = vmatpush2.msra.mxu0 0.0
      %2937 = vmatprep.subr.mxu0 0.0
      %2938 = vmatpush2.msra.mxu0 0.0
      %2939 = vmatprep.subr.mxu0 0.0
      %2940 = vmatpush2.msra.mxu0 0.0
      %2941 = vmatprep.subr.mxu0 0.0
      %2942 = vmatpush2.msra.mxu0 0.0
      %2943 = vmatprep.subr.mxu0 0.0
      %2944 = vmatpush2.msra.mxu0 0.0
      %2945 = vmatprep.subr.mxu0 0.0
      %2946 = vmatpush2.msra.mxu0 0.0
      %2947 = vmatprep.subr.mxu0 0.0
      %2948 = vmatpush2.msra.mxu0 0.0
      %2949 = vmatprep.mubr.f32.mxu0 0.0
      %2950 = vmatmul.mubr.f32.gmra.mxu0 %v2790
      %v2951 = vpop.f32.mrf.mxu0
      %v2952 = vadd.f32 0.0, %v2951
      %v2953 = vpop.f32.mrf.mxu0
      %2954 = vmatprep.mubr.f32.mxu0 0.0
      %2955 = vmatmul.mubr.f32.gmra.mxu0 %v2793
      %v2956 = vpop.f32.mrf.mxu0
      %v2957 = vadd.f32 0.0, %v2956
      %v2958 = vpop.f32.mrf.mxu0
      %2959 = vmatprep.mubr.f32.mxu0 0.0
      %2960 = vmatmul.mubr.f32.gmra.mxu0 %v2796
      %v2961 = vpop.f32.mrf.mxu0
      %v2962 = vadd.f32 0.0, %v2961
      %v2963 = vpop.f32.mrf.mxu0
      %2964 = vmatprep.mubr.f32.mxu0 0.0
      %2965 = vmatmul.mubr.f32.gmra.mxu0 %v2799
      %v2966 = vpop.f32.mrf.mxu0
      %v2967 = vadd.f32 0.0, %v2966
      %v2968 = vpop.f32.mrf.mxu0
      %2969 = vmatprep.mubr.f32.mxu0 0.0
      %2970 = vmatmul.mubr.f32.gmra.mxu0 %v2802
      %v2971 = vpop.f32.mrf.mxu0
      %v2972 = vadd.f32 0.0, %v2971
      %v2973 = vpop.f32.mrf.mxu0
      %2974 = vmatprep.mubr.f32.mxu0 0.0
      %2975 = vmatmul.mubr.f32.gmra.mxu0 %v2805
      %v2976 = vpop.f32.mrf.mxu0
      %v2977 = vadd.f32 0.0, %v2976
      %v2978 = vpop.f32.mrf.mxu0
      %2979 = vmatprep.mubr.f32.mxu0 0.0
      %2980 = vmatmul.mubr.f32.gmra.mxu0 %v2808
      %v2981 = vpop.f32.mrf.mxu0
      %v2982 = vadd.f32 0.0, %v2981
      %v2983 = vpop.f32.mrf.mxu0
      %2984 = vmatprep.mubr.f32.mxu0 0.0
      %2985 = vmatmul.mubr.f32.gmra.mxu0 %v2811
      %v2986 = vpop.f32.mrf.mxu0
      %v2987 = vadd.f32 0.0, %v2986
      %v2988 = vpop.f32.mrf.mxu0
      %2989 = vmatprep.mubr.f32.mxu0 0.0
      %2990 = vmatmul.mubr.f32.gmra.mxu0 %v2814
      %v2991 = vpop.f32.mrf.mxu0
      %v2992 = vadd.f32 0.0, %v2991
      %v2993 = vpop.f32.mrf.mxu0
      %2994 = vmatprep.mubr.f32.mxu0 0.0
      %2995 = vmatmul.mubr.f32.gmra.mxu0 %v2817
      %v2996 = vpop.f32.mrf.mxu0
      %v2997 = vadd.f32 0.0, %v2996
      %v2998 = vpop.f32.mrf.mxu0
      %2999 = vmatprep.mubr.f32.mxu0 0.0
      %3000 = vmatmul.mubr.f32.gmra.mxu0 %v2820
      %v3001 = vpop.f32.mrf.mxu0
      %v3002 = vadd.f32 0.0, %v3001
      %v3003 = vpop.f32.mrf.mxu0
      %3004 = vmatprep.mubr.f32.mxu0 0.0
      %3005 = vmatmul.mubr.f32.gmra.mxu0 %v2823
      %v3006 = vpop.f32.mrf.mxu0
      %v3007 = vadd.f32 0.0, %v3006
      %v3008 = vpop.f32.mrf.mxu0
      %3009 = vmatprep.mubr.f32.mxu0 0.0
      %3010 = vmatmul.mubr.f32.gmra.mxu0 %v2826
      %v3011 = vpop.f32.mrf.mxu0
      %v3012 = vadd.f32 0.0, %v3011
      %v3013 = vpop.f32.mrf.mxu0
      %3014 = vmatprep.mubr.f32.mxu0 0.0
      %3015 = vmatmul.mubr.f32.gmra.mxu0 %v2829
      %v3016 = vpop.f32.mrf.mxu0
      %v3017 = vadd.f32 0.0, %v3016
      %v3018 = vpop.f32.mrf.mxu0
      %3019 = vmatprep.mubr.f32.mxu0 0.0
      %3020 = vmatmul.mubr.f32.gmra.mxu0 %v2832
      %v3021 = vpop.f32.mrf.mxu0
      %v3022 = vadd.f32 0.0, %v3021
      %v3023 = vpop.f32.mrf.mxu0
      %3024 = vmatprep.mubr.f32.mxu0 0.0
      %3025 = vmatmul.mubr.f32.gmra.mxu0 %v2835
      %v3026 = vpop.f32.mrf.mxu0
      %v3027 = vadd.f32 0.0, %v3026
      %v3028 = vpop.f32.mrf.mxu0
      %3029 = vmatprep.mubr.f32.mxu0 0.0
      %3030 = vmatmul.mubr.f32.gmra.mxu0 %v2838
      %v3031 = vpop.f32.mrf.mxu0
      %v3032 = vadd.f32 0.0, %v3031
      %v3033 = vpop.f32.mrf.mxu0
      %3034 = vmatprep.mubr.f32.mxu0 0.0
      %3035 = vmatmul.mubr.f32.gmra.mxu0 %v2841
      %v3036 = vpop.f32.mrf.mxu0
      %v3037 = vadd.f32 0.0, %v3036
      %v3038 = vpop.f32.mrf.mxu0
      %3039 = vmatprep.mubr.f32.mxu0 0.0
      %3040 = vmatmul.mubr.f32.gmra.mxu0 %v2844
      %v3041 = vpop.f32.mrf.mxu0
      %v3042 = vadd.f32 0.0, %v3041
      %v3043 = vpop.f32.mrf.mxu0
      %3044 = vmatprep.mubr.f32.mxu0 0.0
      %3045 = vmatmul.mubr.f32.gmra.mxu0 %v2847
      %v3046 = vpop.f32.mrf.mxu0
      %v3047 = vadd.f32 0.0, %v3046
      %v3048 = vpop.f32.mrf.mxu0
      %3049 = vmatprep.mubr.f32.mxu0 0.0
      %3050 = vmatmul.mubr.f32.gmra.mxu0 %v2850
      %v3051 = vpop.f32.mrf.mxu0
      %v3052 = vadd.f32 0.0, %v3051
      %v3053 = vpop.f32.mrf.mxu0
      %3054 = vmatprep.mubr.f32.mxu0 0.0
      %3055 = vmatmul.mubr.f32.gmra.mxu0 %v2853
      %v3056 = vpop.f32.mrf.mxu0
      %v3057 = vadd.f32 0.0, %v3056
      %v3058 = vpop.f32.mrf.mxu0
      %3059 = vmatprep.mubr.f32.mxu0 0.0
      %3060 = vmatmul.mubr.f32.gmra.mxu0 %v2856
      %v3061 = vpop.f32.mrf.mxu0
      %v3062 = vadd.f32 0.0, %v3061
      %v3063 = vpop.f32.mrf.mxu0
      %3064 = vmatprep.mubr.f32.mxu0 0.0
      %3065 = vmatmul.mubr.f32.gmra.mxu0 %v2859
      %v3066 = vpop.f32.mrf.mxu0
      %v3067 = vadd.f32 0.0, %v3066
      %v3068 = vpop.f32.mrf.mxu0
      %3069 = vmatprep.mubr.f32.mxu0 0.0
      %3070 = vmatmul.mubr.f32.gmra.mxu0 %v2862
      %v3071 = vpop.f32.mrf.mxu0
      %v3072 = vadd.f32 0.0, %v3071
      %v3073 = vpop.f32.mrf.mxu0
      %3074 = vmatprep.mubr.f32.mxu0 0.0
      %3075 = vmatmul.mubr.f32.gmra.mxu0 %v2865
      %v3076 = vpop.f32.mrf.mxu0
      %v3077 = vadd.f32 0.0, %v3076
      %v3078 = vpop.f32.mrf.mxu0
      %3079 = vmatprep.mubr.f32.mxu0 0.0
      %3080 = vmatmul.mubr.f32.gmra.mxu0 %v2868
      %v3081 = vpop.f32.mrf.mxu0
      %v3082 = vadd.f32 0.0, %v3081
      %v3083 = vpop.f32.mrf.mxu0
      %3084 = vmatprep.mubr.f32.mxu0 0.0
      %3085 = vmatmul.mubr.f32.gmra.mxu0 %v2871
      %v3086 = vpop.f32.mrf.mxu0
      %v3087 = vadd.f32 0.0, %v3086
      %v3088 = vpop.f32.mrf.mxu0
      %3089 = vmatprep.mubr.f32.mxu0 0.0
      %3090 = vmatmul.mubr.f32.gmra.mxu0 %v2874
      %v3091 = vpop.f32.mrf.mxu0
      %v3092 = vadd.f32 0.0, %v3091
      %v3093 = vpop.f32.mrf.mxu0
      %3094 = vmatprep.mubr.f32.mxu0 0.0
      %3095 = vmatmul.mubr.f32.gmra.mxu0 %v2877
      %v3096 = vpop.f32.mrf.mxu0
      %v3097 = vadd.f32 0.0, %v3096
      %v3098 = vpop.f32.mrf.mxu0
      %3099 = vmatprep.mubr.f32.mxu0 0.0
      %3100 = vmatmul.mubr.f32.gmra.mxu0 %v2880
      %v3101 = vpop.f32.mrf.mxu0
      %v3102 = vadd.f32 0.0, %v3101
      %v3103 = vpop.f32.mrf.mxu0
      %3104 = vmatprep.mubr.f32.mxu0 0.0
      %3105 = vmatmul.mubr.f32.gmra.mxu0 %v2883
      %v3106 = vpop.f32.mrf.mxu0
      %v3107 = vadd.f32 0.0, %v3106
      %v3108 = vpop.f32.mrf.mxu0
      %3109 = vdwg.mxu0
      %v3110 = vadd.f32 %v2722, %v2952
      %v3111 = vadd.f32 %v2723, %v2957
      %v3112 = vadd.f32 %v2724, %v2962
      %v3113 = vadd.f32 %v2725, %v2967
      %v3114 = vadd.f32 %v2726, %v2972
      %v3115 = vadd.f32 %v2727, %v2977
      %v3116 = vadd.f32 %v2728, %v2982
      %v3117 = vadd.f32 %v2729, %v2987
      %v3118 = vadd.f32 %v2730, %v2992
      %v3119 = vadd.f32 %v2731, %v2997
      %v3120 = vadd.f32 %v2732, %v3002
      %v3121 = vadd.f32 %v2733, %v3007
      %v3122 = vadd.f32 %v2734, %v3012
      %v3123 = vadd.f32 %v2735, %v3017
      %v3124 = vadd.f32 %v2736, %v3022
      %v3125 = vadd.f32 %v2737, %v3027
      %v3126 = vadd.f32 %v2738, %v3032
      %v3127 = vadd.f32 %v2739, %v3037
      %v3128 = vadd.f32 %v2740, %v3042
      %v3129 = vadd.f32 %v2741, %v3047
      %v3130 = vadd.f32 %v2742, %v3052
      %v3131 = vadd.f32 %v2743, %v3057
      %v3132 = vadd.f32 %v2744, %v3062
      %v3133 = vadd.f32 %v2745, %v3067
      %v3134 = vadd.f32 %v2746, %v3072
      %v3135 = vadd.f32 %v2747, %v3077
      %v3136 = vadd.f32 %v2748, %v3082
      %v3137 = vadd.f32 %v2749, %v3087
      %v3138 = vadd.f32 %v2750, %v3092
      %v3139 = vadd.f32 %v2751, %v3097
      %v3140 = vadd.f32 %v2752, %v3102
      %v3141 = vadd.f32 %v2753, %v3107
      %v3142 = vld [vmem:[%s2754 + $0x1] sm:$0xff]
      %v3143 = vld [vmem:[%s2754 + $0x9] sm:$0xff]
      %v3144 = vld [vmem:[%s2754 + $0x19] sm:$0xff]
      %v3145 = vld [vmem:[%s2754 + $0x21] sm:$0xff]
      %v3146 = vld [vmem:[%s2754 + $0x31] sm:$0xff]
      %v3147 = vld [vmem:[%s2754 + $0x39] sm:$0xff]
      %v3148 = vld [vmem:[%s2754 + $0x49] sm:$0xff]
      %v3149 = vld [vmem:[%s2754 + $0x51] sm:$0xff]
      %v3150 = vld [vmem:[%s2754 + $0x61] sm:$0xff]
      %v3151 = vld [vmem:[%s2754 + $0x69] sm:$0xff]
      %v3152 = vld [vmem:[%s2754 + $0x79] sm:$0xff]
      %v3153 = vld [vmem:[%s2754 + $0x81] sm:$0xff]
      %v3154 = vld [vmem:[%s2754 + $0x91] sm:$0xff]
      %v3155 = vld [vmem:[%s2754 + $0x99] sm:$0xff]
      %v3156 = vld [vmem:[%s2754 + $0xa9] sm:$0xff]
      %v3157 = vld [vmem:[%s2754 + $0xb1] sm:$0xff]
      %v3158 = vld [vmem:[%s2754 + $0xc1] sm:$0xff]
      %v3159 = vld [vmem:[%s2754 + $0xc9] sm:$0xff]
      %v3160 = vld [vmem:[%s2754 + $0xd9] sm:$0xff]
      %v3161 = vld [vmem:[%s2754 + $0xe1] sm:$0xff]
      %v3162 = vld [vmem:[%s2754 + $0xf1] sm:$0xff]
      %v3163 = vld [vmem:[%s2754 + $0xf9] sm:$0xff]
      %v3164 = vld [vmem:[%s2754 + $0x109] sm:$0xff]
      %v3165 = vld [vmem:[%s2754 + $0x111] sm:$0xff]
      %v3166 = vld [vmem:[%s2754 + $0x121] sm:$0xff]
      %v3167 = vld [vmem:[%s2754 + $0x129] sm:$0xff]
      %v3168 = vld [vmem:[%s2754 + $0x139] sm:$0xff]
      %v3169 = vld [vmem:[%s2754 + $0x141] sm:$0xff]
      %v3170 = vld [vmem:[%s2754 + $0x151] sm:$0xff]
      %v3171 = vld [vmem:[%s2754 + $0x159] sm:$0xff]
      %v3172 = vld [vmem:[%s2754 + $0x169] sm:$0xff]
      %v3173 = vld [vmem:[%s2754 + $0x171] sm:$0xff]
      %s3174 = scalar_lea.vmem %s1, 56
      %v3175 = vld [vmem:[%s3174] sm:$0xff]
      %v3177 = vsel %vm408, %v3142, 0
      %v3180 = vsel %vm408, %v3143, 0
      %v3183 = vsel %vm408, %v3144, 0
      %v3186 = vsel %vm408, %v3145, 0
      %v3189 = vsel %vm408, %v3146, 0
      %v3192 = vsel %vm408, %v3147, 0
      %v3195 = vsel %vm408, %v3148, 0
      %v3198 = vsel %vm408, %v3149, 0
      %v3201 = vsel %vm408, %v3150, 0
      %v3204 = vsel %vm408, %v3151, 0
      %v3207 = vsel %vm408, %v3152, 0
      %v3210 = vsel %vm408, %v3153, 0
      %v3213 = vsel %vm408, %v3154, 0
      %v3216 = vsel %vm408, %v3155, 0
      %v3219 = vsel %vm408, %v3156, 0
      %v3222 = vsel %vm408, %v3157, 0
      %v3225 = vsel %vm408, %v3158, 0
      %v3228 = vsel %vm408, %v3159, 0
      %v3231 = vsel %vm408, %v3160, 0
      %v3234 = vsel %vm408, %v3161, 0
      %v3237 = vsel %vm408, %v3162, 0
      %v3240 = vsel %vm408, %v3163, 0
      %v3243 = vsel %vm408, %v3164, 0
      %v3246 = vsel %vm408, %v3165, 0
      %v3249 = vsel %vm408, %v3166, 0
      %v3252 = vsel %vm408, %v3167, 0
      %v3255 = vsel %vm408, %v3168, 0
      %v3258 = vsel %vm408, %v3169, 0
      %v3261 = vsel %vm408, %v3170, 0
      %v3264 = vsel %vm408, %v3171, 0
      %v3267 = vsel %vm408, %v3172, 0
      %v3270 = vsel %vm408, %v3173, 0
      %3272 = vmatprep.subr.mxu0 0.0
      %3273 = vmatpush1.msra.mxu0 0.0
      %3274 = vmatprep.subr.mxu0 0.0
      %3275 = vmatpush1.msra.mxu0 0.0
      %3276 = vmatprep.subr.mxu0 0.0
      %3277 = vmatpush1.msra.mxu0 0.0
      %3278 = vmatprep.subr.mxu0 0.0
      %3279 = vmatpush1.msra.mxu0 0.0
      %3280 = vmatprep.subr.mxu0 0.0
      %3281 = vmatpush1.msra.mxu0 0.0
      %3282 = vmatprep.subr.mxu0 0.0
      %3283 = vmatpush1.msra.mxu0 0.0
      %3284 = vmatprep.subr.mxu0 0.0
      %3285 = vmatpush1.msra.mxu0 0.0
      %3286 = vmatprep.subr.mxu0 0.0
      %3287 = vmatpush1.msra.mxu0 0.0
      %3288 = vmatprep.subr.mxu0 0.0
      %3289 = vmatpush1.msra.mxu0 0.0
      %3290 = vmatprep.subr.mxu0 0.0
      %3291 = vmatpush1.msra.mxu0 0.0
      %3292 = vmatprep.subr.mxu0 0.0
      %3293 = vmatpush1.msra.mxu0 0.0
      %3294 = vmatprep.subr.mxu0 0.0
      %3295 = vmatpush1.msra.mxu0 0.0
      %3296 = vmatprep.subr.mxu0 0.0
      %3297 = vmatpush1.msra.mxu0 0.0
      %3298 = vmatprep.subr.mxu0 0.0
      %3299 = vmatpush1.msra.mxu0 0.0
      %3300 = vmatprep.subr.mxu0 0.0
      %3301 = vmatpush1.msra.mxu0 0.0
      %3302 = vmatprep.subr.mxu0 0.0
      %3303 = vmatpush1.msra.mxu0 %v3175
      %3304 = vmatprep.subr.mxu0 0.0
      %3305 = vmatpush2.msra.mxu0 0.0
      %3306 = vmatprep.subr.mxu0 0.0
      %3307 = vmatpush2.msra.mxu0 0.0
      %3308 = vmatprep.subr.mxu0 0.0
      %3309 = vmatpush2.msra.mxu0 0.0
      %3310 = vmatprep.subr.mxu0 0.0
      %3311 = vmatpush2.msra.mxu0 0.0
      %3312 = vmatprep.subr.mxu0 0.0
      %3313 = vmatpush2.msra.mxu0 0.0
      %3314 = vmatprep.subr.mxu0 0.0
      %3315 = vmatpush2.msra.mxu0 0.0
      %3316 = vmatprep.subr.mxu0 0.0
      %3317 = vmatpush2.msra.mxu0 0.0
      %3318 = vmatprep.subr.mxu0 0.0
      %3319 = vmatpush2.msra.mxu0 0.0
      %3320 = vmatprep.subr.mxu0 0.0
      %3321 = vmatpush2.msra.mxu0 0.0
      %3322 = vmatprep.subr.mxu0 0.0
      %3323 = vmatpush2.msra.mxu0 0.0
      %3324 = vmatprep.subr.mxu0 0.0
      %3325 = vmatpush2.msra.mxu0 0.0
      %3326 = vmatprep.subr.mxu0 0.0
      %3327 = vmatpush2.msra.mxu0 0.0
      %3328 = vmatprep.subr.mxu0 0.0
      %3329 = vmatpush2.msra.mxu0 0.0
      %3330 = vmatprep.subr.mxu0 0.0
      %3331 = vmatpush2.msra.mxu0 0.0
      %3332 = vmatprep.subr.mxu0 0.0
      %3333 = vmatpush2.msra.mxu0 0.0
      %3334 = vmatprep.subr.mxu0 0.0
      %3335 = vmatpush2.msra.mxu0 0.0
      %3336 = vmatprep.mubr.f32.mxu0 0.0
      %3337 = vmatmul.mubr.f32.gmra.mxu0 %v3177
      %v3338 = vpop.f32.mrf.mxu0
      %v3339 = vadd.f32 0.0, %v3338
      %v3340 = vpop.f32.mrf.mxu0
      %3341 = vmatprep.mubr.f32.mxu0 0.0
      %3342 = vmatmul.mubr.f32.gmra.mxu0 %v3180
      %v3343 = vpop.f32.mrf.mxu0
      %v3344 = vadd.f32 0.0, %v3343
      %v3345 = vpop.f32.mrf.mxu0
      %3346 = vmatprep.mubr.f32.mxu0 0.0
      %3347 = vmatmul.mubr.f32.gmra.mxu0 %v3183
      %v3348 = vpop.f32.mrf.mxu0
      %v3349 = vadd.f32 0.0, %v3348
      %v3350 = vpop.f32.mrf.mxu0
      %3351 = vmatprep.mubr.f32.mxu0 0.0
      %3352 = vmatmul.mubr.f32.gmra.mxu0 %v3186
      %v3353 = vpop.f32.mrf.mxu0
      %v3354 = vadd.f32 0.0, %v3353
      %v3355 = vpop.f32.mrf.mxu0
      %3356 = vmatprep.mubr.f32.mxu0 0.0
      %3357 = vmatmul.mubr.f32.gmra.mxu0 %v3189
      %v3358 = vpop.f32.mrf.mxu0
      %v3359 = vadd.f32 0.0, %v3358
      %v3360 = vpop.f32.mrf.mxu0
      %3361 = vmatprep.mubr.f32.mxu0 0.0
      %3362 = vmatmul.mubr.f32.gmra.mxu0 %v3192
      %v3363 = vpop.f32.mrf.mxu0
      %v3364 = vadd.f32 0.0, %v3363
      %v3365 = vpop.f32.mrf.mxu0
      %3366 = vmatprep.mubr.f32.mxu0 0.0
      %3367 = vmatmul.mubr.f32.gmra.mxu0 %v3195
      %v3368 = vpop.f32.mrf.mxu0
      %v3369 = vadd.f32 0.0, %v3368
      %v3370 = vpop.f32.mrf.mxu0
      %3371 = vmatprep.mubr.f32.mxu0 0.0
      %3372 = vmatmul.mubr.f32.gmra.mxu0 %v3198
      %v3373 = vpop.f32.mrf.mxu0
      %v3374 = vadd.f32 0.0, %v3373
      %v3375 = vpop.f32.mrf.mxu0
      %3376 = vmatprep.mubr.f32.mxu0 0.0
      %3377 = vmatmul.mubr.f32.gmra.mxu0 %v3201
      %v3378 = vpop.f32.mrf.mxu0
      %v3379 = vadd.f32 0.0, %v3378
      %v3380 = vpop.f32.mrf.mxu0
      %3381 = vmatprep.mubr.f32.mxu0 0.0
      %3382 = vmatmul.mubr.f32.gmra.mxu0 %v3204
      %v3383 = vpop.f32.mrf.mxu0
      %v3384 = vadd.f32 0.0, %v3383
      %v3385 = vpop.f32.mrf.mxu0
      %3386 = vmatprep.mubr.f32.mxu0 0.0
      %3387 = vmatmul.mubr.f32.gmra.mxu0 %v3207
      %v3388 = vpop.f32.mrf.mxu0
      %v3389 = vadd.f32 0.0, %v3388
      %v3390 = vpop.f32.mrf.mxu0
      %3391 = vmatprep.mubr.f32.mxu0 0.0
      %3392 = vmatmul.mubr.f32.gmra.mxu0 %v3210
      %v3393 = vpop.f32.mrf.mxu0
      %v3394 = vadd.f32 0.0, %v3393
      %v3395 = vpop.f32.mrf.mxu0
      %3396 = vmatprep.mubr.f32.mxu0 0.0
      %3397 = vmatmul.mubr.f32.gmra.mxu0 %v3213
      %v3398 = vpop.f32.mrf.mxu0
      %v3399 = vadd.f32 0.0, %v3398
      %v3400 = vpop.f32.mrf.mxu0
      %3401 = vmatprep.mubr.f32.mxu0 0.0
      %3402 = vmatmul.mubr.f32.gmra.mxu0 %v3216
      %v3403 = vpop.f32.mrf.mxu0
      %v3404 = vadd.f32 0.0, %v3403
      %v3405 = vpop.f32.mrf.mxu0
      %3406 = vmatprep.mubr.f32.mxu0 0.0
      %3407 = vmatmul.mubr.f32.gmra.mxu0 %v3219
      %v3408 = vpop.f32.mrf.mxu0
      %v3409 = vadd.f32 0.0, %v3408
      %v3410 = vpop.f32.mrf.mxu0
      %3411 = vmatprep.mubr.f32.mxu0 0.0
      %3412 = vmatmul.mubr.f32.gmra.mxu0 %v3222
      %v3413 = vpop.f32.mrf.mxu0
      %v3414 = vadd.f32 0.0, %v3413
      %v3415 = vpop.f32.mrf.mxu0
      %3416 = vmatprep.mubr.f32.mxu0 0.0
      %3417 = vmatmul.mubr.f32.gmra.mxu0 %v3225
      %v3418 = vpop.f32.mrf.mxu0
      %v3419 = vadd.f32 0.0, %v3418
      %v3420 = vpop.f32.mrf.mxu0
      %3421 = vmatprep.mubr.f32.mxu0 0.0
      %3422 = vmatmul.mubr.f32.gmra.mxu0 %v3228
      %v3423 = vpop.f32.mrf.mxu0
      %v3424 = vadd.f32 0.0, %v3423
      %v3425 = vpop.f32.mrf.mxu0
      %3426 = vmatprep.mubr.f32.mxu0 0.0
      %3427 = vmatmul.mubr.f32.gmra.mxu0 %v3231
      %v3428 = vpop.f32.mrf.mxu0
      %v3429 = vadd.f32 0.0, %v3428
      %v3430 = vpop.f32.mrf.mxu0
      %3431 = vmatprep.mubr.f32.mxu0 0.0
      %3432 = vmatmul.mubr.f32.gmra.mxu0 %v3234
      %v3433 = vpop.f32.mrf.mxu0
      %v3434 = vadd.f32 0.0, %v3433
      %v3435 = vpop.f32.mrf.mxu0
      %3436 = vmatprep.mubr.f32.mxu0 0.0
      %3437 = vmatmul.mubr.f32.gmra.mxu0 %v3237
      %v3438 = vpop.f32.mrf.mxu0
      %v3439 = vadd.f32 0.0, %v3438
      %v3440 = vpop.f32.mrf.mxu0
      %3441 = vmatprep.mubr.f32.mxu0 0.0
      %3442 = vmatmul.mubr.f32.gmra.mxu0 %v3240
      %v3443 = vpop.f32.mrf.mxu0
      %v3444 = vadd.f32 0.0, %v3443
      %v3445 = vpop.f32.mrf.mxu0
      %3446 = vmatprep.mubr.f32.mxu0 0.0
      %3447 = vmatmul.mubr.f32.gmra.mxu0 %v3243
      %v3448 = vpop.f32.mrf.mxu0
      %v3449 = vadd.f32 0.0, %v3448
      %v3450 = vpop.f32.mrf.mxu0
      %3451 = vmatprep.mubr.f32.mxu0 0.0
      %3452 = vmatmul.mubr.f32.gmra.mxu0 %v3246
      %v3453 = vpop.f32.mrf.mxu0
      %v3454 = vadd.f32 0.0, %v3453
      %v3455 = vpop.f32.mrf.mxu0
      %3456 = vmatprep.mubr.f32.mxu0 0.0
      %3457 = vmatmul.mubr.f32.gmra.mxu0 %v3249
      %v3458 = vpop.f32.mrf.mxu0
      %v3459 = vadd.f32 0.0, %v3458
      %v3460 = vpop.f32.mrf.mxu0
      %3461 = vmatprep.mubr.f32.mxu0 0.0
      %3462 = vmatmul.mubr.f32.gmra.mxu0 %v3252
      %v3463 = vpop.f32.mrf.mxu0
      %v3464 = vadd.f32 0.0, %v3463
      %v3465 = vpop.f32.mrf.mxu0
      %3466 = vmatprep.mubr.f32.mxu0 0.0
      %3467 = vmatmul.mubr.f32.gmra.mxu0 %v3255
      %v3468 = vpop.f32.mrf.mxu0
      %v3469 = vadd.f32 0.0, %v3468
      %v3470 = vpop.f32.mrf.mxu0
      %3471 = vmatprep.mubr.f32.mxu0 0.0
      %3472 = vmatmul.mubr.f32.gmra.mxu0 %v3258
      %v3473 = vpop.f32.mrf.mxu0
      %v3474 = vadd.f32 0.0, %v3473
      %v3475 = vpop.f32.mrf.mxu0
      %3476 = vmatprep.mubr.f32.mxu0 0.0
      %3477 = vmatmul.mubr.f32.gmra.mxu0 %v3261
      %v3478 = vpop.f32.mrf.mxu0
      %v3479 = vadd.f32 0.0, %v3478
      %v3480 = vpop.f32.mrf.mxu0
      %3481 = vmatprep.mubr.f32.mxu0 0.0
      %3482 = vmatmul.mubr.f32.gmra.mxu0 %v3264
      %v3483 = vpop.f32.mrf.mxu0
      %v3484 = vadd.f32 0.0, %v3483
      %v3485 = vpop.f32.mrf.mxu0
      %3486 = vmatprep.mubr.f32.mxu0 0.0
      %3487 = vmatmul.mubr.f32.gmra.mxu0 %v3267
      %v3488 = vpop.f32.mrf.mxu0
      %v3489 = vadd.f32 0.0, %v3488
      %v3490 = vpop.f32.mrf.mxu0
      %3491 = vmatprep.mubr.f32.mxu0 0.0
      %3492 = vmatmul.mubr.f32.gmra.mxu0 %v3270
      %v3493 = vpop.f32.mrf.mxu0
      %v3494 = vadd.f32 0.0, %v3493
      %v3495 = vpop.f32.mrf.mxu0
      %3496 = vdwg.mxu0
      %v3497 = vadd.f32 %v3110, %v3339
      %v3498 = vadd.f32 %v3111, %v3344
      %v3499 = vadd.f32 %v3112, %v3349
      %v3500 = vadd.f32 %v3113, %v3354
      %v3501 = vadd.f32 %v3114, %v3359
      %v3502 = vadd.f32 %v3115, %v3364
      %v3503 = vadd.f32 %v3116, %v3369
      %v3504 = vadd.f32 %v3117, %v3374
      %v3505 = vadd.f32 %v3118, %v3379
      %v3506 = vadd.f32 %v3119, %v3384
      %v3507 = vadd.f32 %v3120, %v3389
      %v3508 = vadd.f32 %v3121, %v3394
      %v3509 = vadd.f32 %v3122, %v3399
      %v3510 = vadd.f32 %v3123, %v3404
      %v3511 = vadd.f32 %v3124, %v3409
      %v3512 = vadd.f32 %v3125, %v3414
      %v3513 = vadd.f32 %v3126, %v3419
      %v3514 = vadd.f32 %v3127, %v3424
      %v3515 = vadd.f32 %v3128, %v3429
      %v3516 = vadd.f32 %v3129, %v3434
      %v3517 = vadd.f32 %v3130, %v3439
      %v3518 = vadd.f32 %v3131, %v3444
      %v3519 = vadd.f32 %v3132, %v3449
      %v3520 = vadd.f32 %v3133, %v3454
      %v3521 = vadd.f32 %v3134, %v3459
      %v3522 = vadd.f32 %v3135, %v3464
      %v3523 = vadd.f32 %v3136, %v3469
      %v3524 = vadd.f32 %v3137, %v3474
      %v3525 = vadd.f32 %v3138, %v3479
      %v3526 = vadd.f32 %v3139, %v3484
      %v3527 = vadd.f32 %v3140, %v3489
      %v3528 = vadd.f32 %v3141, %v3494
      %v3529 = vld [vmem:[%s2754 + $0x2] sm:$0xff]
      %v3530 = vld [vmem:[%s2754 + $0xa] sm:$0xff]
      %v3531 = vld [vmem:[%s2754 + $0x1a] sm:$0xff]
      %v3532 = vld [vmem:[%s2754 + $0x22] sm:$0xff]
      %v3533 = vld [vmem:[%s2754 + $0x32] sm:$0xff]
      %v3534 = vld [vmem:[%s2754 + $0x3a] sm:$0xff]
      %v3535 = vld [vmem:[%s2754 + $0x4a] sm:$0xff]
      %v3536 = vld [vmem:[%s2754 + $0x52] sm:$0xff]
      %v3537 = vld [vmem:[%s2754 + $0x62] sm:$0xff]
      %v3538 = vld [vmem:[%s2754 + $0x6a] sm:$0xff]
      %v3539 = vld [vmem:[%s2754 + $0x7a] sm:$0xff]
      %v3540 = vld [vmem:[%s2754 + $0x82] sm:$0xff]
      %v3541 = vld [vmem:[%s2754 + $0x92] sm:$0xff]
      %v3542 = vld [vmem:[%s2754 + $0x9a] sm:$0xff]
      %v3543 = vld [vmem:[%s2754 + $0xaa] sm:$0xff]
      %v3544 = vld [vmem:[%s2754 + $0xb2] sm:$0xff]
      %v3545 = vld [vmem:[%s2754 + $0xc2] sm:$0xff]
      %v3546 = vld [vmem:[%s2754 + $0xca] sm:$0xff]
      %v3547 = vld [vmem:[%s2754 + $0xda] sm:$0xff]
      %v3548 = vld [vmem:[%s2754 + $0xe2] sm:$0xff]
      %v3549 = vld [vmem:[%s2754 + $0xf2] sm:$0xff]
      %v3550 = vld [vmem:[%s2754 + $0xfa] sm:$0xff]
      %v3551 = vld [vmem:[%s2754 + $0x10a] sm:$0xff]
      %v3552 = vld [vmem:[%s2754 + $0x112] sm:$0xff]
      %v3553 = vld [vmem:[%s2754 + $0x122] sm:$0xff]
      %v3554 = vld [vmem:[%s2754 + $0x12a] sm:$0xff]
      %v3555 = vld [vmem:[%s2754 + $0x13a] sm:$0xff]
      %v3556 = vld [vmem:[%s2754 + $0x142] sm:$0xff]
      %v3557 = vld [vmem:[%s2754 + $0x152] sm:$0xff]
      %v3558 = vld [vmem:[%s2754 + $0x15a] sm:$0xff]
      %v3559 = vld [vmem:[%s2754 + $0x16a] sm:$0xff]
      %v3560 = vld [vmem:[%s2754 + $0x172] sm:$0xff]
      %s3561 = scalar_lea.vmem %s1, 64
      %v3562 = vld [vmem:[%s3561] sm:$0xff]
      %v3564 = vsel %vm408, %v3529, 0
      %v3567 = vsel %vm408, %v3530, 0
      %v3570 = vsel %vm408, %v3531, 0
      %v3573 = vsel %vm408, %v3532, 0
      %v3576 = vsel %vm408, %v3533, 0
      %v3579 = vsel %vm408, %v3534, 0
      %v3582 = vsel %vm408, %v3535, 0
      %v3585 = vsel %vm408, %v3536, 0
      %v3588 = vsel %vm408, %v3537, 0
      %v3591 = vsel %vm408, %v3538, 0
      %v3594 = vsel %vm408, %v3539, 0
      %v3597 = vsel %vm408, %v3540, 0
      %v3600 = vsel %vm408, %v3541, 0
      %v3603 = vsel %vm408, %v3542, 0
      %v3606 = vsel %vm408, %v3543, 0
      %v3609 = vsel %vm408, %v3544, 0
      %v3612 = vsel %vm408, %v3545, 0
      %v3615 = vsel %vm408, %v3546, 0
      %v3618 = vsel %vm408, %v3547, 0
      %v3621 = vsel %vm408, %v3548, 0
      %v3624 = vsel %vm408, %v3549, 0
      %v3627 = vsel %vm408, %v3550, 0
      %v3630 = vsel %vm408, %v3551, 0
      %v3633 = vsel %vm408, %v3552, 0
      %v3636 = vsel %vm408, %v3553, 0
      %v3639 = vsel %vm408, %v3554, 0
      %v3642 = vsel %vm408, %v3555, 0
      %v3645 = vsel %vm408, %v3556, 0
      %v3648 = vsel %vm408, %v3557, 0
      %v3651 = vsel %vm408, %v3558, 0
      %v3654 = vsel %vm408, %v3559, 0
      %v3657 = vsel %vm408, %v3560, 0
      %3659 = vmatprep.subr.mxu0 0.0
      %3660 = vmatpush1.msra.mxu0 0.0
      %3661 = vmatprep.subr.mxu0 0.0
      %3662 = vmatpush1.msra.mxu0 0.0
      %3663 = vmatprep.subr.mxu0 0.0
      %3664 = vmatpush1.msra.mxu0 0.0
      %3665 = vmatprep.subr.mxu0 0.0
      %3666 = vmatpush1.msra.mxu0 0.0
      %3667 = vmatprep.subr.mxu0 0.0
      %3668 = vmatpush1.msra.mxu0 0.0
      %3669 = vmatprep.subr.mxu0 0.0
      %3670 = vmatpush1.msra.mxu0 0.0
      %3671 = vmatprep.subr.mxu0 0.0
      %3672 = vmatpush1.msra.mxu0 0.0
      %3673 = vmatprep.subr.mxu0 0.0
      %3674 = vmatpush1.msra.mxu0 0.0
      %3675 = vmatprep.subr.mxu0 0.0
      %3676 = vmatpush1.msra.mxu0 0.0
      %3677 = vmatprep.subr.mxu0 0.0
      %3678 = vmatpush1.msra.mxu0 0.0
      %3679 = vmatprep.subr.mxu0 0.0
      %3680 = vmatpush1.msra.mxu0 0.0
      %3681 = vmatprep.subr.mxu0 0.0
      %3682 = vmatpush1.msra.mxu0 0.0
      %3683 = vmatprep.subr.mxu0 0.0
      %3684 = vmatpush1.msra.mxu0 0.0
      %3685 = vmatprep.subr.mxu0 0.0
      %3686 = vmatpush1.msra.mxu0 0.0
      %3687 = vmatprep.subr.mxu0 0.0
      %3688 = vmatpush1.msra.mxu0 0.0
      %3689 = vmatprep.subr.mxu0 0.0
      %3690 = vmatpush1.msra.mxu0 %v3562
      %3691 = vmatprep.subr.mxu0 0.0
      %3692 = vmatpush2.msra.mxu0 0.0
      %3693 = vmatprep.subr.mxu0 0.0
      %3694 = vmatpush2.msra.mxu0 0.0
      %3695 = vmatprep.subr.mxu0 0.0
      %3696 = vmatpush2.msra.mxu0 0.0
      %3697 = vmatprep.subr.mxu0 0.0
      %3698 = vmatpush2.msra.mxu0 0.0
      %3699 = vmatprep.subr.mxu0 0.0
      %3700 = vmatpush2.msra.mxu0 0.0
      %3701 = vmatprep.subr.mxu0 0.0
      %3702 = vmatpush2.msra.mxu0 0.0
      %3703 = vmatprep.subr.mxu0 0.0
      %3704 = vmatpush2.msra.mxu0 0.0
      %3705 = vmatprep.subr.mxu0 0.0
      %3706 = vmatpush2.msra.mxu0 0.0
      %3707 = vmatprep.subr.mxu0 0.0
      %3708 = vmatpush2.msra.mxu0 0.0
      %3709 = vmatprep.subr.mxu0 0.0
      %3710 = vmatpush2.msra.mxu0 0.0
      %3711 = vmatprep.subr.mxu0 0.0
      %3712 = vmatpush2.msra.mxu0 0.0
      %3713 = vmatprep.subr.mxu0 0.0
      %3714 = vmatpush2.msra.mxu0 0.0
      %3715 = vmatprep.subr.mxu0 0.0
      %3716 = vmatpush2.msra.mxu0 0.0
      %3717 = vmatprep.subr.mxu0 0.0
      %3718 = vmatpush2.msra.mxu0 0.0
      %3719 = vmatprep.subr.mxu0 0.0
      %3720 = vmatpush2.msra.mxu0 0.0
      %3721 = vmatprep.subr.mxu0 0.0
      %3722 = vmatpush2.msra.mxu0 0.0
      %3723 = vmatprep.mubr.f32.mxu0 0.0
      %3724 = vmatmul.mubr.f32.gmra.mxu0 %v3564
      %v3725 = vpop.f32.mrf.mxu0
      %v3726 = vadd.f32 0.0, %v3725
      %v3727 = vpop.f32.mrf.mxu0
      %3728 = vmatprep.mubr.f32.mxu0 0.0
      %3729 = vmatmul.mubr.f32.gmra.mxu0 %v3567
      %v3730 = vpop.f32.mrf.mxu0
      %v3731 = vadd.f32 0.0, %v3730
      %v3732 = vpop.f32.mrf.mxu0
      %3733 = vmatprep.mubr.f32.mxu0 0.0
      %3734 = vmatmul.mubr.f32.gmra.mxu0 %v3570
      %v3735 = vpop.f32.mrf.mxu0
      %v3736 = vadd.f32 0.0, %v3735
      %v3737 = vpop.f32.mrf.mxu0
      %3738 = vmatprep.mubr.f32.mxu0 0.0
      %3739 = vmatmul.mubr.f32.gmra.mxu0 %v3573
      %v3740 = vpop.f32.mrf.mxu0
      %v3741 = vadd.f32 0.0, %v3740
      %v3742 = vpop.f32.mrf.mxu0
      %3743 = vmatprep.mubr.f32.mxu0 0.0
      %3744 = vmatmul.mubr.f32.gmra.mxu0 %v3576
      %v3745 = vpop.f32.mrf.mxu0
      %v3746 = vadd.f32 0.0, %v3745
      %v3747 = vpop.f32.mrf.mxu0
      %3748 = vmatprep.mubr.f32.mxu0 0.0
      %3749 = vmatmul.mubr.f32.gmra.mxu0 %v3579
      %v3750 = vpop.f32.mrf.mxu0
      %v3751 = vadd.f32 0.0, %v3750
      %v3752 = vpop.f32.mrf.mxu0
      %3753 = vmatprep.mubr.f32.mxu0 0.0
      %3754 = vmatmul.mubr.f32.gmra.mxu0 %v3582
      %v3755 = vpop.f32.mrf.mxu0
      %v3756 = vadd.f32 0.0, %v3755
      %v3757 = vpop.f32.mrf.mxu0
      %3758 = vmatprep.mubr.f32.mxu0 0.0
      %3759 = vmatmul.mubr.f32.gmra.mxu0 %v3585
      %v3760 = vpop.f32.mrf.mxu0
      %v3761 = vadd.f32 0.0, %v3760
      %v3762 = vpop.f32.mrf.mxu0
      %3763 = vmatprep.mubr.f32.mxu0 0.0
      %3764 = vmatmul.mubr.f32.gmra.mxu0 %v3588
      %v3765 = vpop.f32.mrf.mxu0
      %v3766 = vadd.f32 0.0, %v3765
      %v3767 = vpop.f32.mrf.mxu0
      %3768 = vmatprep.mubr.f32.mxu0 0.0
      %3769 = vmatmul.mubr.f32.gmra.mxu0 %v3591
      %v3770 = vpop.f32.mrf.mxu0
      %v3771 = vadd.f32 0.0, %v3770
      %v3772 = vpop.f32.mrf.mxu0
      %3773 = vmatprep.mubr.f32.mxu0 0.0
      %3774 = vmatmul.mubr.f32.gmra.mxu0 %v3594
      %v3775 = vpop.f32.mrf.mxu0
      %v3776 = vadd.f32 0.0, %v3775
      %v3777 = vpop.f32.mrf.mxu0
      %3778 = vmatprep.mubr.f32.mxu0 0.0
      %3779 = vmatmul.mubr.f32.gmra.mxu0 %v3597
      %v3780 = vpop.f32.mrf.mxu0
      %v3781 = vadd.f32 0.0, %v3780
      %v3782 = vpop.f32.mrf.mxu0
      %3783 = vmatprep.mubr.f32.mxu0 0.0
      %3784 = vmatmul.mubr.f32.gmra.mxu0 %v3600
      %v3785 = vpop.f32.mrf.mxu0
      %v3786 = vadd.f32 0.0, %v3785
      %v3787 = vpop.f32.mrf.mxu0
      %3788 = vmatprep.mubr.f32.mxu0 0.0
      %3789 = vmatmul.mubr.f32.gmra.mxu0 %v3603
      %v3790 = vpop.f32.mrf.mxu0
      %v3791 = vadd.f32 0.0, %v3790
      %v3792 = vpop.f32.mrf.mxu0
      %3793 = vmatprep.mubr.f32.mxu0 0.0
      %3794 = vmatmul.mubr.f32.gmra.mxu0 %v3606
      %v3795 = vpop.f32.mrf.mxu0
      %v3796 = vadd.f32 0.0, %v3795
      %v3797 = vpop.f32.mrf.mxu0
      %3798 = vmatprep.mubr.f32.mxu0 0.0
      %3799 = vmatmul.mubr.f32.gmra.mxu0 %v3609
      %v3800 = vpop.f32.mrf.mxu0
      %v3801 = vadd.f32 0.0, %v3800
      %v3802 = vpop.f32.mrf.mxu0
      %3803 = vmatprep.mubr.f32.mxu0 0.0
      %3804 = vmatmul.mubr.f32.gmra.mxu0 %v3612
      %v3805 = vpop.f32.mrf.mxu0
      %v3806 = vadd.f32 0.0, %v3805
      %v3807 = vpop.f32.mrf.mxu0
      %3808 = vmatprep.mubr.f32.mxu0 0.0
      %3809 = vmatmul.mubr.f32.gmra.mxu0 %v3615
      %v3810 = vpop.f32.mrf.mxu0
      %v3811 = vadd.f32 0.0, %v3810
      %v3812 = vpop.f32.mrf.mxu0
      %3813 = vmatprep.mubr.f32.mxu0 0.0
      %3814 = vmatmul.mubr.f32.gmra.mxu0 %v3618
      %v3815 = vpop.f32.mrf.mxu0
      %v3816 = vadd.f32 0.0, %v3815
      %v3817 = vpop.f32.mrf.mxu0
      %3818 = vmatprep.mubr.f32.mxu0 0.0
      %3819 = vmatmul.mubr.f32.gmra.mxu0 %v3621
      %v3820 = vpop.f32.mrf.mxu0
      %v3821 = vadd.f32 0.0, %v3820
      %v3822 = vpop.f32.mrf.mxu0
      %3823 = vmatprep.mubr.f32.mxu0 0.0
      %3824 = vmatmul.mubr.f32.gmra.mxu0 %v3624
      %v3825 = vpop.f32.mrf.mxu0
      %v3826 = vadd.f32 0.0, %v3825
      %v3827 = vpop.f32.mrf.mxu0
      %3828 = vmatprep.mubr.f32.mxu0 0.0
      %3829 = vmatmul.mubr.f32.gmra.mxu0 %v3627
      %v3830 = vpop.f32.mrf.mxu0
      %v3831 = vadd.f32 0.0, %v3830
      %v3832 = vpop.f32.mrf.mxu0
      %3833 = vmatprep.mubr.f32.mxu0 0.0
      %3834 = vmatmul.mubr.f32.gmra.mxu0 %v3630
      %v3835 = vpop.f32.mrf.mxu0
      %v3836 = vadd.f32 0.0, %v3835
      %v3837 = vpop.f32.mrf.mxu0
      %3838 = vmatprep.mubr.f32.mxu0 0.0
      %3839 = vmatmul.mubr.f32.gmra.mxu0 %v3633
      %v3840 = vpop.f32.mrf.mxu0
      %v3841 = vadd.f32 0.0, %v3840
      %v3842 = vpop.f32.mrf.mxu0
      %3843 = vmatprep.mubr.f32.mxu0 0.0
      %3844 = vmatmul.mubr.f32.gmra.mxu0 %v3636
      %v3845 = vpop.f32.mrf.mxu0
      %v3846 = vadd.f32 0.0, %v3845
      %v3847 = vpop.f32.mrf.mxu0
      %3848 = vmatprep.mubr.f32.mxu0 0.0
      %3849 = vmatmul.mubr.f32.gmra.mxu0 %v3639
      %v3850 = vpop.f32.mrf.mxu0
      %v3851 = vadd.f32 0.0, %v3850
      %v3852 = vpop.f32.mrf.mxu0
      %3853 = vmatprep.mubr.f32.mxu0 0.0
      %3854 = vmatmul.mubr.f32.gmra.mxu0 %v3642
      %v3855 = vpop.f32.mrf.mxu0
      %v3856 = vadd.f32 0.0, %v3855
      %v3857 = vpop.f32.mrf.mxu0
      %3858 = vmatprep.mubr.f32.mxu0 0.0
      %3859 = vmatmul.mubr.f32.gmra.mxu0 %v3645
      %v3860 = vpop.f32.mrf.mxu0
      %v3861 = vadd.f32 0.0, %v3860
      %v3862 = vpop.f32.mrf.mxu0
      %3863 = vmatprep.mubr.f32.mxu0 0.0
      %3864 = vmatmul.mubr.f32.gmra.mxu0 %v3648
      %v3865 = vpop.f32.mrf.mxu0
      %v3866 = vadd.f32 0.0, %v3865
      %v3867 = vpop.f32.mrf.mxu0
      %3868 = vmatprep.mubr.f32.mxu0 0.0
      %3869 = vmatmul.mubr.f32.gmra.mxu0 %v3651
      %v3870 = vpop.f32.mrf.mxu0
      %v3871 = vadd.f32 0.0, %v3870
      %v3872 = vpop.f32.mrf.mxu0
      %3873 = vmatprep.mubr.f32.mxu0 0.0
      %3874 = vmatmul.mubr.f32.gmra.mxu0 %v3654
      %v3875 = vpop.f32.mrf.mxu0
      %v3876 = vadd.f32 0.0, %v3875
      %v3877 = vpop.f32.mrf.mxu0
      %3878 = vmatprep.mubr.f32.mxu0 0.0
      %3879 = vmatmul.mubr.f32.gmra.mxu0 %v3657
      %v3880 = vpop.f32.mrf.mxu0
      %v3881 = vadd.f32 0.0, %v3880
      %v3882 = vpop.f32.mrf.mxu0
      %3883 = vdwg.mxu0
      %v3884 = vadd.f32 %v3497, %v3726
      %v3885 = vadd.f32 %v3498, %v3731
      %v3886 = vadd.f32 %v3499, %v3736
      %v3887 = vadd.f32 %v3500, %v3741
      %v3888 = vadd.f32 %v3501, %v3746
      %v3889 = vadd.f32 %v3502, %v3751
      %v3890 = vadd.f32 %v3503, %v3756
      %v3891 = vadd.f32 %v3504, %v3761
      %v3892 = vadd.f32 %v3505, %v3766
      %v3893 = vadd.f32 %v3506, %v3771
      %v3894 = vadd.f32 %v3507, %v3776
      %v3895 = vadd.f32 %v3508, %v3781
      %v3896 = vadd.f32 %v3509, %v3786
      %v3897 = vadd.f32 %v3510, %v3791
      %v3898 = vadd.f32 %v3511, %v3796
      %v3899 = vadd.f32 %v3512, %v3801
      %v3900 = vadd.f32 %v3513, %v3806
      %v3901 = vadd.f32 %v3514, %v3811
      %v3902 = vadd.f32 %v3515, %v3816
      %v3903 = vadd.f32 %v3516, %v3821
      %v3904 = vadd.f32 %v3517, %v3826
      %v3905 = vadd.f32 %v3518, %v3831
      %v3906 = vadd.f32 %v3519, %v3836
      %v3907 = vadd.f32 %v3520, %v3841
      %v3908 = vadd.f32 %v3521, %v3846
      %v3909 = vadd.f32 %v3522, %v3851
      %v3910 = vadd.f32 %v3523, %v3856
      %v3911 = vadd.f32 %v3524, %v3861
      %v3912 = vadd.f32 %v3525, %v3866
      %v3913 = vadd.f32 %v3526, %v3871
      %v3914 = vadd.f32 %v3527, %v3876
      %v3915 = vadd.f32 %v3528, %v3881
      %vm3916 = vcmask 130048
      %3917 = vst.msk [vmem:[%s230] sm:$0xff] %vm3916, %v3884
      %3918 = vst.msk [vmem:[%s230 + $0x8] sm:$0xff] %vm3916, %v3885
      %3919 = vst.msk [vmem:[%s230 + $0x10] sm:$0xff] %vm3916, %v3886
      %3920 = vst.msk [vmem:[%s230 + $0x18] sm:$0xff] %vm3916, %v3887
      %3921 = vst.msk [vmem:[%s230 + $0x20] sm:$0xff] %vm3916, %v3888
      %3922 = vst.msk [vmem:[%s230 + $0x28] sm:$0xff] %vm3916, %v3889
      %3923 = vst.msk [vmem:[%s230 + $0x30] sm:$0xff] %vm3916, %v3890
      %3924 = vst.msk [vmem:[%s230 + $0x38] sm:$0xff] %vm3916, %v3891
      %3925 = vst.msk [vmem:[%s230 + $0x40] sm:$0xff] %vm3916, %v3892
      %3926 = vst.msk [vmem:[%s230 + $0x48] sm:$0xff] %vm3916, %v3893
      %3927 = vst.msk [vmem:[%s230 + $0x50] sm:$0xff] %vm3916, %v3894
      %3928 = vst.msk [vmem:[%s230 + $0x58] sm:$0xff] %vm3916, %v3895
      %3929 = vst.msk [vmem:[%s230 + $0x60] sm:$0xff] %vm3916, %v3896
      %3930 = vst.msk [vmem:[%s230 + $0x68] sm:$0xff] %vm3916, %v3897
      %3931 = vst.msk [vmem:[%s230 + $0x70] sm:$0xff] %vm3916, %v3898
      %3932 = vst.msk [vmem:[%s230 + $0x78] sm:$0xff] %vm3916, %v3899
      %3933 = vst.msk [vmem:[%s230 + $0x80] sm:$0xff] %vm3916, %v3900
      %3934 = vst.msk [vmem:[%s230 + $0x88] sm:$0xff] %vm3916, %v3901
      %3935 = vst.msk [vmem:[%s230 + $0x90] sm:$0xff] %vm3916, %v3902
      %3936 = vst.msk [vmem:[%s230 + $0x98] sm:$0xff] %vm3916, %v3903
      %3937 = vst.msk [vmem:[%s230 + $0xa0] sm:$0xff] %vm3916, %v3904
      %3938 = vst.msk [vmem:[%s230 + $0xa8] sm:$0xff] %vm3916, %v3905
      %3939 = vst.msk [vmem:[%s230 + $0xb0] sm:$0xff] %vm3916, %v3906
      %3940 = vst.msk [vmem:[%s230 + $0xb8] sm:$0xff] %vm3916, %v3907
      %3941 = vst.msk [vmem:[%s230 + $0xc0] sm:$0xff] %vm3916, %v3908
      %3942 = vst.msk [vmem:[%s230 + $0xc8] sm:$0xff] %vm3916, %v3909
      %3943 = vst.msk [vmem:[%s230 + $0xd0] sm:$0xff] %vm3916, %v3910
      %3944 = vst.msk [vmem:[%s230 + $0xd8] sm:$0xff] %vm3916, %v3911
      %3945 = vst.msk [vmem:[%s230 + $0xe0] sm:$0xff] %vm3916, %v3912
      %3946 = vst.msk [vmem:[%s230 + $0xe8] sm:$0xff] %vm3916, %v3913
      %3947 = vst.msk [vmem:[%s230 + $0xf0] sm:$0xff] %vm3916, %v3914
      %3948 = vst.msk [vmem:[%s230 + $0xf8] sm:$0xff] %vm3916, %v3915
      %v3949 = vsel %vm3916, %v3884, 0.0
      %v3950 = vsel %vm3916, %v3885, 0.0
      %v3951 = vadd.f32 %v3949, %v3950
      %v3952 = vsel %vm3916, %v3886, 0.0
      %v3953 = vadd.f32 %v3951, %v3952
      %v3954 = vsel %vm3916, %v3887, 0.0
      %v3955 = vadd.f32 %v3953, %v3954
      %v3956 = vsel %vm3916, %v3888, 0.0
      %v3957 = vadd.f32 %v3955, %v3956
      %v3958 = vsel %vm3916, %v3889, 0.0
      %v3959 = vadd.f32 %v3957, %v3958
      %v3960 = vsel %vm3916, %v3890, 0.0
      %v3961 = vadd.f32 %v3959, %v3960
      %v3962 = vsel %vm3916, %v3891, 0.0
      %v3963 = vadd.f32 %v3961, %v3962
      %v3964 = vsel %vm3916, %v3892, 0.0
      %v3965 = vadd.f32 %v3963, %v3964
      %v3966 = vsel %vm3916, %v3893, 0.0
      %v3967 = vadd.f32 %v3965, %v3966
      %v3968 = vsel %vm3916, %v3894, 0.0
      %v3969 = vadd.f32 %v3967, %v3968
      %v3970 = vsel %vm3916, %v3895, 0.0
      %v3971 = vadd.f32 %v3969, %v3970
      %v3972 = vsel %vm3916, %v3896, 0.0
      %v3973 = vadd.f32 %v3971, %v3972
      %v3974 = vsel %vm3916, %v3897, 0.0
      %v3975 = vadd.f32 %v3973, %v3974
      %v3976 = vsel %vm3916, %v3898, 0.0
      %v3977 = vadd.f32 %v3975, %v3976
      %v3978 = vsel %vm3916, %v3899, 0.0
      %v3979 = vadd.f32 %v3977, %v3978
      %v3980 = vsel %vm3916, %v3900, 0.0
      %v3981 = vadd.f32 %v3979, %v3980
      %v3982 = vsel %vm3916, %v3901, 0.0
      %v3983 = vadd.f32 %v3981, %v3982
      %v3984 = vsel %vm3916, %v3902, 0.0
      %v3985 = vadd.f32 %v3983, %v3984
      %v3986 = vsel %vm3916, %v3903, 0.0
      %v3987 = vadd.f32 %v3985, %v3986
      %v3988 = vsel %vm3916, %v3904, 0.0
      %v3989 = vadd.f32 %v3987, %v3988
      %v3990 = vsel %vm3916, %v3905, 0.0
      %v3991 = vadd.f32 %v3989, %v3990
      %v3992 = vsel %vm3916, %v3906, 0.0
      %v3993 = vadd.f32 %v3991, %v3992
      %v3994 = vsel %vm3916, %v3907, 0.0
      %v3995 = vadd.f32 %v3993, %v3994
      %v3996 = vsel %vm3916, %v3908, 0.0
      %v3997 = vadd.f32 %v3995, %v3996
      %v3998 = vsel %vm3916, %v3909, 0.0
      %v3999 = vadd.f32 %v3997, %v3998
      %v4000 = vsel %vm3916, %v3910, 0.0
      %v4001 = vadd.f32 %v3999, %v4000
      %v4002 = vsel %vm3916, %v3911, 0.0
      %v4003 = vadd.f32 %v4001, %v4002
      %v4004 = vsel %vm3916, %v3912, 0.0
      %v4005 = vadd.f32 %v4003, %v4004
      %v4006 = vsel %vm3916, %v3913, 0.0
      %v4007 = vadd.f32 %v4005, %v4006
      %v4008 = vsel %vm3916, %v3914, 0.0
      %v4009 = vadd.f32 %v4007, %v4008
      %v4010 = vsel %vm3916, %v3915, 0.0
      %v4011 = vadd.f32 %v4009, %v4010
      %v4012 = vrot.slane %v4011, 4
      %v4013 = vadd.f32 %v4011, %v4012
      %v4014 = vrot.slane %v4013, 2
      %v4015 = vadd.f32 %v4013, %v4014
      %v4016 = vrot.slane %v4015, 1
      %v4017 = vadd.f32 %v4015, %v4016
      %v4018 = vrcp.pop 256.0
      %v4019 = vmul.f32 %v4017, %v4018
      %v4020 = vsub.f32 %v3884, %v4019
      %v4021 = vsub.f32 %v3885, %v4019
      %v4022 = vsub.f32 %v3886, %v4019
      %v4023 = vsub.f32 %v3887, %v4019
      %v4024 = vsub.f32 %v3888, %v4019
      %v4025 = vsub.f32 %v3889, %v4019
      %v4026 = vsub.f32 %v3890, %v4019
      %v4027 = vsub.f32 %v3891, %v4019
      %v4028 = vsub.f32 %v3892, %v4019
      %v4029 = vsub.f32 %v3893, %v4019
      %v4030 = vsub.f32 %v3894, %v4019
      %v4031 = vsub.f32 %v3895, %v4019
      %v4032 = vsub.f32 %v3896, %v4019
      %v4033 = vsub.f32 %v3897, %v4019
      %v4034 = vsub.f32 %v3898, %v4019
      %v4035 = vsub.f32 %v3899, %v4019
      %v4036 = vsub.f32 %v3900, %v4019
      %v4037 = vsub.f32 %v3901, %v4019
      %v4038 = vsub.f32 %v3902, %v4019
      %v4039 = vsub.f32 %v3903, %v4019
      %v4040 = vsub.f32 %v3904, %v4019
      %v4041 = vsub.f32 %v3905, %v4019
      %v4042 = vsub.f32 %v3906, %v4019
      %v4043 = vsub.f32 %v3907, %v4019
      %v4044 = vsub.f32 %v3908, %v4019
      %v4045 = vsub.f32 %v3909, %v4019
      %v4046 = vsub.f32 %v3910, %v4019
      %v4047 = vsub.f32 %v3911, %v4019
      %v4048 = vsub.f32 %v3912, %v4019
      %v4049 = vsub.f32 %v3913, %v4019
      %v4050 = vsub.f32 %v3914, %v4019
      %v4051 = vsub.f32 %v3915, %v4019
      %v4052 = vmul.f32 %v4020, %v4020
      %v4053 = vmul.f32 %v4021, %v4021
      %v4054 = vmul.f32 %v4022, %v4022
      %v4055 = vmul.f32 %v4023, %v4023
      %v4056 = vmul.f32 %v4024, %v4024
      %v4057 = vmul.f32 %v4025, %v4025
      %v4058 = vmul.f32 %v4026, %v4026
      %v4059 = vmul.f32 %v4027, %v4027
      %v4060 = vmul.f32 %v4028, %v4028
      %v4061 = vmul.f32 %v4029, %v4029
      %v4062 = vmul.f32 %v4030, %v4030
      %v4063 = vmul.f32 %v4031, %v4031
      %v4064 = vmul.f32 %v4032, %v4032
      %v4065 = vmul.f32 %v4033, %v4033
      %v4066 = vmul.f32 %v4034, %v4034
      %v4067 = vmul.f32 %v4035, %v4035
      %v4068 = vmul.f32 %v4036, %v4036
      %v4069 = vmul.f32 %v4037, %v4037
      %v4070 = vmul.f32 %v4038, %v4038
      %v4071 = vmul.f32 %v4039, %v4039
      %v4072 = vmul.f32 %v4040, %v4040
      %v4073 = vmul.f32 %v4041, %v4041
      %v4074 = vmul.f32 %v4042, %v4042
      %v4075 = vmul.f32 %v4043, %v4043
      %v4076 = vmul.f32 %v4044, %v4044
      %v4077 = vmul.f32 %v4045, %v4045
      %v4078 = vmul.f32 %v4046, %v4046
      %v4079 = vmul.f32 %v4047, %v4047
      %v4080 = vmul.f32 %v4048, %v4048
      %v4081 = vmul.f32 %v4049, %v4049
      %v4082 = vmul.f32 %v4050, %v4050
      %v4083 = vmul.f32 %v4051, %v4051
      %v4084 = vsel %vm3916, %v4052, 0.0
      %v4085 = vsel %vm3916, %v4053, 0.0
      %v4086 = vadd.f32 %v4084, %v4085
      %v4087 = vsel %vm3916, %v4054, 0.0
      %v4088 = vadd.f32 %v4086, %v4087
      %v4089 = vsel %vm3916, %v4055, 0.0
      %v4090 = vadd.f32 %v4088, %v4089
      %v4091 = vsel %vm3916, %v4056, 0.0
      %v4092 = vadd.f32 %v4090, %v4091
      %v4093 = vsel %vm3916, %v4057, 0.0
      %v4094 = vadd.f32 %v4092, %v4093
      %v4095 = vsel %vm3916, %v4058, 0.0
      %v4096 = vadd.f32 %v4094, %v4095
      %v4097 = vsel %vm3916, %v4059, 0.0
      %v4098 = vadd.f32 %v4096, %v4097
      %v4099 = vsel %vm3916, %v4060, 0.0
      %v4100 = vadd.f32 %v4098, %v4099
      %v4101 = vsel %vm3916, %v4061, 0.0
      %v4102 = vadd.f32 %v4100, %v4101
      %v4103 = vsel %vm3916, %v4062, 0.0
      %v4104 = vadd.f32 %v4102, %v4103
      %v4105 = vsel %vm3916, %v4063, 0.0
      %v4106 = vadd.f32 %v4104, %v4105
      %v4107 = vsel %vm3916, %v4064, 0.0
      %v4108 = vadd.f32 %v4106, %v4107
      %v4109 = vsel %vm3916, %v4065, 0.0
      %v4110 = vadd.f32 %v4108, %v4109
      %v4111 = vsel %vm3916, %v4066, 0.0
      %v4112 = vadd.f32 %v4110, %v4111
      %v4113 = vsel %vm3916, %v4067, 0.0
      %v4114 = vadd.f32 %v4112, %v4113
      %v4115 = vsel %vm3916, %v4068, 0.0
      %v4116 = vadd.f32 %v4114, %v4115
      %v4117 = vsel %vm3916, %v4069, 0.0
      %v4118 = vadd.f32 %v4116, %v4117
      %v4119 = vsel %vm3916, %v4070, 0.0
      %v4120 = vadd.f32 %v4118, %v4119
      %v4121 = vsel %vm3916, %v4071, 0.0
      %v4122 = vadd.f32 %v4120, %v4121
      %v4123 = vsel %vm3916, %v4072, 0.0
      %v4124 = vadd.f32 %v4122, %v4123
      %v4125 = vsel %vm3916, %v4073, 0.0
      %v4126 = vadd.f32 %v4124, %v4125
      %v4127 = vsel %vm3916, %v4074, 0.0
      %v4128 = vadd.f32 %v4126, %v4127
      %v4129 = vsel %vm3916, %v4075, 0.0
      %v4130 = vadd.f32 %v4128, %v4129
      %v4131 = vsel %vm3916, %v4076, 0.0
      %v4132 = vadd.f32 %v4130, %v4131
      %v4133 = vsel %vm3916, %v4077, 0.0
      %v4134 = vadd.f32 %v4132, %v4133
      %v4135 = vsel %vm3916, %v4078, 0.0
      %v4136 = vadd.f32 %v4134, %v4135
      %v4137 = vsel %vm3916, %v4079, 0.0
      %v4138 = vadd.f32 %v4136, %v4137
      %v4139 = vsel %vm3916, %v4080, 0.0
      %v4140 = vadd.f32 %v4138, %v4139
      %v4141 = vsel %vm3916, %v4081, 0.0
      %v4142 = vadd.f32 %v4140, %v4141
      %v4143 = vsel %vm3916, %v4082, 0.0
      %v4144 = vadd.f32 %v4142, %v4143
      %v4145 = vsel %vm3916, %v4083, 0.0
      %v4146 = vadd.f32 %v4144, %v4145
      %v4147 = vrot.slane %v4146, 4
      %v4148 = vadd.f32 %v4146, %v4147
      %v4149 = vrot.slane %v4148, 2
      %v4150 = vadd.f32 %v4148, %v4149
      %v4151 = vrot.slane %v4150, 1
      %v4152 = vadd.f32 %v4150, %v4151
      %4154 = vrot.lane.b32.xlu0 %v4152, 16
      %v4155 = vpop.permute.xlu0 %4154
      %v4157 = vsel %vm3916, %v4017, %v4155
      %vm4158 = vcmask 253952
      %4159 = vst.msk [vmem:[%s233] sm:$0x1] %vm4158, %v4157
      %p4160 = scmp.lt.s32.totalorder %s17, 1
      %s4161 = scalar_select %p4160, %s17, 1
      %s4162 = smul.addr %s4161, 32
      %s4163 = smul.addr %s4162, 8
      %s4164 = scalar_lea.vmem %s4, %s4163
      %p4165 = scmp.lt.s32.totalorder %s17, 1
      %s4166 = scalar_select %p4165, %s17, 1
      %s4167 = scalar_lea.vmem %s5, %s4166
      // Predicated region
      $region37: #{residual_block_forward.6} parent=35 // pred_check
        %p4168 = pneg %p124
      $region38: #{residual_block_forward.6} parent=35 // pred_check_branch
        %4170 = sbr.rel (%p4168) target = $region40
      $region39: #{residual_block_forward.6} parent=35 // pred_region
        _
      $region40: #{residual_block_forward.6} parent=35 // pred_fallthru
        _
      // Predicated region
      $region41: #{residual_block_forward.6} parent=35 // pred_check
        %p4171 = pneg %p150
      $region42: #{residual_block_forward.6} parent=35 // pred_check_branch
        %4173 = sbr.rel (%p4171) target = $region44
      $region43: #{residual_block_forward.6} parent=35 // pred_region
        _
      $region44: #{residual_block_forward.6} parent=35 // pred_fallthru
        _
    $region36: #{residual_block_forward.6} parent=5 // pred_fallthru
      _
    %p4174 = scmp.le.s32.totalorder 2, %s12
    // Predicated region
    $region45: #{residual_block_forward.6} parent=5 // pred_check
      %p4175 = pneg %p4174
    $region46: #{residual_block_forward.6} parent=5 // pred_check_branch
      %4177 = sbr.rel (%p4175) target = $region48
    $region47: #{residual_block_forward.6} parent=5 // pred_region
      %s4178 = ssub.s32 %s12, 2
      // Predicated region
      $region49: #{residual_block_forward.6} parent=47 // pred_check
        %p4179 = pneg %p130
      $region50: #{residual_block_forward.6} parent=47 // pred_check_branch
        %4181 = sbr.rel (%p4179) target = $region52
      $region51: #{residual_block_forward.6} parent=47 // pred_region
        %p4182 = scmp.lt.s32.totalorder %s18, 1
        %s4183 = scalar_select %p4182, %s18, 1
        %s4184 = smul.addr %s4183, 32
        %s4185 = smul.addr %s4184, 8
        %s4186 = scalar_lea.vmem %s4, %s4185
      $region52: #{residual_block_forward.6} parent=47 // pred_fallthru
        _
      // Predicated region
      $region53: #{residual_block_forward.6} parent=47 // pred_check
        %p4187 = pneg %p156
      $region54: #{residual_block_forward.6} parent=47 // pred_check_branch
        %4189 = sbr.rel (%p4187) target = $region56
      $region55: #{residual_block_forward.6} parent=47 // pred_region
        %p4190 = scmp.lt.s32.totalorder %s18, 1
        %s4191 = scalar_select %p4190, %s18, 1
        %s4192 = scalar_lea.vmem %s5, %s4191
      $region56: #{residual_block_forward.6} parent=47 // pred_fallthru
        _
    $region48: #{residual_block_forward.6} parent=5 // pred_fallthru
      _
  $region6: #{residual_block_forward.6} parent=0 // loop_footer
    %s16 = sadd.s32 1, %s12
  $region7: #{residual_block_forward.6} parent=0 // loop_footer_branch
    %11 = sbr.rel target = $region3
  $region8: #{residual_block_forward.6} parent=0 // loop_exit
    _

</llo_original>
